<compile_context>
chip_gen: v7x
topology: tpu7x:2x2x1
jax: 0.10.0
libtpu: 0.0.40
codegen_flags: <defaults>
</compile_context>

<pallas_src>
import jax
import jax.numpy as jnp
from jax.experimental import pallas as pl
from jax.experimental.pallas import tpu as pltpu


# ----------------------------------------------------------------------------
# In-kernel helpers (operate on VMEM refs / values)
# ----------------------------------------------------------------------------
_PHASES = ((0, 0), (0, 1), (1, 0), (1, 1))


def _pack_taps(patch_ref, sources, H, W):
    """In-VMEM im2col: write the 9 shifted (H, W, Cin) taps of every source
    into `patch_ref` at consecutive lane offsets.  Returns total K."""
    M = H * W
    off = 0
    for src in sources:                       # padded scratch refs (H+2, W+2, Cin)
        cin = src.shape[-1]
        for kh in range(3):
            for kw in range(3):
                tap = src[kh:kh + H, kw:kw + W, :]          # static slice load
                patch_ref[0:M, off:off + cin] = (
                    tap.reshape(M, cin).astype(jnp.bfloat16))
                off += cin
    return off


def _conv3x3(patch_ref, sources, w_ref, b_ref, H, W, act):
    """3x3 / pad=1 conv over the concatenation of `sources`, as ONE MXU matmul
    on the packed patch matrix.  Returns (H*W, Cout) float32."""
    M = H * W
    K = _pack_taps(patch_ref, sources, H, W)
    y = jnp.dot(patch_ref[0:M, 0:K], w_ref[...],
                preferred_element_type=jnp.float32) + b_ref[...]
    if act == "relu":
        y = jnp.maximum(y, 0.0)
    elif act == "tanh":
        y = jnp.tanh(y)
    return y


def _store_interior(dst_pad, y2d, H, W):
    """Store an (H*W, C) activation into the interior of a zero-haloed pad."""
    c = dst_pad.shape[-1]
    dst_pad[1:H + 1, 1:W + 1, :] = y2d.reshape(H, W, c)


def _maxpool2x2_from_pad(pad_ref, Ho, Wo):
    """2x2 stride-2 max-pool read directly (strided loads) from a padded
    scratch whose interior starts at (1, 1).  Returns (Ho, Wo, C)."""
    def pick(r, s):
        return pad_ref[pl.ds(1 + r, Ho, 2), pl.ds(1 + s, Wo, 2), :]
    return jnp.maximum(jnp.maximum(pick(0, 0), pick(0, 1)),
                       jnp.maximum(pick(1, 0), pick(1, 1)))


def _conv_transpose2x(patch_ref, src_pad, w_ref, b_ref, u_il_ref, dst_pad, H, W):
    """ConvTranspose2d(k=3, stride=2, pad=1, output_pad=1) via the 4-phase
    (sub-pixel) decomposition, fused with the 2x2 interleave into the
    destination pad's interior.  src_pad: (H+2, W+2, Cin), output: 2H x 2W."""
    M = H * W
    cin = src_pad.shape[-1]
    cout = u_il_ref.shape[-1]
    # taps x[y+dy, x+dx] (zero beyond the boundary, courtesy of the halo)
    for i, (dy, dx) in enumerate(_PHASES):
        tap = src_pad[1 + dy:1 + dy + H, 1 + dx:1 + dx + W, :]
        patch_ref[0:M, i * cin:(i + 1) * cin] = (
            tap.reshape(M, cin).astype(jnp.bfloat16))
    y = jnp.dot(patch_ref[0:M, 0:4 * cin], w_ref[...],
                preferred_element_type=jnp.float32) + b_ref[...]
    # y lanes: [p00 | p01 | p10 | p11]; phase (r, s) holds output pixels (2y+r, 2x+s)
    for i, (r, s) in enumerate(_PHASES):
        u_il_ref[:, r, :, s, :] = y[:, i * cout:(i + 1) * cout].reshape(H, W, cout)
    # (H, 2, W, 2, C) is memory-order identical to the interleaved (2H, 2W, C)
    dst_pad[1:2 * H + 1, 1:2 * W + 1, :] = u_il_ref[...].reshape(2 * H, 2 * W, cout)


# ----------------------------------------------------------------------------
# The fused UNet kernel (one image per grid step)
# ----------------------------------------------------------------------------
def _unet_kernel(x_ref,
                 w_e1, b_e1, w_e2, b_e2, w_e3, b_e3,
                 w_u1, b_u1, w_u2, b_u2,
                 w_d1, b_d1, w_o, b_o,
                 o_ref,
                 patch, pad_x, pad_e1, pad_d1, pad_e2, pad_d2, pad_e3,
                 u1_il, pad_u1, pad_dec1, u2_il, pad_u2):
    # Zero the haloed scratches (interiors are fully overwritten below).
    for ref in (pad_x, pad_e1, pad_d1, pad_e2, pad_d2, pad_e3,
                pad_u1, pad_dec1, pad_u2):
        ref[...] = jnp.zeros_like(ref)

    pad_x[1:17, 1:17, :] = x_ref[0]                                  # (16,16,4)

    # -------------------------- encoder --------------------------
    e1 = _conv3x3(patch, [pad_x], w_e1, b_e1, 16, 16, "relu")        # (256, 8)
    _store_interior(pad_e1, e1, 16, 16)                              # skip for out conv
    pad_d1[1:9, 1:9, :] = _maxpool2x2_from_pad(pad_e1, 8, 8)         # (8,8,8)

    e2 = _conv3x3(patch, [pad_d1], w_e2, b_e2, 8, 8, "relu")         # (64, 16)
    _store_interior(pad_e2, e2, 8, 8)                                # skip for dec1
    pad_d2[1:5, 1:5, :] = _maxpool2x2_from_pad(pad_e2, 4, 4)         # (4,4,16)

    e3 = _conv3x3(patch, [pad_d2], w_e3, b_e3, 4, 4, "relu")         # (16, 32)
    _store_interior(pad_e3, e3, 4, 4)

    # -------------------------- decoder --------------------------
    _conv_transpose2x(patch, pad_e3, w_u1, b_u1, u1_il, pad_u1, 4, 4)   # u1: 8x8x16
    # cat([u1, e2]) is consumed directly from VMEM via the K-split packed weight
    d1 = _conv3x3(patch, [pad_u1, pad_e2], w_d1, b_d1, 8, 8, "relu")    # (64, 16)
    _store_interior(pad_dec1, d1, 8, 8)

    _conv_transpose2x(patch, pad_dec1, w_u2, b_u2, u2_il, pad_u2, 8, 8) # u2: 16x16x8
    out = _conv3x3(patch, [pad_u2, pad_e1], w_o, b_o, 16, 16, "tanh")   # (256, 3)

    o_ref[0] = out


# ----------------------------------------------------------------------------
# Parameter init (torch layouts) + one-time relayout into kernel layouts
# ----------------------------------------------------------------------------
def _init_conv(key, cout, cin, k=3):
    kw_, kb_ = jax.random.split(key)
    bound = 1.0 / jnp.sqrt(cin * k * k)
    w = jax.random.uniform(kw_, (cout, cin, k, k), jnp.float32, -bound, bound)
    b = jax.random.uniform(kb_, (cout,), jnp.float32, -bound, bound)
    return w, b


def _init_convT(key, cin, cout, k=3):
    kw_, kb_ = jax.random.split(key)
    bound = 1.0 / jnp.sqrt(cout * k * k)   # torch ConvTranspose fan_in
    w = jax.random.uniform(kw_, (cin, cout, k, k), jnp.float32, -bound, bound)
    b = jax.random.uniform(kb_, (cout,), jnp.float32, -bound, bound)
    return w, b


def init_unet_params(key):
    keys = jax.random.split(key, 7)
    p = {}
    p["enc1_w"], p["enc1_b"] = _init_conv(keys[0], 8, 4)
    p["enc2_w"], p["enc2_b"] = _init_conv(keys[1], 16, 8)
    p["enc3_w"], p["enc3_b"] = _init_conv(keys[2], 32, 16)
    p["up1_w"], p["up1_b"] = _init_convT(keys[3], 32, 16)
    p["up2_w"], p["up2_b"] = _init_convT(keys[4], 16, 8)
    p["dec1_w"], p["dec1_b"] = _init_conv(keys[5], 16, 32)   # corrected in-ch (see TODO)
    p["out_w"], p["out_b"] = _init_conv(keys[6], 3, 16)
    return p


def prepare_params(p):
    """One-time relayout of torch-layout weights into the packed matmul layouts
    the fused kernel consumes (done at init, never in the hot path)."""
    def conv_w(w, groups=None):
        cout, cin = w.shape[0], w.shape[1]
        wt = jnp.transpose(w, (2, 3, 1, 0))                 # (kh, kw, cin, cout)
        if groups is None:
            return wt.reshape(9 * cin, cout).astype(jnp.bfloat16)
        parts, start = [], 0
        for g in groups:                                    # K order: source-major, tap, ci
            parts.append(wt[:, :, start:start + g, :].reshape(9 * g, cout))
            start += g
        return jnp.concatenate(parts, axis=0).astype(jnp.bfloat16)

    def convt_w(w):
        # 4-phase block matrix: rows = taps [x00|x01|x10|x11], cols = phases
        # [p00|p01|p10|p11];  out[2y+r, 2x+s] = sum of the listed original taps.
        cin, cout = w.shape[0], w.shape[1]
        z = jnp.zeros((cin, cout), w.dtype)
        t = lambda kh, kw: w[:, :, kh, kw]                  # (cin, cout)
        rows = [
            jnp.concatenate([t(1, 1), t(1, 2), t(2, 1), t(2, 2)], axis=1),
            jnp.concatenate([z,       t(1, 0), z,       t(2, 0)], axis=1),
            jnp.concatenate([z,       z,       t(0, 1), t(0, 2)], axis=1),
            jnp.concatenate([z,       z,       z,       t(0, 0)], axis=1),
        ]
        return jnp.concatenate(rows, axis=0).astype(jnp.bfloat16)   # (4cin, 4cout)

    bias = lambda b: b.reshape(1, -1).astype(jnp.float32)
    bias4 = lambda b: jnp.tile(b.reshape(1, -1), (1, 4)).astype(jnp.float32)

    return {
        "enc1_w": conv_w(p["enc1_w"]), "enc1_b": bias(p["enc1_b"]),
        "enc2_w": conv_w(p["enc2_w"]), "enc2_b": bias(p["enc2_b"]),
        "enc3_w": conv_w(p["enc3_w"]), "enc3_b": bias(p["enc3_b"]),
        "up1_w": convt_w(p["up1_w"]), "up1_b": bias4(p["up1_b"]),
        "up2_w": convt_w(p["up2_w"]), "up2_b": bias4(p["up2_b"]),
        "dec1_w": conv_w(p["dec1_w"], groups=(16, 16)), "dec1_b": bias(p["dec1_b"]),
        "out_w": conv_w(p["out_w"], groups=(8, 8)), "out_b": bias(p["out_b"]),
    }


# ----------------------------------------------------------------------------
# Forward wrapper
# ----------------------------------------------------------------------------
def _bcast_spec(shape):
    zeros = (0,) * len(shape)
    return pl.BlockSpec(shape, lambda n, _z=zeros: _z)


@jax.jit
def unet_forward(x_nchw, params):
    N, C, H, W = x_nchw.shape
    assert (C, H, W) == (4, 16, 16), (C, H, W)
    x = jnp.transpose(x_nchw, (0, 2, 3, 1))                 # NCHW -> NHWC

    p = params
    weight_args = (
        p["enc1_w"], p["enc1_b"], p["enc2_w"], p["enc2_b"],
        p["enc3_w"], p["enc3_b"], p["up1_w"], p["up1_b"],
        p["up2_w"], p["up2_b"], p["dec1_w"], p["dec1_b"],
        p["out_w"], p["out_b"],
    )
    in_specs = [pl.BlockSpec((1, 16, 16, 4), lambda n: (n, 0, 0, 0))]
    in_specs += [_bcast_spec(a.shape) for a in weight_args]

    out = pl.pallas_call(
        _unet_kernel,
        grid=(N,),
        out_shape=jax.ShapeDtypeStruct((N, 256, 3), jnp.float32),
        in_specs=in_specs,
        out_specs=pl.BlockSpec((1, 256, 3), lambda n: (n, 0, 0)),
        scratch_shapes=[
            pltpu.VMEM((256, 288), jnp.bfloat16),      # shared im2col patch matrix
            pltpu.VMEM((18, 18, 4), jnp.float32),      # pad_x
            pltpu.VMEM((18, 18, 8), jnp.float32),      # pad_e1  (skip for out conv)
            pltpu.VMEM((10, 10, 8), jnp.float32),      # pad_d1
            pltpu.VMEM((10, 10, 16), jnp.float32),     # pad_e2  (skip for dec1)
            pltpu.VMEM((6, 6, 16), jnp.float32),       # pad_d2
            pltpu.VMEM((6, 6, 32), jnp.float32),       # pad_e3
            pltpu.VMEM((4, 2, 4, 2, 16), jnp.float32), # u1 interleave buffer
            pltpu.VMEM((10, 10, 16), jnp.float32),     # pad_u1
            pltpu.VMEM((10, 10, 16), jnp.float32),     # pad_dec1
            pltpu.VMEM((8, 2, 8, 2, 8), jnp.float32),  # u2 interleave buffer
            pltpu.VMEM((18, 18, 8), jnp.float32),      # pad_u2
        ],
        compiler_params=pltpu.CompilerParams(
            dimension_semantics=("parallel",)),        # 2nd TC on v7x; no-op on v5e/v6e
    )(x, *weight_args)

    # (N, H*W, 3) -> NCHW (N, 3, 16, 16); tiny relayout done once in XLA.
    return jnp.transpose(out, (0, 2, 1)).reshape(N, 3, 16, 16)


if __name__ == "__main__":
    key = jax.random.PRNGKey(0)
    k_x, k_p = jax.random.split(key)
    x = jax.random.normal(k_x, (2, 4, 16, 16), jnp.float32)   # NCHW, like torch
    params = prepare_params(init_unet_params(k_p))

    y = unet_forward(x, params)
    jax.block_until_ready(y)

    assert y.shape == (2, 3, 16, 16), y.shape
    assert bool(jnp.all(jnp.isfinite(y)))
    assert bool(jnp.all(jnp.abs(y) <= 1.0))   # tanh output range
    print("KERNEL_OK")
</pallas_src>

<mosaic_0001>
module attributes {stable_mosaic.version = 11 : i64} {
  func.func @_unet_kernel(%arg0: i32, %arg1: memref<1x16x16x4xf32, #tpu.memory_space<vmem>>, %arg2: memref<36x8xbf16, #tpu.memory_space<vmem>>, %arg3: memref<1x8xf32, #tpu.memory_space<vmem>>, %arg4: memref<72x16xbf16, #tpu.memory_space<vmem>>, %arg5: memref<1x16xf32, #tpu.memory_space<vmem>>, %arg6: memref<144x32xbf16, #tpu.memory_space<vmem>>, %arg7: memref<1x32xf32, #tpu.memory_space<vmem>>, %arg8: memref<128x64xbf16, #tpu.memory_space<vmem>>, %arg9: memref<1x64xf32, #tpu.memory_space<vmem>>, %arg10: memref<64x32xbf16, #tpu.memory_space<vmem>>, %arg11: memref<1x32xf32, #tpu.memory_space<vmem>>, %arg12: memref<288x16xbf16, #tpu.memory_space<vmem>>, %arg13: memref<1x16xf32, #tpu.memory_space<vmem>>, %arg14: memref<144x3xbf16, #tpu.memory_space<vmem>>, %arg15: memref<1x3xf32, #tpu.memory_space<vmem>>, %arg16: memref<1x256x3xf32, #tpu.memory_space<vmem>>, %arg17: memref<256x288xbf16, #tpu.memory_space<vmem>>, %arg18: memref<18x18x4xf32, #tpu.memory_space<vmem>>, %arg19: memref<18x18x8xf32, #tpu.memory_space<vmem>>, %arg20: memref<10x10x8xf32, #tpu.memory_space<vmem>>, %arg21: memref<10x10x16xf32, #tpu.memory_space<vmem>>, %arg22: memref<6x6x16xf32, #tpu.memory_space<vmem>>, %arg23: memref<6x6x32xf32, #tpu.memory_space<vmem>>, %arg24: memref<4x2x4x2x16xf32, #tpu.memory_space<vmem>>, %arg25: memref<10x10x16xf32, #tpu.memory_space<vmem>>, %arg26: memref<10x10x16xf32, #tpu.memory_space<vmem>>, %arg27: memref<8x2x8x2x8xf32, #tpu.memory_space<vmem>>, %arg28: memref<18x18x8xf32, #tpu.memory_space<vmem>>) attributes {dimension_semantics = [#tpu.dimension_semantics<parallel>], iteration_bounds = array<i64: 2>, scalar_prefetch = 0 : i64, scratch_operands = 12 : i64, tpu.core_type = #tpu.core_type<tc>, window_params = [{transform_indices = @transform_0, window_bounds = array<i64: 1, 16, 16, 4>}, {pipeline_mode = #tpu.pipeline_mode<synchronous>, transform_indices = @transform_1, window_bounds = array<i64: 36, 8>}, {pipeline_mode = #tpu.pipeline_mode<synchronous>, transform_indices = @transform_2, window_bounds = array<i64: 1, 8>}, {pipeline_mode = #tpu.pipeline_mode<synchronous>, transform_indices = @transform_3, window_bounds = array<i64: 72, 16>}, {pipeline_mode = #tpu.pipeline_mode<synchronous>, transform_indices = @transform_4, window_bounds = array<i64: 1, 16>}, {pipeline_mode = #tpu.pipeline_mode<synchronous>, transform_indices = @transform_5, window_bounds = array<i64: 144, 32>}, {pipeline_mode = #tpu.pipeline_mode<synchronous>, transform_indices = @transform_6, window_bounds = array<i64: 1, 32>}, {pipeline_mode = #tpu.pipeline_mode<synchronous>, transform_indices = @transform_7, window_bounds = array<i64: 128, 64>}, {pipeline_mode = #tpu.pipeline_mode<synchronous>, transform_indices = @transform_8, window_bounds = array<i64: 1, 64>}, {pipeline_mode = #tpu.pipeline_mode<synchronous>, transform_indices = @transform_9, window_bounds = array<i64: 64, 32>}, {pipeline_mode = #tpu.pipeline_mode<synchronous>, transform_indices = @transform_10, window_bounds = array<i64: 1, 32>}, {pipeline_mode = #tpu.pipeline_mode<synchronous>, transform_indices = @transform_11, window_bounds = array<i64: 288, 16>}, {pipeline_mode = #tpu.pipeline_mode<synchronous>, transform_indices = @transform_12, window_bounds = array<i64: 1, 16>}, {pipeline_mode = #tpu.pipeline_mode<synchronous>, transform_indices = @transform_13, window_bounds = array<i64: 144, 3>}, {pipeline_mode = #tpu.pipeline_mode<synchronous>, transform_indices = @transform_14, window_bounds = array<i64: 1, 3>}, {transform_indices = @transform_15, window_bounds = array<i64: 1, 256, 3>}]} {
    %cst = arith.constant 0.000000e+00 : f32
    %0 = vector.broadcast %cst : f32 to vector<18x18x4xf32>
    %c0 = arith.constant 0 : index
    %c0_0 = arith.constant 0 : index
    %c0_1 = arith.constant 0 : index
    %1 = vector.load %arg18[%c0, %c0_0, %c0_1] : memref<18x18x4xf32, #tpu.memory_space<vmem>>, vector<18x18x4xf32>
    tpu.vector_store %arg18[%c0, %c0_0, %c0_1], %0 {strides = array<i32>} : memref<18x18x4xf32, #tpu.memory_space<vmem>>, vector<18x18x4xf32>,
    %cst_2 = arith.constant 0.000000e+00 : f32
    %2 = vector.broadcast %cst_2 : f32 to vector<18x18x8xf32>
    %c0_3 = arith.constant 0 : index
    %c0_4 = arith.constant 0 : index
    %c0_5 = arith.constant 0 : index
    %3 = vector.load %arg19[%c0_3, %c0_4, %c0_5] : memref<18x18x8xf32, #tpu.memory_space<vmem>>, vector<18x18x8xf32>
    tpu.vector_store %arg19[%c0_3, %c0_4, %c0_5], %2 {strides = array<i32>} : memref<18x18x8xf32, #tpu.memory_space<vmem>>, vector<18x18x8xf32>,
    %cst_6 = arith.constant 0.000000e+00 : f32
    %4 = vector.broadcast %cst_6 : f32 to vector<10x10x8xf32>
    %c0_7 = arith.constant 0 : index
    %c0_8 = arith.constant 0 : index
    %c0_9 = arith.constant 0 : index
    %5 = vector.load %arg20[%c0_7, %c0_8, %c0_9] : memref<10x10x8xf32, #tpu.memory_space<vmem>>, vector<10x10x8xf32>
    tpu.vector_store %arg20[%c0_7, %c0_8, %c0_9], %4 {strides = array<i32>} : memref<10x10x8xf32, #tpu.memory_space<vmem>>, vector<10x10x8xf32>,
    %cst_10 = arith.constant 0.000000e+00 : f32
    %6 = vector.broadcast %cst_10 : f32 to vector<10x10x16xf32>
    %c0_11 = arith.constant 0 : index
    %c0_12 = arith.constant 0 : index
    %c0_13 = arith.constant 0 : index
    %7 = vector.load %arg21[%c0_11, %c0_12, %c0_13] : memref<10x10x16xf32, #tpu.memory_space<vmem>>, vector<10x10x16xf32>
    tpu.vector_store %arg21[%c0_11, %c0_12, %c0_13], %6 {strides = array<i32>} : memref<10x10x16xf32, #tpu.memory_space<vmem>>, vector<10x10x16xf32>,
    %cst_14 = arith.constant 0.000000e+00 : f32
    %8 = vector.broadcast %cst_14 : f32 to vector<6x6x16xf32>
    %c0_15 = arith.constant 0 : index
    %c0_16 = arith.constant 0 : index
    %c0_17 = arith.constant 0 : index
    %9 = vector.load %arg22[%c0_15, %c0_16, %c0_17] : memref<6x6x16xf32, #tpu.memory_space<vmem>>, vector<6x6x16xf32>
    tpu.vector_store %arg22[%c0_15, %c0_16, %c0_17], %8 {strides = array<i32>} : memref<6x6x16xf32, #tpu.memory_space<vmem>>, vector<6x6x16xf32>,
    %cst_18 = arith.constant 0.000000e+00 : f32
    %10 = vector.broadcast %cst_18 : f32 to vector<6x6x32xf32>
    %c0_19 = arith.constant 0 : index
    %c0_20 = arith.constant 0 : index
    %c0_21 = arith.constant 0 : index
    %11 = vector.load %arg23[%c0_19, %c0_20, %c0_21] : memref<6x6x32xf32, #tpu.memory_space<vmem>>, vector<6x6x32xf32>
    tpu.vector_store %arg23[%c0_19, %c0_20, %c0_21], %10 {strides = array<i32>} : memref<6x6x32xf32, #tpu.memory_space<vmem>>, vector<6x6x32xf32>,
    %cst_22 = arith.constant 0.000000e+00 : f32
    %12 = vector.broadcast %cst_22 : f32 to vector<10x10x16xf32>
    %c0_23 = arith.constant 0 : index
    %c0_24 = arith.constant 0 : index
    %c0_25 = arith.constant 0 : index
    %13 = vector.load %arg25[%c0_23, %c0_24, %c0_25] : memref<10x10x16xf32, #tpu.memory_space<vmem>>, vector<10x10x16xf32>
    tpu.vector_store %arg25[%c0_23, %c0_24, %c0_25], %12 {strides = array<i32>} : memref<10x10x16xf32, #tpu.memory_space<vmem>>, vector<10x10x16xf32>,
    %cst_26 = arith.constant 0.000000e+00 : f32
    %14 = vector.broadcast %cst_26 : f32 to vector<10x10x16xf32>
    %c0_27 = arith.constant 0 : index
    %c0_28 = arith.constant 0 : index
    %c0_29 = arith.constant 0 : index
    %15 = vector.load %arg26[%c0_27, %c0_28, %c0_29] : memref<10x10x16xf32, #tpu.memory_space<vmem>>, vector<10x10x16xf32>
    tpu.vector_store %arg26[%c0_27, %c0_28, %c0_29], %14 {strides = array<i32>} : memref<10x10x16xf32, #tpu.memory_space<vmem>>, vector<10x10x16xf32>,
    %cst_30 = arith.constant 0.000000e+00 : f32
    %16 = vector.broadcast %cst_30 : f32 to vector<18x18x8xf32>
    %c0_31 = arith.constant 0 : index
    %c0_32 = arith.constant 0 : index
    %c0_33 = arith.constant 0 : index
    %17 = vector.load %arg28[%c0_31, %c0_32, %c0_33] : memref<18x18x8xf32, #tpu.memory_space<vmem>>, vector<18x18x8xf32>
    tpu.vector_store %arg28[%c0_31, %c0_32, %c0_33], %16 {strides = array<i32>} : memref<18x18x8xf32, #tpu.memory_space<vmem>>, vector<18x18x8xf32>,
    %c0_34 = arith.constant 0 : index
    %c0_35 = arith.constant 0 : index
    %c0_36 = arith.constant 0 : index
    %c0_37 = arith.constant 0 : index
    %18 = vector.load %arg1[%c0_34, %c0_35, %c0_36, %c0_37] : memref<1x16x16x4xf32, #tpu.memory_space<vmem>>, vector<1x16x16x4xf32>
    %19 = vector.shape_cast %18 : vector<1x16x16x4xf32> to vector<16x16x4xf32>
    %c1 = arith.constant 1 : index
    %c1_38 = arith.constant 1 : index
    %c0_39 = arith.constant 0 : index
    %20 = vector.load %arg18[%c1, %c1_38, %c0_39] : memref<18x18x4xf32, #tpu.memory_space<vmem>>, vector<16x16x4xf32>
    tpu.vector_store %arg18[%c1, %c1_38, %c0_39], %19 {strides = array<i32>} : memref<18x18x4xf32, #tpu.memory_space<vmem>>, vector<16x16x4xf32>,
    %c0_40 = arith.constant 0 : index
    %c0_41 = arith.constant 0 : index
    %c0_42 = arith.constant 0 : index
    %21 = vector.load %arg18[%c0_40, %c0_41, %c0_42] : memref<18x18x4xf32, #tpu.memory_space<vmem>>, vector<16x16x4xf32>
    %22 = vector.shape_cast %21 : vector<16x16x4xf32> to vector<256x4xf32>
    %23 = arith.truncf %22 : vector<256x4xf32> to vector<256x4xbf16>
    %c0_43 = arith.constant 0 : index
    %c0_44 = arith.constant 0 : index
    %24 = vector.load %arg17[%c0_43, %c0_44] : memref<256x288xbf16, #tpu.memory_space<vmem>>, vector<256x4xbf16>
    tpu.vector_store %arg17[%c0_43, %c0_44], %23 {strides = array<i32>} : memref<256x288xbf16, #tpu.memory_space<vmem>>, vector<256x4xbf16>,
    %c0_45 = arith.constant 0 : index
    %c1_46 = arith.constant 1 : index
    %c0_47 = arith.constant 0 : index
    %25 = vector.load %arg18[%c0_45, %c1_46, %c0_47] : memref<18x18x4xf32, #tpu.memory_space<vmem>>, vector<16x16x4xf32>
    %26 = vector.shape_cast %25 : vector<16x16x4xf32> to vector<256x4xf32>
    %27 = arith.truncf %26 : vector<256x4xf32> to vector<256x4xbf16>
    %c0_48 = arith.constant 0 : index
    %c4 = arith.constant 4 : index
    %28 = vector.load %arg17[%c0_48, %c4] : memref<256x288xbf16, #tpu.memory_space<vmem>>, vector<256x4xbf16>
    tpu.vector_store %arg17[%c0_48, %c4], %27 {strides = array<i32>} : memref<256x288xbf16, #tpu.memory_space<vmem>>, vector<256x4xbf16>,
    %c0_49 = arith.constant 0 : index
    %c2 = arith.constant 2 : index
    %c0_50 = arith.constant 0 : index
    %29 = vector.load %arg18[%c0_49, %c2, %c0_50] : memref<18x18x4xf32, #tpu.memory_space<vmem>>, vector<16x16x4xf32>
    %30 = vector.shape_cast %29 : vector<16x16x4xf32> to vector<256x4xf32>
    %31 = arith.truncf %30 : vector<256x4xf32> to vector<256x4xbf16>
    %c0_51 = arith.constant 0 : index
    %c8 = arith.constant 8 : index
    %32 = vector.load %arg17[%c0_51, %c8] : memref<256x288xbf16, #tpu.memory_space<vmem>>, vector<256x4xbf16>
    tpu.vector_store %arg17[%c0_51, %c8], %31 {strides = array<i32>} : memref<256x288xbf16, #tpu.memory_space<vmem>>, vector<256x4xbf16>,
    %c1_52 = arith.constant 1 : index
    %c0_53 = arith.constant 0 : index
    %c0_54 = arith.constant 0 : index
    %33 = vector.load %arg18[%c1_52, %c0_53, %c0_54] : memref<18x18x4xf32, #tpu.memory_space<vmem>>, vector<16x16x4xf32>
    %34 = vector.shape_cast %33 : vector<16x16x4xf32> to vector<256x4xf32>
    %35 = arith.truncf %34 : vector<256x4xf32> to vector<256x4xbf16>
    %c0_55 = arith.constant 0 : index
    %c12 = arith.constant 12 : index
    %36 = vector.load %arg17[%c0_55, %c12] : memref<256x288xbf16, #tpu.memory_space<vmem>>, vector<256x4xbf16>
    tpu.vector_store %arg17[%c0_55, %c12], %35 {strides = array<i32>} : memref<256x288xbf16, #tpu.memory_space<vmem>>, vector<256x4xbf16>,
    %c1_56 = arith.constant 1 : index
    %c1_57 = arith.constant 1 : index
    %c0_58 = arith.constant 0 : index
    %37 = vector.load %arg18[%c1_56, %c1_57, %c0_58] : memref<18x18x4xf32, #tpu.memory_space<vmem>>, vector<16x16x4xf32>
    %38 = vector.shape_cast %37 : vector<16x16x4xf32> to vector<256x4xf32>
    %39 = arith.truncf %38 : vector<256x4xf32> to vector<256x4xbf16>
    %c0_59 = arith.constant 0 : index
    %c16 = arith.constant 16 : index
    %40 = vector.load %arg17[%c0_59, %c16] : memref<256x288xbf16, #tpu.memory_space<vmem>>, vector<256x4xbf16>
    tpu.vector_store %arg17[%c0_59, %c16], %39 {strides = array<i32>} : memref<256x288xbf16, #tpu.memory_space<vmem>>, vector<256x4xbf16>,
    %c1_60 = arith.constant 1 : index
    %c2_61 = arith.constant 2 : index
    %c0_62 = arith.constant 0 : index
    %41 = vector.load %arg18[%c1_60, %c2_61, %c0_62] : memref<18x18x4xf32, #tpu.memory_space<vmem>>, vector<16x16x4xf32>
    %42 = vector.shape_cast %41 : vector<16x16x4xf32> to vector<256x4xf32>
    %43 = arith.truncf %42 : vector<256x4xf32> to vector<256x4xbf16>
    %c0_63 = arith.constant 0 : index
    %c20 = arith.constant 20 : index
    %44 = vector.load %arg17[%c0_63, %c20] : memref<256x288xbf16, #tpu.memory_space<vmem>>, vector<256x4xbf16>
    tpu.vector_store %arg17[%c0_63, %c20], %43 {strides = array<i32>} : memref<256x288xbf16, #tpu.memory_space<vmem>>, vector<256x4xbf16>,
    %c2_64 = arith.constant 2 : index
    %c0_65 = arith.constant 0 : index
    %c0_66 = arith.constant 0 : index
    %45 = vector.load %arg18[%c2_64, %c0_65, %c0_66] : memref<18x18x4xf32, #tpu.memory_space<vmem>>, vector<16x16x4xf32>
    %46 = vector.shape_cast %45 : vector<16x16x4xf32> to vector<256x4xf32>
    %47 = arith.truncf %46 : vector<256x4xf32> to vector<256x4xbf16>
    %c0_67 = arith.constant 0 : index
    %c24 = arith.constant 24 : index
    %48 = vector.load %arg17[%c0_67, %c24] : memref<256x288xbf16, #tpu.memory_space<vmem>>, vector<256x4xbf16>
    tpu.vector_store %arg17[%c0_67, %c24], %47 {strides = array<i32>} : memref<256x288xbf16, #tpu.memory_space<vmem>>, vector<256x4xbf16>,
    %c2_68 = arith.constant 2 : index
    %c1_69 = arith.constant 1 : index
    %c0_70 = arith.constant 0 : index
    %49 = vector.load %arg18[%c2_68, %c1_69, %c0_70] : memref<18x18x4xf32, #tpu.memory_space<vmem>>, vector<16x16x4xf32>
    %50 = vector.shape_cast %49 : vector<16x16x4xf32> to vector<256x4xf32>
    %51 = arith.truncf %50 : vector<256x4xf32> to vector<256x4xbf16>
    %c0_71 = arith.constant 0 : index
    %c28 = arith.constant 28 : index
    %52 = vector.load %arg17[%c0_71, %c28] : memref<256x288xbf16, #tpu.memory_space<vmem>>, vector<256x4xbf16>
    tpu.vector_store %arg17[%c0_71, %c28], %51 {strides = array<i32>} : memref<256x288xbf16, #tpu.memory_space<vmem>>, vector<256x4xbf16>,
    %c2_72 = arith.constant 2 : index
    %c2_73 = arith.constant 2 : index
    %c0_74 = arith.constant 0 : index
    %53 = vector.load %arg18[%c2_72, %c2_73, %c0_74] : memref<18x18x4xf32, #tpu.memory_space<vmem>>, vector<16x16x4xf32>
    %54 = vector.shape_cast %53 : vector<16x16x4xf32> to vector<256x4xf32>
    %55 = arith.truncf %54 : vector<256x4xf32> to vector<256x4xbf16>
    %c0_75 = arith.constant 0 : index
    %c32 = arith.constant 32 : index
    %56 = vector.load %arg17[%c0_75, %c32] : memref<256x288xbf16, #tpu.memory_space<vmem>>, vector<256x4xbf16>
    tpu.vector_store %arg17[%c0_75, %c32], %55 {strides = array<i32>} : memref<256x288xbf16, #tpu.memory_space<vmem>>, vector<256x4xbf16>,
    %c0_76 = arith.constant 0 : index
    %c0_77 = arith.constant 0 : index
    %57 = vector.load %arg17[%c0_76, %c0_77] : memref<256x288xbf16, #tpu.memory_space<vmem>>, vector<256x36xbf16>
    %c0_78 = arith.constant 0 : index
    %c0_79 = arith.constant 0 : index
    %58 = vector.load %arg2[%c0_78, %c0_79] : memref<36x8xbf16, #tpu.memory_space<vmem>>, vector<36x8xbf16>
    %cst_80 = arith.constant dense<0.000000e+00> : vector<256x8xf32>
    %59 = tpu.matmul %57, %58, %cst_80 {dimension_numbers = #tpu.dot_dimension_numbers<[1], [0], [0], [1], [0, 0, 1, 1], [], []>} : vector<256x36xbf16>, vector<36x8xbf16>, vector<256x8xf32> -> vector<256x8xf32>
    %c0_81 = arith.constant 0 : index
    %c0_82 = arith.constant 0 : index
    %60 = vector.load %arg3[%c0_81, %c0_82] : memref<1x8xf32, #tpu.memory_space<vmem>>, vector<1x8xf32>
    %61 = vector.broadcast %60 : vector<1x8xf32> to vector<256x8xf32>
    %62 = arith.addf %59, %61 : vector<256x8xf32>
    %cst_83 = arith.constant 0.000000e+00 : f32
    %63 = vector.broadcast %cst_83 : f32 to vector<256x8xf32>
    %64 = arith.maximumf %62, %63 : vector<256x8xf32>
    %65 = vector.shape_cast %64 : vector<256x8xf32> to vector<16x16x8xf32>
    %c1_84 = arith.constant 1 : index
    %c1_85 = arith.constant 1 : index
    %c0_86 = arith.constant 0 : index
    %66 = vector.load %arg19[%c1_84, %c1_85, %c0_86] : memref<18x18x8xf32, #tpu.memory_space<vmem>>, vector<16x16x8xf32>
    tpu.vector_store %arg19[%c1_84, %c1_85, %c0_86], %65 {strides = array<i32>} : memref<18x18x8xf32, #tpu.memory_space<vmem>>, vector<16x16x8xf32>,
    %c1_87 = arith.constant 1 : index
    %c1_88 = arith.constant 1 : index
    %c0_89 = arith.constant 0 : index
    %67 = tpu.strided_load %arg19[%c1_87, %c1_88, %c0_89] {strides = array<i32: 2, 2, 1>} : memref<18x18x8xf32, #tpu.memory_space<vmem>>, vector<8x8x8xf32>
    %c1_90 = arith.constant 1 : index
    %c2_91 = arith.constant 2 : index
    %c0_92 = arith.constant 0 : index
    %68 = tpu.strided_load %arg19[%c1_90, %c2_91, %c0_92] {strides = array<i32: 2, 2, 1>} : memref<18x18x8xf32, #tpu.memory_space<vmem>>, vector<8x8x8xf32>
    %69 = arith.maximumf %67, %68 : vector<8x8x8xf32>
    %c2_93 = arith.constant 2 : index
    %c1_94 = arith.constant 1 : index
    %c0_95 = arith.constant 0 : index
    %70 = tpu.strided_load %arg19[%c2_93, %c1_94, %c0_95] {strides = array<i32: 2, 2, 1>} : memref<18x18x8xf32, #tpu.memory_space<vmem>>, vector<8x8x8xf32>
    %c2_96 = arith.constant 2 : index
    %c2_97 = arith.constant 2 : index
    %c0_98 = arith.constant 0 : index
    %71 = tpu.strided_load %arg19[%c2_96, %c2_97, %c0_98] {strides = array<i32: 2, 2, 1>} : memref<18x18x8xf32, #tpu.memory_space<vmem>>, vector<8x8x8xf32>
    %72 = arith.maximumf %70, %71 : vector<8x8x8xf32>
    %73 = arith.maximumf %69, %72 : vector<8x8x8xf32>
    %c1_99 = arith.constant 1 : index
    %c1_100 = arith.constant 1 : index
    %c0_101 = arith.constant 0 : index
    %74 = vector.load %arg20[%c1_99, %c1_100, %c0_101] : memref<10x10x8xf32, #tpu.memory_space<vmem>>, vector<8x8x8xf32>
    tpu.vector_store %arg20[%c1_99, %c1_100, %c0_101], %73 {strides = array<i32>} : memref<10x10x8xf32, #tpu.memory_space<vmem>>, vector<8x8x8xf32>,
    %c0_102 = arith.constant 0 : index
    %c0_103 = arith.constant 0 : index
    %c0_104 = arith.constant 0 : index
    %75 = vector.load %arg20[%c0_102, %c0_103, %c0_104] : memref<10x10x8xf32, #tpu.memory_space<vmem>>, vector<8x8x8xf32>
    %76 = vector.shape_cast %75 : vector<8x8x8xf32> to vector<64x8xf32>
    %77 = arith.truncf %76 : vector<64x8xf32> to vector<64x8xbf16>
    %c0_105 = arith.constant 0 : index
    %c0_106 = arith.constant 0 : index
    %78 = vector.load %arg17[%c0_105, %c0_106] : memref<256x288xbf16, #tpu.memory_space<vmem>>, vector<64x8xbf16>
    tpu.vector_store %arg17[%c0_105, %c0_106], %77 {strides = array<i32>} : memref<256x288xbf16, #tpu.memory_space<vmem>>, vector<64x8xbf16>,
    %c0_107 = arith.constant 0 : index
    %c1_108 = arith.constant 1 : index
    %c0_109 = arith.constant 0 : index
    %79 = vector.load %arg20[%c0_107, %c1_108, %c0_109] : memref<10x10x8xf32, #tpu.memory_space<vmem>>, vector<8x8x8xf32>
    %80 = vector.shape_cast %79 : vector<8x8x8xf32> to vector<64x8xf32>
    %81 = arith.truncf %80 : vector<64x8xf32> to vector<64x8xbf16>
    %c0_110 = arith.constant 0 : index
    %c8_111 = arith.constant 8 : index
    %82 = vector.load %arg17[%c0_110, %c8_111] : memref<256x288xbf16, #tpu.memory_space<vmem>>, vector<64x8xbf16>
    tpu.vector_store %arg17[%c0_110, %c8_111], %81 {strides = array<i32>} : memref<256x288xbf16, #tpu.memory_space<vmem>>, vector<64x8xbf16>,
    %c0_112 = arith.constant 0 : index
    %c2_113 = arith.constant 2 : index
    %c0_114 = arith.constant 0 : index
    %83 = vector.load %arg20[%c0_112, %c2_113, %c0_114] : memref<10x10x8xf32, #tpu.memory_space<vmem>>, vector<8x8x8xf32>
    %84 = vector.shape_cast %83 : vector<8x8x8xf32> to vector<64x8xf32>
    %85 = arith.truncf %84 : vector<64x8xf32> to vector<64x8xbf16>
    %c0_115 = arith.constant 0 : index
    %c16_116 = arith.constant 16 : index
    %86 = vector.load %arg17[%c0_115, %c16_116] : memref<256x288xbf16, #tpu.memory_space<vmem>>, vector<64x8xbf16>
    tpu.vector_store %arg17[%c0_115, %c16_116], %85 {strides = array<i32>} : memref<256x288xbf16, #tpu.memory_space<vmem>>, vector<64x8xbf16>,
    %c1_117 = arith.constant 1 : index
    %c0_118 = arith.constant 0 : index
    %c0_119 = arith.constant 0 : index
    %87 = vector.load %arg20[%c1_117, %c0_118, %c0_119] : memref<10x10x8xf32, #tpu.memory_space<vmem>>, vector<8x8x8xf32>
    %88 = vector.shape_cast %87 : vector<8x8x8xf32> to vector<64x8xf32>
    %89 = arith.truncf %88 : vector<64x8xf32> to vector<64x8xbf16>
    %c0_120 = arith.constant 0 : index
    %c24_121 = arith.constant 24 : index
    %90 = vector.load %arg17[%c0_120, %c24_121] : memref<256x288xbf16, #tpu.memory_space<vmem>>, vector<64x8xbf16>
    tpu.vector_store %arg17[%c0_120, %c24_121], %89 {strides = array<i32>} : memref<256x288xbf16, #tpu.memory_space<vmem>>, vector<64x8xbf16>,
    %c1_122 = arith.constant 1 : index
    %c1_123 = arith.constant 1 : index
    %c0_124 = arith.constant 0 : index
    %91 = vector.load %arg20[%c1_122, %c1_123, %c0_124] : memref<10x10x8xf32, #tpu.memory_space<vmem>>, vector<8x8x8xf32>
    %92 = vector.shape_cast %91 : vector<8x8x8xf32> to vector<64x8xf32>
    %93 = arith.truncf %92 : vector<64x8xf32> to vector<64x8xbf16>
    %c0_125 = arith.constant 0 : index
    %c32_126 = arith.constant 32 : index
    %94 = vector.load %arg17[%c0_125, %c32_126] : memref<256x288xbf16, #tpu.memory_space<vmem>>, vector<64x8xbf16>
    tpu.vector_store %arg17[%c0_125, %c32_126], %93 {strides = array<i32>} : memref<256x288xbf16, #tpu.memory_space<vmem>>, vector<64x8xbf16>,
    %c1_127 = arith.constant 1 : index
    %c2_128 = arith.constant 2 : index
    %c0_129 = arith.constant 0 : index
    %95 = vector.load %arg20[%c1_127, %c2_128, %c0_129] : memref<10x10x8xf32, #tpu.memory_space<vmem>>, vector<8x8x8xf32>
    %96 = vector.shape_cast %95 : vector<8x8x8xf32> to vector<64x8xf32>
    %97 = arith.truncf %96 : vector<64x8xf32> to vector<64x8xbf16>
    %c0_130 = arith.constant 0 : index
    %c40 = arith.constant 40 : index
    %98 = vector.load %arg17[%c0_130, %c40] : memref<256x288xbf16, #tpu.memory_space<vmem>>, vector<64x8xbf16>
    tpu.vector_store %arg17[%c0_130, %c40], %97 {strides = array<i32>} : memref<256x288xbf16, #tpu.memory_space<vmem>>, vector<64x8xbf16>,
    %c2_131 = arith.constant 2 : index
    %c0_132 = arith.constant 0 : index
    %c0_133 = arith.constant 0 : index
    %99 = vector.load %arg20[%c2_131, %c0_132, %c0_133] : memref<10x10x8xf32, #tpu.memory_space<vmem>>, vector<8x8x8xf32>
    %100 = vector.shape_cast %99 : vector<8x8x8xf32> to vector<64x8xf32>
    %101 = arith.truncf %100 : vector<64x8xf32> to vector<64x8xbf16>
    %c0_134 = arith.constant 0 : index
    %c48 = arith.constant 48 : index
    %102 = vector.load %arg17[%c0_134, %c48] : memref<256x288xbf16, #tpu.memory_space<vmem>>, vector<64x8xbf16>
    tpu.vector_store %arg17[%c0_134, %c48], %101 {strides = array<i32>} : memref<256x288xbf16, #tpu.memory_space<vmem>>, vector<64x8xbf16>,
    %c2_135 = arith.constant 2 : index
    %c1_136 = arith.constant 1 : index
    %c0_137 = arith.constant 0 : index
    %103 = vector.load %arg20[%c2_135, %c1_136, %c0_137] : memref<10x10x8xf32, #tpu.memory_space<vmem>>, vector<8x8x8xf32>
    %104 = vector.shape_cast %103 : vector<8x8x8xf32> to vector<64x8xf32>
    %105 = arith.truncf %104 : vector<64x8xf32> to vector<64x8xbf16>
    %c0_138 = arith.constant 0 : index
    %c56 = arith.constant 56 : index
    %106 = vector.load %arg17[%c0_138, %c56] : memref<256x288xbf16, #tpu.memory_space<vmem>>, vector<64x8xbf16>
    tpu.vector_store %arg17[%c0_138, %c56], %105 {strides = array<i32>} : memref<256x288xbf16, #tpu.memory_space<vmem>>, vector<64x8xbf16>,
    %c2_139 = arith.constant 2 : index
    %c2_140 = arith.constant 2 : index
    %c0_141 = arith.constant 0 : index
    %107 = vector.load %arg20[%c2_139, %c2_140, %c0_141] : memref<10x10x8xf32, #tpu.memory_space<vmem>>, vector<8x8x8xf32>
    %108 = vector.shape_cast %107 : vector<8x8x8xf32> to vector<64x8xf32>
    %109 = arith.truncf %108 : vector<64x8xf32> to vector<64x8xbf16>
    %c0_142 = arith.constant 0 : index
    %c64 = arith.constant 64 : index
    %110 = vector.load %arg17[%c0_142, %c64] : memref<256x288xbf16, #tpu.memory_space<vmem>>, vector<64x8xbf16>
    tpu.vector_store %arg17[%c0_142, %c64], %109 {strides = array<i32>} : memref<256x288xbf16, #tpu.memory_space<vmem>>, vector<64x8xbf16>,
    %c0_143 = arith.constant 0 : index
    %c0_144 = arith.constant 0 : index
    %111 = vector.load %arg17[%c0_143, %c0_144] : memref<256x288xbf16, #tpu.memory_space<vmem>>, vector<64x72xbf16>
    %c0_145 = arith.constant 0 : index
    %c0_146 = arith.constant 0 : index
    %112 = vector.load %arg4[%c0_145, %c0_146] : memref<72x16xbf16, #tpu.memory_space<vmem>>, vector<72x16xbf16>
    %cst_147 = arith.constant dense<0.000000e+00> : vector<64x16xf32>
    %113 = tpu.matmul %111, %112, %cst_147 {dimension_numbers = #tpu.dot_dimension_numbers<[1], [0], [0], [1], [0, 0, 1, 1], [], []>} : vector<64x72xbf16>, vector<72x16xbf16>, vector<64x16xf32> -> vector<64x16xf32>
    %c0_148 = arith.constant 0 : index
    %c0_149 = arith.constant 0 : index
    %114 = vector.load %arg5[%c0_148, %c0_149] : memref<1x16xf32, #tpu.memory_space<vmem>>, vector<1x16xf32>
    %115 = vector.broadcast %114 : vector<1x16xf32> to vector<64x16xf32>
    %116 = arith.addf %113, %115 : vector<64x16xf32>
    %cst_150 = arith.constant 0.000000e+00 : f32
    %117 = vector.broadcast %cst_150 : f32 to vector<64x16xf32>
    %118 = arith.maximumf %116, %117 : vector<64x16xf32>
    %119 = vector.shape_cast %118 : vector<64x16xf32> to vector<8x8x16xf32>
    %c1_151 = arith.constant 1 : index
    %c1_152 = arith.constant 1 : index
    %c0_153 = arith.constant 0 : index
    %120 = vector.load %arg21[%c1_151, %c1_152, %c0_153] : memref<10x10x16xf32, #tpu.memory_space<vmem>>, vector<8x8x16xf32>
    tpu.vector_store %arg21[%c1_151, %c1_152, %c0_153], %119 {strides = array<i32>} : memref<10x10x16xf32, #tpu.memory_space<vmem>>, vector<8x8x16xf32>,
    %c1_154 = arith.constant 1 : index
    %c1_155 = arith.constant 1 : index
    %c0_156 = arith.constant 0 : index
    %121 = tpu.strided_load %arg21[%c1_154, %c1_155, %c0_156] {strides = array<i32: 2, 2, 1>} : memref<10x10x16xf32, #tpu.memory_space<vmem>>, vector<4x4x16xf32>
    %c1_157 = arith.constant 1 : index
    %c2_158 = arith.constant 2 : index
    %c0_159 = arith.constant 0 : index
    %122 = tpu.strided_load %arg21[%c1_157, %c2_158, %c0_159] {strides = array<i32: 2, 2, 1>} : memref<10x10x16xf32, #tpu.memory_space<vmem>>, vector<4x4x16xf32>
    %123 = arith.maximumf %121, %122 : vector<4x4x16xf32>
    %c2_160 = arith.constant 2 : index
    %c1_161 = arith.constant 1 : index
    %c0_162 = arith.constant 0 : index
    %124 = tpu.strided_load %arg21[%c2_160, %c1_161, %c0_162] {strides = array<i32: 2, 2, 1>} : memref<10x10x16xf32, #tpu.memory_space<vmem>>, vector<4x4x16xf32>
    %c2_163 = arith.constant 2 : index
    %c2_164 = arith.constant 2 : index
    %c0_165 = arith.constant 0 : index
    %125 = tpu.strided_load %arg21[%c2_163, %c2_164, %c0_165] {strides = array<i32: 2, 2, 1>} : memref<10x10x16xf32, #tpu.memory_space<vmem>>, vector<4x4x16xf32>
    %126 = arith.maximumf %124, %125 : vector<4x4x16xf32>
    %127 = arith.maximumf %123, %126 : vector<4x4x16xf32>
    %c1_166 = arith.constant 1 : index
    %c1_167 = arith.constant 1 : index
    %c0_168 = arith.constant 0 : index
    %128 = vector.load %arg22[%c1_166, %c1_167, %c0_168] : memref<6x6x16xf32, #tpu.memory_space<vmem>>, vector<4x4x16xf32>
    tpu.vector_store %arg22[%c1_166, %c1_167, %c0_168], %127 {strides = array<i32>} : memref<6x6x16xf32, #tpu.memory_space<vmem>>, vector<4x4x16xf32>,
    %c0_169 = arith.constant 0 : index
    %c0_170 = arith.constant 0 : index
    %c0_171 = arith.constant 0 : index
    %129 = vector.load %arg22[%c0_169, %c0_170, %c0_171] : memref<6x6x16xf32, #tpu.memory_space<vmem>>, vector<4x4x16xf32>
    %130 = vector.shape_cast %129 : vector<4x4x16xf32> to vector<16x16xf32>
    %131 = arith.truncf %130 : vector<16x16xf32> to vector<16x16xbf16>
    %c0_172 = arith.constant 0 : index
    %c0_173 = arith.constant 0 : index
    %132 = vector.load %arg17[%c0_172, %c0_173] : memref<256x288xbf16, #tpu.memory_space<vmem>>, vector<16x16xbf16>
    tpu.vector_store %arg17[%c0_172, %c0_173], %131 {strides = array<i32>} : memref<256x288xbf16, #tpu.memory_space<vmem>>, vector<16x16xbf16>,
    %c0_174 = arith.constant 0 : index
    %c1_175 = arith.constant 1 : index
    %c0_176 = arith.constant 0 : index
    %133 = vector.load %arg22[%c0_174, %c1_175, %c0_176] : memref<6x6x16xf32, #tpu.memory_space<vmem>>, vector<4x4x16xf32>
    %134 = vector.shape_cast %133 : vector<4x4x16xf32> to vector<16x16xf32>
    %135 = arith.truncf %134 : vector<16x16xf32> to vector<16x16xbf16>
    %c0_177 = arith.constant 0 : index
    %c16_178 = arith.constant 16 : index
    %136 = vector.load %arg17[%c0_177, %c16_178] : memref<256x288xbf16, #tpu.memory_space<vmem>>, vector<16x16xbf16>
    tpu.vector_store %arg17[%c0_177, %c16_178], %135 {strides = array<i32>} : memref<256x288xbf16, #tpu.memory_space<vmem>>, vector<16x16xbf16>,
    %c0_179 = arith.constant 0 : index
    %c2_180 = arith.constant 2 : index
    %c0_181 = arith.constant 0 : index
    %137 = vector.load %arg22[%c0_179, %c2_180, %c0_181] : memref<6x6x16xf32, #tpu.memory_space<vmem>>, vector<4x4x16xf32>
    %138 = vector.shape_cast %137 : vector<4x4x16xf32> to vector<16x16xf32>
    %139 = arith.truncf %138 : vector<16x16xf32> to vector<16x16xbf16>
    %c0_182 = arith.constant 0 : index
    %c32_183 = arith.constant 32 : index
    %140 = vector.load %arg17[%c0_182, %c32_183] : memref<256x288xbf16, #tpu.memory_space<vmem>>, vector<16x16xbf16>
    tpu.vector_store %arg17[%c0_182, %c32_183], %139 {strides = array<i32>} : memref<256x288xbf16, #tpu.memory_space<vmem>>, vector<16x16xbf16>,
    %c1_184 = arith.constant 1 : index
    %c0_185 = arith.constant 0 : index
    %c0_186 = arith.constant 0 : index
    %141 = vector.load %arg22[%c1_184, %c0_185, %c0_186] : memref<6x6x16xf32, #tpu.memory_space<vmem>>, vector<4x4x16xf32>
    %142 = vector.shape_cast %141 : vector<4x4x16xf32> to vector<16x16xf32>
    %143 = arith.truncf %142 : vector<16x16xf32> to vector<16x16xbf16>
    %c0_187 = arith.constant 0 : index
    %c48_188 = arith.constant 48 : index
    %144 = vector.load %arg17[%c0_187, %c48_188] : memref<256x288xbf16, #tpu.memory_space<vmem>>, vector<16x16xbf16>
    tpu.vector_store %arg17[%c0_187, %c48_188], %143 {strides = array<i32>} : memref<256x288xbf16, #tpu.memory_space<vmem>>, vector<16x16xbf16>,
    %c1_189 = arith.constant 1 : index
    %c1_190 = arith.constant 1 : index
    %c0_191 = arith.constant 0 : index
    %145 = vector.load %arg22[%c1_189, %c1_190, %c0_191] : memref<6x6x16xf32, #tpu.memory_space<vmem>>, vector<4x4x16xf32>
    %146 = vector.shape_cast %145 : vector<4x4x16xf32> to vector<16x16xf32>
    %147 = arith.truncf %146 : vector<16x16xf32> to vector<16x16xbf16>
    %c0_192 = arith.constant 0 : index
    %c64_193 = arith.constant 64 : index
    %148 = vector.load %arg17[%c0_192, %c64_193] : memref<256x288xbf16, #tpu.memory_space<vmem>>, vector<16x16xbf16>
    tpu.vector_store %arg17[%c0_192, %c64_193], %147 {strides = array<i32>} : memref<256x288xbf16, #tpu.memory_space<vmem>>, vector<16x16xbf16>,
    %c1_194 = arith.constant 1 : index
    %c2_195 = arith.constant 2 : index
    %c0_196 = arith.constant 0 : index
    %149 = vector.load %arg22[%c1_194, %c2_195, %c0_196] : memref<6x6x16xf32, #tpu.memory_space<vmem>>, vector<4x4x16xf32>
    %150 = vector.shape_cast %149 : vector<4x4x16xf32> to vector<16x16xf32>
    %151 = arith.truncf %150 : vector<16x16xf32> to vector<16x16xbf16>
    %c0_197 = arith.constant 0 : index
    %c80 = arith.constant 80 : index
    %152 = vector.load %arg17[%c0_197, %c80] : memref<256x288xbf16, #tpu.memory_space<vmem>>, vector<16x16xbf16>
    tpu.vector_store %arg17[%c0_197, %c80], %151 {strides = array<i32>} : memref<256x288xbf16, #tpu.memory_space<vmem>>, vector<16x16xbf16>,
    %c2_198 = arith.constant 2 : index
    %c0_199 = arith.constant 0 : index
    %c0_200 = arith.constant 0 : index
    %153 = vector.load %arg22[%c2_198, %c0_199, %c0_200] : memref<6x6x16xf32, #tpu.memory_space<vmem>>, vector<4x4x16xf32>
    %154 = vector.shape_cast %153 : vector<4x4x16xf32> to vector<16x16xf32>
    %155 = arith.truncf %154 : vector<16x16xf32> to vector<16x16xbf16>
    %c0_201 = arith.constant 0 : index
    %c96 = arith.constant 96 : index
    %156 = vector.load %arg17[%c0_201, %c96] : memref<256x288xbf16, #tpu.memory_space<vmem>>, vector<16x16xbf16>
    tpu.vector_store %arg17[%c0_201, %c96], %155 {strides = array<i32>} : memref<256x288xbf16, #tpu.memory_space<vmem>>, vector<16x16xbf16>,
    %c2_202 = arith.constant 2 : index
    %c1_203 = arith.constant 1 : index
    %c0_204 = arith.constant 0 : index
    %157 = vector.load %arg22[%c2_202, %c1_203, %c0_204] : memref<6x6x16xf32, #tpu.memory_space<vmem>>, vector<4x4x16xf32>
    %158 = vector.shape_cast %157 : vector<4x4x16xf32> to vector<16x16xf32>
    %159 = arith.truncf %158 : vector<16x16xf32> to vector<16x16xbf16>
    %c0_205 = arith.constant 0 : index
    %c112 = arith.constant 112 : index
    %160 = vector.load %arg17[%c0_205, %c112] : memref<256x288xbf16, #tpu.memory_space<vmem>>, vector<16x16xbf16>
    tpu.vector_store %arg17[%c0_205, %c112], %159 {strides = array<i32>} : memref<256x288xbf16, #tpu.memory_space<vmem>>, vector<16x16xbf16>,
    %c2_206 = arith.constant 2 : index
    %c2_207 = arith.constant 2 : index
    %c0_208 = arith.constant 0 : index
    %161 = vector.load %arg22[%c2_206, %c2_207, %c0_208] : memref<6x6x16xf32, #tpu.memory_space<vmem>>, vector<4x4x16xf32>
    %162 = vector.shape_cast %161 : vector<4x4x16xf32> to vector<16x16xf32>
    %163 = arith.truncf %162 : vector<16x16xf32> to vector<16x16xbf16>
    %c0_209 = arith.constant 0 : index
    %c128 = arith.constant 128 : index
    %164 = vector.load %arg17[%c0_209, %c128] : memref<256x288xbf16, #tpu.memory_space<vmem>>, vector<16x16xbf16>
    tpu.vector_store %arg17[%c0_209, %c128], %163 {strides = array<i32>} : memref<256x288xbf16, #tpu.memory_space<vmem>>, vector<16x16xbf16>,
    %c0_210 = arith.constant 0 : index
    %c0_211 = arith.constant 0 : index
    %165 = vector.load %arg17[%c0_210, %c0_211] : memref<256x288xbf16, #tpu.memory_space<vmem>>, vector<16x144xbf16>
    %c0_212 = arith.constant 0 : index
    %c0_213 = arith.constant 0 : index
    %166 = vector.load %arg6[%c0_212, %c0_213] : memref<144x32xbf16, #tpu.memory_space<vmem>>, vector<144x32xbf16>
    %cst_214 = arith.constant dense<0.000000e+00> : vector<16x32xf32>
    %167 = tpu.matmul %165, %166, %cst_214 {dimension_numbers = #tpu.dot_dimension_numbers<[1], [0], [0], [1], [0, 0, 1, 1], [], []>} : vector<16x144xbf16>, vector<144x32xbf16>, vector<16x32xf32> -> vector<16x32xf32>
    %c0_215 = arith.constant 0 : index
    %c0_216 = arith.constant 0 : index
    %168 = vector.load %arg7[%c0_215, %c0_216] : memref<1x32xf32, #tpu.memory_space<vmem>>, vector<1x32xf32>
    %169 = vector.broadcast %168 : vector<1x32xf32> to vector<16x32xf32>
    %170 = arith.addf %167, %169 : vector<16x32xf32>
    %cst_217 = arith.constant 0.000000e+00 : f32
    %171 = vector.broadcast %cst_217 : f32 to vector<16x32xf32>
    %172 = arith.maximumf %170, %171 : vector<16x32xf32>
    %173 = vector.shape_cast %172 : vector<16x32xf32> to vector<4x4x32xf32>
    %c1_218 = arith.constant 1 : index
    %c1_219 = arith.constant 1 : index
    %c0_220 = arith.constant 0 : index
    %174 = vector.load %arg23[%c1_218, %c1_219, %c0_220] : memref<6x6x32xf32, #tpu.memory_space<vmem>>, vector<4x4x32xf32>
    tpu.vector_store %arg23[%c1_218, %c1_219, %c0_220], %173 {strides = array<i32>} : memref<6x6x32xf32, #tpu.memory_space<vmem>>, vector<4x4x32xf32>,
    %c1_221 = arith.constant 1 : index
    %c1_222 = arith.constant 1 : index
    %c0_223 = arith.constant 0 : index
    %175 = vector.load %arg23[%c1_221, %c1_222, %c0_223] : memref<6x6x32xf32, #tpu.memory_space<vmem>>, vector<4x4x32xf32>
    %176 = vector.shape_cast %175 : vector<4x4x32xf32> to vector<16x32xf32>
    %177 = arith.truncf %176 : vector<16x32xf32> to vector<16x32xbf16>
    %c0_224 = arith.constant 0 : index
    %c0_225 = arith.constant 0 : index
    %178 = vector.load %arg17[%c0_224, %c0_225] : memref<256x288xbf16, #tpu.memory_space<vmem>>, vector<16x32xbf16>
    tpu.vector_store %arg17[%c0_224, %c0_225], %177 {strides = array<i32>} : memref<256x288xbf16, #tpu.memory_space<vmem>>, vector<16x32xbf16>,
    %c1_226 = arith.constant 1 : index
    %c2_227 = arith.constant 2 : index
    %c0_228 = arith.constant 0 : index
    %179 = vector.load %arg23[%c1_226, %c2_227, %c0_228] : memref<6x6x32xf32, #tpu.memory_space<vmem>>, vector<4x4x32xf32>
    %180 = vector.shape_cast %179 : vector<4x4x32xf32> to vector<16x32xf32>
    %181 = arith.truncf %180 : vector<16x32xf32> to vector<16x32xbf16>
    %c0_229 = arith.constant 0 : index
    %c32_230 = arith.constant 32 : index
    %182 = vector.load %arg17[%c0_229, %c32_230] : memref<256x288xbf16, #tpu.memory_space<vmem>>, vector<16x32xbf16>
    tpu.vector_store %arg17[%c0_229, %c32_230], %181 {strides = array<i32>} : memref<256x288xbf16, #tpu.memory_space<vmem>>, vector<16x32xbf16>,
    %c2_231 = arith.constant 2 : index
    %c1_232 = arith.constant 1 : index
    %c0_233 = arith.constant 0 : index
    %183 = vector.load %arg23[%c2_231, %c1_232, %c0_233] : memref<6x6x32xf32, #tpu.memory_space<vmem>>, vector<4x4x32xf32>
    %184 = vector.shape_cast %183 : vector<4x4x32xf32> to vector<16x32xf32>
    %185 = arith.truncf %184 : vector<16x32xf32> to vector<16x32xbf16>
    %c0_234 = arith.constant 0 : index
    %c64_235 = arith.constant 64 : index
    %186 = vector.load %arg17[%c0_234, %c64_235] : memref<256x288xbf16, #tpu.memory_space<vmem>>, vector<16x32xbf16>
    tpu.vector_store %arg17[%c0_234, %c64_235], %185 {strides = array<i32>} : memref<256x288xbf16, #tpu.memory_space<vmem>>, vector<16x32xbf16>,
    %c2_236 = arith.constant 2 : index
    %c2_237 = arith.constant 2 : index
    %c0_238 = arith.constant 0 : index
    %187 = vector.load %arg23[%c2_236, %c2_237, %c0_238] : memref<6x6x32xf32, #tpu.memory_space<vmem>>, vector<4x4x32xf32>
    %188 = vector.shape_cast %187 : vector<4x4x32xf32> to vector<16x32xf32>
    %189 = arith.truncf %188 : vector<16x32xf32> to vector<16x32xbf16>
    %c0_239 = arith.constant 0 : index
    %c96_240 = arith.constant 96 : index
    %190 = vector.load %arg17[%c0_239, %c96_240] : memref<256x288xbf16, #tpu.memory_space<vmem>>, vector<16x32xbf16>
    tpu.vector_store %arg17[%c0_239, %c96_240], %189 {strides = array<i32>} : memref<256x288xbf16, #tpu.memory_space<vmem>>, vector<16x32xbf16>,
    %c0_241 = arith.constant 0 : index
    %c0_242 = arith.constant 0 : index
    %191 = vector.load %arg17[%c0_241, %c0_242] : memref<256x288xbf16, #tpu.memory_space<vmem>>, vector<16x128xbf16>
    %c0_243 = arith.constant 0 : index
    %c0_244 = arith.constant 0 : index
    %192 = vector.load %arg8[%c0_243, %c0_244] : memref<128x64xbf16, #tpu.memory_space<vmem>>, vector<128x64xbf16>
    %cst_245 = arith.constant dense<0.000000e+00> : vector<16x64xf32>
    %193 = tpu.matmul %191, %192, %cst_245 {dimension_numbers = #tpu.dot_dimension_numbers<[1], [0], [0], [1], [0, 0, 1, 1], [], []>} : vector<16x128xbf16>, vector<128x64xbf16>, vector<16x64xf32> -> vector<16x64xf32>
    %c0_246 = arith.constant 0 : index
    %c0_247 = arith.constant 0 : index
    %194 = vector.load %arg9[%c0_246, %c0_247] : memref<1x64xf32, #tpu.memory_space<vmem>>, vector<1x64xf32>
    %195 = vector.broadcast %194 : vector<1x64xf32> to vector<16x64xf32>
    %196 = arith.addf %193, %195 : vector<16x64xf32>
    %197 = vector.extract_strided_slice %196 {offsets = [0, 0], sizes = [16, 16], strides = [1, 1]} : vector<16x64xf32> to vector<16x16xf32>
    %198 = vector.shape_cast %197 : vector<16x16xf32> to vector<4x4x16xf32>
    %c0_248 = arith.constant 0 : index
    %c0_249 = arith.constant 0 : index
    %c0_250 = arith.constant 0 : index
    %c0_251 = arith.constant 0 : index
    %c0_252 = arith.constant 0 : index
    %199 = vector.load %arg24[%c0_248, %c0_249, %c0_250, %c0_251, %c0_252] : memref<4x2x4x2x16xf32, #tpu.memory_space<vmem>>, vector<4x1x4x1x16xf32>
    %200 = vector.shape_cast %199 : vector<4x1x4x1x16xf32> to vector<4x4x16xf32>
    %201 = vector.shape_cast %198 : vector<4x4x16xf32> to vector<4x1x4x1x16xf32>
    tpu.vector_store %arg24[%c0_248, %c0_249, %c0_250, %c0_251, %c0_252], %201 {strides = array<i32>} : memref<4x2x4x2x16xf32, #tpu.memory_space<vmem>>, vector<4x1x4x1x16xf32>,
    %202 = vector.extract_strided_slice %196 {offsets = [0, 16], sizes = [16, 16], strides = [1, 1]} : vector<16x64xf32> to vector<16x16xf32>
    %203 = vector.shape_cast %202 : vector<16x16xf32> to vector<4x4x16xf32>
    %c0_253 = arith.constant 0 : index
    %c0_254 = arith.constant 0 : index
    %c0_255 = arith.constant 0 : index
    %c1_256 = arith.constant 1 : index
    %c0_257 = arith.constant 0 : index
    %204 = vector.load %arg24[%c0_253, %c0_254, %c0_255, %c1_256, %c0_257] : memref<4x2x4x2x16xf32, #tpu.memory_space<vmem>>, vector<4x1x4x1x16xf32>
    %205 = vector.shape_cast %204 : vector<4x1x4x1x16xf32> to vector<4x4x16xf32>
    %206 = vector.shape_cast %203 : vector<4x4x16xf32> to vector<4x1x4x1x16xf32>
    tpu.vector_store %arg24[%c0_253, %c0_254, %c0_255, %c1_256, %c0_257], %206 {strides = array<i32>} : memref<4x2x4x2x16xf32, #tpu.memory_space<vmem>>, vector<4x1x4x1x16xf32>,
    %207 = vector.extract_strided_slice %196 {offsets = [0, 32], sizes = [16, 16], strides = [1, 1]} : vector<16x64xf32> to vector<16x16xf32>
    %208 = vector.shape_cast %207 : vector<16x16xf32> to vector<4x4x16xf32>
    %c0_258 = arith.constant 0 : index
    %c1_259 = arith.constant 1 : index
    %c0_260 = arith.constant 0 : index
    %c0_261 = arith.constant 0 : index
    %c0_262 = arith.constant 0 : index
    %209 = vector.load %arg24[%c0_258, %c1_259, %c0_260, %c0_261, %c0_262] : memref<4x2x4x2x16xf32, #tpu.memory_space<vmem>>, vector<4x1x4x1x16xf32>
    %210 = vector.shape_cast %209 : vector<4x1x4x1x16xf32> to vector<4x4x16xf32>
    %211 = vector.shape_cast %208 : vector<4x4x16xf32> to vector<4x1x4x1x16xf32>
    tpu.vector_store %arg24[%c0_258, %c1_259, %c0_260, %c0_261, %c0_262], %211 {strides = array<i32>} : memref<4x2x4x2x16xf32, #tpu.memory_space<vmem>>, vector<4x1x4x1x16xf32>,
    %212 = vector.extract_strided_slice %196 {offsets = [0, 48], sizes = [16, 16], strides = [1, 1]} : vector<16x64xf32> to vector<16x16xf32>
    %213 = vector.shape_cast %212 : vector<16x16xf32> to vector<4x4x16xf32>
    %c0_263 = arith.constant 0 : index
    %c1_264 = arith.constant 1 : index
    %c0_265 = arith.constant 0 : index
    %c1_266 = arith.constant 1 : index
    %c0_267 = arith.constant 0 : index
    %214 = vector.load %arg24[%c0_263, %c1_264, %c0_265, %c1_266, %c0_267] : memref<4x2x4x2x16xf32, #tpu.memory_space<vmem>>, vector<4x1x4x1x16xf32>
    %215 = vector.shape_cast %214 : vector<4x1x4x1x16xf32> to vector<4x4x16xf32>
    %216 = vector.shape_cast %213 : vector<4x4x16xf32> to vector<4x1x4x1x16xf32>
    tpu.vector_store %arg24[%c0_263, %c1_264, %c0_265, %c1_266, %c0_267], %216 {strides = array<i32>} : memref<4x2x4x2x16xf32, #tpu.memory_space<vmem>>, vector<4x1x4x1x16xf32>,
    %c0_268 = arith.constant 0 : index
    %c0_269 = arith.constant 0 : index
    %c0_270 = arith.constant 0 : index
    %c0_271 = arith.constant 0 : index
    %c0_272 = arith.constant 0 : index
    %217 = vector.load %arg24[%c0_268, %c0_269, %c0_270, %c0_271, %c0_272] : memref<4x2x4x2x16xf32, #tpu.memory_space<vmem>>, vector<4x2x4x2x16xf32>
    %218 = vector.shape_cast %217 : vector<4x2x4x2x16xf32> to vector<8x8x16xf32>
    %c1_273 = arith.constant 1 : index
    %c1_274 = arith.constant 1 : index
    %c0_275 = arith.constant 0 : index
    %219 = vector.load %arg25[%c1_273, %c1_274, %c0_275] : memref<10x10x16xf32, #tpu.memory_space<vmem>>, vector<8x8x16xf32>
    tpu.vector_store %arg25[%c1_273, %c1_274, %c0_275], %218 {strides = array<i32>} : memref<10x10x16xf32, #tpu.memory_space<vmem>>, vector<8x8x16xf32>,
    %c0_276 = arith.constant 0 : index
    %c0_277 = arith.constant 0 : index
    %c0_278 = arith.constant 0 : index
    %220 = vector.load %arg25[%c0_276, %c0_277, %c0_278] : memref<10x10x16xf32, #tpu.memory_space<vmem>>, vector<8x8x16xf32>
    %221 = vector.shape_cast %220 : vector<8x8x16xf32> to vector<64x16xf32>
    %222 = arith.truncf %221 : vector<64x16xf32> to vector<64x16xbf16>
    %c0_279 = arith.constant 0 : index
    %c0_280 = arith.constant 0 : index
    %223 = vector.load %arg17[%c0_279, %c0_280] : memref<256x288xbf16, #tpu.memory_space<vmem>>, vector<64x16xbf16>
    tpu.vector_store %arg17[%c0_279, %c0_280], %222 {strides = array<i32>} : memref<256x288xbf16, #tpu.memory_space<vmem>>, vector<64x16xbf16>,
    %c0_281 = arith.constant 0 : index
    %c1_282 = arith.constant 1 : index
    %c0_283 = arith.constant 0 : index
    %224 = vector.load %arg25[%c0_281, %c1_282, %c0_283] : memref<10x10x16xf32, #tpu.memory_space<vmem>>, vector<8x8x16xf32>
    %225 = vector.shape_cast %224 : vector<8x8x16xf32> to vector<64x16xf32>
    %226 = arith.truncf %225 : vector<64x16xf32> to vector<64x16xbf16>
    %c0_284 = arith.constant 0 : index
    %c16_285 = arith.constant 16 : index
    %227 = vector.load %arg17[%c0_284, %c16_285] : memref<256x288xbf16, #tpu.memory_space<vmem>>, vector<64x16xbf16>
    tpu.vector_store %arg17[%c0_284, %c16_285], %226 {strides = array<i32>} : memref<256x288xbf16, #tpu.memory_space<vmem>>, vector<64x16xbf16>,
    %c0_286 = arith.constant 0 : index
    %c2_287 = arith.constant 2 : index
    %c0_288 = arith.constant 0 : index
    %228 = vector.load %arg25[%c0_286, %c2_287, %c0_288] : memref<10x10x16xf32, #tpu.memory_space<vmem>>, vector<8x8x16xf32>
    %229 = vector.shape_cast %228 : vector<8x8x16xf32> to vector<64x16xf32>
    %230 = arith.truncf %229 : vector<64x16xf32> to vector<64x16xbf16>
    %c0_289 = arith.constant 0 : index
    %c32_290 = arith.constant 32 : index
    %231 = vector.load %arg17[%c0_289, %c32_290] : memref<256x288xbf16, #tpu.memory_space<vmem>>, vector<64x16xbf16>
    tpu.vector_store %arg17[%c0_289, %c32_290], %230 {strides = array<i32>} : memref<256x288xbf16, #tpu.memory_space<vmem>>, vector<64x16xbf16>,
    %c1_291 = arith.constant 1 : index
    %c0_292 = arith.constant 0 : index
    %c0_293 = arith.constant 0 : index
    %232 = vector.load %arg25[%c1_291, %c0_292, %c0_293] : memref<10x10x16xf32, #tpu.memory_space<vmem>>, vector<8x8x16xf32>
    %233 = vector.shape_cast %232 : vector<8x8x16xf32> to vector<64x16xf32>
    %234 = arith.truncf %233 : vector<64x16xf32> to vector<64x16xbf16>
    %c0_294 = arith.constant 0 : index
    %c48_295 = arith.constant 48 : index
    %235 = vector.load %arg17[%c0_294, %c48_295] : memref<256x288xbf16, #tpu.memory_space<vmem>>, vector<64x16xbf16>
    tpu.vector_store %arg17[%c0_294, %c48_295], %234 {strides = array<i32>} : memref<256x288xbf16, #tpu.memory_space<vmem>>, vector<64x16xbf16>,
    %c1_296 = arith.constant 1 : index
    %c1_297 = arith.constant 1 : index
    %c0_298 = arith.constant 0 : index
    %236 = vector.load %arg25[%c1_296, %c1_297, %c0_298] : memref<10x10x16xf32, #tpu.memory_space<vmem>>, vector<8x8x16xf32>
    %237 = vector.shape_cast %236 : vector<8x8x16xf32> to vector<64x16xf32>
    %238 = arith.truncf %237 : vector<64x16xf32> to vector<64x16xbf16>
    %c0_299 = arith.constant 0 : index
    %c64_300 = arith.constant 64 : index
    %239 = vector.load %arg17[%c0_299, %c64_300] : memref<256x288xbf16, #tpu.memory_space<vmem>>, vector<64x16xbf16>
    tpu.vector_store %arg17[%c0_299, %c64_300], %238 {strides = array<i32>} : memref<256x288xbf16, #tpu.memory_space<vmem>>, vector<64x16xbf16>,
    %c1_301 = arith.constant 1 : index
    %c2_302 = arith.constant 2 : index
    %c0_303 = arith.constant 0 : index
    %240 = vector.load %arg25[%c1_301, %c2_302, %c0_303] : memref<10x10x16xf32, #tpu.memory_space<vmem>>, vector<8x8x16xf32>
    %241 = vector.shape_cast %240 : vector<8x8x16xf32> to vector<64x16xf32>
    %242 = arith.truncf %241 : vector<64x16xf32> to vector<64x16xbf16>
    %c0_304 = arith.constant 0 : index
    %c80_305 = arith.constant 80 : index
    %243 = vector.load %arg17[%c0_304, %c80_305] : memref<256x288xbf16, #tpu.memory_space<vmem>>, vector<64x16xbf16>
    tpu.vector_store %arg17[%c0_304, %c80_305], %242 {strides = array<i32>} : memref<256x288xbf16, #tpu.memory_space<vmem>>, vector<64x16xbf16>,
    %c2_306 = arith.constant 2 : index
    %c0_307 = arith.constant 0 : index
    %c0_308 = arith.constant 0 : index
    %244 = vector.load %arg25[%c2_306, %c0_307, %c0_308] : memref<10x10x16xf32, #tpu.memory_space<vmem>>, vector<8x8x16xf32>
    %245 = vector.shape_cast %244 : vector<8x8x16xf32> to vector<64x16xf32>
    %246 = arith.truncf %245 : vector<64x16xf32> to vector<64x16xbf16>
    %c0_309 = arith.constant 0 : index
    %c96_310 = arith.constant 96 : index
    %247 = vector.load %arg17[%c0_309, %c96_310] : memref<256x288xbf16, #tpu.memory_space<vmem>>, vector<64x16xbf16>
    tpu.vector_store %arg17[%c0_309, %c96_310], %246 {strides = array<i32>} : memref<256x288xbf16, #tpu.memory_space<vmem>>, vector<64x16xbf16>,
    %c2_311 = arith.constant 2 : index
    %c1_312 = arith.constant 1 : index
    %c0_313 = arith.constant 0 : index
    %248 = vector.load %arg25[%c2_311, %c1_312, %c0_313] : memref<10x10x16xf32, #tpu.memory_space<vmem>>, vector<8x8x16xf32>
    %249 = vector.shape_cast %248 : vector<8x8x16xf32> to vector<64x16xf32>
    %250 = arith.truncf %249 : vector<64x16xf32> to vector<64x16xbf16>
    %c0_314 = arith.constant 0 : index
    %c112_315 = arith.constant 112 : index
    %251 = vector.load %arg17[%c0_314, %c112_315] : memref<256x288xbf16, #tpu.memory_space<vmem>>, vector<64x16xbf16>
    tpu.vector_store %arg17[%c0_314, %c112_315], %250 {strides = array<i32>} : memref<256x288xbf16, #tpu.memory_space<vmem>>, vector<64x16xbf16>,
    %c2_316 = arith.constant 2 : index
    %c2_317 = arith.constant 2 : index
    %c0_318 = arith.constant 0 : index
    %252 = vector.load %arg25[%c2_316, %c2_317, %c0_318] : memref<10x10x16xf32, #tpu.memory_space<vmem>>, vector<8x8x16xf32>
    %253 = vector.shape_cast %252 : vector<8x8x16xf32> to vector<64x16xf32>
    %254 = arith.truncf %253 : vector<64x16xf32> to vector<64x16xbf16>
    %c0_319 = arith.constant 0 : index
    %c128_320 = arith.constant 128 : index
    %255 = vector.load %arg17[%c0_319, %c128_320] : memref<256x288xbf16, #tpu.memory_space<vmem>>, vector<64x16xbf16>
    tpu.vector_store %arg17[%c0_319, %c128_320], %254 {strides = array<i32>} : memref<256x288xbf16, #tpu.memory_space<vmem>>, vector<64x16xbf16>,
    %c0_321 = arith.constant 0 : index
    %c0_322 = arith.constant 0 : index
    %c0_323 = arith.constant 0 : index
    %256 = vector.load %arg21[%c0_321, %c0_322, %c0_323] : memref<10x10x16xf32, #tpu.memory_space<vmem>>, vector<8x8x16xf32>
    %257 = vector.shape_cast %256 : vector<8x8x16xf32> to vector<64x16xf32>
    %258 = arith.truncf %257 : vector<64x16xf32> to vector<64x16xbf16>
    %c0_324 = arith.constant 0 : index
    %c144 = arith.constant 144 : index
    %259 = vector.load %arg17[%c0_324, %c144] : memref<256x288xbf16, #tpu.memory_space<vmem>>, vector<64x16xbf16>
    tpu.vector_store %arg17[%c0_324, %c144], %258 {strides = array<i32>} : memref<256x288xbf16, #tpu.memory_space<vmem>>, vector<64x16xbf16>,
    %c0_325 = arith.constant 0 : index
    %c1_326 = arith.constant 1 : index
    %c0_327 = arith.constant 0 : index
    %260 = vector.load %arg21[%c0_325, %c1_326, %c0_327] : memref<10x10x16xf32, #tpu.memory_space<vmem>>, vector<8x8x16xf32>
    %261 = vector.shape_cast %260 : vector<8x8x16xf32> to vector<64x16xf32>
    %262 = arith.truncf %261 : vector<64x16xf32> to vector<64x16xbf16>
    %c0_328 = arith.constant 0 : index
    %c160 = arith.constant 160 : index
    %263 = vector.load %arg17[%c0_328, %c160] : memref<256x288xbf16, #tpu.memory_space<vmem>>, vector<64x16xbf16>
    tpu.vector_store %arg17[%c0_328, %c160], %262 {strides = array<i32>} : memref<256x288xbf16, #tpu.memory_space<vmem>>, vector<64x16xbf16>,
    %c0_329 = arith.constant 0 : index
    %c2_330 = arith.constant 2 : index
    %c0_331 = arith.constant 0 : index
    %264 = vector.load %arg21[%c0_329, %c2_330, %c0_331] : memref<10x10x16xf32, #tpu.memory_space<vmem>>, vector<8x8x16xf32>
    %265 = vector.shape_cast %264 : vector<8x8x16xf32> to vector<64x16xf32>
    %266 = arith.truncf %265 : vector<64x16xf32> to vector<64x16xbf16>
    %c0_332 = arith.constant 0 : index
    %c176 = arith.constant 176 : index
    %267 = vector.load %arg17[%c0_332, %c176] : memref<256x288xbf16, #tpu.memory_space<vmem>>, vector<64x16xbf16>
    tpu.vector_store %arg17[%c0_332, %c176], %266 {strides = array<i32>} : memref<256x288xbf16, #tpu.memory_space<vmem>>, vector<64x16xbf16>,
    %c1_333 = arith.constant 1 : index
    %c0_334 = arith.constant 0 : index
    %c0_335 = arith.constant 0 : index
    %268 = vector.load %arg21[%c1_333, %c0_334, %c0_335] : memref<10x10x16xf32, #tpu.memory_space<vmem>>, vector<8x8x16xf32>
    %269 = vector.shape_cast %268 : vector<8x8x16xf32> to vector<64x16xf32>
    %270 = arith.truncf %269 : vector<64x16xf32> to vector<64x16xbf16>
    %c0_336 = arith.constant 0 : index
    %c192 = arith.constant 192 : index
    %271 = vector.load %arg17[%c0_336, %c192] : memref<256x288xbf16, #tpu.memory_space<vmem>>, vector<64x16xbf16>
    tpu.vector_store %arg17[%c0_336, %c192], %270 {strides = array<i32>} : memref<256x288xbf16, #tpu.memory_space<vmem>>, vector<64x16xbf16>,
    %c1_337 = arith.constant 1 : index
    %c1_338 = arith.constant 1 : index
    %c0_339 = arith.constant 0 : index
    %272 = vector.load %arg21[%c1_337, %c1_338, %c0_339] : memref<10x10x16xf32, #tpu.memory_space<vmem>>, vector<8x8x16xf32>
    %273 = vector.shape_cast %272 : vector<8x8x16xf32> to vector<64x16xf32>
    %274 = arith.truncf %273 : vector<64x16xf32> to vector<64x16xbf16>
    %c0_340 = arith.constant 0 : index
    %c208 = arith.constant 208 : index
    %275 = vector.load %arg17[%c0_340, %c208] : memref<256x288xbf16, #tpu.memory_space<vmem>>, vector<64x16xbf16>
    tpu.vector_store %arg17[%c0_340, %c208], %274 {strides = array<i32>} : memref<256x288xbf16, #tpu.memory_space<vmem>>, vector<64x16xbf16>,
    %c1_341 = arith.constant 1 : index
    %c2_342 = arith.constant 2 : index
    %c0_343 = arith.constant 0 : index
    %276 = vector.load %arg21[%c1_341, %c2_342, %c0_343] : memref<10x10x16xf32, #tpu.memory_space<vmem>>, vector<8x8x16xf32>
    %277 = vector.shape_cast %276 : vector<8x8x16xf32> to vector<64x16xf32>
    %278 = arith.truncf %277 : vector<64x16xf32> to vector<64x16xbf16>
    %c0_344 = arith.constant 0 : index
    %c224 = arith.constant 224 : index
    %279 = vector.load %arg17[%c0_344, %c224] : memref<256x288xbf16, #tpu.memory_space<vmem>>, vector<64x16xbf16>
    tpu.vector_store %arg17[%c0_344, %c224], %278 {strides = array<i32>} : memref<256x288xbf16, #tpu.memory_space<vmem>>, vector<64x16xbf16>,
    %c2_345 = arith.constant 2 : index
    %c0_346 = arith.constant 0 : index
    %c0_347 = arith.constant 0 : index
    %280 = vector.load %arg21[%c2_345, %c0_346, %c0_347] : memref<10x10x16xf32, #tpu.memory_space<vmem>>, vector<8x8x16xf32>
    %281 = vector.shape_cast %280 : vector<8x8x16xf32> to vector<64x16xf32>
    %282 = arith.truncf %281 : vector<64x16xf32> to vector<64x16xbf16>
    %c0_348 = arith.constant 0 : index
    %c240 = arith.constant 240 : index
    %283 = vector.load %arg17[%c0_348, %c240] : memref<256x288xbf16, #tpu.memory_space<vmem>>, vector<64x16xbf16>
    tpu.vector_store %arg17[%c0_348, %c240], %282 {strides = array<i32>} : memref<256x288xbf16, #tpu.memory_space<vmem>>, vector<64x16xbf16>,
    %c2_349 = arith.constant 2 : index
    %c1_350 = arith.constant 1 : index
    %c0_351 = arith.constant 0 : index
    %284 = vector.load %arg21[%c2_349, %c1_350, %c0_351] : memref<10x10x16xf32, #tpu.memory_space<vmem>>, vector<8x8x16xf32>
    %285 = vector.shape_cast %284 : vector<8x8x16xf32> to vector<64x16xf32>
    %286 = arith.truncf %285 : vector<64x16xf32> to vector<64x16xbf16>
    %c0_352 = arith.constant 0 : index
    %c256 = arith.constant 256 : index
    %287 = vector.load %arg17[%c0_352, %c256] : memref<256x288xbf16, #tpu.memory_space<vmem>>, vector<64x16xbf16>
    tpu.vector_store %arg17[%c0_352, %c256], %286 {strides = array<i32>} : memref<256x288xbf16, #tpu.memory_space<vmem>>, vector<64x16xbf16>,
    %c2_353 = arith.constant 2 : index
    %c2_354 = arith.constant 2 : index
    %c0_355 = arith.constant 0 : index
    %288 = vector.load %arg21[%c2_353, %c2_354, %c0_355] : memref<10x10x16xf32, #tpu.memory_space<vmem>>, vector<8x8x16xf32>
    %289 = vector.shape_cast %288 : vector<8x8x16xf32> to vector<64x16xf32>
    %290 = arith.truncf %289 : vector<64x16xf32> to vector<64x16xbf16>
    %c0_356 = arith.constant 0 : index
    %c272 = arith.constant 272 : index
    %291 = vector.load %arg17[%c0_356, %c272] : memref<256x288xbf16, #tpu.memory_space<vmem>>, vector<64x16xbf16>
    tpu.vector_store %arg17[%c0_356, %c272], %290 {strides = array<i32>} : memref<256x288xbf16, #tpu.memory_space<vmem>>, vector<64x16xbf16>,
    %c0_357 = arith.constant 0 : index
    %c0_358 = arith.constant 0 : index
    %292 = vector.load %arg17[%c0_357, %c0_358] : memref<256x288xbf16, #tpu.memory_space<vmem>>, vector<64x288xbf16>
    %c0_359 = arith.constant 0 : index
    %c0_360 = arith.constant 0 : index
    %293 = vector.load %arg12[%c0_359, %c0_360] : memref<288x16xbf16, #tpu.memory_space<vmem>>, vector<288x16xbf16>
    %cst_361 = arith.constant dense<0.000000e+00> : vector<64x16xf32>
    %294 = tpu.matmul %292, %293, %cst_361 {dimension_numbers = #tpu.dot_dimension_numbers<[1], [0], [0], [1], [0, 0, 1, 1], [], []>} : vector<64x288xbf16>, vector<288x16xbf16>, vector<64x16xf32> -> vector<64x16xf32>
    %c0_362 = arith.constant 0 : index
    %c0_363 = arith.constant 0 : index
    %295 = vector.load %arg13[%c0_362, %c0_363] : memref<1x16xf32, #tpu.memory_space<vmem>>, vector<1x16xf32>
    %296 = vector.broadcast %295 : vector<1x16xf32> to vector<64x16xf32>
    %297 = arith.addf %294, %296 : vector<64x16xf32>
    %cst_364 = arith.constant 0.000000e+00 : f32
    %298 = vector.broadcast %cst_364 : f32 to vector<64x16xf32>
    %299 = arith.maximumf %297, %298 : vector<64x16xf32>
    %300 = vector.shape_cast %299 : vector<64x16xf32> to vector<8x8x16xf32>
    %c1_365 = arith.constant 1 : index
    %c1_366 = arith.constant 1 : index
    %c0_367 = arith.constant 0 : index
    %301 = vector.load %arg26[%c1_365, %c1_366, %c0_367] : memref<10x10x16xf32, #tpu.memory_space<vmem>>, vector<8x8x16xf32>
    tpu.vector_store %arg26[%c1_365, %c1_366, %c0_367], %300 {strides = array<i32>} : memref<10x10x16xf32, #tpu.memory_space<vmem>>, vector<8x8x16xf32>,
    %c1_368 = arith.constant 1 : index
    %c1_369 = arith.constant 1 : index
    %c0_370 = arith.constant 0 : index
    %302 = vector.load %arg26[%c1_368, %c1_369, %c0_370] : memref<10x10x16xf32, #tpu.memory_space<vmem>>, vector<8x8x16xf32>
    %303 = vector.shape_cast %302 : vector<8x8x16xf32> to vector<64x16xf32>
    %304 = arith.truncf %303 : vector<64x16xf32> to vector<64x16xbf16>
    %c0_371 = arith.constant 0 : index
    %c0_372 = arith.constant 0 : index
    %305 = vector.load %arg17[%c0_371, %c0_372] : memref<256x288xbf16, #tpu.memory_space<vmem>>, vector<64x16xbf16>
    tpu.vector_store %arg17[%c0_371, %c0_372], %304 {strides = array<i32>} : memref<256x288xbf16, #tpu.memory_space<vmem>>, vector<64x16xbf16>,
    %c1_373 = arith.constant 1 : index
    %c2_374 = arith.constant 2 : index
    %c0_375 = arith.constant 0 : index
    %306 = vector.load %arg26[%c1_373, %c2_374, %c0_375] : memref<10x10x16xf32, #tpu.memory_space<vmem>>, vector<8x8x16xf32>
    %307 = vector.shape_cast %306 : vector<8x8x16xf32> to vector<64x16xf32>
    %308 = arith.truncf %307 : vector<64x16xf32> to vector<64x16xbf16>
    %c0_376 = arith.constant 0 : index
    %c16_377 = arith.constant 16 : index
    %309 = vector.load %arg17[%c0_376, %c16_377] : memref<256x288xbf16, #tpu.memory_space<vmem>>, vector<64x16xbf16>
    tpu.vector_store %arg17[%c0_376, %c16_377], %308 {strides = array<i32>} : memref<256x288xbf16, #tpu.memory_space<vmem>>, vector<64x16xbf16>,
    %c2_378 = arith.constant 2 : index
    %c1_379 = arith.constant 1 : index
    %c0_380 = arith.constant 0 : index
    %310 = vector.load %arg26[%c2_378, %c1_379, %c0_380] : memref<10x10x16xf32, #tpu.memory_space<vmem>>, vector<8x8x16xf32>
    %311 = vector.shape_cast %310 : vector<8x8x16xf32> to vector<64x16xf32>
    %312 = arith.truncf %311 : vector<64x16xf32> to vector<64x16xbf16>
    %c0_381 = arith.constant 0 : index
    %c32_382 = arith.constant 32 : index
    %313 = vector.load %arg17[%c0_381, %c32_382] : memref<256x288xbf16, #tpu.memory_space<vmem>>, vector<64x16xbf16>
    tpu.vector_store %arg17[%c0_381, %c32_382], %312 {strides = array<i32>} : memref<256x288xbf16, #tpu.memory_space<vmem>>, vector<64x16xbf16>,
    %c2_383 = arith.constant 2 : index
    %c2_384 = arith.constant 2 : index
    %c0_385 = arith.constant 0 : index
    %314 = vector.load %arg26[%c2_383, %c2_384, %c0_385] : memref<10x10x16xf32, #tpu.memory_space<vmem>>, vector<8x8x16xf32>
    %315 = vector.shape_cast %314 : vector<8x8x16xf32> to vector<64x16xf32>
    %316 = arith.truncf %315 : vector<64x16xf32> to vector<64x16xbf16>
    %c0_386 = arith.constant 0 : index
    %c48_387 = arith.constant 48 : index
    %317 = vector.load %arg17[%c0_386, %c48_387] : memref<256x288xbf16, #tpu.memory_space<vmem>>, vector<64x16xbf16>
    tpu.vector_store %arg17[%c0_386, %c48_387], %316 {strides = array<i32>} : memref<256x288xbf16, #tpu.memory_space<vmem>>, vector<64x16xbf16>,
    %c0_388 = arith.constant 0 : index
    %c0_389 = arith.constant 0 : index
    %318 = vector.load %arg17[%c0_388, %c0_389] : memref<256x288xbf16, #tpu.memory_space<vmem>>, vector<64x64xbf16>
    %c0_390 = arith.constant 0 : index
    %c0_391 = arith.constant 0 : index
    %319 = vector.load %arg10[%c0_390, %c0_391] : memref<64x32xbf16, #tpu.memory_space<vmem>>, vector<64x32xbf16>
    %cst_392 = arith.constant dense<0.000000e+00> : vector<64x32xf32>
    %320 = tpu.matmul %318, %319, %cst_392 {dimension_numbers = #tpu.dot_dimension_numbers<[1], [0], [0], [1], [0, 0, 1, 1], [], []>} : vector<64x64xbf16>, vector<64x32xbf16>, vector<64x32xf32> -> vector<64x32xf32>
    %c0_393 = arith.constant 0 : index
    %c0_394 = arith.constant 0 : index
    %321 = vector.load %arg11[%c0_393, %c0_394] : memref<1x32xf32, #tpu.memory_space<vmem>>, vector<1x32xf32>
    %322 = vector.broadcast %321 : vector<1x32xf32> to vector<64x32xf32>
    %323 = arith.addf %320, %322 : vector<64x32xf32>
    %324 = vector.extract_strided_slice %323 {offsets = [0, 0], sizes = [64, 8], strides = [1, 1]} : vector<64x32xf32> to vector<64x8xf32>
    %325 = vector.shape_cast %324 : vector<64x8xf32> to vector<8x8x8xf32>
    %c0_395 = arith.constant 0 : index
    %c0_396 = arith.constant 0 : index
    %c0_397 = arith.constant 0 : index
    %c0_398 = arith.constant 0 : index
    %c0_399 = arith.constant 0 : index
    %326 = vector.load %arg27[%c0_395, %c0_396, %c0_397, %c0_398, %c0_399] : memref<8x2x8x2x8xf32, #tpu.memory_space<vmem>>, vector<8x1x8x1x8xf32>
    %327 = vector.shape_cast %326 : vector<8x1x8x1x8xf32> to vector<8x8x8xf32>
    %328 = vector.shape_cast %325 : vector<8x8x8xf32> to vector<8x1x8x1x8xf32>
    tpu.vector_store %arg27[%c0_395, %c0_396, %c0_397, %c0_398, %c0_399], %328 {strides = array<i32>} : memref<8x2x8x2x8xf32, #tpu.memory_space<vmem>>, vector<8x1x8x1x8xf32>,
    %329 = vector.extract_strided_slice %323 {offsets = [0, 8], sizes = [64, 8], strides = [1, 1]} : vector<64x32xf32> to vector<64x8xf32>
    %330 = vector.shape_cast %329 : vector<64x8xf32> to vector<8x8x8xf32>
    %c0_400 = arith.constant 0 : index
    %c0_401 = arith.constant 0 : index
    %c0_402 = arith.constant 0 : index
    %c1_403 = arith.constant 1 : index
    %c0_404 = arith.constant 0 : index
    %331 = vector.load %arg27[%c0_400, %c0_401, %c0_402, %c1_403, %c0_404] : memref<8x2x8x2x8xf32, #tpu.memory_space<vmem>>, vector<8x1x8x1x8xf32>
    %332 = vector.shape_cast %331 : vector<8x1x8x1x8xf32> to vector<8x8x8xf32>
    %333 = vector.shape_cast %330 : vector<8x8x8xf32> to vector<8x1x8x1x8xf32>
    tpu.vector_store %arg27[%c0_400, %c0_401, %c0_402, %c1_403, %c0_404], %333 {strides = array<i32>} : memref<8x2x8x2x8xf32, #tpu.memory_space<vmem>>, vector<8x1x8x1x8xf32>,
    %334 = vector.extract_strided_slice %323 {offsets = [0, 16], sizes = [64, 8], strides = [1, 1]} : vector<64x32xf32> to vector<64x8xf32>
    %335 = vector.shape_cast %334 : vector<64x8xf32> to vector<8x8x8xf32>
    %c0_405 = arith.constant 0 : index
    %c1_406 = arith.constant 1 : index
    %c0_407 = arith.constant 0 : index
    %c0_408 = arith.constant 0 : index
    %c0_409 = arith.constant 0 : index
    %336 = vector.load %arg27[%c0_405, %c1_406, %c0_407, %c0_408, %c0_409] : memref<8x2x8x2x8xf32, #tpu.memory_space<vmem>>, vector<8x1x8x1x8xf32>
    %337 = vector.shape_cast %336 : vector<8x1x8x1x8xf32> to vector<8x8x8xf32>
    %338 = vector.shape_cast %335 : vector<8x8x8xf32> to vector<8x1x8x1x8xf32>
    tpu.vector_store %arg27[%c0_405, %c1_406, %c0_407, %c0_408, %c0_409], %338 {strides = array<i32>} : memref<8x2x8x2x8xf32, #tpu.memory_space<vmem>>, vector<8x1x8x1x8xf32>,
    %339 = vector.extract_strided_slice %323 {offsets = [0, 24], sizes = [64, 8], strides = [1, 1]} : vector<64x32xf32> to vector<64x8xf32>
    %340 = vector.shape_cast %339 : vector<64x8xf32> to vector<8x8x8xf32>
    %c0_410 = arith.constant 0 : index
    %c1_411 = arith.constant 1 : index
    %c0_412 = arith.constant 0 : index
    %c1_413 = arith.constant 1 : index
    %c0_414 = arith.constant 0 : index
    %341 = vector.load %arg27[%c0_410, %c1_411, %c0_412, %c1_413, %c0_414] : memref<8x2x8x2x8xf32, #tpu.memory_space<vmem>>, vector<8x1x8x1x8xf32>
    %342 = vector.shape_cast %341 : vector<8x1x8x1x8xf32> to vector<8x8x8xf32>
    %343 = vector.shape_cast %340 : vector<8x8x8xf32> to vector<8x1x8x1x8xf32>
    tpu.vector_store %arg27[%c0_410, %c1_411, %c0_412, %c1_413, %c0_414], %343 {strides = array<i32>} : memref<8x2x8x2x8xf32, #tpu.memory_space<vmem>>, vector<8x1x8x1x8xf32>,
    %c0_415 = arith.constant 0 : index
    %c0_416 = arith.constant 0 : index
    %c0_417 = arith.constant 0 : index
    %c0_418 = arith.constant 0 : index
    %c0_419 = arith.constant 0 : index
    %344 = vector.load %arg27[%c0_415, %c0_416, %c0_417, %c0_418, %c0_419] : memref<8x2x8x2x8xf32, #tpu.memory_space<vmem>>, vector<8x2x8x2x8xf32>
    %345 = vector.shape_cast %344 : vector<8x2x8x2x8xf32> to vector<16x16x8xf32>
    %c1_420 = arith.constant 1 : index
    %c1_421 = arith.constant 1 : index
    %c0_422 = arith.constant 0 : index
    %346 = vector.load %arg28[%c1_420, %c1_421, %c0_422] : memref<18x18x8xf32, #tpu.memory_space<vmem>>, vector<16x16x8xf32>
    tpu.vector_store %arg28[%c1_420, %c1_421, %c0_422], %345 {strides = array<i32>} : memref<18x18x8xf32, #tpu.memory_space<vmem>>, vector<16x16x8xf32>,
    %c0_423 = arith.constant 0 : index
    %c0_424 = arith.constant 0 : index
    %c0_425 = arith.constant 0 : index
    %347 = vector.load %arg28[%c0_423, %c0_424, %c0_425] : memref<18x18x8xf32, #tpu.memory_space<vmem>>, vector<16x16x8xf32>
    %348 = vector.shape_cast %347 : vector<16x16x8xf32> to vector<256x8xf32>
    %349 = arith.truncf %348 : vector<256x8xf32> to vector<256x8xbf16>
    %c0_426 = arith.constant 0 : index
    %c0_427 = arith.constant 0 : index
    %350 = vector.load %arg17[%c0_426, %c0_427] : memref<256x288xbf16, #tpu.memory_space<vmem>>, vector<256x8xbf16>
    tpu.vector_store %arg17[%c0_426, %c0_427], %349 {strides = array<i32>} : memref<256x288xbf16, #tpu.memory_space<vmem>>, vector<256x8xbf16>,
    %c0_428 = arith.constant 0 : index
    %c1_429 = arith.constant 1 : index
    %c0_430 = arith.constant 0 : index
    %351 = vector.load %arg28[%c0_428, %c1_429, %c0_430] : memref<18x18x8xf32, #tpu.memory_space<vmem>>, vector<16x16x8xf32>
    %352 = vector.shape_cast %351 : vector<16x16x8xf32> to vector<256x8xf32>
    %353 = arith.truncf %352 : vector<256x8xf32> to vector<256x8xbf16>
    %c0_431 = arith.constant 0 : index
    %c8_432 = arith.constant 8 : index
    %354 = vector.load %arg17[%c0_431, %c8_432] : memref<256x288xbf16, #tpu.memory_space<vmem>>, vector<256x8xbf16>
    tpu.vector_store %arg17[%c0_431, %c8_432], %353 {strides = array<i32>} : memref<256x288xbf16, #tpu.memory_space<vmem>>, vector<256x8xbf16>,
    %c0_433 = arith.constant 0 : index
    %c2_434 = arith.constant 2 : index
    %c0_435 = arith.constant 0 : index
    %355 = vector.load %arg28[%c0_433, %c2_434, %c0_435] : memref<18x18x8xf32, #tpu.memory_space<vmem>>, vector<16x16x8xf32>
    %356 = vector.shape_cast %355 : vector<16x16x8xf32> to vector<256x8xf32>
    %357 = arith.truncf %356 : vector<256x8xf32> to vector<256x8xbf16>
    %c0_436 = arith.constant 0 : index
    %c16_437 = arith.constant 16 : index
    %358 = vector.load %arg17[%c0_436, %c16_437] : memref<256x288xbf16, #tpu.memory_space<vmem>>, vector<256x8xbf16>
    tpu.vector_store %arg17[%c0_436, %c16_437], %357 {strides = array<i32>} : memref<256x288xbf16, #tpu.memory_space<vmem>>, vector<256x8xbf16>,
    %c1_438 = arith.constant 1 : index
    %c0_439 = arith.constant 0 : index
    %c0_440 = arith.constant 0 : index
    %359 = vector.load %arg28[%c1_438, %c0_439, %c0_440] : memref<18x18x8xf32, #tpu.memory_space<vmem>>, vector<16x16x8xf32>
    %360 = vector.shape_cast %359 : vector<16x16x8xf32> to vector<256x8xf32>
    %361 = arith.truncf %360 : vector<256x8xf32> to vector<256x8xbf16>
    %c0_441 = arith.constant 0 : index
    %c24_442 = arith.constant 24 : index
    %362 = vector.load %arg17[%c0_441, %c24_442] : memref<256x288xbf16, #tpu.memory_space<vmem>>, vector<256x8xbf16>
    tpu.vector_store %arg17[%c0_441, %c24_442], %361 {strides = array<i32>} : memref<256x288xbf16, #tpu.memory_space<vmem>>, vector<256x8xbf16>,
    %c1_443 = arith.constant 1 : index
    %c1_444 = arith.constant 1 : index
    %c0_445 = arith.constant 0 : index
    %363 = vector.load %arg28[%c1_443, %c1_444, %c0_445] : memref<18x18x8xf32, #tpu.memory_space<vmem>>, vector<16x16x8xf32>
    %364 = vector.shape_cast %363 : vector<16x16x8xf32> to vector<256x8xf32>
    %365 = arith.truncf %364 : vector<256x8xf32> to vector<256x8xbf16>
    %c0_446 = arith.constant 0 : index
    %c32_447 = arith.constant 32 : index
    %366 = vector.load %arg17[%c0_446, %c32_447] : memref<256x288xbf16, #tpu.memory_space<vmem>>, vector<256x8xbf16>
    tpu.vector_store %arg17[%c0_446, %c32_447], %365 {strides = array<i32>} : memref<256x288xbf16, #tpu.memory_space<vmem>>, vector<256x8xbf16>,
    %c1_448 = arith.constant 1 : index
    %c2_449 = arith.constant 2 : index
    %c0_450 = arith.constant 0 : index
    %367 = vector.load %arg28[%c1_448, %c2_449, %c0_450] : memref<18x18x8xf32, #tpu.memory_space<vmem>>, vector<16x16x8xf32>
    %368 = vector.shape_cast %367 : vector<16x16x8xf32> to vector<256x8xf32>
    %369 = arith.truncf %368 : vector<256x8xf32> to vector<256x8xbf16>
    %c0_451 = arith.constant 0 : index
    %c40_452 = arith.constant 40 : index
    %370 = vector.load %arg17[%c0_451, %c40_452] : memref<256x288xbf16, #tpu.memory_space<vmem>>, vector<256x8xbf16>
    tpu.vector_store %arg17[%c0_451, %c40_452], %369 {strides = array<i32>} : memref<256x288xbf16, #tpu.memory_space<vmem>>, vector<256x8xbf16>,
    %c2_453 = arith.constant 2 : index
    %c0_454 = arith.constant 0 : index
    %c0_455 = arith.constant 0 : index
    %371 = vector.load %arg28[%c2_453, %c0_454, %c0_455] : memref<18x18x8xf32, #tpu.memory_space<vmem>>, vector<16x16x8xf32>
    %372 = vector.shape_cast %371 : vector<16x16x8xf32> to vector<256x8xf32>
    %373 = arith.truncf %372 : vector<256x8xf32> to vector<256x8xbf16>
    %c0_456 = arith.constant 0 : index
    %c48_457 = arith.constant 48 : index
    %374 = vector.load %arg17[%c0_456, %c48_457] : memref<256x288xbf16, #tpu.memory_space<vmem>>, vector<256x8xbf16>
    tpu.vector_store %arg17[%c0_456, %c48_457], %373 {strides = array<i32>} : memref<256x288xbf16, #tpu.memory_space<vmem>>, vector<256x8xbf16>,
    %c2_458 = arith.constant 2 : index
    %c1_459 = arith.constant 1 : index
    %c0_460 = arith.constant 0 : index
    %375 = vector.load %arg28[%c2_458, %c1_459, %c0_460] : memref<18x18x8xf32, #tpu.memory_space<vmem>>, vector<16x16x8xf32>
    %376 = vector.shape_cast %375 : vector<16x16x8xf32> to vector<256x8xf32>
    %377 = arith.truncf %376 : vector<256x8xf32> to vector<256x8xbf16>
    %c0_461 = arith.constant 0 : index
    %c56_462 = arith.constant 56 : index
    %378 = vector.load %arg17[%c0_461, %c56_462] : memref<256x288xbf16, #tpu.memory_space<vmem>>, vector<256x8xbf16>
    tpu.vector_store %arg17[%c0_461, %c56_462], %377 {strides = array<i32>} : memref<256x288xbf16, #tpu.memory_space<vmem>>, vector<256x8xbf16>,
    %c2_463 = arith.constant 2 : index
    %c2_464 = arith.constant 2 : index
    %c0_465 = arith.constant 0 : index
    %379 = vector.load %arg28[%c2_463, %c2_464, %c0_465] : memref<18x18x8xf32, #tpu.memory_space<vmem>>, vector<16x16x8xf32>
    %380 = vector.shape_cast %379 : vector<16x16x8xf32> to vector<256x8xf32>
    %381 = arith.truncf %380 : vector<256x8xf32> to vector<256x8xbf16>
    %c0_466 = arith.constant 0 : index
    %c64_467 = arith.constant 64 : index
    %382 = vector.load %arg17[%c0_466, %c64_467] : memref<256x288xbf16, #tpu.memory_space<vmem>>, vector<256x8xbf16>
    tpu.vector_store %arg17[%c0_466, %c64_467], %381 {strides = array<i32>} : memref<256x288xbf16, #tpu.memory_space<vmem>>, vector<256x8xbf16>,
    %c0_468 = arith.constant 0 : index
    %c0_469 = arith.constant 0 : index
    %c0_470 = arith.constant 0 : index
    %383 = vector.load %arg19[%c0_468, %c0_469, %c0_470] : memref<18x18x8xf32, #tpu.memory_space<vmem>>, vector<16x16x8xf32>
    %384 = vector.shape_cast %383 : vector<16x16x8xf32> to vector<256x8xf32>
    %385 = arith.truncf %384 : vector<256x8xf32> to vector<256x8xbf16>
    %c0_471 = arith.constant 0 : index
    %c72 = arith.constant 72 : index
    %386 = vector.load %arg17[%c0_471, %c72] : memref<256x288xbf16, #tpu.memory_space<vmem>>, vector<256x8xbf16>
    tpu.vector_store %arg17[%c0_471, %c72], %385 {strides = array<i32>} : memref<256x288xbf16, #tpu.memory_space<vmem>>, vector<256x8xbf16>,
    %c0_472 = arith.constant 0 : index
    %c1_473 = arith.constant 1 : index
    %c0_474 = arith.constant 0 : index
    %387 = vector.load %arg19[%c0_472, %c1_473, %c0_474] : memref<18x18x8xf32, #tpu.memory_space<vmem>>, vector<16x16x8xf32>
    %388 = vector.shape_cast %387 : vector<16x16x8xf32> to vector<256x8xf32>
    %389 = arith.truncf %388 : vector<256x8xf32> to vector<256x8xbf16>
    %c0_475 = arith.constant 0 : index
    %c80_476 = arith.constant 80 : index
    %390 = vector.load %arg17[%c0_475, %c80_476] : memref<256x288xbf16, #tpu.memory_space<vmem>>, vector<256x8xbf16>
    tpu.vector_store %arg17[%c0_475, %c80_476], %389 {strides = array<i32>} : memref<256x288xbf16, #tpu.memory_space<vmem>>, vector<256x8xbf16>,
    %c0_477 = arith.constant 0 : index
    %c2_478 = arith.constant 2 : index
    %c0_479 = arith.constant 0 : index
    %391 = vector.load %arg19[%c0_477, %c2_478, %c0_479] : memref<18x18x8xf32, #tpu.memory_space<vmem>>, vector<16x16x8xf32>
    %392 = vector.shape_cast %391 : vector<16x16x8xf32> to vector<256x8xf32>
    %393 = arith.truncf %392 : vector<256x8xf32> to vector<256x8xbf16>
    %c0_480 = arith.constant 0 : index
    %c88 = arith.constant 88 : index
    %394 = vector.load %arg17[%c0_480, %c88] : memref<256x288xbf16, #tpu.memory_space<vmem>>, vector<256x8xbf16>
    tpu.vector_store %arg17[%c0_480, %c88], %393 {strides = array<i32>} : memref<256x288xbf16, #tpu.memory_space<vmem>>, vector<256x8xbf16>,
    %c1_481 = arith.constant 1 : index
    %c0_482 = arith.constant 0 : index
    %c0_483 = arith.constant 0 : index
    %395 = vector.load %arg19[%c1_481, %c0_482, %c0_483] : memref<18x18x8xf32, #tpu.memory_space<vmem>>, vector<16x16x8xf32>
    %396 = vector.shape_cast %395 : vector<16x16x8xf32> to vector<256x8xf32>
    %397 = arith.truncf %396 : vector<256x8xf32> to vector<256x8xbf16>
    %c0_484 = arith.constant 0 : index
    %c96_485 = arith.constant 96 : index
    %398 = vector.load %arg17[%c0_484, %c96_485] : memref<256x288xbf16, #tpu.memory_space<vmem>>, vector<256x8xbf16>
    tpu.vector_store %arg17[%c0_484, %c96_485], %397 {strides = array<i32>} : memref<256x288xbf16, #tpu.memory_space<vmem>>, vector<256x8xbf16>,
    %c1_486 = arith.constant 1 : index
    %c1_487 = arith.constant 1 : index
    %c0_488 = arith.constant 0 : index
    %399 = vector.load %arg19[%c1_486, %c1_487, %c0_488] : memref<18x18x8xf32, #tpu.memory_space<vmem>>, vector<16x16x8xf32>
    %400 = vector.shape_cast %399 : vector<16x16x8xf32> to vector<256x8xf32>
    %401 = arith.truncf %400 : vector<256x8xf32> to vector<256x8xbf16>
    %c0_489 = arith.constant 0 : index
    %c104 = arith.constant 104 : index
    %402 = vector.load %arg17[%c0_489, %c104] : memref<256x288xbf16, #tpu.memory_space<vmem>>, vector<256x8xbf16>
    tpu.vector_store %arg17[%c0_489, %c104], %401 {strides = array<i32>} : memref<256x288xbf16, #tpu.memory_space<vmem>>, vector<256x8xbf16>,
    %c1_490 = arith.constant 1 : index
    %c2_491 = arith.constant 2 : index
    %c0_492 = arith.constant 0 : index
    %403 = vector.load %arg19[%c1_490, %c2_491, %c0_492] : memref<18x18x8xf32, #tpu.memory_space<vmem>>, vector<16x16x8xf32>
    %404 = vector.shape_cast %403 : vector<16x16x8xf32> to vector<256x8xf32>
    %405 = arith.truncf %404 : vector<256x8xf32> to vector<256x8xbf16>
    %c0_493 = arith.constant 0 : index
    %c112_494 = arith.constant 112 : index
    %406 = vector.load %arg17[%c0_493, %c112_494] : memref<256x288xbf16, #tpu.memory_space<vmem>>, vector<256x8xbf16>
    tpu.vector_store %arg17[%c0_493, %c112_494], %405 {strides = array<i32>} : memref<256x288xbf16, #tpu.memory_space<vmem>>, vector<256x8xbf16>,
    %c2_495 = arith.constant 2 : index
    %c0_496 = arith.constant 0 : index
    %c0_497 = arith.constant 0 : index
    %407 = vector.load %arg19[%c2_495, %c0_496, %c0_497] : memref<18x18x8xf32, #tpu.memory_space<vmem>>, vector<16x16x8xf32>
    %408 = vector.shape_cast %407 : vector<16x16x8xf32> to vector<256x8xf32>
    %409 = arith.truncf %408 : vector<256x8xf32> to vector<256x8xbf16>
    %c0_498 = arith.constant 0 : index
    %c120 = arith.constant 120 : index
    %410 = vector.load %arg17[%c0_498, %c120] : memref<256x288xbf16, #tpu.memory_space<vmem>>, vector<256x8xbf16>
    tpu.vector_store %arg17[%c0_498, %c120], %409 {strides = array<i32>} : memref<256x288xbf16, #tpu.memory_space<vmem>>, vector<256x8xbf16>,
    %c2_499 = arith.constant 2 : index
    %c1_500 = arith.constant 1 : index
    %c0_501 = arith.constant 0 : index
    %411 = vector.load %arg19[%c2_499, %c1_500, %c0_501] : memref<18x18x8xf32, #tpu.memory_space<vmem>>, vector<16x16x8xf32>
    %412 = vector.shape_cast %411 : vector<16x16x8xf32> to vector<256x8xf32>
    %413 = arith.truncf %412 : vector<256x8xf32> to vector<256x8xbf16>
    %c0_502 = arith.constant 0 : index
    %c128_503 = arith.constant 128 : index
    %414 = vector.load %arg17[%c0_502, %c128_503] : memref<256x288xbf16, #tpu.memory_space<vmem>>, vector<256x8xbf16>
    tpu.vector_store %arg17[%c0_502, %c128_503], %413 {strides = array<i32>} : memref<256x288xbf16, #tpu.memory_space<vmem>>, vector<256x8xbf16>,
    %c2_504 = arith.constant 2 : index
    %c2_505 = arith.constant 2 : index
    %c0_506 = arith.constant 0 : index
    %415 = vector.load %arg19[%c2_504, %c2_505, %c0_506] : memref<18x18x8xf32, #tpu.memory_space<vmem>>, vector<16x16x8xf32>
    %416 = vector.shape_cast %415 : vector<16x16x8xf32> to vector<256x8xf32>
    %417 = arith.truncf %416 : vector<256x8xf32> to vector<256x8xbf16>
    %c0_507 = arith.constant 0 : index
    %c136 = arith.constant 136 : index
    %418 = vector.load %arg17[%c0_507, %c136] : memref<256x288xbf16, #tpu.memory_space<vmem>>, vector<256x8xbf16>
    tpu.vector_store %arg17[%c0_507, %c136], %417 {strides = array<i32>} : memref<256x288xbf16, #tpu.memory_space<vmem>>, vector<256x8xbf16>,
    %c0_508 = arith.constant 0 : index
    %c0_509 = arith.constant 0 : index
    %419 = vector.load %arg17[%c0_508, %c0_509] : memref<256x288xbf16, #tpu.memory_space<vmem>>, vector<256x144xbf16>
    %c0_510 = arith.constant 0 : index
    %c0_511 = arith.constant 0 : index
    %420 = vector.load %arg14[%c0_510, %c0_511] : memref<144x3xbf16, #tpu.memory_space<vmem>>, vector<144x3xbf16>
    %cst_512 = arith.constant dense<0.000000e+00> : vector<256x3xf32>
    %421 = tpu.matmul %419, %420, %cst_512 {dimension_numbers = #tpu.dot_dimension_numbers<[1], [0], [0], [1], [0, 0, 1, 1], [], []>} : vector<256x144xbf16>, vector<144x3xbf16>, vector<256x3xf32> -> vector<256x3xf32>
    %c0_513 = arith.constant 0 : index
    %c0_514 = arith.constant 0 : index
    %422 = vector.load %arg15[%c0_513, %c0_514] : memref<1x3xf32, #tpu.memory_space<vmem>>, vector<1x3xf32>
    %423 = vector.broadcast %422 : vector<1x3xf32> to vector<256x3xf32>
    %424 = arith.addf %421, %423 : vector<256x3xf32>
    %425 = math.tanh %424 : vector<256x3xf32>
    %c0_515 = arith.constant 0 : index
    %c0_516 = arith.constant 0 : index
    %c0_517 = arith.constant 0 : index
    %426 = vector.load %arg16[%c0_515, %c0_516, %c0_517] : memref<1x256x3xf32, #tpu.memory_space<vmem>>, vector<1x256x3xf32>
    %427 = vector.shape_cast %426 : vector<1x256x3xf32> to vector<256x3xf32>
    %428 = vector.shape_cast %425 : vector<256x3xf32> to vector<1x256x3xf32>
    tpu.vector_store %arg16[%c0_515, %c0_516, %c0_517], %428 {strides = array<i32>} : memref<1x256x3xf32, #tpu.memory_space<vmem>>, vector<1x256x3xf32>,
    return
  }
  func.func @transform_0(%arg0: i32) -> (i32, i32, i32, i32) {
    %c0_i32 = arith.constant 0 : i32
    %c0_i32_0 = arith.constant 0 : i32
    %c0_i32_1 = arith.constant 0 : i32
    %c0_i32_2 = arith.constant 0 : i32
    return %arg0, %c0_i32, %c0_i32_0, %c0_i32_1 : i32, i32, i32, i32
  }
  func.func @transform_1(%arg0: i32) -> (i32, i32) {
    %c0_i32 = arith.constant 0 : i32
    %c0_i32_0 = arith.constant 0 : i32
    %c0_i32_1 = arith.constant 0 : i32
    return %c0_i32, %c0_i32_0 : i32, i32
  }
  func.func @transform_2(%arg0: i32) -> (i32, i32) {
    %c0_i32 = arith.constant 0 : i32
    %c0_i32_0 = arith.constant 0 : i32
    %c0_i32_1 = arith.constant 0 : i32
    return %c0_i32, %c0_i32_0 : i32, i32
  }
  func.func @transform_3(%arg0: i32) -> (i32, i32) {
    %c0_i32 = arith.constant 0 : i32
    %c0_i32_0 = arith.constant 0 : i32
    %c0_i32_1 = arith.constant 0 : i32
    return %c0_i32, %c0_i32_0 : i32, i32
  }
  func.func @transform_4(%arg0: i32) -> (i32, i32) {
    %c0_i32 = arith.constant 0 : i32
    %c0_i32_0 = arith.constant 0 : i32
    %c0_i32_1 = arith.constant 0 : i32
    return %c0_i32, %c0_i32_0 : i32, i32
  }
  func.func @transform_5(%arg0: i32) -> (i32, i32) {
    %c0_i32 = arith.constant 0 : i32
    %c0_i32_0 = arith.constant 0 : i32
    %c0_i32_1 = arith.constant 0 : i32
    return %c0_i32, %c0_i32_0 : i32, i32
  }
  func.func @transform_6(%arg0: i32) -> (i32, i32) {
    %c0_i32 = arith.constant 0 : i32
    %c0_i32_0 = arith.constant 0 : i32
    %c0_i32_1 = arith.constant 0 : i32
    return %c0_i32, %c0_i32_0 : i32, i32
  }
  func.func @transform_7(%arg0: i32) -> (i32, i32) {
    %c0_i32 = arith.constant 0 : i32
    %c0_i32_0 = arith.constant 0 : i32
    %c0_i32_1 = arith.constant 0 : i32
    return %c0_i32, %c0_i32_0 : i32, i32
  }
  func.func @transform_8(%arg0: i32) -> (i32, i32) {
    %c0_i32 = arith.constant 0 : i32
    %c0_i32_0 = arith.constant 0 : i32
    %c0_i32_1 = arith.constant 0 : i32
    return %c0_i32, %c0_i32_0 : i32, i32
  }
  func.func @transform_9(%arg0: i32) -> (i32, i32) {
    %c0_i32 = arith.constant 0 : i32
    %c0_i32_0 = arith.constant 0 : i32
    %c0_i32_1 = arith.constant 0 : i32
    return %c0_i32, %c0_i32_0 : i32, i32
  }
  func.func @transform_10(%arg0: i32) -> (i32, i32) {
    %c0_i32 = arith.constant 0 : i32
    %c0_i32_0 = arith.constant 0 : i32
    %c0_i32_1 = arith.constant 0 : i32
    return %c0_i32, %c0_i32_0 : i32, i32
  }
  func.func @transform_11(%arg0: i32) -> (i32, i32) {
    %c0_i32 = arith.constant 0 : i32
    %c0_i32_0 = arith.constant 0 : i32
    %c0_i32_1 = arith.constant 0 : i32
    return %c0_i32, %c0_i32_0 : i32, i32
  }
  func.func @transform_12(%arg0: i32) -> (i32, i32) {
    %c0_i32 = arith.constant 0 : i32
    %c0_i32_0 = arith.constant 0 : i32
    %c0_i32_1 = arith.constant 0 : i32
    return %c0_i32, %c0_i32_0 : i32, i32
  }
  func.func @transform_13(%arg0: i32) -> (i32, i32) {
    %c0_i32 = arith.constant 0 : i32
    %c0_i32_0 = arith.constant 0 : i32
    %c0_i32_1 = arith.constant 0 : i32
    return %c0_i32, %c0_i32_0 : i32, i32
  }
  func.func @transform_14(%arg0: i32) -> (i32, i32) {
    %c0_i32 = arith.constant 0 : i32
    %c0_i32_0 = arith.constant 0 : i32
    %c0_i32_1 = arith.constant 0 : i32
    return %c0_i32, %c0_i32_0 : i32, i32
  }
  func.func @transform_15(%arg0: i32) -> (i32, i32, i32) {
    %c0_i32 = arith.constant 0 : i32
    %c0_i32_0 = arith.constant 0 : i32
    %c0_i32_1 = arith.constant 0 : i32
    return %arg0, %c0_i32, %c0_i32_0 : i32, i32, i32
  }
}

</mosaic_0001>

<llo_original>
// kernel: unet_forward.1
$region0: #{unet_forward.1}
  #allocation0 [shape = 'u32[]', space=smem, size = 0x4, offset = 0x4, fixed_abs, tag = 'smem constant byte address 0x4 - core index']
  #allocation1 [shape = 'u32[144,128]{1,0:T(1,128)}', space=vmem, size = 0x12000, scoped, tag = 'internal scratch']
  #allocation2 [shape = 'bf16[256,288]{1,0:T(16,128)(2,1)}', space=vmem, size = 0x30000, scoped, tag = 'scratch operand']
  #allocation3 [shape = 'f32[18,18,4]{2,1,0:T(8,128)}', space=vmem, size = 0x36000, scoped, tag = 'scratch operand']
  #allocation4 [shape = 'f32[18,18,8]{2,1,0:T(8,128)}', space=vmem, size = 0x36000, scoped, tag = 'scratch operand']
  #allocation5 [shape = 'f32[10,10,8]{2,1,0:T(8,128)}', space=vmem, size = 0x14000, scoped, tag = 'scratch operand']
  #allocation6 [shape = 'f32[10,10,16]{2,1,0:T(8,128)}', space=vmem, size = 0x14000, scoped, tag = 'scratch operand']
  #allocation7 [shape = 'f32[6,6,16]{2,1,0:T(8,128)}', space=vmem, size = 0x6000, scoped, tag = 'scratch operand']
  #allocation8 [shape = 'f32[6,6,32]{2,1,0:T(8,128)}', space=vmem, size = 0x6000, scoped, tag = 'scratch operand']
  #allocation9 [shape = 'f32[4,2,4,2,16]{4,3,2,1,0:T(2,128)}', space=vmem, size = 0x8000, scoped, tag = 'scratch operand']
  #allocation10 [shape = 'f32[10,10,16]{2,1,0:T(8,128)}', space=vmem, size = 0x14000, scoped, tag = 'scratch operand']
  #allocation11 [shape = 'f32[10,10,16]{2,1,0:T(8,128)}', space=vmem, size = 0x14000, scoped, tag = 'scratch operand']
  #allocation12 [shape = 'f32[8,2,8,2,8]{4,3,2,1,0:T(2,128)}', space=vmem, size = 0x20000, scoped, tag = 'scratch operand']
  #allocation13 [shape = 'f32[18,18,8]{2,1,0:T(8,128)}', space=vmem, size = 0x36000, scoped, tag = 'scratch operand']
  %s0 = inlined_call_operand.vmem [shape: f32[2,16,16,4], index: 0, kind: input, shape index: {}]
  %s1 = inlined_call_operand.vmem [shape: bf16[36,8], index: 1, kind: input, shape index: {}]
  %s2 = inlined_call_operand.vmem [shape: f32[1,8], index: 2, kind: input, shape index: {}]
  %s3 = inlined_call_operand.vmem [shape: bf16[72,16], index: 3, kind: input, shape index: {}]
  %s4 = inlined_call_operand.vmem [shape: f32[1,16], index: 4, kind: input, shape index: {}]
  %s5 = inlined_call_operand.vmem [shape: bf16[144,32], index: 5, kind: input, shape index: {}]
  %s6 = inlined_call_operand.vmem [shape: f32[1,32], index: 6, kind: input, shape index: {}]
  %s7 = inlined_call_operand.vmem [shape: bf16[128,64], index: 7, kind: input, shape index: {}]
  %s8 = inlined_call_operand.vmem [shape: f32[1,64], index: 8, kind: input, shape index: {}]
  %s9 = inlined_call_operand.vmem [shape: bf16[64,32], index: 9, kind: input, shape index: {}]
  %s10 = inlined_call_operand.vmem [shape: f32[1,32], index: 10, kind: input, shape index: {}]
  %s11 = inlined_call_operand.vmem [shape: bf16[288,16], index: 11, kind: input, shape index: {}]
  %s12 = inlined_call_operand.vmem [shape: f32[1,16], index: 12, kind: input, shape index: {}]
  %s13 = inlined_call_operand.vmem [shape: bf16[144,3], index: 13, kind: input, shape index: {}]
  %s14 = inlined_call_operand.vmem [shape: f32[1,3], index: 14, kind: input, shape index: {}]
  %s15 = inlined_call_operand.vmem [shape: f32[2,256,3], index: 15, kind: output, shape index: {}]
  %s16 = sld [smem:[#allocation0]]
  $region93: #{unet_forward.1} parent=0
    _
  %s18 = ssub.s32 1, %s16
  %s19 = scalar_select 0, %s18, %s16
  loop: start=0, step=1, limit=4
  $region2: #{unet_forward.1} parent=0 // loop_pre_header
    _
  $region3: #{unet_forward.1} parent=0 // loop_header
    %s21 = sphi 0, %s25
    %p22 = scmp.ge.s32.totalorder %s21, 4
    %s31 = sphi 0, %s33
    %s34 = sphi 0, %s31
    %s35 = sphi 0, %s34
    %s51 = sphi 0, %s35
    %s55 = sphi 0, %s55
    %s57 = sphi 0, %s55
    %s58 = sphi 0, %s57
    %s72 = sphi 0, %s58
    %s76 = sphi 0, %s76
    %s78 = sphi 0, %s76
    %s79 = sphi 0, %s78
    %s93 = sphi 0, %s79
    %s97 = sphi 0, %s97
    %s99 = sphi 0, %s97
    %s100 = sphi 0, %s99
    %s114 = sphi 0, %s100
    %s118 = sphi 0, %s118
    %s120 = sphi 0, %s118
    %s121 = sphi 0, %s120
    %s135 = sphi 0, %s121
    %s139 = sphi 0, %s139
    %s141 = sphi 0, %s139
    %s142 = sphi 0, %s141
    %s156 = sphi 0, %s142
    %s160 = sphi 0, %s160
    %s162 = sphi 0, %s160
    %s163 = sphi 0, %s162
    %s177 = sphi 0, %s163
    %s181 = sphi 0, %s181
    %s183 = sphi 0, %s181
    %s184 = sphi 0, %s183
    %s198 = sphi 0, %s184
    %s202 = sphi 0, %s202
    %s204 = sphi 0, %s202
    %s205 = sphi 0, %s204
    %s219 = sphi 0, %s205
    %s223 = sphi 0, %s223
    %s225 = sphi 0, %s223
    %s226 = sphi 0, %s225
    %s240 = sphi 0, %s226
    %s244 = sphi 0, %s244
    %s246 = sphi 0, %s244
    %s247 = sphi 0, %s246
    %s261 = sphi 0, %s247
    %s265 = sphi 0, %s265
    %s267 = sphi 0, %s265
    %s268 = sphi 0, %s267
    %s282 = sphi 0, %s268
    %s286 = sphi 0, %s286
    %s288 = sphi 0, %s286
    %s289 = sphi 0, %s288
    %s303 = sphi 0, %s289
    %s307 = sphi 0, %s307
    %s309 = sphi 0, %s307
    %s310 = sphi 0, %s309
    %s324 = sphi 0, %s310
    %s328 = sphi 0, %s328
    %s330 = sphi 0, %s328
    %s331 = sphi 0, %s330
    %s345 = sphi 0, %s331
    %s351 = sphi 0, %s353
    %s354 = sphi 0, %s351
    %s355 = sphi 0, %s354
    %s371 = sphi 0, %s355
  $region4: #{unet_forward.1} parent=0 // loop_header_branch
    %24 = sbr.rel (%p22) target = $region8
  $region5: #{unet_forward.1} parent=0 // loop_body
    %s26 = ssub.s32 %s21, 1
    %s27 = ssub.s32 %s21, 2
    %s28 = sadd.s32 %s21, 1
    %s29 = ssub.s32 %s21, %s28
    %p30 = scmp.eq.s32.totalorder %s29, 0
    %s32 = sadd.s32 %s31, 1
    %s33 = scalar_select %p30, %s31, %s32
    %p36 = pneg %p30
    %p37 = scmp.eq.s32.totalorder %s21, 1
    %p38 = por %p36, %p37
    %p39 = scmp.ne.s32.totalorder %s31, %s34
    %p40 = scmp.eq.s32.totalorder %s21, 0
    %p41 = por %p39, %p40
    %p42 = scmp.ne.s32.totalorder %s31, %s34
    %p43 = scmp.eq.s32.totalorder %s26, 1
    %p44 = por %p42, %p43
    %p45 = scmp.ne.s32.totalorder %s34, %s35
    %p46 = scmp.eq.s32.totalorder %s26, 0
    %p47 = por %p45, %p46
    %p48 = scmp.ne.s32.totalorder %s34, %s35
    %p49 = scmp.eq.s32.totalorder %s27, 1
    %p50 = por %p48, %p49
    %p52 = scmp.ne.s32.totalorder %s35, %s51
    %p53 = scmp.eq.s32.totalorder %s27, 0
    %p54 = por %p52, %p53
    %s56 = sadd.s32 %s55, 1
    %p59 = scmp.eq.s32.totalorder %s21, 1
    %p60 = scmp.ne.s32.totalorder %s55, %s57
    %p61 = scmp.eq.s32.totalorder %s21, 0
    %p62 = por %p60, %p61
    %p63 = scmp.ne.s32.totalorder %s55, %s57
    %p64 = scmp.eq.s32.totalorder %s26, 1
    %p65 = por %p63, %p64
    %p66 = scmp.ne.s32.totalorder %s57, %s58
    %p67 = scmp.eq.s32.totalorder %s26, 0
    %p68 = por %p66, %p67
    %p69 = scmp.ne.s32.totalorder %s57, %s58
    %p70 = scmp.eq.s32.totalorder %s27, 1
    %p71 = por %p69, %p70
    %p73 = scmp.ne.s32.totalorder %s58, %s72
    %p74 = scmp.eq.s32.totalorder %s27, 0
    %p75 = por %p73, %p74
    %s77 = sadd.s32 %s76, 1
    %p80 = scmp.eq.s32.totalorder %s21, 1
    %p81 = scmp.ne.s32.totalorder %s76, %s78
    %p82 = scmp.eq.s32.totalorder %s21, 0
    %p83 = por %p81, %p82
    %p84 = scmp.ne.s32.totalorder %s76, %s78
    %p85 = scmp.eq.s32.totalorder %s26, 1
    %p86 = por %p84, %p85
    %p87 = scmp.ne.s32.totalorder %s78, %s79
    %p88 = scmp.eq.s32.totalorder %s26, 0
    %p89 = por %p87, %p88
    %p90 = scmp.ne.s32.totalorder %s78, %s79
    %p91 = scmp.eq.s32.totalorder %s27, 1
    %p92 = por %p90, %p91
    %p94 = scmp.ne.s32.totalorder %s79, %s93
    %p95 = scmp.eq.s32.totalorder %s27, 0
    %p96 = por %p94, %p95
    %s98 = sadd.s32 %s97, 1
    %p101 = scmp.eq.s32.totalorder %s21, 1
    %p102 = scmp.ne.s32.totalorder %s97, %s99
    %p103 = scmp.eq.s32.totalorder %s21, 0
    %p104 = por %p102, %p103
    %p105 = scmp.ne.s32.totalorder %s97, %s99
    %p106 = scmp.eq.s32.totalorder %s26, 1
    %p107 = por %p105, %p106
    %p108 = scmp.ne.s32.totalorder %s99, %s100
    %p109 = scmp.eq.s32.totalorder %s26, 0
    %p110 = por %p108, %p109
    %p111 = scmp.ne.s32.totalorder %s99, %s100
    %p112 = scmp.eq.s32.totalorder %s27, 1
    %p113 = por %p111, %p112
    %p115 = scmp.ne.s32.totalorder %s100, %s114
    %p116 = scmp.eq.s32.totalorder %s27, 0
    %p117 = por %p115, %p116
    %s119 = sadd.s32 %s118, 1
    %p122 = scmp.eq.s32.totalorder %s21, 1
    %p123 = scmp.ne.s32.totalorder %s118, %s120
    %p124 = scmp.eq.s32.totalorder %s21, 0
    %p125 = por %p123, %p124
    %p126 = scmp.ne.s32.totalorder %s118, %s120
    %p127 = scmp.eq.s32.totalorder %s26, 1
    %p128 = por %p126, %p127
    %p129 = scmp.ne.s32.totalorder %s120, %s121
    %p130 = scmp.eq.s32.totalorder %s26, 0
    %p131 = por %p129, %p130
    %p132 = scmp.ne.s32.totalorder %s120, %s121
    %p133 = scmp.eq.s32.totalorder %s27, 1
    %p134 = por %p132, %p133
    %p136 = scmp.ne.s32.totalorder %s121, %s135
    %p137 = scmp.eq.s32.totalorder %s27, 0
    %p138 = por %p136, %p137
    %s140 = sadd.s32 %s139, 1
    %p143 = scmp.eq.s32.totalorder %s21, 1
    %p144 = scmp.ne.s32.totalorder %s139, %s141
    %p145 = scmp.eq.s32.totalorder %s21, 0
    %p146 = por %p144, %p145
    %p147 = scmp.ne.s32.totalorder %s139, %s141
    %p148 = scmp.eq.s32.totalorder %s26, 1
    %p149 = por %p147, %p148
    %p150 = scmp.ne.s32.totalorder %s141, %s142
    %p151 = scmp.eq.s32.totalorder %s26, 0
    %p152 = por %p150, %p151
    %p153 = scmp.ne.s32.totalorder %s141, %s142
    %p154 = scmp.eq.s32.totalorder %s27, 1
    %p155 = por %p153, %p154
    %p157 = scmp.ne.s32.totalorder %s142, %s156
    %p158 = scmp.eq.s32.totalorder %s27, 0
    %p159 = por %p157, %p158
    %s161 = sadd.s32 %s160, 1
    %p164 = scmp.eq.s32.totalorder %s21, 1
    %p165 = scmp.ne.s32.totalorder %s160, %s162
    %p166 = scmp.eq.s32.totalorder %s21, 0
    %p167 = por %p165, %p166
    %p168 = scmp.ne.s32.totalorder %s160, %s162
    %p169 = scmp.eq.s32.totalorder %s26, 1
    %p170 = por %p168, %p169
    %p171 = scmp.ne.s32.totalorder %s162, %s163
    %p172 = scmp.eq.s32.totalorder %s26, 0
    %p173 = por %p171, %p172
    %p174 = scmp.ne.s32.totalorder %s162, %s163
    %p175 = scmp.eq.s32.totalorder %s27, 1
    %p176 = por %p174, %p175
    %p178 = scmp.ne.s32.totalorder %s163, %s177
    %p179 = scmp.eq.s32.totalorder %s27, 0
    %p180 = por %p178, %p179
    %s182 = sadd.s32 %s181, 1
    %p185 = scmp.eq.s32.totalorder %s21, 1
    %p186 = scmp.ne.s32.totalorder %s181, %s183
    %p187 = scmp.eq.s32.totalorder %s21, 0
    %p188 = por %p186, %p187
    %p189 = scmp.ne.s32.totalorder %s181, %s183
    %p190 = scmp.eq.s32.totalorder %s26, 1
    %p191 = por %p189, %p190
    %p192 = scmp.ne.s32.totalorder %s183, %s184
    %p193 = scmp.eq.s32.totalorder %s26, 0
    %p194 = por %p192, %p193
    %p195 = scmp.ne.s32.totalorder %s183, %s184
    %p196 = scmp.eq.s32.totalorder %s27, 1
    %p197 = por %p195, %p196
    %p199 = scmp.ne.s32.totalorder %s184, %s198
    %p200 = scmp.eq.s32.totalorder %s27, 0
    %p201 = por %p199, %p200
    %s203 = sadd.s32 %s202, 1
    %p206 = scmp.eq.s32.totalorder %s21, 1
    %p207 = scmp.ne.s32.totalorder %s202, %s204
    %p208 = scmp.eq.s32.totalorder %s21, 0
    %p209 = por %p207, %p208
    %p210 = scmp.ne.s32.totalorder %s202, %s204
    %p211 = scmp.eq.s32.totalorder %s26, 1
    %p212 = por %p210, %p211
    %p213 = scmp.ne.s32.totalorder %s204, %s205
    %p214 = scmp.eq.s32.totalorder %s26, 0
    %p215 = por %p213, %p214
    %p216 = scmp.ne.s32.totalorder %s204, %s205
    %p217 = scmp.eq.s32.totalorder %s27, 1
    %p218 = por %p216, %p217
    %p220 = scmp.ne.s32.totalorder %s205, %s219
    %p221 = scmp.eq.s32.totalorder %s27, 0
    %p222 = por %p220, %p221
    %s224 = sadd.s32 %s223, 1
    %p227 = scmp.eq.s32.totalorder %s21, 1
    %p228 = scmp.ne.s32.totalorder %s223, %s225
    %p229 = scmp.eq.s32.totalorder %s21, 0
    %p230 = por %p228, %p229
    %p231 = scmp.ne.s32.totalorder %s223, %s225
    %p232 = scmp.eq.s32.totalorder %s26, 1
    %p233 = por %p231, %p232
    %p234 = scmp.ne.s32.totalorder %s225, %s226
    %p235 = scmp.eq.s32.totalorder %s26, 0
    %p236 = por %p234, %p235
    %p237 = scmp.ne.s32.totalorder %s225, %s226
    %p238 = scmp.eq.s32.totalorder %s27, 1
    %p239 = por %p237, %p238
    %p241 = scmp.ne.s32.totalorder %s226, %s240
    %p242 = scmp.eq.s32.totalorder %s27, 0
    %p243 = por %p241, %p242
    %s245 = sadd.s32 %s244, 1
    %p248 = scmp.eq.s32.totalorder %s21, 1
    %p249 = scmp.ne.s32.totalorder %s244, %s246
    %p250 = scmp.eq.s32.totalorder %s21, 0
    %p251 = por %p249, %p250
    %p252 = scmp.ne.s32.totalorder %s244, %s246
    %p253 = scmp.eq.s32.totalorder %s26, 1
    %p254 = por %p252, %p253
    %p255 = scmp.ne.s32.totalorder %s246, %s247
    %p256 = scmp.eq.s32.totalorder %s26, 0
    %p257 = por %p255, %p256
    %p258 = scmp.ne.s32.totalorder %s246, %s247
    %p259 = scmp.eq.s32.totalorder %s27, 1
    %p260 = por %p258, %p259
    %p262 = scmp.ne.s32.totalorder %s247, %s261
    %p263 = scmp.eq.s32.totalorder %s27, 0
    %p264 = por %p262, %p263
    %s266 = sadd.s32 %s265, 1
    %p269 = scmp.eq.s32.totalorder %s21, 1
    %p270 = scmp.ne.s32.totalorder %s265, %s267
    %p271 = scmp.eq.s32.totalorder %s21, 0
    %p272 = por %p270, %p271
    %p273 = scmp.ne.s32.totalorder %s265, %s267
    %p274 = scmp.eq.s32.totalorder %s26, 1
    %p275 = por %p273, %p274
    %p276 = scmp.ne.s32.totalorder %s267, %s268
    %p277 = scmp.eq.s32.totalorder %s26, 0
    %p278 = por %p276, %p277
    %p279 = scmp.ne.s32.totalorder %s267, %s268
    %p280 = scmp.eq.s32.totalorder %s27, 1
    %p281 = por %p279, %p280
    %p283 = scmp.ne.s32.totalorder %s268, %s282
    %p284 = scmp.eq.s32.totalorder %s27, 0
    %p285 = por %p283, %p284
    %s287 = sadd.s32 %s286, 1
    %p290 = scmp.eq.s32.totalorder %s21, 1
    %p291 = scmp.ne.s32.totalorder %s286, %s288
    %p292 = scmp.eq.s32.totalorder %s21, 0
    %p293 = por %p291, %p292
    %p294 = scmp.ne.s32.totalorder %s286, %s288
    %p295 = scmp.eq.s32.totalorder %s26, 1
    %p296 = por %p294, %p295
    %p297 = scmp.ne.s32.totalorder %s288, %s289
    %p298 = scmp.eq.s32.totalorder %s26, 0
    %p299 = por %p297, %p298
    %p300 = scmp.ne.s32.totalorder %s288, %s289
    %p301 = scmp.eq.s32.totalorder %s27, 1
    %p302 = por %p300, %p301
    %p304 = scmp.ne.s32.totalorder %s289, %s303
    %p305 = scmp.eq.s32.totalorder %s27, 0
    %p306 = por %p304, %p305
    %s308 = sadd.s32 %s307, 1
    %p311 = scmp.eq.s32.totalorder %s21, 1
    %p312 = scmp.ne.s32.totalorder %s307, %s309
    %p313 = scmp.eq.s32.totalorder %s21, 0
    %p314 = por %p312, %p313
    %p315 = scmp.ne.s32.totalorder %s307, %s309
    %p316 = scmp.eq.s32.totalorder %s26, 1
    %p317 = por %p315, %p316
    %p318 = scmp.ne.s32.totalorder %s309, %s310
    %p319 = scmp.eq.s32.totalorder %s26, 0
    %p320 = por %p318, %p319
    %p321 = scmp.ne.s32.totalorder %s309, %s310
    %p322 = scmp.eq.s32.totalorder %s27, 1
    %p323 = por %p321, %p322
    %p325 = scmp.ne.s32.totalorder %s310, %s324
    %p326 = scmp.eq.s32.totalorder %s27, 0
    %p327 = por %p325, %p326
    %s329 = sadd.s32 %s328, 1
    %p332 = scmp.eq.s32.totalorder %s21, 1
    %p333 = scmp.ne.s32.totalorder %s328, %s330
    %p334 = scmp.eq.s32.totalorder %s21, 0
    %p335 = por %p333, %p334
    %p336 = scmp.ne.s32.totalorder %s328, %s330
    %p337 = scmp.eq.s32.totalorder %s26, 1
    %p338 = por %p336, %p337
    %p339 = scmp.ne.s32.totalorder %s330, %s331
    %p340 = scmp.eq.s32.totalorder %s26, 0
    %p341 = por %p339, %p340
    %p342 = scmp.ne.s32.totalorder %s330, %s331
    %p343 = scmp.eq.s32.totalorder %s27, 1
    %p344 = por %p342, %p343
    %p346 = scmp.ne.s32.totalorder %s331, %s345
    %p347 = scmp.eq.s32.totalorder %s27, 0
    %p348 = por %p346, %p347
    %s349 = ssub.s32 %s21, %s28
    %p350 = scmp.eq.s32.totalorder %s349, 0
    %s352 = sadd.s32 %s351, 1
    %s353 = scalar_select %p350, %s351, %s352
    %p356 = pneg %p350
    %p357 = scmp.eq.s32.totalorder %s21, 1
    %p358 = por %p356, %p357
    %p359 = scmp.ne.s32.totalorder %s351, %s354
    %p360 = scmp.eq.s32.totalorder %s21, 0
    %p361 = por %p359, %p360
    %p362 = scmp.ne.s32.totalorder %s351, %s354
    %p363 = scmp.eq.s32.totalorder %s26, 1
    %p364 = por %p362, %p363
    %p365 = scmp.ne.s32.totalorder %s354, %s355
    %p366 = scmp.eq.s32.totalorder %s26, 0
    %p367 = por %p365, %p366
    %p368 = scmp.ne.s32.totalorder %s354, %s355
    %p369 = scmp.eq.s32.totalorder %s27, 1
    %p370 = por %p368, %p369
    %p372 = scmp.ne.s32.totalorder %s355, %s371
    %p373 = scmp.eq.s32.totalorder %s27, 0
    %p374 = por %p372, %p373
    %p375 = scmp.le.s32.totalorder 1, %s21
    %p376 = scmp.lt.s32.totalorder %s21, 3
    %p377 = pnand %p375, %p376
    %p378 = pneg %p377
    // Predicated region
    $region9: #{unet_forward.1} parent=5 // pred_check
      _
    $region10: #{unet_forward.1} parent=5 // pred_check_branch
      %380 = sbr.rel (%p377) target = $region12
    $region11: #{unet_forward.1} parent=5 // pred_region
      %s381 = ssub.s32 %s21, 1
      // Predicated region
      $region13: #{unet_forward.1} parent=11 // pred_check
        %p382 = pneg %p68
      $region14: #{unet_forward.1} parent=11 // pred_check_branch
        %384 = sbr.rel (%p382) target = $region16
      $region15: #{unet_forward.1} parent=11 // pred_region
        _
      $region16: #{unet_forward.1} parent=11 // pred_fallthru
        _
      // Predicated region
      $region17: #{unet_forward.1} parent=11 // pred_check
        %p385 = pneg %p89
      $region18: #{unet_forward.1} parent=11 // pred_check_branch
        %387 = sbr.rel (%p385) target = $region20
      $region19: #{unet_forward.1} parent=11 // pred_region
        _
      $region20: #{unet_forward.1} parent=11 // pred_fallthru
        _
      // Predicated region
      $region21: #{unet_forward.1} parent=11 // pred_check
        %p388 = pneg %p110
      $region22: #{unet_forward.1} parent=11 // pred_check_branch
        %390 = sbr.rel (%p388) target = $region24
      $region23: #{unet_forward.1} parent=11 // pred_region
        _
      $region24: #{unet_forward.1} parent=11 // pred_fallthru
        _
      // Predicated region
      $region25: #{unet_forward.1} parent=11 // pred_check
        %p391 = pneg %p131
      $region26: #{unet_forward.1} parent=11 // pred_check_branch
        %393 = sbr.rel (%p391) target = $region28
      $region27: #{unet_forward.1} parent=11 // pred_region
        _
      $region28: #{unet_forward.1} parent=11 // pred_fallthru
        _
      // Predicated region
      $region29: #{unet_forward.1} parent=11 // pred_check
        %p394 = pneg %p152
      $region30: #{unet_forward.1} parent=11 // pred_check_branch
        %396 = sbr.rel (%p394) target = $region32
      $region31: #{unet_forward.1} parent=11 // pred_region
        _
      $region32: #{unet_forward.1} parent=11 // pred_fallthru
        _
      // Predicated region
      $region33: #{unet_forward.1} parent=11 // pred_check
        %p397 = pneg %p173
      $region34: #{unet_forward.1} parent=11 // pred_check_branch
        %399 = sbr.rel (%p397) target = $region36
      $region35: #{unet_forward.1} parent=11 // pred_region
        _
      $region36: #{unet_forward.1} parent=11 // pred_fallthru
        _
      // Predicated region
      $region37: #{unet_forward.1} parent=11 // pred_check
        %p400 = pneg %p194
      $region38: #{unet_forward.1} parent=11 // pred_check_branch
        %402 = sbr.rel (%p400) target = $region40
      $region39: #{unet_forward.1} parent=11 // pred_region
        _
      $region40: #{unet_forward.1} parent=11 // pred_fallthru
        _
      // Predicated region
      $region41: #{unet_forward.1} parent=11 // pred_check
        %p403 = pneg %p215
      $region42: #{unet_forward.1} parent=11 // pred_check_branch
        %405 = sbr.rel (%p403) target = $region44
      $region43: #{unet_forward.1} parent=11 // pred_region
        _
      $region44: #{unet_forward.1} parent=11 // pred_fallthru
        _
      // Predicated region
      $region45: #{unet_forward.1} parent=11 // pred_check
        %p406 = pneg %p236
      $region46: #{unet_forward.1} parent=11 // pred_check_branch
        %408 = sbr.rel (%p406) target = $region48
      $region47: #{unet_forward.1} parent=11 // pred_region
        _
      $region48: #{unet_forward.1} parent=11 // pred_fallthru
        _
      // Predicated region
      $region49: #{unet_forward.1} parent=11 // pred_check
        %p409 = pneg %p257
      $region50: #{unet_forward.1} parent=11 // pred_check_branch
        %411 = sbr.rel (%p409) target = $region52
      $region51: #{unet_forward.1} parent=11 // pred_region
        _
      $region52: #{unet_forward.1} parent=11 // pred_fallthru
        _
      // Predicated region
      $region53: #{unet_forward.1} parent=11 // pred_check
        %p412 = pneg %p278
      $region54: #{unet_forward.1} parent=11 // pred_check_branch
        %414 = sbr.rel (%p412) target = $region56
      $region55: #{unet_forward.1} parent=11 // pred_region
        _
      $region56: #{unet_forward.1} parent=11 // pred_fallthru
        _
      // Predicated region
      $region57: #{unet_forward.1} parent=11 // pred_check
        %p415 = pneg %p299
      $region58: #{unet_forward.1} parent=11 // pred_check_branch
        %417 = sbr.rel (%p415) target = $region60
      $region59: #{unet_forward.1} parent=11 // pred_region
        _
      $region60: #{unet_forward.1} parent=11 // pred_fallthru
        _
      // Predicated region
      $region61: #{unet_forward.1} parent=11 // pred_check
        %p418 = pneg %p320
      $region62: #{unet_forward.1} parent=11 // pred_check_branch
        %420 = sbr.rel (%p418) target = $region64
      $region63: #{unet_forward.1} parent=11 // pred_region
        _
      $region64: #{unet_forward.1} parent=11 // pred_fallthru
        _
      // Predicated region
      $region65: #{unet_forward.1} parent=11 // pred_check
        %p421 = pneg %p341
      $region66: #{unet_forward.1} parent=11 // pred_check_branch
        %423 = sbr.rel (%p421) target = $region68
      $region67: #{unet_forward.1} parent=11 // pred_region
        _
      $region68: #{unet_forward.1} parent=11 // pred_fallthru
        _
    $region12: #{unet_forward.1} parent=5 // pred_fallthru
      _
    %p424 = scmp.lt.s32.totalorder %s21, 2
    // Predicated region
    $region69: #{unet_forward.1} parent=5 // pred_check
      %p425 = pneg %p424
    $region70: #{unet_forward.1} parent=5 // pred_check_branch
      %427 = sbr.rel (%p425) target = $region72
    $region71: #{unet_forward.1} parent=5 // pred_region
      // Predicated region
      $region73: #{unet_forward.1} parent=71 // pred_check
        %p428 = pneg %p41
      $region74: #{unet_forward.1} parent=71 // pred_check_branch
        %430 = sbr.rel (%p428) target = $region76
      $region75: #{unet_forward.1} parent=71 // pred_region
        %p431 = scmp.lt.s32.totalorder %s21, 1
        %s432 = scalar_select %p431, %s21, 1
        %s433 = smul.addr %s432, 32
        %s434 = smul.addr %s433, 8
        %s435 = scalar_lea.vmem %s0, %s434
      $region76: #{unet_forward.1} parent=71 // pred_fallthru
        _
    $region72: #{unet_forward.1} parent=5 // pred_fallthru
      _
    %p436 = scmp.le.s32.totalorder 1, %s21
    %p437 = scmp.lt.s32.totalorder %s21, 3
    %p438 = pnand %p436, %p437
    %p439 = pneg %p438
    // Predicated region
    $region77: #{unet_forward.1} parent=5 // pred_check
      _
    $region78: #{unet_forward.1} parent=5 // pred_check_branch
      %441 = sbr.rel (%p438) target = $region80
    $region79: #{unet_forward.1} parent=5 // pred_region
      %s442 = ssub.s32 %s21, 1
      %p443 = scmp.lt.s32.totalorder %s26, 1
      %s444 = scalar_select %p443, %s26, 1
      %s445 = smul.addr %s444, 32
      %s446 = smul.addr %s445, 8
      %s447 = scalar_lea.vmem %s0, %s446
      %p448 = pneg %p47
      %p449 = pneg %p44
      %p450 = pneg %p68
      %p451 = pneg %p65
      %p452 = pneg %p89
      %p453 = pneg %p86
      %p454 = pneg %p110
      %p455 = pneg %p107
      %p456 = pneg %p131
      %p457 = pneg %p128
      %p458 = pneg %p152
      %p459 = pneg %p149
      %p460 = pneg %p173
      %p461 = pneg %p170
      %p462 = pneg %p194
      %p463 = pneg %p191
      %p464 = pneg %p215
      %p465 = pneg %p212
      %p466 = pneg %p236
      %p467 = pneg %p233
      %p468 = pneg %p257
      %p469 = pneg %p254
      %p470 = pneg %p278
      %p471 = pneg %p275
      %p472 = pneg %p299
      %p473 = pneg %p296
      %p474 = pneg %p320
      %p475 = pneg %p317
      %p476 = pneg %p341
      %p477 = pneg %p338
      %p478 = pneg %p367
      %p479 = pneg %p364
      %p480 = scmp.lt.s32.totalorder %s26, 1
      %s481 = scalar_select %p480, %s26, 1
      %s482 = smul.addr %s481, 32
      %s483 = smul.addr %s482, 8
      %s484 = scalar_lea.vmem %s15, %s483
      %p485 = scmp.lt.s32.totalorder %s26, 1
      %s486 = scalar_select %p485, %s26, 1
      %s487 = smul.addr %s486, 32
      %s488 = smul.addr %s487, 8
      %s489 = scalar_lea.vmem %s0, %s488
      %p490 = scmp.lt.s32.totalorder %s26, 1
      %s491 = scalar_select %p490, %s26, 1
      %s492 = smul.addr %s491, 32
      %s493 = smul.addr %s492, 8
      %s494 = scalar_lea.vmem %s15, %s493
      %vm496 = vcmask 31744
      %497 = vst.msk [vmem:[#allocation3] sm:$0xff] %vm496, 0.0
      %498 = vst.msk [vmem:[#allocation3 + $0x8] sm:$0xff] %vm496, 0.0
      %vm499 = vcmask 25600
      %500 = vst.msk [vmem:[#allocation3 + $0x10] sm:$0x3] %vm499, 0.0
      %501 = vst.msk [vmem:[#allocation3 + $0x18] sm:$0xff] %vm496, 0.0
      %502 = vst.msk [vmem:[#allocation3 + $0x20] sm:$0xff] %vm496, 0.0
      %503 = vst.msk [vmem:[#allocation3 + $0x28] sm:$0x3] %vm499, 0.0
      %504 = vst.msk [vmem:[#allocation3 + $0x30] sm:$0xff] %vm496, 0.0
      %505 = vst.msk [vmem:[#allocation3 + $0x38] sm:$0xff] %vm496, 0.0
      %506 = vst.msk [vmem:[#allocation3 + $0x40] sm:$0x3] %vm499, 0.0
      %507 = vst.msk [vmem:[#allocation3 + $0x48] sm:$0xff] %vm496, 0.0
      %508 = vst.msk [vmem:[#allocation3 + $0x50] sm:$0xff] %vm496, 0.0
      %509 = vst.msk [vmem:[#allocation3 + $0x58] sm:$0x3] %vm499, 0.0
      %510 = vst.msk [vmem:[#allocation3 + $0x60] sm:$0xff] %vm496, 0.0
      %511 = vst.msk [vmem:[#allocation3 + $0x68] sm:$0xff] %vm496, 0.0
      %512 = vst.msk [vmem:[#allocation3 + $0x70] sm:$0x3] %vm499, 0.0
      %513 = vst.msk [vmem:[#allocation3 + $0x78] sm:$0xff] %vm496, 0.0
      %514 = vst.msk [vmem:[#allocation3 + $0x80] sm:$0xff] %vm496, 0.0
      %515 = vst.msk [vmem:[#allocation3 + $0x88] sm:$0x3] %vm499, 0.0
      %516 = vst.msk [vmem:[#allocation3 + $0x90] sm:$0xff] %vm496, 0.0
      %517 = vst.msk [vmem:[#allocation3 + $0x98] sm:$0xff] %vm496, 0.0
      %518 = vst.msk [vmem:[#allocation3 + $0xa0] sm:$0x3] %vm499, 0.0
      %519 = vst.msk [vmem:[#allocation3 + $0xa8] sm:$0xff] %vm496, 0.0
      %520 = vst.msk [vmem:[#allocation3 + $0xb0] sm:$0xff] %vm496, 0.0
      %521 = vst.msk [vmem:[#allocation3 + $0xb8] sm:$0x3] %vm499, 0.0
      %522 = vst.msk [vmem:[#allocation3 + $0xc0] sm:$0xff] %vm496, 0.0
      %523 = vst.msk [vmem:[#allocation3 + $0xc8] sm:$0xff] %vm496, 0.0
      %524 = vst.msk [vmem:[#allocation3 + $0xd0] sm:$0x3] %vm499, 0.0
      %525 = vst.msk [vmem:[#allocation3 + $0xd8] sm:$0xff] %vm496, 0.0
      %526 = vst.msk [vmem:[#allocation3 + $0xe0] sm:$0xff] %vm496, 0.0
      %527 = vst.msk [vmem:[#allocation3 + $0xe8] sm:$0x3] %vm499, 0.0
      %528 = vst.msk [vmem:[#allocation3 + $0xf0] sm:$0xff] %vm496, 0.0
      %529 = vst.msk [vmem:[#allocation3 + $0xf8] sm:$0xff] %vm496, 0.0
      %530 = vst.msk [vmem:[#allocation3 + $0x100] sm:$0x3] %vm499, 0.0
      %531 = vst.msk [vmem:[#allocation3 + $0x108] sm:$0xff] %vm496, 0.0
      %532 = vst.msk [vmem:[#allocation3 + $0x110] sm:$0xff] %vm496, 0.0
      %533 = vst.msk [vmem:[#allocation3 + $0x118] sm:$0x3] %vm499, 0.0
      %534 = vst.msk [vmem:[#allocation3 + $0x120] sm:$0xff] %vm496, 0.0
      %535 = vst.msk [vmem:[#allocation3 + $0x128] sm:$0xff] %vm496, 0.0
      %536 = vst.msk [vmem:[#allocation3 + $0x130] sm:$0x3] %vm499, 0.0
      %537 = vst.msk [vmem:[#allocation3 + $0x138] sm:$0xff] %vm496, 0.0
      %538 = vst.msk [vmem:[#allocation3 + $0x140] sm:$0xff] %vm496, 0.0
      %539 = vst.msk [vmem:[#allocation3 + $0x148] sm:$0x3] %vm499, 0.0
      %540 = vst.msk [vmem:[#allocation3 + $0x150] sm:$0xff] %vm496, 0.0
      %541 = vst.msk [vmem:[#allocation3 + $0x158] sm:$0xff] %vm496, 0.0
      %542 = vst.msk [vmem:[#allocation3 + $0x160] sm:$0x3] %vm499, 0.0
      %543 = vst.msk [vmem:[#allocation3 + $0x168] sm:$0xff] %vm496, 0.0
      %544 = vst.msk [vmem:[#allocation3 + $0x170] sm:$0xff] %vm496, 0.0
      %545 = vst.msk [vmem:[#allocation3 + $0x178] sm:$0x3] %vm499, 0.0
      %546 = vst.msk [vmem:[#allocation3 + $0x180] sm:$0xff] %vm496, 0.0
      %547 = vst.msk [vmem:[#allocation3 + $0x188] sm:$0xff] %vm496, 0.0
      %548 = vst.msk [vmem:[#allocation3 + $0x190] sm:$0x3] %vm499, 0.0
      %549 = vst.msk [vmem:[#allocation3 + $0x198] sm:$0xff] %vm496, 0.0
      %550 = vst.msk [vmem:[#allocation3 + $0x1a0] sm:$0xff] %vm496, 0.0
      %551 = vst.msk [vmem:[#allocation3 + $0x1a8] sm:$0x3] %vm499, 0.0
      %vm552 = vcmask 64512
      %553 = vst.msk [vmem:[#allocation4] sm:$0xff] %vm552, 0.0
      %554 = vst.msk [vmem:[#allocation4 + $0x8] sm:$0xff] %vm552, 0.0
      %vm555 = vcmask 58368
      %556 = vst.msk [vmem:[#allocation4 + $0x10] sm:$0x3] %vm555, 0.0
      %557 = vst.msk [vmem:[#allocation4 + $0x18] sm:$0xff] %vm552, 0.0
      %558 = vst.msk [vmem:[#allocation4 + $0x20] sm:$0xff] %vm552, 0.0
      %559 = vst.msk [vmem:[#allocation4 + $0x28] sm:$0x3] %vm555, 0.0
      %560 = vst.msk [vmem:[#allocation4 + $0x30] sm:$0xff] %vm552, 0.0
      %561 = vst.msk [vmem:[#allocation4 + $0x38] sm:$0xff] %vm552, 0.0
      %562 = vst.msk [vmem:[#allocation4 + $0x40] sm:$0x3] %vm555, 0.0
      %563 = vst.msk [vmem:[#allocation4 + $0x48] sm:$0xff] %vm552, 0.0
      %564 = vst.msk [vmem:[#allocation4 + $0x50] sm:$0xff] %vm552, 0.0
      %565 = vst.msk [vmem:[#allocation4 + $0x58] sm:$0x3] %vm555, 0.0
      %566 = vst.msk [vmem:[#allocation4 + $0x60] sm:$0xff] %vm552, 0.0
      %567 = vst.msk [vmem:[#allocation4 + $0x68] sm:$0xff] %vm552, 0.0
      %568 = vst.msk [vmem:[#allocation4 + $0x70] sm:$0x3] %vm555, 0.0
      %569 = vst.msk [vmem:[#allocation4 + $0x78] sm:$0xff] %vm552, 0.0
      %570 = vst.msk [vmem:[#allocation4 + $0x80] sm:$0xff] %vm552, 0.0
      %571 = vst.msk [vmem:[#allocation4 + $0x88] sm:$0x3] %vm555, 0.0
      %572 = vst.msk [vmem:[#allocation4 + $0x90] sm:$0xff] %vm552, 0.0
      %573 = vst.msk [vmem:[#allocation4 + $0x98] sm:$0xff] %vm552, 0.0
      %574 = vst.msk [vmem:[#allocation4 + $0xa0] sm:$0x3] %vm555, 0.0
      %575 = vst.msk [vmem:[#allocation4 + $0xa8] sm:$0xff] %vm552, 0.0
      %576 = vst.msk [vmem:[#allocation4 + $0xb0] sm:$0xff] %vm552, 0.0
      %577 = vst.msk [vmem:[#allocation4 + $0xb8] sm:$0x3] %vm555, 0.0
      %578 = vst.msk [vmem:[#allocation4 + $0xc0] sm:$0xff] %vm552, 0.0
      %579 = vst.msk [vmem:[#allocation4 + $0xc8] sm:$0xff] %vm552, 0.0
      %580 = vst.msk [vmem:[#allocation4 + $0xd0] sm:$0x3] %vm555, 0.0
      %581 = vst.msk [vmem:[#allocation4 + $0xd8] sm:$0xff] %vm552, 0.0
      %582 = vst.msk [vmem:[#allocation4 + $0xe0] sm:$0xff] %vm552, 0.0
      %583 = vst.msk [vmem:[#allocation4 + $0xe8] sm:$0x3] %vm555, 0.0
      %584 = vst.msk [vmem:[#allocation4 + $0xf0] sm:$0xff] %vm552, 0.0
      %585 = vst.msk [vmem:[#allocation4 + $0xf8] sm:$0xff] %vm552, 0.0
      %586 = vst.msk [vmem:[#allocation4 + $0x100] sm:$0x3] %vm555, 0.0
      %587 = vst.msk [vmem:[#allocation4 + $0x108] sm:$0xff] %vm552, 0.0
      %588 = vst.msk [vmem:[#allocation4 + $0x110] sm:$0xff] %vm552, 0.0
      %589 = vst.msk [vmem:[#allocation4 + $0x118] sm:$0x3] %vm555, 0.0
      %590 = vst.msk [vmem:[#allocation4 + $0x120] sm:$0xff] %vm552, 0.0
      %591 = vst.msk [vmem:[#allocation4 + $0x128] sm:$0xff] %vm552, 0.0
      %592 = vst.msk [vmem:[#allocation4 + $0x130] sm:$0x3] %vm555, 0.0
      %593 = vst.msk [vmem:[#allocation4 + $0x138] sm:$0xff] %vm552, 0.0
      %594 = vst.msk [vmem:[#allocation4 + $0x140] sm:$0xff] %vm552, 0.0
      %595 = vst.msk [vmem:[#allocation4 + $0x148] sm:$0x3] %vm555, 0.0
      %596 = vst.msk [vmem:[#allocation4 + $0x150] sm:$0xff] %vm552, 0.0
      %597 = vst.msk [vmem:[#allocation4 + $0x158] sm:$0xff] %vm552, 0.0
      %598 = vst.msk [vmem:[#allocation4 + $0x160] sm:$0x3] %vm555, 0.0
      %599 = vst.msk [vmem:[#allocation4 + $0x168] sm:$0xff] %vm552, 0.0
      %600 = vst.msk [vmem:[#allocation4 + $0x170] sm:$0xff] %vm552, 0.0
      %601 = vst.msk [vmem:[#allocation4 + $0x178] sm:$0x3] %vm555, 0.0
      %602 = vst.msk [vmem:[#allocation4 + $0x180] sm:$0xff] %vm552, 0.0
      %603 = vst.msk [vmem:[#allocation4 + $0x188] sm:$0xff] %vm552, 0.0
      %604 = vst.msk [vmem:[#allocation4 + $0x190] sm:$0x3] %vm555, 0.0
      %605 = vst.msk [vmem:[#allocation4 + $0x198] sm:$0xff] %vm552, 0.0
      %606 = vst.msk [vmem:[#allocation4 + $0x1a0] sm:$0xff] %vm552, 0.0
      %607 = vst.msk [vmem:[#allocation4 + $0x1a8] sm:$0x3] %vm555, 0.0
      %608 = vst.msk [vmem:[#allocation5] sm:$0xff] %vm552, 0.0
      %609 = vst.msk [vmem:[#allocation5 + $0x8] sm:$0x3] %vm555, 0.0
      %610 = vst.msk [vmem:[#allocation5 + $0x10] sm:$0xff] %vm552, 0.0
      %611 = vst.msk [vmem:[#allocation5 + $0x18] sm:$0x3] %vm555, 0.0
      %612 = vst.msk [vmem:[#allocation5 + $0x20] sm:$0xff] %vm552, 0.0
      %613 = vst.msk [vmem:[#allocation5 + $0x28] sm:$0x3] %vm555, 0.0
      %614 = vst.msk [vmem:[#allocation5 + $0x30] sm:$0xff] %vm552, 0.0
      %615 = vst.msk [vmem:[#allocation5 + $0x38] sm:$0x3] %vm555, 0.0
      %616 = vst.msk [vmem:[#allocation5 + $0x40] sm:$0xff] %vm552, 0.0
      %617 = vst.msk [vmem:[#allocation5 + $0x48] sm:$0x3] %vm555, 0.0
      %618 = vst.msk [vmem:[#allocation5 + $0x50] sm:$0xff] %vm552, 0.0
      %619 = vst.msk [vmem:[#allocation5 + $0x58] sm:$0x3] %vm555, 0.0
      %620 = vst.msk [vmem:[#allocation5 + $0x60] sm:$0xff] %vm552, 0.0
      %621 = vst.msk [vmem:[#allocation5 + $0x68] sm:$0x3] %vm555, 0.0
      %622 = vst.msk [vmem:[#allocation5 + $0x70] sm:$0xff] %vm552, 0.0
      %623 = vst.msk [vmem:[#allocation5 + $0x78] sm:$0x3] %vm555, 0.0
      %624 = vst.msk [vmem:[#allocation5 + $0x80] sm:$0xff] %vm552, 0.0
      %625 = vst.msk [vmem:[#allocation5 + $0x88] sm:$0x3] %vm555, 0.0
      %626 = vst.msk [vmem:[#allocation5 + $0x90] sm:$0xff] %vm552, 0.0
      %627 = vst.msk [vmem:[#allocation5 + $0x98] sm:$0x3] %vm555, 0.0
      %vm628 = vcmask 130048
      %629 = vst.msk [vmem:[#allocation6] sm:$0xff] %vm628, 0.0
      %vm630 = vcmask 123904
      %631 = vst.msk [vmem:[#allocation6 + $0x8] sm:$0x3] %vm630, 0.0
      %632 = vst.msk [vmem:[#allocation6 + $0x10] sm:$0xff] %vm628, 0.0
      %633 = vst.msk [vmem:[#allocation6 + $0x18] sm:$0x3] %vm630, 0.0
      %634 = vst.msk [vmem:[#allocation6 + $0x20] sm:$0xff] %vm628, 0.0
      %635 = vst.msk [vmem:[#allocation6 + $0x28] sm:$0x3] %vm630, 0.0
      %636 = vst.msk [vmem:[#allocation6 + $0x30] sm:$0xff] %vm628, 0.0
      %637 = vst.msk [vmem:[#allocation6 + $0x38] sm:$0x3] %vm630, 0.0
      %638 = vst.msk [vmem:[#allocation6 + $0x40] sm:$0xff] %vm628, 0.0
      %639 = vst.msk [vmem:[#allocation6 + $0x48] sm:$0x3] %vm630, 0.0
      %640 = vst.msk [vmem:[#allocation6 + $0x50] sm:$0xff] %vm628, 0.0
      %641 = vst.msk [vmem:[#allocation6 + $0x58] sm:$0x3] %vm630, 0.0
      %642 = vst.msk [vmem:[#allocation6 + $0x60] sm:$0xff] %vm628, 0.0
      %643 = vst.msk [vmem:[#allocation6 + $0x68] sm:$0x3] %vm630, 0.0
      %644 = vst.msk [vmem:[#allocation6 + $0x70] sm:$0xff] %vm628, 0.0
      %645 = vst.msk [vmem:[#allocation6 + $0x78] sm:$0x3] %vm630, 0.0
      %646 = vst.msk [vmem:[#allocation6 + $0x80] sm:$0xff] %vm628, 0.0
      %647 = vst.msk [vmem:[#allocation6 + $0x88] sm:$0x3] %vm630, 0.0
      %648 = vst.msk [vmem:[#allocation6 + $0x90] sm:$0xff] %vm628, 0.0
      %649 = vst.msk [vmem:[#allocation6 + $0x98] sm:$0x3] %vm630, 0.0
      %vm650 = vcmask 128000
      %651 = vst.msk [vmem:[#allocation7] sm:$0x3f] %vm650, 0.0
      %652 = vst.msk [vmem:[#allocation7 + $0x8] sm:$0x3f] %vm650, 0.0
      %653 = vst.msk [vmem:[#allocation7 + $0x10] sm:$0x3f] %vm650, 0.0
      %654 = vst.msk [vmem:[#allocation7 + $0x18] sm:$0x3f] %vm650, 0.0
      %655 = vst.msk [vmem:[#allocation7 + $0x20] sm:$0x3f] %vm650, 0.0
      %656 = vst.msk [vmem:[#allocation7 + $0x28] sm:$0x3f] %vm650, 0.0
      %vm657 = vcmask 259072
      %658 = vst.msk [vmem:[#allocation8] sm:$0x3f] %vm657, 0.0
      %659 = vst.msk [vmem:[#allocation8 + $0x8] sm:$0x3f] %vm657, 0.0
      %660 = vst.msk [vmem:[#allocation8 + $0x10] sm:$0x3f] %vm657, 0.0
      %661 = vst.msk [vmem:[#allocation8 + $0x18] sm:$0x3f] %vm657, 0.0
      %662 = vst.msk [vmem:[#allocation8 + $0x20] sm:$0x3f] %vm657, 0.0
      %663 = vst.msk [vmem:[#allocation8 + $0x28] sm:$0x3f] %vm657, 0.0
      %664 = vst.msk [vmem:[#allocation10] sm:$0xff] %vm628, 0.0
      %665 = vst.msk [vmem:[#allocation10 + $0x8] sm:$0x3] %vm630, 0.0
      %666 = vst.msk [vmem:[#allocation10 + $0x10] sm:$0xff] %vm628, 0.0
      %667 = vst.msk [vmem:[#allocation10 + $0x18] sm:$0x3] %vm630, 0.0
      %668 = vst.msk [vmem:[#allocation10 + $0x20] sm:$0xff] %vm628, 0.0
      %669 = vst.msk [vmem:[#allocation10 + $0x28] sm:$0x3] %vm630, 0.0
      %670 = vst.msk [vmem:[#allocation10 + $0x30] sm:$0xff] %vm628, 0.0
      %671 = vst.msk [vmem:[#allocation10 + $0x38] sm:$0x3] %vm630, 0.0
      %672 = vst.msk [vmem:[#allocation10 + $0x40] sm:$0xff] %vm628, 0.0
      %673 = vst.msk [vmem:[#allocation10 + $0x48] sm:$0x3] %vm630, 0.0
      %674 = vst.msk [vmem:[#allocation10 + $0x50] sm:$0xff] %vm628, 0.0
      %675 = vst.msk [vmem:[#allocation10 + $0x58] sm:$0x3] %vm630, 0.0
      %676 = vst.msk [vmem:[#allocation10 + $0x60] sm:$0xff] %vm628, 0.0
      %677 = vst.msk [vmem:[#allocation10 + $0x68] sm:$0x3] %vm630, 0.0
      %678 = vst.msk [vmem:[#allocation10 + $0x70] sm:$0xff] %vm628, 0.0
      %679 = vst.msk [vmem:[#allocation10 + $0x78] sm:$0x3] %vm630, 0.0
      %680 = vst.msk [vmem:[#allocation10 + $0x80] sm:$0xff] %vm628, 0.0
      %681 = vst.msk [vmem:[#allocation10 + $0x88] sm:$0x3] %vm630, 0.0
      %682 = vst.msk [vmem:[#allocation10 + $0x90] sm:$0xff] %vm628, 0.0
      %683 = vst.msk [vmem:[#allocation10 + $0x98] sm:$0x3] %vm630, 0.0
      %684 = vst.msk [vmem:[#allocation11] sm:$0xff] %vm628, 0.0
      %685 = vst.msk [vmem:[#allocation11 + $0x8] sm:$0x3] %vm630, 0.0
      %686 = vst.msk [vmem:[#allocation11 + $0x10] sm:$0xff] %vm628, 0.0
      %687 = vst.msk [vmem:[#allocation11 + $0x18] sm:$0x3] %vm630, 0.0
      %688 = vst.msk [vmem:[#allocation11 + $0x20] sm:$0xff] %vm628, 0.0
      %689 = vst.msk [vmem:[#allocation11 + $0x28] sm:$0x3] %vm630, 0.0
      %690 = vst.msk [vmem:[#allocation11 + $0x30] sm:$0xff] %vm628, 0.0
      %691 = vst.msk [vmem:[#allocation11 + $0x38] sm:$0x3] %vm630, 0.0
      %692 = vst.msk [vmem:[#allocation11 + $0x40] sm:$0xff] %vm628, 0.0
      %693 = vst.msk [vmem:[#allocation11 + $0x48] sm:$0x3] %vm630, 0.0
      %694 = vst.msk [vmem:[#allocation11 + $0x50] sm:$0xff] %vm628, 0.0
      %695 = vst.msk [vmem:[#allocation11 + $0x58] sm:$0x3] %vm630, 0.0
      %696 = vst.msk [vmem:[#allocation11 + $0x60] sm:$0xff] %vm628, 0.0
      %697 = vst.msk [vmem:[#allocation11 + $0x68] sm:$0x3] %vm630, 0.0
      %698 = vst.msk [vmem:[#allocation11 + $0x70] sm:$0xff] %vm628, 0.0
      %699 = vst.msk [vmem:[#allocation11 + $0x78] sm:$0x3] %vm630, 0.0
      %700 = vst.msk [vmem:[#allocation11 + $0x80] sm:$0xff] %vm628, 0.0
      %701 = vst.msk [vmem:[#allocation11 + $0x88] sm:$0x3] %vm630, 0.0
      %702 = vst.msk [vmem:[#allocation11 + $0x90] sm:$0xff] %vm628, 0.0
      %703 = vst.msk [vmem:[#allocation11 + $0x98] sm:$0x3] %vm630, 0.0
      %704 = vst.msk [vmem:[#allocation13] sm:$0xff] %vm552, 0.0
      %705 = vst.msk [vmem:[#allocation13 + $0x8] sm:$0xff] %vm552, 0.0
      %706 = vst.msk [vmem:[#allocation13 + $0x10] sm:$0x3] %vm555, 0.0
      %707 = vst.msk [vmem:[#allocation13 + $0x18] sm:$0xff] %vm552, 0.0
      %708 = vst.msk [vmem:[#allocation13 + $0x20] sm:$0xff] %vm552, 0.0
      %709 = vst.msk [vmem:[#allocation13 + $0x28] sm:$0x3] %vm555, 0.0
      %710 = vst.msk [vmem:[#allocation13 + $0x30] sm:$0xff] %vm552, 0.0
      %711 = vst.msk [vmem:[#allocation13 + $0x38] sm:$0xff] %vm552, 0.0
      %712 = vst.msk [vmem:[#allocation13 + $0x40] sm:$0x3] %vm555, 0.0
      %713 = vst.msk [vmem:[#allocation13 + $0x48] sm:$0xff] %vm552, 0.0
      %714 = vst.msk [vmem:[#allocation13 + $0x50] sm:$0xff] %vm552, 0.0
      %715 = vst.msk [vmem:[#allocation13 + $0x58] sm:$0x3] %vm555, 0.0
      %716 = vst.msk [vmem:[#allocation13 + $0x60] sm:$0xff] %vm552, 0.0
      %717 = vst.msk [vmem:[#allocation13 + $0x68] sm:$0xff] %vm552, 0.0
      %718 = vst.msk [vmem:[#allocation13 + $0x70] sm:$0x3] %vm555, 0.0
      %719 = vst.msk [vmem:[#allocation13 + $0x78] sm:$0xff] %vm552, 0.0
      %720 = vst.msk [vmem:[#allocation13 + $0x80] sm:$0xff] %vm552, 0.0
      %721 = vst.msk [vmem:[#allocation13 + $0x88] sm:$0x3] %vm555, 0.0
      %722 = vst.msk [vmem:[#allocation13 + $0x90] sm:$0xff] %vm552, 0.0
      %723 = vst.msk [vmem:[#allocation13 + $0x98] sm:$0xff] %vm552, 0.0
      %724 = vst.msk [vmem:[#allocation13 + $0xa0] sm:$0x3] %vm555, 0.0
      %725 = vst.msk [vmem:[#allocation13 + $0xa8] sm:$0xff] %vm552, 0.0
      %726 = vst.msk [vmem:[#allocation13 + $0xb0] sm:$0xff] %vm552, 0.0
      %727 = vst.msk [vmem:[#allocation13 + $0xb8] sm:$0x3] %vm555, 0.0
      %728 = vst.msk [vmem:[#allocation13 + $0xc0] sm:$0xff] %vm552, 0.0
      %729 = vst.msk [vmem:[#allocation13 + $0xc8] sm:$0xff] %vm552, 0.0
      %730 = vst.msk [vmem:[#allocation13 + $0xd0] sm:$0x3] %vm555, 0.0
      %731 = vst.msk [vmem:[#allocation13 + $0xd8] sm:$0xff] %vm552, 0.0
      %732 = vst.msk [vmem:[#allocation13 + $0xe0] sm:$0xff] %vm552, 0.0
      %733 = vst.msk [vmem:[#allocation13 + $0xe8] sm:$0x3] %vm555, 0.0
      %734 = vst.msk [vmem:[#allocation13 + $0xf0] sm:$0xff] %vm552, 0.0
      %735 = vst.msk [vmem:[#allocation13 + $0xf8] sm:$0xff] %vm552, 0.0
      %736 = vst.msk [vmem:[#allocation13 + $0x100] sm:$0x3] %vm555, 0.0
      %737 = vst.msk [vmem:[#allocation13 + $0x108] sm:$0xff] %vm552, 0.0
      %738 = vst.msk [vmem:[#allocation13 + $0x110] sm:$0xff] %vm552, 0.0
      %739 = vst.msk [vmem:[#allocation13 + $0x118] sm:$0x3] %vm555, 0.0
      %740 = vst.msk [vmem:[#allocation13 + $0x120] sm:$0xff] %vm552, 0.0
      %741 = vst.msk [vmem:[#allocation13 + $0x128] sm:$0xff] %vm552, 0.0
      %742 = vst.msk [vmem:[#allocation13 + $0x130] sm:$0x3] %vm555, 0.0
      %743 = vst.msk [vmem:[#allocation13 + $0x138] sm:$0xff] %vm552, 0.0
      %744 = vst.msk [vmem:[#allocation13 + $0x140] sm:$0xff] %vm552, 0.0
      %745 = vst.msk [vmem:[#allocation13 + $0x148] sm:$0x3] %vm555, 0.0
      %746 = vst.msk [vmem:[#allocation13 + $0x150] sm:$0xff] %vm552, 0.0
      %747 = vst.msk [vmem:[#allocation13 + $0x158] sm:$0xff] %vm552, 0.0
      %748 = vst.msk [vmem:[#allocation13 + $0x160] sm:$0x3] %vm555, 0.0
      %749 = vst.msk [vmem:[#allocation13 + $0x168] sm:$0xff] %vm552, 0.0
      %750 = vst.msk [vmem:[#allocation13 + $0x170] sm:$0xff] %vm552, 0.0
      %751 = vst.msk [vmem:[#allocation13 + $0x178] sm:$0x3] %vm555, 0.0
      %752 = vst.msk [vmem:[#allocation13 + $0x180] sm:$0xff] %vm552, 0.0
      %753 = vst.msk [vmem:[#allocation13 + $0x188] sm:$0xff] %vm552, 0.0
      %754 = vst.msk [vmem:[#allocation13 + $0x190] sm:$0x3] %vm555, 0.0
      %755 = vst.msk [vmem:[#allocation13 + $0x198] sm:$0xff] %vm552, 0.0
      %756 = vst.msk [vmem:[#allocation13 + $0x1a0] sm:$0xff] %vm552, 0.0
      %757 = vst.msk [vmem:[#allocation13 + $0x1a8] sm:$0x3] %vm555, 0.0
      %v758 = vld [vmem:[%s489] sm:$0xff]
      %v759 = vld [vmem:[%s489 + $0x8] sm:$0xff]
      %v760 = vld [vmem:[%s489 + $0x10] sm:$0xff]
      %v761 = vld [vmem:[%s489 + $0x18] sm:$0xff]
      %v762 = vld [vmem:[%s489 + $0x20] sm:$0xff]
      %v763 = vld [vmem:[%s489 + $0x28] sm:$0xff]
      %v764 = vld [vmem:[%s489 + $0x30] sm:$0xff]
      %v765 = vld [vmem:[%s489 + $0x38] sm:$0xff]
      %v766 = vld [vmem:[%s489 + $0x40] sm:$0xff]
      %v767 = vld [vmem:[%s489 + $0x48] sm:$0xff]
      %v768 = vld [vmem:[%s489 + $0x50] sm:$0xff]
      %v769 = vld [vmem:[%s489 + $0x58] sm:$0xff]
      %v770 = vld [vmem:[%s489 + $0x60] sm:$0xff]
      %v771 = vld [vmem:[%s489 + $0x68] sm:$0xff]
      %v772 = vld [vmem:[%s489 + $0x70] sm:$0xff]
      %v773 = vld [vmem:[%s489 + $0x78] sm:$0xff]
      %v774 = vld [vmem:[%s489 + $0x80] sm:$0xff]
      %v775 = vld [vmem:[%s489 + $0x88] sm:$0xff]
      %v776 = vld [vmem:[%s489 + $0x90] sm:$0xff]
      %v777 = vld [vmem:[%s489 + $0x98] sm:$0xff]
      %v778 = vld [vmem:[%s489 + $0xa0] sm:$0xff]
      %v779 = vld [vmem:[%s489 + $0xa8] sm:$0xff]
      %v780 = vld [vmem:[%s489 + $0xb0] sm:$0xff]
      %v781 = vld [vmem:[%s489 + $0xb8] sm:$0xff]
      %v782 = vld [vmem:[%s489 + $0xc0] sm:$0xff]
      %v783 = vld [vmem:[%s489 + $0xc8] sm:$0xff]
      %v784 = vld [vmem:[%s489 + $0xd0] sm:$0xff]
      %v785 = vld [vmem:[%s489 + $0xd8] sm:$0xff]
      %v786 = vld [vmem:[%s489 + $0xe0] sm:$0xff]
      %v787 = vld [vmem:[%s489 + $0xe8] sm:$0xff]
      %v788 = vld [vmem:[%s489 + $0xf0] sm:$0xff]
      %v789 = vld [vmem:[%s489 + $0xf8] sm:$0xff]
      %s790 = scalar_lea.vmem [#allocation3], 24
      %791 = vst.msk [vmem:[%s790 + $0x1] sm:$0xff] %vm496, %v758
      %792 = vst.msk [vmem:[%s790 + $0x9] sm:$0xff] %vm496, %v759
      %793 = vst.msk [vmem:[%s790 + $0x19] sm:$0xff] %vm496, %v760
      %794 = vst.msk [vmem:[%s790 + $0x21] sm:$0xff] %vm496, %v761
      %795 = vst.msk [vmem:[%s790 + $0x31] sm:$0xff] %vm496, %v762
      %796 = vst.msk [vmem:[%s790 + $0x39] sm:$0xff] %vm496, %v763
      %797 = vst.msk [vmem:[%s790 + $0x49] sm:$0xff] %vm496, %v764
      %798 = vst.msk [vmem:[%s790 + $0x51] sm:$0xff] %vm496, %v765
      %799 = vst.msk [vmem:[%s790 + $0x61] sm:$0xff] %vm496, %v766
      %800 = vst.msk [vmem:[%s790 + $0x69] sm:$0xff] %vm496, %v767
      %801 = vst.msk [vmem:[%s790 + $0x79] sm:$0xff] %vm496, %v768
      %802 = vst.msk [vmem:[%s790 + $0x81] sm:$0xff] %vm496, %v769
      %803 = vst.msk [vmem:[%s790 + $0x91] sm:$0xff] %vm496, %v770
      %804 = vst.msk [vmem:[%s790 + $0x99] sm:$0xff] %vm496, %v771
      %805 = vst.msk [vmem:[%s790 + $0xa9] sm:$0xff] %vm496, %v772
      %806 = vst.msk [vmem:[%s790 + $0xb1] sm:$0xff] %vm496, %v773
      %807 = vst.msk [vmem:[%s790 + $0xc1] sm:$0xff] %vm496, %v774
      %808 = vst.msk [vmem:[%s790 + $0xc9] sm:$0xff] %vm496, %v775
      %809 = vst.msk [vmem:[%s790 + $0xd9] sm:$0xff] %vm496, %v776
      %810 = vst.msk [vmem:[%s790 + $0xe1] sm:$0xff] %vm496, %v777
      %811 = vst.msk [vmem:[%s790 + $0xf1] sm:$0xff] %vm496, %v778
      %812 = vst.msk [vmem:[%s790 + $0xf9] sm:$0xff] %vm496, %v779
      %813 = vst.msk [vmem:[%s790 + $0x109] sm:$0xff] %vm496, %v780
      %814 = vst.msk [vmem:[%s790 + $0x111] sm:$0xff] %vm496, %v781
      %815 = vst.msk [vmem:[%s790 + $0x121] sm:$0xff] %vm496, %v782
      %816 = vst.msk [vmem:[%s790 + $0x129] sm:$0xff] %vm496, %v783
      %817 = vst.msk [vmem:[%s790 + $0x139] sm:$0xff] %vm496, %v784
      %818 = vst.msk [vmem:[%s790 + $0x141] sm:$0xff] %vm496, %v785
      %819 = vst.msk [vmem:[%s790 + $0x151] sm:$0xff] %vm496, %v786
      %820 = vst.msk [vmem:[%s790 + $0x159] sm:$0xff] %vm496, %v787
      %821 = vst.msk [vmem:[%s790 + $0x169] sm:$0xff] %vm496, %v788
      %822 = vst.msk [vmem:[%s790 + $0x171] sm:$0xff] %vm496, %v789
      %v823 = vld [vmem:[#allocation3] sm:$0xff]
      %v824 = vld [vmem:[#allocation3 + $0x8] sm:$0xff]
      %v825 = vld [vmem:[#allocation3 + $0x18] sm:$0xff]
      %v826 = vld [vmem:[#allocation3 + $0x20] sm:$0xff]
      %v827 = vld [vmem:[#allocation3 + $0x30] sm:$0xff]
      %v828 = vld [vmem:[#allocation3 + $0x38] sm:$0xff]
      %v829 = vld [vmem:[#allocation3 + $0x48] sm:$0xff]
      %v830 = vld [vmem:[#allocation3 + $0x50] sm:$0xff]
      %v831 = vld [vmem:[#allocation3 + $0x60] sm:$0xff]
      %v832 = vld [vmem:[#allocation3 + $0x68] sm:$0xff]
      %v833 = vld [vmem:[#allocation3 + $0x78] sm:$0xff]
      %v834 = vld [vmem:[#allocation3 + $0x80] sm:$0xff]
      %v835 = vld [vmem:[#allocation3 + $0x90] sm:$0xff]
      %v836 = vld [vmem:[#allocation3 + $0x98] sm:$0xff]
      %v837 = vld [vmem:[#allocation3 + $0xa8] sm:$0xff]
      %v838 = vld [vmem:[#allocation3 + $0xb0] sm:$0xff]
      %v839 = vld [vmem:[#allocation3 + $0xc0] sm:$0xff]
      %v840 = vld [vmem:[#allocation3 + $0xc8] sm:$0xff]
      %v841 = vld [vmem:[#allocation3 + $0xd8] sm:$0xff]
      %v842 = vld [vmem:[#allocation3 + $0xe0] sm:$0xff]
      %v843 = vld [vmem:[#allocation3 + $0xf0] sm:$0xff]
      %v844 = vld [vmem:[#allocation3 + $0xf8] sm:$0xff]
      %v845 = vld [vmem:[#allocation3 + $0x108] sm:$0xff]
      %v846 = vld [vmem:[#allocation3 + $0x110] sm:$0xff]
      %v847 = vld [vmem:[#allocation3 + $0x120] sm:$0xff]
      %v848 = vld [vmem:[#allocation3 + $0x128] sm:$0xff]
      %v849 = vld [vmem:[#allocation3 + $0x138] sm:$0xff]
      %v850 = vld [vmem:[#allocation3 + $0x140] sm:$0xff]
      %v851 = vld [vmem:[#allocation3 + $0x150] sm:$0xff]
      %v852 = vld [vmem:[#allocation3 + $0x158] sm:$0xff]
      %v853 = vld [vmem:[#allocation3 + $0x168] sm:$0xff]
      %v854 = vld [vmem:[#allocation3 + $0x170] sm:$0xff]
      %v855 = vpack.c.bf16 %v824, %v823
      %v856 = vpack.c.bf16 %v826, %v825
      %v857 = vpack.c.bf16 %v828, %v827
      %v858 = vpack.c.bf16 %v830, %v829
      %v859 = vpack.c.bf16 %v832, %v831
      %v860 = vpack.c.bf16 %v834, %v833
      %v861 = vpack.c.bf16 %v836, %v835
      %v862 = vpack.c.bf16 %v838, %v837
      %v863 = vpack.c.bf16 %v840, %v839
      %v864 = vpack.c.bf16 %v842, %v841
      %v865 = vpack.c.bf16 %v844, %v843
      %v866 = vpack.c.bf16 %v846, %v845
      %v867 = vpack.c.bf16 %v848, %v847
      %v868 = vpack.c.bf16 %v850, %v849
      %v869 = vpack.c.bf16 %v852, %v851
      %v870 = vpack.c.bf16 %v854, %v853
      %871 = vst.msk [vmem:[#allocation2] sm:$0xff] %vm496, %v855
      %872 = vst.msk [vmem:[#allocation2 + $0x18] sm:$0xff] %vm496, %v856
      %873 = vst.msk [vmem:[#allocation2 + $0x30] sm:$0xff] %vm496, %v857
      %874 = vst.msk [vmem:[#allocation2 + $0x48] sm:$0xff] %vm496, %v858
      %875 = vst.msk [vmem:[#allocation2 + $0x60] sm:$0xff] %vm496, %v859
      %876 = vst.msk [vmem:[#allocation2 + $0x78] sm:$0xff] %vm496, %v860
      %877 = vst.msk [vmem:[#allocation2 + $0x90] sm:$0xff] %vm496, %v861
      %878 = vst.msk [vmem:[#allocation2 + $0xa8] sm:$0xff] %vm496, %v862
      %879 = vst.msk [vmem:[#allocation2 + $0xc0] sm:$0xff] %vm496, %v863
      %880 = vst.msk [vmem:[#allocation2 + $0xd8] sm:$0xff] %vm496, %v864
      %881 = vst.msk [vmem:[#allocation2 + $0xf0] sm:$0xff] %vm496, %v865
      %882 = vst.msk [vmem:[#allocation2 + $0x108] sm:$0xff] %vm496, %v866
      %883 = vst.msk [vmem:[#allocation2 + $0x120] sm:$0xff] %vm496, %v867
      %884 = vst.msk [vmem:[#allocation2 + $0x138] sm:$0xff] %vm496, %v868
      %885 = vst.msk [vmem:[#allocation2 + $0x150] sm:$0xff] %vm496, %v869
      %886 = vst.msk [vmem:[#allocation2 + $0x168] sm:$0xff] %vm496, %v870
      %v887 = vld [vmem:[#allocation3 + $0x1] sm:$0xff]
      %v888 = vld [vmem:[#allocation3 + $0x9] sm:$0xff]
      %v889 = vld [vmem:[#allocation3 + $0x19] sm:$0xff]
      %v890 = vld [vmem:[#allocation3 + $0x21] sm:$0xff]
      %v891 = vld [vmem:[#allocation3 + $0x31] sm:$0xff]
      %v892 = vld [vmem:[#allocation3 + $0x39] sm:$0xff]
      %v893 = vld [vmem:[#allocation3 + $0x49] sm:$0xff]
      %v894 = vld [vmem:[#allocation3 + $0x51] sm:$0xff]
      %v895 = vld [vmem:[#allocation3 + $0x61] sm:$0xff]
      %v896 = vld [vmem:[#allocation3 + $0x69] sm:$0xff]
      %v897 = vld [vmem:[#allocation3 + $0x79] sm:$0xff]
      %v898 = vld [vmem:[#allocation3 + $0x81] sm:$0xff]
      %v899 = vld [vmem:[#allocation3 + $0x91] sm:$0xff]
      %v900 = vld [vmem:[#allocation3 + $0x99] sm:$0xff]
      %v901 = vld [vmem:[#allocation3 + $0xa9] sm:$0xff]
      %v902 = vld [vmem:[#allocation3 + $0xb1] sm:$0xff]
      %v903 = vld [vmem:[#allocation3 + $0xc1] sm:$0xff]
      %v904 = vld [vmem:[#allocation3 + $0xc9] sm:$0xff]
      %v905 = vld [vmem:[#allocation3 + $0xd9] sm:$0xff]
      %v906 = vld [vmem:[#allocation3 + $0xe1] sm:$0xff]
      %v907 = vld [vmem:[#allocation3 + $0xf1] sm:$0xff]
      %v908 = vld [vmem:[#allocation3 + $0xf9] sm:$0xff]
      %v909 = vld [vmem:[#allocation3 + $0x109] sm:$0xff]
      %v910 = vld [vmem:[#allocation3 + $0x111] sm:$0xff]
      %v911 = vld [vmem:[#allocation3 + $0x121] sm:$0xff]
      %v912 = vld [vmem:[#allocation3 + $0x129] sm:$0xff]
      %v913 = vld [vmem:[#allocation3 + $0x139] sm:$0xff]
      %v914 = vld [vmem:[#allocation3 + $0x141] sm:$0xff]
      %v915 = vld [vmem:[#allocation3 + $0x151] sm:$0xff]
      %v916 = vld [vmem:[#allocation3 + $0x159] sm:$0xff]
      %v917 = vld [vmem:[#allocation3 + $0x169] sm:$0xff]
      %v918 = vld [vmem:[#allocation3 + $0x171] sm:$0xff]
      %v919 = vpack.c.bf16 %v888, %v887
      %v920 = vpack.c.bf16 %v890, %v889
      %v921 = vpack.c.bf16 %v892, %v891
      %v922 = vpack.c.bf16 %v894, %v893
      %v923 = vpack.c.bf16 %v896, %v895
      %v924 = vpack.c.bf16 %v898, %v897
      %v925 = vpack.c.bf16 %v900, %v899
      %v926 = vpack.c.bf16 %v902, %v901
      %v927 = vpack.c.bf16 %v904, %v903
      %v928 = vpack.c.bf16 %v906, %v905
      %v929 = vpack.c.bf16 %v908, %v907
      %v930 = vpack.c.bf16 %v910, %v909
      %v931 = vpack.c.bf16 %v912, %v911
      %v932 = vpack.c.bf16 %v914, %v913
      %v933 = vpack.c.bf16 %v916, %v915
      %v934 = vpack.c.bf16 %v918, %v917
      %951 = vrot.lane.b32.xlu0 %v919, 4
      %v952 = vpop.permute.xlu0 %951
      %953 = vrot.lane.b32.xlu0 %v920, 4
      %v954 = vpop.permute.xlu0 %953
      %955 = vrot.lane.b32.xlu0 %v921, 4
      %v956 = vpop.permute.xlu0 %955
      %957 = vrot.lane.b32.xlu0 %v922, 4
      %v958 = vpop.permute.xlu0 %957
      %959 = vrot.lane.b32.xlu0 %v923, 4
      %v960 = vpop.permute.xlu0 %959
      %961 = vrot.lane.b32.xlu0 %v924, 4
      %v962 = vpop.permute.xlu0 %961
      %963 = vrot.lane.b32.xlu0 %v925, 4
      %v964 = vpop.permute.xlu0 %963
      %965 = vrot.lane.b32.xlu0 %v926, 4
      %v966 = vpop.permute.xlu0 %965
      %967 = vrot.lane.b32.xlu0 %v927, 4
      %v968 = vpop.permute.xlu0 %967
      %969 = vrot.lane.b32.xlu0 %v928, 4
      %v970 = vpop.permute.xlu0 %969
      %971 = vrot.lane.b32.xlu0 %v929, 4
      %v972 = vpop.permute.xlu0 %971
      %973 = vrot.lane.b32.xlu0 %v930, 4
      %v974 = vpop.permute.xlu0 %973
      %975 = vrot.lane.b32.xlu0 %v931, 4
      %v976 = vpop.permute.xlu0 %975
      %977 = vrot.lane.b32.xlu0 %v932, 4
      %v978 = vpop.permute.xlu0 %977
      %979 = vrot.lane.b32.xlu0 %v933, 4
      %v980 = vpop.permute.xlu0 %979
      %981 = vrot.lane.b32.xlu0 %v934, 4
      %v982 = vpop.permute.xlu0 %981
      %vm999 = vcmask 64544
      %1000 = vst.msk [vmem:[#allocation2] sm:$0xff] %vm999, %v952
      %1001 = vst.msk [vmem:[#allocation2 + $0x18] sm:$0xff] %vm999, %v954
      %1002 = vst.msk [vmem:[#allocation2 + $0x30] sm:$0xff] %vm999, %v956
      %1003 = vst.msk [vmem:[#allocation2 + $0x48] sm:$0xff] %vm999, %v958
      %1004 = vst.msk [vmem:[#allocation2 + $0x60] sm:$0xff] %vm999, %v960
      %1005 = vst.msk [vmem:[#allocation2 + $0x78] sm:$0xff] %vm999, %v962
      %1006 = vst.msk [vmem:[#allocation2 + $0x90] sm:$0xff] %vm999, %v964
      %1007 = vst.msk [vmem:[#allocation2 + $0xa8] sm:$0xff] %vm999, %v966
      %1008 = vst.msk [vmem:[#allocation2 + $0xc0] sm:$0xff] %vm999, %v968
      %1009 = vst.msk [vmem:[#allocation2 + $0xd8] sm:$0xff] %vm999, %v970
      %1010 = vst.msk [vmem:[#allocation2 + $0xf0] sm:$0xff] %vm999, %v972
      %1011 = vst.msk [vmem:[#allocation2 + $0x108] sm:$0xff] %vm999, %v974
      %1012 = vst.msk [vmem:[#allocation2 + $0x120] sm:$0xff] %vm999, %v976
      %1013 = vst.msk [vmem:[#allocation2 + $0x138] sm:$0xff] %vm999, %v978
      %1014 = vst.msk [vmem:[#allocation2 + $0x150] sm:$0xff] %vm999, %v980
      %1015 = vst.msk [vmem:[#allocation2 + $0x168] sm:$0xff] %vm999, %v982
      %v1016 = vld [vmem:[#allocation3 + $0x2] sm:$0xff]
      %v1017 = vld [vmem:[#allocation3 + $0xa] sm:$0xff]
      %v1018 = vld [vmem:[#allocation3 + $0x1a] sm:$0xff]
      %v1019 = vld [vmem:[#allocation3 + $0x22] sm:$0xff]
      %v1020 = vld [vmem:[#allocation3 + $0x32] sm:$0xff]
      %v1021 = vld [vmem:[#allocation3 + $0x3a] sm:$0xff]
      %v1022 = vld [vmem:[#allocation3 + $0x4a] sm:$0xff]
      %v1023 = vld [vmem:[#allocation3 + $0x52] sm:$0xff]
      %v1024 = vld [vmem:[#allocation3 + $0x62] sm:$0xff]
      %v1025 = vld [vmem:[#allocation3 + $0x6a] sm:$0xff]
      %v1026 = vld [vmem:[#allocation3 + $0x7a] sm:$0xff]
      %v1027 = vld [vmem:[#allocation3 + $0x82] sm:$0xff]
      %v1028 = vld [vmem:[#allocation3 + $0x92] sm:$0xff]
      %v1029 = vld [vmem:[#allocation3 + $0x9a] sm:$0xff]
      %v1030 = vld [vmem:[#allocation3 + $0xaa] sm:$0xff]
      %v1031 = vld [vmem:[#allocation3 + $0xb2] sm:$0xff]
      %v1032 = vld [vmem:[#allocation3 + $0xc2] sm:$0xff]
      %v1033 = vld [vmem:[#allocation3 + $0xca] sm:$0xff]
      %v1034 = vld [vmem:[#allocation3 + $0xda] sm:$0xff]
      %v1035 = vld [vmem:[#allocation3 + $0xe2] sm:$0xff]
      %v1036 = vld [vmem:[#allocation3 + $0xf2] sm:$0xff]
      %v1037 = vld [vmem:[#allocation3 + $0xfa] sm:$0xff]
      %v1038 = vld [vmem:[#allocation3 + $0x10a] sm:$0xff]
      %v1039 = vld [vmem:[#allocation3 + $0x112] sm:$0xff]
      %v1040 = vld [vmem:[#allocation3 + $0x122] sm:$0xff]
      %v1041 = vld [vmem:[#allocation3 + $0x12a] sm:$0xff]
      %v1042 = vld [vmem:[#allocation3 + $0x13a] sm:$0xff]
      %v1043 = vld [vmem:[#allocation3 + $0x142] sm:$0xff]
      %v1044 = vld [vmem:[#allocation3 + $0x152] sm:$0xff]
      %v1045 = vld [vmem:[#allocation3 + $0x15a] sm:$0xff]
      %v1046 = vld [vmem:[#allocation3 + $0x16a] sm:$0xff]
      %v1047 = vld [vmem:[#allocation3 + $0x172] sm:$0xff]
      %v1048 = vpack.c.bf16 %v1017, %v1016
      %v1049 = vpack.c.bf16 %v1019, %v1018
      %v1050 = vpack.c.bf16 %v1021, %v1020
      %v1051 = vpack.c.bf16 %v1023, %v1022
      %v1052 = vpack.c.bf16 %v1025, %v1024
      %v1053 = vpack.c.bf16 %v1027, %v1026
      %v1054 = vpack.c.bf16 %v1029, %v1028
      %v1055 = vpack.c.bf16 %v1031, %v1030
      %v1056 = vpack.c.bf16 %v1033, %v1032
      %v1057 = vpack.c.bf16 %v1035, %v1034
      %v1058 = vpack.c.bf16 %v1037, %v1036
      %v1059 = vpack.c.bf16 %v1039, %v1038
      %v1060 = vpack.c.bf16 %v1041, %v1040
      %v1061 = vpack.c.bf16 %v1043, %v1042
      %v1062 = vpack.c.bf16 %v1045, %v1044
      %v1063 = vpack.c.bf16 %v1047, %v1046
      %1080 = vrot.lane.b32.xlu0 %v1048, 8
      %v1081 = vpop.permute.xlu0 %1080
      %1082 = vrot.lane.b32.xlu0 %v1049, 8
      %v1083 = vpop.permute.xlu0 %1082
      %1084 = vrot.lane.b32.xlu0 %v1050, 8
      %v1085 = vpop.permute.xlu0 %1084
      %1086 = vrot.lane.b32.xlu0 %v1051, 8
      %v1087 = vpop.permute.xlu0 %1086
      %1088 = vrot.lane.b32.xlu0 %v1052, 8
      %v1089 = vpop.permute.xlu0 %1088
      %1090 = vrot.lane.b32.xlu0 %v1053, 8
      %v1091 = vpop.permute.xlu0 %1090
      %1092 = vrot.lane.b32.xlu0 %v1054, 8
      %v1093 = vpop.permute.xlu0 %1092
      %1094 = vrot.lane.b32.xlu0 %v1055, 8
      %v1095 = vpop.permute.xlu0 %1094
      %1096 = vrot.lane.b32.xlu0 %v1056, 8
      %v1097 = vpop.permute.xlu0 %1096
      %1098 = vrot.lane.b32.xlu0 %v1057, 8
      %v1099 = vpop.permute.xlu0 %1098
      %1100 = vrot.lane.b32.xlu0 %v1058, 8
      %v1101 = vpop.permute.xlu0 %1100
      %1102 = vrot.lane.b32.xlu0 %v1059, 8
      %v1103 = vpop.permute.xlu0 %1102
      %1104 = vrot.lane.b32.xlu0 %v1060, 8
      %v1105 = vpop.permute.xlu0 %1104
      %1106 = vrot.lane.b32.xlu0 %v1061, 8
      %v1107 = vpop.permute.xlu0 %1106
      %1108 = vrot.lane.b32.xlu0 %v1062, 8
      %v1109 = vpop.permute.xlu0 %1108
      %1110 = vrot.lane.b32.xlu0 %v1063, 8
      %v1111 = vpop.permute.xlu0 %1110
      %vm1128 = vcmask 97344
      %1129 = vst.msk [vmem:[#allocation2] sm:$0xff] %vm1128, %v1081
      %1130 = vst.msk [vmem:[#allocation2 + $0x18] sm:$0xff] %vm1128, %v1083
      %1131 = vst.msk [vmem:[#allocation2 + $0x30] sm:$0xff] %vm1128, %v1085
      %1132 = vst.msk [vmem:[#allocation2 + $0x48] sm:$0xff] %vm1128, %v1087
      %1133 = vst.msk [vmem:[#allocation2 + $0x60] sm:$0xff] %vm1128, %v1089
      %1134 = vst.msk [vmem:[#allocation2 + $0x78] sm:$0xff] %vm1128, %v1091
      %1135 = vst.msk [vmem:[#allocation2 + $0x90] sm:$0xff] %vm1128, %v1093
      %1136 = vst.msk [vmem:[#allocation2 + $0xa8] sm:$0xff] %vm1128, %v1095
      %1137 = vst.msk [vmem:[#allocation2 + $0xc0] sm:$0xff] %vm1128, %v1097
      %1138 = vst.msk [vmem:[#allocation2 + $0xd8] sm:$0xff] %vm1128, %v1099
      %1139 = vst.msk [vmem:[#allocation2 + $0xf0] sm:$0xff] %vm1128, %v1101
      %1140 = vst.msk [vmem:[#allocation2 + $0x108] sm:$0xff] %vm1128, %v1103
      %1141 = vst.msk [vmem:[#allocation2 + $0x120] sm:$0xff] %vm1128, %v1105
      %1142 = vst.msk [vmem:[#allocation2 + $0x138] sm:$0xff] %vm1128, %v1107
      %1143 = vst.msk [vmem:[#allocation2 + $0x150] sm:$0xff] %vm1128, %v1109
      %1144 = vst.msk [vmem:[#allocation2 + $0x168] sm:$0xff] %vm1128, %v1111
      %v1145 = vld [vmem:[%s790] sm:$0xff]
      %v1146 = vld [vmem:[%s790 + $0x8] sm:$0xff]
      %v1147 = vld [vmem:[%s790 + $0x18] sm:$0xff]
      %v1148 = vld [vmem:[%s790 + $0x20] sm:$0xff]
      %v1149 = vld [vmem:[%s790 + $0x30] sm:$0xff]
      %v1150 = vld [vmem:[%s790 + $0x38] sm:$0xff]
      %v1151 = vld [vmem:[%s790 + $0x48] sm:$0xff]
      %v1152 = vld [vmem:[%s790 + $0x50] sm:$0xff]
      %v1153 = vld [vmem:[%s790 + $0x60] sm:$0xff]
      %v1154 = vld [vmem:[%s790 + $0x68] sm:$0xff]
      %v1155 = vld [vmem:[%s790 + $0x78] sm:$0xff]
      %v1156 = vld [vmem:[%s790 + $0x80] sm:$0xff]
      %v1157 = vld [vmem:[%s790 + $0x90] sm:$0xff]
      %v1158 = vld [vmem:[%s790 + $0x98] sm:$0xff]
      %v1159 = vld [vmem:[%s790 + $0xa8] sm:$0xff]
      %v1160 = vld [vmem:[%s790 + $0xb0] sm:$0xff]
      %v1161 = vld [vmem:[%s790 + $0xc0] sm:$0xff]
      %v1162 = vld [vmem:[%s790 + $0xc8] sm:$0xff]
      %v1163 = vld [vmem:[%s790 + $0xd8] sm:$0xff]
      %v1164 = vld [vmem:[%s790 + $0xe0] sm:$0xff]
      %v1165 = vld [vmem:[%s790 + $0xf0] sm:$0xff]
      %v1166 = vld [vmem:[%s790 + $0xf8] sm:$0xff]
      %v1167 = vld [vmem:[%s790 + $0x108] sm:$0xff]
      %v1168 = vld [vmem:[%s790 + $0x110] sm:$0xff]
      %v1169 = vld [vmem:[%s790 + $0x120] sm:$0xff]
      %v1170 = vld [vmem:[%s790 + $0x128] sm:$0xff]
      %v1171 = vld [vmem:[%s790 + $0x138] sm:$0xff]
      %v1172 = vld [vmem:[%s790 + $0x140] sm:$0xff]
      %v1173 = vld [vmem:[%s790 + $0x150] sm:$0xff]
      %v1174 = vld [vmem:[%s790 + $0x158] sm:$0xff]
      %v1175 = vld [vmem:[%s790 + $0x168] sm:$0xff]
      %v1176 = vld [vmem:[%s790 + $0x170] sm:$0xff]
      %v1177 = vpack.c.bf16 %v1146, %v1145
      %v1178 = vpack.c.bf16 %v1148, %v1147
      %v1179 = vpack.c.bf16 %v1150, %v1149
      %v1180 = vpack.c.bf16 %v1152, %v1151
      %v1181 = vpack.c.bf16 %v1154, %v1153
      %v1182 = vpack.c.bf16 %v1156, %v1155
      %v1183 = vpack.c.bf16 %v1158, %v1157
      %v1184 = vpack.c.bf16 %v1160, %v1159
      %v1185 = vpack.c.bf16 %v1162, %v1161
      %v1186 = vpack.c.bf16 %v1164, %v1163
      %v1187 = vpack.c.bf16 %v1166, %v1165
      %v1188 = vpack.c.bf16 %v1168, %v1167
      %v1189 = vpack.c.bf16 %v1170, %v1169
      %v1190 = vpack.c.bf16 %v1172, %v1171
      %v1191 = vpack.c.bf16 %v1174, %v1173
      %v1192 = vpack.c.bf16 %v1176, %v1175
      %1209 = vrot.lane.b32.xlu0 %v1177, 12
      %v1210 = vpop.permute.xlu0 %1209
      %1211 = vrot.lane.b32.xlu0 %v1178, 12
      %v1212 = vpop.permute.xlu0 %1211
      %1213 = vrot.lane.b32.xlu0 %v1179, 12
      %v1214 = vpop.permute.xlu0 %1213
      %1215 = vrot.lane.b32.xlu0 %v1180, 12
      %v1216 = vpop.permute.xlu0 %1215
      %1217 = vrot.lane.b32.xlu0 %v1181, 12
      %v1218 = vpop.permute.xlu0 %1217
      %1219 = vrot.lane.b32.xlu0 %v1182, 12
      %v1220 = vpop.permute.xlu0 %1219
      %1221 = vrot.lane.b32.xlu0 %v1183, 12
      %v1222 = vpop.permute.xlu0 %1221
      %1223 = vrot.lane.b32.xlu0 %v1184, 12
      %v1224 = vpop.permute.xlu0 %1223
      %1225 = vrot.lane.b32.xlu0 %v1185, 12
      %v1226 = vpop.permute.xlu0 %1225
      %1227 = vrot.lane.b32.xlu0 %v1186, 12
      %v1228 = vpop.permute.xlu0 %1227
      %1229 = vrot.lane.b32.xlu0 %v1187, 12
      %v1230 = vpop.permute.xlu0 %1229
      %1231 = vrot.lane.b32.xlu0 %v1188, 12
      %v1232 = vpop.permute.xlu0 %1231
      %1233 = vrot.lane.b32.xlu0 %v1189, 12
      %v1234 = vpop.permute.xlu0 %1233
      %1235 = vrot.lane.b32.xlu0 %v1190, 12
      %v1236 = vpop.permute.xlu0 %1235
      %1237 = vrot.lane.b32.xlu0 %v1191, 12
      %v1238 = vpop.permute.xlu0 %1237
      %1239 = vrot.lane.b32.xlu0 %v1192, 12
      %v1240 = vpop.permute.xlu0 %1239
      %vm1257 = vcmask 130144
      %1258 = vst.msk [vmem:[#allocation2] sm:$0xff] %vm1257, %v1210
      %1259 = vst.msk [vmem:[#allocation2 + $0x18] sm:$0xff] %vm1257, %v1212
      %1260 = vst.msk [vmem:[#allocation2 + $0x30] sm:$0xff] %vm1257, %v1214
      %1261 = vst.msk [vmem:[#allocation2 + $0x48] sm:$0xff] %vm1257, %v1216
      %1262 = vst.msk [vmem:[#allocation2 + $0x60] sm:$0xff] %vm1257, %v1218
      %1263 = vst.msk [vmem:[#allocation2 + $0x78] sm:$0xff] %vm1257, %v1220
      %1264 = vst.msk [vmem:[#allocation2 + $0x90] sm:$0xff] %vm1257, %v1222
      %1265 = vst.msk [vmem:[#allocation2 + $0xa8] sm:$0xff] %vm1257, %v1224
      %1266 = vst.msk [vmem:[#allocation2 + $0xc0] sm:$0xff] %vm1257, %v1226
      %1267 = vst.msk [vmem:[#allocation2 + $0xd8] sm:$0xff] %vm1257, %v1228
      %1268 = vst.msk [vmem:[#allocation2 + $0xf0] sm:$0xff] %vm1257, %v1230
      %1269 = vst.msk [vmem:[#allocation2 + $0x108] sm:$0xff] %vm1257, %v1232
      %1270 = vst.msk [vmem:[#allocation2 + $0x120] sm:$0xff] %vm1257, %v1234
      %1271 = vst.msk [vmem:[#allocation2 + $0x138] sm:$0xff] %vm1257, %v1236
      %1272 = vst.msk [vmem:[#allocation2 + $0x150] sm:$0xff] %vm1257, %v1238
      %1273 = vst.msk [vmem:[#allocation2 + $0x168] sm:$0xff] %vm1257, %v1240
      %v1274 = vld [vmem:[%s790 + $0x1] sm:$0xff]
      %v1275 = vld [vmem:[%s790 + $0x9] sm:$0xff]
      %v1276 = vld [vmem:[%s790 + $0x19] sm:$0xff]
      %v1277 = vld [vmem:[%s790 + $0x21] sm:$0xff]
      %v1278 = vld [vmem:[%s790 + $0x31] sm:$0xff]
      %v1279 = vld [vmem:[%s790 + $0x39] sm:$0xff]
      %v1280 = vld [vmem:[%s790 + $0x49] sm:$0xff]
      %v1281 = vld [vmem:[%s790 + $0x51] sm:$0xff]
      %v1282 = vld [vmem:[%s790 + $0x61] sm:$0xff]
      %v1283 = vld [vmem:[%s790 + $0x69] sm:$0xff]
      %v1284 = vld [vmem:[%s790 + $0x79] sm:$0xff]
      %v1285 = vld [vmem:[%s790 + $0x81] sm:$0xff]
      %v1286 = vld [vmem:[%s790 + $0x91] sm:$0xff]
      %v1287 = vld [vmem:[%s790 + $0x99] sm:$0xff]
      %v1288 = vld [vmem:[%s790 + $0xa9] sm:$0xff]
      %v1289 = vld [vmem:[%s790 + $0xb1] sm:$0xff]
      %v1290 = vld [vmem:[%s790 + $0xc1] sm:$0xff]
      %v1291 = vld [vmem:[%s790 + $0xc9] sm:$0xff]
      %v1292 = vld [vmem:[%s790 + $0xd9] sm:$0xff]
      %v1293 = vld [vmem:[%s790 + $0xe1] sm:$0xff]
      %v1294 = vld [vmem:[%s790 + $0xf1] sm:$0xff]
      %v1295 = vld [vmem:[%s790 + $0xf9] sm:$0xff]
      %v1296 = vld [vmem:[%s790 + $0x109] sm:$0xff]
      %v1297 = vld [vmem:[%s790 + $0x111] sm:$0xff]
      %v1298 = vld [vmem:[%s790 + $0x121] sm:$0xff]
      %v1299 = vld [vmem:[%s790 + $0x129] sm:$0xff]
      %v1300 = vld [vmem:[%s790 + $0x139] sm:$0xff]
      %v1301 = vld [vmem:[%s790 + $0x141] sm:$0xff]
      %v1302 = vld [vmem:[%s790 + $0x151] sm:$0xff]
      %v1303 = vld [vmem:[%s790 + $0x159] sm:$0xff]
      %v1304 = vld [vmem:[%s790 + $0x169] sm:$0xff]
      %v1305 = vld [vmem:[%s790 + $0x171] sm:$0xff]
      %v1306 = vpack.c.bf16 %v1275, %v1274
      %v1307 = vpack.c.bf16 %v1277, %v1276
      %v1308 = vpack.c.bf16 %v1279, %v1278
      %v1309 = vpack.c.bf16 %v1281, %v1280
      %v1310 = vpack.c.bf16 %v1283, %v1282
      %v1311 = vpack.c.bf16 %v1285, %v1284
      %v1312 = vpack.c.bf16 %v1287, %v1286
      %v1313 = vpack.c.bf16 %v1289, %v1288
      %v1314 = vpack.c.bf16 %v1291, %v1290
      %v1315 = vpack.c.bf16 %v1293, %v1292
      %v1316 = vpack.c.bf16 %v1295, %v1294
      %v1317 = vpack.c.bf16 %v1297, %v1296
      %v1318 = vpack.c.bf16 %v1299, %v1298
      %v1319 = vpack.c.bf16 %v1301, %v1300
      %v1320 = vpack.c.bf16 %v1303, %v1302
      %v1321 = vpack.c.bf16 %v1305, %v1304
      %1338 = vrot.lane.b32.xlu0 %v1306, 16
      %v1339 = vpop.permute.xlu0 %1338
      %1340 = vrot.lane.b32.xlu0 %v1307, 16
      %v1341 = vpop.permute.xlu0 %1340
      %1342 = vrot.lane.b32.xlu0 %v1308, 16
      %v1343 = vpop.permute.xlu0 %1342
      %1344 = vrot.lane.b32.xlu0 %v1309, 16
      %v1345 = vpop.permute.xlu0 %1344
      %1346 = vrot.lane.b32.xlu0 %v1310, 16
      %v1347 = vpop.permute.xlu0 %1346
      %1348 = vrot.lane.b32.xlu0 %v1311, 16
      %v1349 = vpop.permute.xlu0 %1348
      %1350 = vrot.lane.b32.xlu0 %v1312, 16
      %v1351 = vpop.permute.xlu0 %1350
      %1352 = vrot.lane.b32.xlu0 %v1313, 16
      %v1353 = vpop.permute.xlu0 %1352
      %1354 = vrot.lane.b32.xlu0 %v1314, 16
      %v1355 = vpop.permute.xlu0 %1354
      %1356 = vrot.lane.b32.xlu0 %v1315, 16
      %v1357 = vpop.permute.xlu0 %1356
      %1358 = vrot.lane.b32.xlu0 %v1316, 16
      %v1359 = vpop.permute.xlu0 %1358
      %1360 = vrot.lane.b32.xlu0 %v1317, 16
      %v1361 = vpop.permute.xlu0 %1360
      %1362 = vrot.lane.b32.xlu0 %v1318, 16
      %v1363 = vpop.permute.xlu0 %1362
      %1364 = vrot.lane.b32.xlu0 %v1319, 16
      %v1365 = vpop.permute.xlu0 %1364
      %1366 = vrot.lane.b32.xlu0 %v1320, 16
      %v1367 = vpop.permute.xlu0 %1366
      %1368 = vrot.lane.b32.xlu0 %v1321, 16
      %v1369 = vpop.permute.xlu0 %1368
      %vm1386 = vcmask 162944
      %1387 = vst.msk [vmem:[#allocation2] sm:$0xff] %vm1386, %v1339
      %1388 = vst.msk [vmem:[#allocation2 + $0x18] sm:$0xff] %vm1386, %v1341
      %1389 = vst.msk [vmem:[#allocation2 + $0x30] sm:$0xff] %vm1386, %v1343
      %1390 = vst.msk [vmem:[#allocation2 + $0x48] sm:$0xff] %vm1386, %v1345
      %1391 = vst.msk [vmem:[#allocation2 + $0x60] sm:$0xff] %vm1386, %v1347
      %1392 = vst.msk [vmem:[#allocation2 + $0x78] sm:$0xff] %vm1386, %v1349
      %1393 = vst.msk [vmem:[#allocation2 + $0x90] sm:$0xff] %vm1386, %v1351
      %1394 = vst.msk [vmem:[#allocation2 + $0xa8] sm:$0xff] %vm1386, %v1353
      %1395 = vst.msk [vmem:[#allocation2 + $0xc0] sm:$0xff] %vm1386, %v1355
      %1396 = vst.msk [vmem:[#allocation2 + $0xd8] sm:$0xff] %vm1386, %v1357
      %1397 = vst.msk [vmem:[#allocation2 + $0xf0] sm:$0xff] %vm1386, %v1359
      %1398 = vst.msk [vmem:[#allocation2 + $0x108] sm:$0xff] %vm1386, %v1361
      %1399 = vst.msk [vmem:[#allocation2 + $0x120] sm:$0xff] %vm1386, %v1363
      %1400 = vst.msk [vmem:[#allocation2 + $0x138] sm:$0xff] %vm1386, %v1365
      %1401 = vst.msk [vmem:[#allocation2 + $0x150] sm:$0xff] %vm1386, %v1367
      %1402 = vst.msk [vmem:[#allocation2 + $0x168] sm:$0xff] %vm1386, %v1369
      %v1403 = vld [vmem:[%s790 + $0x2] sm:$0xff]
      %v1404 = vld [vmem:[%s790 + $0xa] sm:$0xff]
      %v1405 = vld [vmem:[%s790 + $0x1a] sm:$0xff]
      %v1406 = vld [vmem:[%s790 + $0x22] sm:$0xff]
      %v1407 = vld [vmem:[%s790 + $0x32] sm:$0xff]
      %v1408 = vld [vmem:[%s790 + $0x3a] sm:$0xff]
      %v1409 = vld [vmem:[%s790 + $0x4a] sm:$0xff]
      %v1410 = vld [vmem:[%s790 + $0x52] sm:$0xff]
      %v1411 = vld [vmem:[%s790 + $0x62] sm:$0xff]
      %v1412 = vld [vmem:[%s790 + $0x6a] sm:$0xff]
      %v1413 = vld [vmem:[%s790 + $0x7a] sm:$0xff]
      %v1414 = vld [vmem:[%s790 + $0x82] sm:$0xff]
      %v1415 = vld [vmem:[%s790 + $0x92] sm:$0xff]
      %v1416 = vld [vmem:[%s790 + $0x9a] sm:$0xff]
      %v1417 = vld [vmem:[%s790 + $0xaa] sm:$0xff]
      %v1418 = vld [vmem:[%s790 + $0xb2] sm:$0xff]
      %v1419 = vld [vmem:[%s790 + $0xc2] sm:$0xff]
      %v1420 = vld [vmem:[%s790 + $0xca] sm:$0xff]
      %v1421 = vld [vmem:[%s790 + $0xda] sm:$0xff]
      %v1422 = vld [vmem:[%s790 + $0xe2] sm:$0xff]
      %v1423 = vld [vmem:[%s790 + $0xf2] sm:$0xff]
      %v1424 = vld [vmem:[%s790 + $0xfa] sm:$0xff]
      %v1425 = vld [vmem:[%s790 + $0x10a] sm:$0xff]
      %v1426 = vld [vmem:[%s790 + $0x112] sm:$0xff]
      %v1427 = vld [vmem:[%s790 + $0x122] sm:$0xff]
      %v1428 = vld [vmem:[%s790 + $0x12a] sm:$0xff]
      %v1429 = vld [vmem:[%s790 + $0x13a] sm:$0xff]
      %v1430 = vld [vmem:[%s790 + $0x142] sm:$0xff]
      %v1431 = vld [vmem:[%s790 + $0x152] sm:$0xff]
      %v1432 = vld [vmem:[%s790 + $0x15a] sm:$0xff]
      %v1433 = vld [vmem:[%s790 + $0x16a] sm:$0xff]
      %v1434 = vld [vmem:[%s790 + $0x172] sm:$0xff]
      %v1435 = vpack.c.bf16 %v1404, %v1403
      %v1436 = vpack.c.bf16 %v1406, %v1405
      %v1437 = vpack.c.bf16 %v1408, %v1407
      %v1438 = vpack.c.bf16 %v1410, %v1409
      %v1439 = vpack.c.bf16 %v1412, %v1411
      %v1440 = vpack.c.bf16 %v1414, %v1413
      %v1441 = vpack.c.bf16 %v1416, %v1415
      %v1442 = vpack.c.bf16 %v1418, %v1417
      %v1443 = vpack.c.bf16 %v1420, %v1419
      %v1444 = vpack.c.bf16 %v1422, %v1421
      %v1445 = vpack.c.bf16 %v1424, %v1423
      %v1446 = vpack.c.bf16 %v1426, %v1425
      %v1447 = vpack.c.bf16 %v1428, %v1427
      %v1448 = vpack.c.bf16 %v1430, %v1429
      %v1449 = vpack.c.bf16 %v1432, %v1431
      %v1450 = vpack.c.bf16 %v1434, %v1433
      %1467 = vrot.lane.b32.xlu0 %v1435, 20
      %v1468 = vpop.permute.xlu0 %1467
      %1469 = vrot.lane.b32.xlu0 %v1436, 20
      %v1470 = vpop.permute.xlu0 %1469
      %1471 = vrot.lane.b32.xlu0 %v1437, 20
      %v1472 = vpop.permute.xlu0 %1471
      %1473 = vrot.lane.b32.xlu0 %v1438, 20
      %v1474 = vpop.permute.xlu0 %1473
      %1475 = vrot.lane.b32.xlu0 %v1439, 20
      %v1476 = vpop.permute.xlu0 %1475
      %1477 = vrot.lane.b32.xlu0 %v1440, 20
      %v1478 = vpop.permute.xlu0 %1477
      %1479 = vrot.lane.b32.xlu0 %v1441, 20
      %v1480 = vpop.permute.xlu0 %1479
      %1481 = vrot.lane.b32.xlu0 %v1442, 20
      %v1482 = vpop.permute.xlu0 %1481
      %1483 = vrot.lane.b32.xlu0 %v1443, 20
      %v1484 = vpop.permute.xlu0 %1483
      %1485 = vrot.lane.b32.xlu0 %v1444, 20
      %v1486 = vpop.permute.xlu0 %1485
      %1487 = vrot.lane.b32.xlu0 %v1445, 20
      %v1488 = vpop.permute.xlu0 %1487
      %1489 = vrot.lane.b32.xlu0 %v1446, 20
      %v1490 = vpop.permute.xlu0 %1489
      %1491 = vrot.lane.b32.xlu0 %v1447, 20
      %v1492 = vpop.permute.xlu0 %1491
      %1493 = vrot.lane.b32.xlu0 %v1448, 20
      %v1494 = vpop.permute.xlu0 %1493
      %1495 = vrot.lane.b32.xlu0 %v1449, 20
      %v1496 = vpop.permute.xlu0 %1495
      %1497 = vrot.lane.b32.xlu0 %v1450, 20
      %v1498 = vpop.permute.xlu0 %1497
      %vm1515 = vcmask 195744
      %1516 = vst.msk [vmem:[#allocation2] sm:$0xff] %vm1515, %v1468
      %1517 = vst.msk [vmem:[#allocation2 + $0x18] sm:$0xff] %vm1515, %v1470
      %1518 = vst.msk [vmem:[#allocation2 + $0x30] sm:$0xff] %vm1515, %v1472
      %1519 = vst.msk [vmem:[#allocation2 + $0x48] sm:$0xff] %vm1515, %v1474
      %1520 = vst.msk [vmem:[#allocation2 + $0x60] sm:$0xff] %vm1515, %v1476
      %1521 = vst.msk [vmem:[#allocation2 + $0x78] sm:$0xff] %vm1515, %v1478
      %1522 = vst.msk [vmem:[#allocation2 + $0x90] sm:$0xff] %vm1515, %v1480
      %1523 = vst.msk [vmem:[#allocation2 + $0xa8] sm:$0xff] %vm1515, %v1482
      %1524 = vst.msk [vmem:[#allocation2 + $0xc0] sm:$0xff] %vm1515, %v1484
      %1525 = vst.msk [vmem:[#allocation2 + $0xd8] sm:$0xff] %vm1515, %v1486
      %1526 = vst.msk [vmem:[#allocation2 + $0xf0] sm:$0xff] %vm1515, %v1488
      %1527 = vst.msk [vmem:[#allocation2 + $0x108] sm:$0xff] %vm1515, %v1490
      %1528 = vst.msk [vmem:[#allocation2 + $0x120] sm:$0xff] %vm1515, %v1492
      %1529 = vst.msk [vmem:[#allocation2 + $0x138] sm:$0xff] %vm1515, %v1494
      %1530 = vst.msk [vmem:[#allocation2 + $0x150] sm:$0xff] %vm1515, %v1496
      %1531 = vst.msk [vmem:[#allocation2 + $0x168] sm:$0xff] %vm1515, %v1498
      %s1532 = scalar_lea.vmem [#allocation3], 48
      %v1533 = vld [vmem:[%s1532] sm:$0xff]
      %v1534 = vld [vmem:[%s1532 + $0x8] sm:$0xff]
      %v1535 = vld [vmem:[%s1532 + $0x18] sm:$0xff]
      %v1536 = vld [vmem:[%s1532 + $0x20] sm:$0xff]
      %v1537 = vld [vmem:[%s1532 + $0x30] sm:$0xff]
      %v1538 = vld [vmem:[%s1532 + $0x38] sm:$0xff]
      %v1539 = vld [vmem:[%s1532 + $0x48] sm:$0xff]
      %v1540 = vld [vmem:[%s1532 + $0x50] sm:$0xff]
      %v1541 = vld [vmem:[%s1532 + $0x60] sm:$0xff]
      %v1542 = vld [vmem:[%s1532 + $0x68] sm:$0xff]
      %v1543 = vld [vmem:[%s1532 + $0x78] sm:$0xff]
      %v1544 = vld [vmem:[%s1532 + $0x80] sm:$0xff]
      %v1545 = vld [vmem:[%s1532 + $0x90] sm:$0xff]
      %v1546 = vld [vmem:[%s1532 + $0x98] sm:$0xff]
      %v1547 = vld [vmem:[%s1532 + $0xa8] sm:$0xff]
      %v1548 = vld [vmem:[%s1532 + $0xb0] sm:$0xff]
      %v1549 = vld [vmem:[%s1532 + $0xc0] sm:$0xff]
      %v1550 = vld [vmem:[%s1532 + $0xc8] sm:$0xff]
      %v1551 = vld [vmem:[%s1532 + $0xd8] sm:$0xff]
      %v1552 = vld [vmem:[%s1532 + $0xe0] sm:$0xff]
      %v1553 = vld [vmem:[%s1532 + $0xf0] sm:$0xff]
      %v1554 = vld [vmem:[%s1532 + $0xf8] sm:$0xff]
      %v1555 = vld [vmem:[%s1532 + $0x108] sm:$0xff]
      %v1556 = vld [vmem:[%s1532 + $0x110] sm:$0xff]
      %v1557 = vld [vmem:[%s1532 + $0x120] sm:$0xff]
      %v1558 = vld [vmem:[%s1532 + $0x128] sm:$0xff]
      %v1559 = vld [vmem:[%s1532 + $0x138] sm:$0xff]
      %v1560 = vld [vmem:[%s1532 + $0x140] sm:$0xff]
      %v1561 = vld [vmem:[%s1532 + $0x150] sm:$0xff]
      %v1562 = vld [vmem:[%s1532 + $0x158] sm:$0xff]
      %v1563 = vld [vmem:[%s1532 + $0x168] sm:$0xff]
      %v1564 = vld [vmem:[%s1532 + $0x170] sm:$0xff]
      %v1565 = vpack.c.bf16 %v1534, %v1533
      %v1566 = vpack.c.bf16 %v1536, %v1535
      %v1567 = vpack.c.bf16 %v1538, %v1537
      %v1568 = vpack.c.bf16 %v1540, %v1539
      %v1569 = vpack.c.bf16 %v1542, %v1541
      %v1570 = vpack.c.bf16 %v1544, %v1543
      %v1571 = vpack.c.bf16 %v1546, %v1545
      %v1572 = vpack.c.bf16 %v1548, %v1547
      %v1573 = vpack.c.bf16 %v1550, %v1549
      %v1574 = vpack.c.bf16 %v1552, %v1551
      %v1575 = vpack.c.bf16 %v1554, %v1553
      %v1576 = vpack.c.bf16 %v1556, %v1555
      %v1577 = vpack.c.bf16 %v1558, %v1557
      %v1578 = vpack.c.bf16 %v1560, %v1559
      %v1579 = vpack.c.bf16 %v1562, %v1561
      %v1580 = vpack.c.bf16 %v1564, %v1563
      %1597 = vrot.lane.b32.xlu0 %v1565, 24
      %v1598 = vpop.permute.xlu0 %1597
      %1599 = vrot.lane.b32.xlu0 %v1566, 24
      %v1600 = vpop.permute.xlu0 %1599
      %1601 = vrot.lane.b32.xlu0 %v1567, 24
      %v1602 = vpop.permute.xlu0 %1601
      %1603 = vrot.lane.b32.xlu0 %v1568, 24
      %v1604 = vpop.permute.xlu0 %1603
      %1605 = vrot.lane.b32.xlu0 %v1569, 24
      %v1606 = vpop.permute.xlu0 %1605
      %1607 = vrot.lane.b32.xlu0 %v1570, 24
      %v1608 = vpop.permute.xlu0 %1607
      %1609 = vrot.lane.b32.xlu0 %v1571, 24
      %v1610 = vpop.permute.xlu0 %1609
      %1611 = vrot.lane.b32.xlu0 %v1572, 24
      %v1612 = vpop.permute.xlu0 %1611
      %1613 = vrot.lane.b32.xlu0 %v1573, 24
      %v1614 = vpop.permute.xlu0 %1613
      %1615 = vrot.lane.b32.xlu0 %v1574, 24
      %v1616 = vpop.permute.xlu0 %1615
      %1617 = vrot.lane.b32.xlu0 %v1575, 24
      %v1618 = vpop.permute.xlu0 %1617
      %1619 = vrot.lane.b32.xlu0 %v1576, 24
      %v1620 = vpop.permute.xlu0 %1619
      %1621 = vrot.lane.b32.xlu0 %v1577, 24
      %v1622 = vpop.permute.xlu0 %1621
      %1623 = vrot.lane.b32.xlu0 %v1578, 24
      %v1624 = vpop.permute.xlu0 %1623
      %1625 = vrot.lane.b32.xlu0 %v1579, 24
      %v1626 = vpop.permute.xlu0 %1625
      %1627 = vrot.lane.b32.xlu0 %v1580, 24
      %v1628 = vpop.permute.xlu0 %1627
      %vm1645 = vcmask 228544
      %1646 = vst.msk [vmem:[#allocation2] sm:$0xff] %vm1645, %v1598
      %1647 = vst.msk [vmem:[#allocation2 + $0x18] sm:$0xff] %vm1645, %v1600
      %1648 = vst.msk [vmem:[#allocation2 + $0x30] sm:$0xff] %vm1645, %v1602
      %1649 = vst.msk [vmem:[#allocation2 + $0x48] sm:$0xff] %vm1645, %v1604
      %1650 = vst.msk [vmem:[#allocation2 + $0x60] sm:$0xff] %vm1645, %v1606
      %1651 = vst.msk [vmem:[#allocation2 + $0x78] sm:$0xff] %vm1645, %v1608
      %1652 = vst.msk [vmem:[#allocation2 + $0x90] sm:$0xff] %vm1645, %v1610
      %1653 = vst.msk [vmem:[#allocation2 + $0xa8] sm:$0xff] %vm1645, %v1612
      %1654 = vst.msk [vmem:[#allocation2 + $0xc0] sm:$0xff] %vm1645, %v1614
      %1655 = vst.msk [vmem:[#allocation2 + $0xd8] sm:$0xff] %vm1645, %v1616
      %1656 = vst.msk [vmem:[#allocation2 + $0xf0] sm:$0xff] %vm1645, %v1618
      %1657 = vst.msk [vmem:[#allocation2 + $0x108] sm:$0xff] %vm1645, %v1620
      %1658 = vst.msk [vmem:[#allocation2 + $0x120] sm:$0xff] %vm1645, %v1622
      %1659 = vst.msk [vmem:[#allocation2 + $0x138] sm:$0xff] %vm1645, %v1624
      %1660 = vst.msk [vmem:[#allocation2 + $0x150] sm:$0xff] %vm1645, %v1626
      %1661 = vst.msk [vmem:[#allocation2 + $0x168] sm:$0xff] %vm1645, %v1628
      %v1662 = vld [vmem:[%s1532 + $0x1] sm:$0xff]
      %v1663 = vld [vmem:[%s1532 + $0x9] sm:$0xff]
      %v1664 = vld [vmem:[%s1532 + $0x19] sm:$0xff]
      %v1665 = vld [vmem:[%s1532 + $0x21] sm:$0xff]
      %v1666 = vld [vmem:[%s1532 + $0x31] sm:$0xff]
      %v1667 = vld [vmem:[%s1532 + $0x39] sm:$0xff]
      %v1668 = vld [vmem:[%s1532 + $0x49] sm:$0xff]
      %v1669 = vld [vmem:[%s1532 + $0x51] sm:$0xff]
      %v1670 = vld [vmem:[%s1532 + $0x61] sm:$0xff]
      %v1671 = vld [vmem:[%s1532 + $0x69] sm:$0xff]
      %v1672 = vld [vmem:[%s1532 + $0x79] sm:$0xff]
      %v1673 = vld [vmem:[%s1532 + $0x81] sm:$0xff]
      %v1674 = vld [vmem:[%s1532 + $0x91] sm:$0xff]
      %v1675 = vld [vmem:[%s1532 + $0x99] sm:$0xff]
      %v1676 = vld [vmem:[%s1532 + $0xa9] sm:$0xff]
      %v1677 = vld [vmem:[%s1532 + $0xb1] sm:$0xff]
      %v1678 = vld [vmem:[%s1532 + $0xc1] sm:$0xff]
      %v1679 = vld [vmem:[%s1532 + $0xc9] sm:$0xff]
      %v1680 = vld [vmem:[%s1532 + $0xd9] sm:$0xff]
      %v1681 = vld [vmem:[%s1532 + $0xe1] sm:$0xff]
      %v1682 = vld [vmem:[%s1532 + $0xf1] sm:$0xff]
      %v1683 = vld [vmem:[%s1532 + $0xf9] sm:$0xff]
      %v1684 = vld [vmem:[%s1532 + $0x109] sm:$0xff]
      %v1685 = vld [vmem:[%s1532 + $0x111] sm:$0xff]
      %v1686 = vld [vmem:[%s1532 + $0x121] sm:$0xff]
      %v1687 = vld [vmem:[%s1532 + $0x129] sm:$0xff]
      %v1688 = vld [vmem:[%s1532 + $0x139] sm:$0xff]
      %v1689 = vld [vmem:[%s1532 + $0x141] sm:$0xff]
      %v1690 = vld [vmem:[%s1532 + $0x151] sm:$0xff]
      %v1691 = vld [vmem:[%s1532 + $0x159] sm:$0xff]
      %v1692 = vld [vmem:[%s1532 + $0x169] sm:$0xff]
      %v1693 = vld [vmem:[%s1532 + $0x171] sm:$0xff]
      %v1694 = vpack.c.bf16 %v1663, %v1662
      %v1695 = vpack.c.bf16 %v1665, %v1664
      %v1696 = vpack.c.bf16 %v1667, %v1666
      %v1697 = vpack.c.bf16 %v1669, %v1668
      %v1698 = vpack.c.bf16 %v1671, %v1670
      %v1699 = vpack.c.bf16 %v1673, %v1672
      %v1700 = vpack.c.bf16 %v1675, %v1674
      %v1701 = vpack.c.bf16 %v1677, %v1676
      %v1702 = vpack.c.bf16 %v1679, %v1678
      %v1703 = vpack.c.bf16 %v1681, %v1680
      %v1704 = vpack.c.bf16 %v1683, %v1682
      %v1705 = vpack.c.bf16 %v1685, %v1684
      %v1706 = vpack.c.bf16 %v1687, %v1686
      %v1707 = vpack.c.bf16 %v1689, %v1688
      %v1708 = vpack.c.bf16 %v1691, %v1690
      %v1709 = vpack.c.bf16 %v1693, %v1692
      %1726 = vrot.lane.b32.xlu0 %v1694, 28
      %v1727 = vpop.permute.xlu0 %1726
      %1728 = vrot.lane.b32.xlu0 %v1695, 28
      %v1729 = vpop.permute.xlu0 %1728
      %1730 = vrot.lane.b32.xlu0 %v1696, 28
      %v1731 = vpop.permute.xlu0 %1730
      %1732 = vrot.lane.b32.xlu0 %v1697, 28
      %v1733 = vpop.permute.xlu0 %1732
      %1734 = vrot.lane.b32.xlu0 %v1698, 28
      %v1735 = vpop.permute.xlu0 %1734
      %1736 = vrot.lane.b32.xlu0 %v1699, 28
      %v1737 = vpop.permute.xlu0 %1736
      %1738 = vrot.lane.b32.xlu0 %v1700, 28
      %v1739 = vpop.permute.xlu0 %1738
      %1740 = vrot.lane.b32.xlu0 %v1701, 28
      %v1741 = vpop.permute.xlu0 %1740
      %1742 = vrot.lane.b32.xlu0 %v1702, 28
      %v1743 = vpop.permute.xlu0 %1742
      %1744 = vrot.lane.b32.xlu0 %v1703, 28
      %v1745 = vpop.permute.xlu0 %1744
      %1746 = vrot.lane.b32.xlu0 %v1704, 28
      %v1747 = vpop.permute.xlu0 %1746
      %1748 = vrot.lane.b32.xlu0 %v1705, 28
      %v1749 = vpop.permute.xlu0 %1748
      %1750 = vrot.lane.b32.xlu0 %v1706, 28
      %v1751 = vpop.permute.xlu0 %1750
      %1752 = vrot.lane.b32.xlu0 %v1707, 28
      %v1753 = vpop.permute.xlu0 %1752
      %1754 = vrot.lane.b32.xlu0 %v1708, 28
      %v1755 = vpop.permute.xlu0 %1754
      %1756 = vrot.lane.b32.xlu0 %v1709, 28
      %v1757 = vpop.permute.xlu0 %1756
      %vm1774 = vcmask 261344
      %1775 = vst.msk [vmem:[#allocation2] sm:$0xff] %vm1774, %v1727
      %1776 = vst.msk [vmem:[#allocation2 + $0x18] sm:$0xff] %vm1774, %v1729
      %1777 = vst.msk [vmem:[#allocation2 + $0x30] sm:$0xff] %vm1774, %v1731
      %1778 = vst.msk [vmem:[#allocation2 + $0x48] sm:$0xff] %vm1774, %v1733
      %1779 = vst.msk [vmem:[#allocation2 + $0x60] sm:$0xff] %vm1774, %v1735
      %1780 = vst.msk [vmem:[#allocation2 + $0x78] sm:$0xff] %vm1774, %v1737
      %1781 = vst.msk [vmem:[#allocation2 + $0x90] sm:$0xff] %vm1774, %v1739
      %1782 = vst.msk [vmem:[#allocation2 + $0xa8] sm:$0xff] %vm1774, %v1741
      %1783 = vst.msk [vmem:[#allocation2 + $0xc0] sm:$0xff] %vm1774, %v1743
      %1784 = vst.msk [vmem:[#allocation2 + $0xd8] sm:$0xff] %vm1774, %v1745
      %1785 = vst.msk [vmem:[#allocation2 + $0xf0] sm:$0xff] %vm1774, %v1747
      %1786 = vst.msk [vmem:[#allocation2 + $0x108] sm:$0xff] %vm1774, %v1749
      %1787 = vst.msk [vmem:[#allocation2 + $0x120] sm:$0xff] %vm1774, %v1751
      %1788 = vst.msk [vmem:[#allocation2 + $0x138] sm:$0xff] %vm1774, %v1753
      %1789 = vst.msk [vmem:[#allocation2 + $0x150] sm:$0xff] %vm1774, %v1755
      %1790 = vst.msk [vmem:[#allocation2 + $0x168] sm:$0xff] %vm1774, %v1757
      %v1791 = vld [vmem:[%s1532 + $0x2] sm:$0xff]
      %v1792 = vld [vmem:[%s1532 + $0xa] sm:$0xff]
      %v1793 = vld [vmem:[%s1532 + $0x1a] sm:$0xff]
      %v1794 = vld [vmem:[%s1532 + $0x22] sm:$0xff]
      %v1795 = vld [vmem:[%s1532 + $0x32] sm:$0xff]
      %v1796 = vld [vmem:[%s1532 + $0x3a] sm:$0xff]
      %v1797 = vld [vmem:[%s1532 + $0x4a] sm:$0xff]
      %v1798 = vld [vmem:[%s1532 + $0x52] sm:$0xff]
      %v1799 = vld [vmem:[%s1532 + $0x62] sm:$0xff]
      %v1800 = vld [vmem:[%s1532 + $0x6a] sm:$0xff]
      %v1801 = vld [vmem:[%s1532 + $0x7a] sm:$0xff]
      %v1802 = vld [vmem:[%s1532 + $0x82] sm:$0xff]
      %v1803 = vld [vmem:[%s1532 + $0x92] sm:$0xff]
      %v1804 = vld [vmem:[%s1532 + $0x9a] sm:$0xff]
      %v1805 = vld [vmem:[%s1532 + $0xaa] sm:$0xff]
      %v1806 = vld [vmem:[%s1532 + $0xb2] sm:$0xff]
      %v1807 = vld [vmem:[%s1532 + $0xc2] sm:$0xff]
      %v1808 = vld [vmem:[%s1532 + $0xca] sm:$0xff]
      %v1809 = vld [vmem:[%s1532 + $0xda] sm:$0xff]
      %v1810 = vld [vmem:[%s1532 + $0xe2] sm:$0xff]
      %v1811 = vld [vmem:[%s1532 + $0xf2] sm:$0xff]
      %v1812 = vld [vmem:[%s1532 + $0xfa] sm:$0xff]
      %v1813 = vld [vmem:[%s1532 + $0x10a] sm:$0xff]
      %v1814 = vld [vmem:[%s1532 + $0x112] sm:$0xff]
      %v1815 = vld [vmem:[%s1532 + $0x122] sm:$0xff]
      %v1816 = vld [vmem:[%s1532 + $0x12a] sm:$0xff]
      %v1817 = vld [vmem:[%s1532 + $0x13a] sm:$0xff]
      %v1818 = vld [vmem:[%s1532 + $0x142] sm:$0xff]
      %v1819 = vld [vmem:[%s1532 + $0x152] sm:$0xff]
      %v1820 = vld [vmem:[%s1532 + $0x15a] sm:$0xff]
      %v1821 = vld [vmem:[%s1532 + $0x16a] sm:$0xff]
      %v1822 = vld [vmem:[%s1532 + $0x172] sm:$0xff]
      %v1823 = vpack.c.bf16 %v1792, %v1791
      %v1824 = vpack.c.bf16 %v1794, %v1793
      %v1825 = vpack.c.bf16 %v1796, %v1795
      %v1826 = vpack.c.bf16 %v1798, %v1797
      %v1827 = vpack.c.bf16 %v1800, %v1799
      %v1828 = vpack.c.bf16 %v1802, %v1801
      %v1829 = vpack.c.bf16 %v1804, %v1803
      %v1830 = vpack.c.bf16 %v1806, %v1805
      %v1831 = vpack.c.bf16 %v1808, %v1807
      %v1832 = vpack.c.bf16 %v1810, %v1809
      %v1833 = vpack.c.bf16 %v1812, %v1811
      %v1834 = vpack.c.bf16 %v1814, %v1813
      %v1835 = vpack.c.bf16 %v1816, %v1815
      %v1836 = vpack.c.bf16 %v1818, %v1817
      %v1837 = vpack.c.bf16 %v1820, %v1819
      %v1838 = vpack.c.bf16 %v1822, %v1821
      %1855 = vrot.lane.b32.xlu0 %v1823, 32
      %v1856 = vpop.permute.xlu0 %1855
      %1857 = vrot.lane.b32.xlu0 %v1824, 32
      %v1858 = vpop.permute.xlu0 %1857
      %1859 = vrot.lane.b32.xlu0 %v1825, 32
      %v1860 = vpop.permute.xlu0 %1859
      %1861 = vrot.lane.b32.xlu0 %v1826, 32
      %v1862 = vpop.permute.xlu0 %1861
      %1863 = vrot.lane.b32.xlu0 %v1827, 32
      %v1864 = vpop.permute.xlu0 %1863
      %1865 = vrot.lane.b32.xlu0 %v1828, 32
      %v1866 = vpop.permute.xlu0 %1865
      %1867 = vrot.lane.b32.xlu0 %v1829, 32
      %v1868 = vpop.permute.xlu0 %1867
      %1869 = vrot.lane.b32.xlu0 %v1830, 32
      %v1870 = vpop.permute.xlu0 %1869
      %1871 = vrot.lane.b32.xlu0 %v1831, 32
      %v1872 = vpop.permute.xlu0 %1871
      %1873 = vrot.lane.b32.xlu0 %v1832, 32
      %v1874 = vpop.permute.xlu0 %1873
      %1875 = vrot.lane.b32.xlu0 %v1833, 32
      %v1876 = vpop.permute.xlu0 %1875
      %1877 = vrot.lane.b32.xlu0 %v1834, 32
      %v1878 = vpop.permute.xlu0 %1877
      %1879 = vrot.lane.b32.xlu0 %v1835, 32
      %v1880 = vpop.permute.xlu0 %1879
      %1881 = vrot.lane.b32.xlu0 %v1836, 32
      %v1882 = vpop.permute.xlu0 %1881
      %1883 = vrot.lane.b32.xlu0 %v1837, 32
      %v1884 = vpop.permute.xlu0 %1883
      %1885 = vrot.lane.b32.xlu0 %v1838, 32
      %v1886 = vpop.permute.xlu0 %1885
      %vm1903 = vcmask 294144
      %1904 = vst.msk [vmem:[#allocation2] sm:$0xff] %vm1903, %v1856
      %1905 = vst.msk [vmem:[#allocation2 + $0x18] sm:$0xff] %vm1903, %v1858
      %1906 = vst.msk [vmem:[#allocation2 + $0x30] sm:$0xff] %vm1903, %v1860
      %1907 = vst.msk [vmem:[#allocation2 + $0x48] sm:$0xff] %vm1903, %v1862
      %1908 = vst.msk [vmem:[#allocation2 + $0x60] sm:$0xff] %vm1903, %v1864
      %1909 = vst.msk [vmem:[#allocation2 + $0x78] sm:$0xff] %vm1903, %v1866
      %1910 = vst.msk [vmem:[#allocation2 + $0x90] sm:$0xff] %vm1903, %v1868
      %1911 = vst.msk [vmem:[#allocation2 + $0xa8] sm:$0xff] %vm1903, %v1870
      %1912 = vst.msk [vmem:[#allocation2 + $0xc0] sm:$0xff] %vm1903, %v1872
      %1913 = vst.msk [vmem:[#allocation2 + $0xd8] sm:$0xff] %vm1903, %v1874
      %1914 = vst.msk [vmem:[#allocation2 + $0xf0] sm:$0xff] %vm1903, %v1876
      %1915 = vst.msk [vmem:[#allocation2 + $0x108] sm:$0xff] %vm1903, %v1878
      %1916 = vst.msk [vmem:[#allocation2 + $0x120] sm:$0xff] %vm1903, %v1880
      %1917 = vst.msk [vmem:[#allocation2 + $0x138] sm:$0xff] %vm1903, %v1882
      %1918 = vst.msk [vmem:[#allocation2 + $0x150] sm:$0xff] %vm1903, %v1884
      %1919 = vst.msk [vmem:[#allocation2 + $0x168] sm:$0xff] %vm1903, %v1886
      %v1920 = vld [vmem:[#allocation2] sm:$0xff]
      %v1921 = vld [vmem:[#allocation2 + $0x18] sm:$0xff]
      %v1922 = vld [vmem:[#allocation2 + $0x30] sm:$0xff]
      %v1923 = vld [vmem:[#allocation2 + $0x48] sm:$0xff]
      %v1924 = vld [vmem:[#allocation2 + $0x60] sm:$0xff]
      %v1925 = vld [vmem:[#allocation2 + $0x78] sm:$0xff]
      %v1926 = vld [vmem:[#allocation2 + $0x90] sm:$0xff]
      %v1927 = vld [vmem:[#allocation2 + $0xa8] sm:$0xff]
      %v1928 = vld [vmem:[#allocation2 + $0xc0] sm:$0xff]
      %v1929 = vld [vmem:[#allocation2 + $0xd8] sm:$0xff]
      %v1930 = vld [vmem:[#allocation2 + $0xf0] sm:$0xff]
      %v1931 = vld [vmem:[#allocation2 + $0x108] sm:$0xff]
      %v1932 = vld [vmem:[#allocation2 + $0x120] sm:$0xff]
      %v1933 = vld [vmem:[#allocation2 + $0x138] sm:$0xff]
      %v1934 = vld [vmem:[#allocation2 + $0x150] sm:$0xff]
      %v1935 = vld [vmem:[#allocation2 + $0x168] sm:$0xff]
      %v1936 = vld [vmem:[%s1] sm:$0xf]
      %v1937 = vld [vmem:[%s1 + $0x4] sm:$0xf]
      %v1938 = vld [vmem:[%s1 + $0x8] sm:$0xf]
      %v1939 = vld [vmem:[%s1 + $0xc] sm:$0xf]
      %v1940 = vld [vmem:[%s1 + $0x10] sm:$0x3]
      %v1941 = vld [vmem:[%s2] sm:$0x1]
      %v1943 = vlaneseq
      %v1944 = vshrl.u32 %v1943, 7
      %v1945 = vsub.s32 0, %v1944
      %v1946 = vrot.slane %v1941, %v1945
      %v1953 = vunpack.c.l.b16 %v1936
      %v1954 = vunpack.c.l.b16 %v1937
      %v1955 = vunpack.c.l.b16 %v1938
      %v1956 = vunpack.c.l.b16 %v1939
      %v1957 = vunpack.c.l.b16 %v1940
      %v1958 = vpack.c.b16 %v1954, %v1953
      %v1959 = vpack.c.b16 %v1956, %v1955
      %v1960 = vpack.c.b16 %v1957, %v1957
      %vm1963 = vcmask 293888
      %v1965 = vsel %vm1963, %v1920, 0
      %v1968 = vsel %vm1963, %v1921, 0
      %v1971 = vsel %vm1963, %v1922, 0
      %v1974 = vsel %vm1963, %v1923, 0
      %v1977 = vsel %vm1963, %v1924, 0
      %v1980 = vsel %vm1963, %v1925, 0
      %v1983 = vsel %vm1963, %v1926, 0
      %v1986 = vsel %vm1963, %v1927, 0
      %v1989 = vsel %vm1963, %v1928, 0
      %v1992 = vsel %vm1963, %v1929, 0
      %v1995 = vsel %vm1963, %v1930, 0
      %v1998 = vsel %vm1963, %v1931, 0
      %v2001 = vsel %vm1963, %v1932, 0
      %v2004 = vsel %vm1963, %v1933, 0
      %v2007 = vsel %vm1963, %v1934, 0
      %v2010 = vsel %vm1963, %v1935, 0
      %vm2012 = vcmask 1041408
      %v2014 = vsel %vm2012, %v1960, 0
      %2016 = vmatprep.subr.bf16.mxu0 0
      %2017 = vmatpush1.bf16.msra.mxu0 %v1958
      %2018 = vmatprep.subr.bf16.mxu0 0
      %2019 = vmatpush1.bf16.msra.mxu0 %v1959
      %2020 = vmatprep.subr.bf16.mxu0 0
      %2021 = vmatpush1.bf16.msra.mxu0 %v2014
      %2022 = vmatprep.subr.bf16.mxu0 0
      %2023 = vmatpush1.bf16.msra.mxu0 0
      %2024 = vmatprep.subr.bf16.mxu0 0
      %2025 = vmatpush1.bf16.msra.mxu0 0
      %2026 = vmatprep.subr.bf16.mxu0 0
      %2027 = vmatpush1.bf16.msra.mxu0 0
      %2028 = vmatprep.subr.bf16.mxu0 0
      %2029 = vmatpush1.bf16.msra.mxu0 0
      %2030 = vmatprep.subr.bf16.mxu0 0
      %2031 = vmatpush1.bf16.msra.mxu0 0
      %2032 = vmatprep.subr.bf16.mxu0 0
      %2033 = vmatpush1.bf16.msra.mxu0 0
      %2034 = vmatprep.subr.bf16.mxu0 0
      %2035 = vmatpush1.bf16.msra.mxu0 0
      %2036 = vmatprep.subr.bf16.mxu0 0
      %2037 = vmatpush1.bf16.msra.mxu0 0
      %2038 = vmatprep.subr.bf16.mxu0 0
      %2039 = vmatpush1.bf16.msra.mxu0 0
      %2040 = vmatprep.subr.bf16.mxu0 0
      %2041 = vmatpush1.bf16.msra.mxu0 0
      %2042 = vmatprep.subr.bf16.mxu0 0
      %2043 = vmatpush1.bf16.msra.mxu0 0
      %2044 = vmatprep.subr.bf16.mxu0 0
      %2045 = vmatpush1.bf16.msra.mxu0 0
      %2046 = vmatprep.subr.bf16.mxu0 0
      %2047 = vmatpush1.bf16.msra.mxu0 0
      %2048 = vmatprep.mubr.bf16.mxu0 0
      %2049 = vmatmul.mubr.bf16.gmra.mrb[0].mxu0 %v1965
      %v2050 = vpop.f32.mrb[0].mxu0
      %v2051 = vadd.f32 %v1946, %v2050
      %v2052 = vpop.f32.mrb[0].mxu0
      %v2053 = vpop.f32.mrb[0].mxu0
      %v2054 = vadd.f32 %v1946, %v2053
      %v2055 = vpop.f32.mrb[0].mxu0
      %2056 = vmatprep.mubr.bf16.mxu0 0
      %2057 = vmatmul.mubr.bf16.gmra.mrb[0].mxu0 %v1968
      %v2058 = vpop.f32.mrb[0].mxu0
      %v2059 = vadd.f32 %v1946, %v2058
      %v2060 = vpop.f32.mrb[0].mxu0
      %v2061 = vpop.f32.mrb[0].mxu0
      %v2062 = vadd.f32 %v1946, %v2061
      %v2063 = vpop.f32.mrb[0].mxu0
      %2064 = vmatprep.mubr.bf16.mxu0 0
      %2065 = vmatmul.mubr.bf16.gmra.mrb[0].mxu0 %v1971
      %v2066 = vpop.f32.mrb[0].mxu0
      %v2067 = vadd.f32 %v1946, %v2066
      %v2068 = vpop.f32.mrb[0].mxu0
      %v2069 = vpop.f32.mrb[0].mxu0
      %v2070 = vadd.f32 %v1946, %v2069
      %v2071 = vpop.f32.mrb[0].mxu0
      %2072 = vmatprep.mubr.bf16.mxu0 0
      %2073 = vmatmul.mubr.bf16.gmra.mrb[0].mxu0 %v1974
      %v2074 = vpop.f32.mrb[0].mxu0
      %v2075 = vadd.f32 %v1946, %v2074
      %v2076 = vpop.f32.mrb[0].mxu0
      %v2077 = vpop.f32.mrb[0].mxu0
      %v2078 = vadd.f32 %v1946, %v2077
      %v2079 = vpop.f32.mrb[0].mxu0
      %2080 = vmatprep.mubr.bf16.mxu0 0
      %2081 = vmatmul.mubr.bf16.gmra.mrb[0].mxu0 %v1977
      %v2082 = vpop.f32.mrb[0].mxu0
      %v2083 = vadd.f32 %v1946, %v2082
      %v2084 = vpop.f32.mrb[0].mxu0
      %v2085 = vpop.f32.mrb[0].mxu0
      %v2086 = vadd.f32 %v1946, %v2085
      %v2087 = vpop.f32.mrb[0].mxu0
      %2088 = vmatprep.mubr.bf16.mxu0 0
      %2089 = vmatmul.mubr.bf16.gmra.mrb[0].mxu0 %v1980
      %v2090 = vpop.f32.mrb[0].mxu0
      %v2091 = vadd.f32 %v1946, %v2090
      %v2092 = vpop.f32.mrb[0].mxu0
      %v2093 = vpop.f32.mrb[0].mxu0
      %v2094 = vadd.f32 %v1946, %v2093
      %v2095 = vpop.f32.mrb[0].mxu0
      %2096 = vmatprep.mubr.bf16.mxu0 0
      %2097 = vmatmul.mubr.bf16.gmra.mrb[0].mxu0 %v1983
      %v2098 = vpop.f32.mrb[0].mxu0
      %v2099 = vadd.f32 %v1946, %v2098
      %v2100 = vpop.f32.mrb[0].mxu0
      %v2101 = vpop.f32.mrb[0].mxu0
      %v2102 = vadd.f32 %v1946, %v2101
      %v2103 = vpop.f32.mrb[0].mxu0
      %2104 = vmatprep.mubr.bf16.mxu0 0
      %2105 = vmatmul.mubr.bf16.gmra.mrb[0].mxu0 %v1986
      %v2106 = vpop.f32.mrb[0].mxu0
      %v2107 = vadd.f32 %v1946, %v2106
      %v2108 = vpop.f32.mrb[0].mxu0
      %v2109 = vpop.f32.mrb[0].mxu0
      %v2110 = vadd.f32 %v1946, %v2109
      %v2111 = vpop.f32.mrb[0].mxu0
      %2112 = vmatprep.mubr.bf16.mxu0 0
      %2113 = vmatmul.mubr.bf16.gmra.mrb[0].mxu0 %v1989
      %v2114 = vpop.f32.mrb[0].mxu0
      %v2115 = vadd.f32 %v1946, %v2114
      %v2116 = vpop.f32.mrb[0].mxu0
      %v2117 = vpop.f32.mrb[0].mxu0
      %v2118 = vadd.f32 %v1946, %v2117
      %v2119 = vpop.f32.mrb[0].mxu0
      %2120 = vmatprep.mubr.bf16.mxu0 0
      %2121 = vmatmul.mubr.bf16.gmra.mrb[0].mxu0 %v1992
      %v2122 = vpop.f32.mrb[0].mxu0
      %v2123 = vadd.f32 %v1946, %v2122
      %v2124 = vpop.f32.mrb[0].mxu0
      %v2125 = vpop.f32.mrb[0].mxu0
      %v2126 = vadd.f32 %v1946, %v2125
      %v2127 = vpop.f32.mrb[0].mxu0
      %2128 = vmatprep.mubr.bf16.mxu0 0
      %2129 = vmatmul.mubr.bf16.gmra.mrb[0].mxu0 %v1995
      %v2130 = vpop.f32.mrb[0].mxu0
      %v2131 = vadd.f32 %v1946, %v2130
      %v2132 = vpop.f32.mrb[0].mxu0
      %v2133 = vpop.f32.mrb[0].mxu0
      %v2134 = vadd.f32 %v1946, %v2133
      %v2135 = vpop.f32.mrb[0].mxu0
      %2136 = vmatprep.mubr.bf16.mxu0 0
      %2137 = vmatmul.mubr.bf16.gmra.mrb[0].mxu0 %v1998
      %v2138 = vpop.f32.mrb[0].mxu0
      %v2139 = vadd.f32 %v1946, %v2138
      %v2140 = vpop.f32.mrb[0].mxu0
      %v2141 = vpop.f32.mrb[0].mxu0
      %v2142 = vadd.f32 %v1946, %v2141
      %v2143 = vpop.f32.mrb[0].mxu0
      %2144 = vmatprep.mubr.bf16.mxu0 0
      %2145 = vmatmul.mubr.bf16.gmra.mrb[0].mxu0 %v2001
      %v2146 = vpop.f32.mrb[0].mxu0
      %v2147 = vadd.f32 %v1946, %v2146
      %v2148 = vpop.f32.mrb[0].mxu0
      %v2149 = vpop.f32.mrb[0].mxu0
      %v2150 = vadd.f32 %v1946, %v2149
      %v2151 = vpop.f32.mrb[0].mxu0
      %2152 = vmatprep.mubr.bf16.mxu0 0
      %2153 = vmatmul.mubr.bf16.gmra.mrb[0].mxu0 %v2004
      %v2154 = vpop.f32.mrb[0].mxu0
      %v2155 = vadd.f32 %v1946, %v2154
      %v2156 = vpop.f32.mrb[0].mxu0
      %v2157 = vpop.f32.mrb[0].mxu0
      %v2158 = vadd.f32 %v1946, %v2157
      %v2159 = vpop.f32.mrb[0].mxu0
      %2160 = vmatprep.mubr.bf16.mxu0 0
      %2161 = vmatmul.mubr.bf16.gmra.mrb[0].mxu0 %v2007
      %v2162 = vpop.f32.mrb[0].mxu0
      %v2163 = vadd.f32 %v1946, %v2162
      %v2164 = vpop.f32.mrb[0].mxu0
      %v2165 = vpop.f32.mrb[0].mxu0
      %v2166 = vadd.f32 %v1946, %v2165
      %v2167 = vpop.f32.mrb[0].mxu0
      %2168 = vmatprep.mubr.bf16.mxu0 0
      %2169 = vmatmul.mubr.bf16.gmra.mrb[0].mxu0 %v2010
      %v2170 = vpop.f32.mrb[0].mxu0
      %v2171 = vadd.f32 %v1946, %v2170
      %v2172 = vpop.f32.mrb[0].mxu0
      %v2173 = vpop.f32.mrb[0].mxu0
      %v2174 = vadd.f32 %v1946, %v2173
      %v2175 = vpop.f32.mrb[0].mxu0
      %2176 = vdwg.mxu0
      %v2177 = vmax.f32 %v2051, 0.0
      %v2178 = vmax.f32 %v2054, 0.0
      %v2179 = vmax.f32 %v2059, 0.0
      %v2180 = vmax.f32 %v2062, 0.0
      %v2181 = vmax.f32 %v2067, 0.0
      %v2182 = vmax.f32 %v2070, 0.0
      %v2183 = vmax.f32 %v2075, 0.0
      %v2184 = vmax.f32 %v2078, 0.0
      %v2185 = vmax.f32 %v2083, 0.0
      %v2186 = vmax.f32 %v2086, 0.0
      %v2187 = vmax.f32 %v2091, 0.0
      %v2188 = vmax.f32 %v2094, 0.0
      %v2189 = vmax.f32 %v2099, 0.0
      %v2190 = vmax.f32 %v2102, 0.0
      %v2191 = vmax.f32 %v2107, 0.0
      %v2192 = vmax.f32 %v2110, 0.0
      %v2193 = vmax.f32 %v2115, 0.0
      %v2194 = vmax.f32 %v2118, 0.0
      %v2195 = vmax.f32 %v2123, 0.0
      %v2196 = vmax.f32 %v2126, 0.0
      %v2197 = vmax.f32 %v2131, 0.0
      %v2198 = vmax.f32 %v2134, 0.0
      %v2199 = vmax.f32 %v2139, 0.0
      %v2200 = vmax.f32 %v2142, 0.0
      %v2201 = vmax.f32 %v2147, 0.0
      %v2202 = vmax.f32 %v2150, 0.0
      %v2203 = vmax.f32 %v2155, 0.0
      %v2204 = vmax.f32 %v2158, 0.0
      %v2205 = vmax.f32 %v2163, 0.0
      %v2206 = vmax.f32 %v2166, 0.0
      %v2207 = vmax.f32 %v2171, 0.0
      %v2208 = vmax.f32 %v2174, 0.0
      %s2209 = scalar_lea.vmem [#allocation4], 24
      %2210 = vst.msk [vmem:[%s2209 + $0x1] sm:$0xff] %vm552, %v2177
      %2211 = vst.msk [vmem:[%s2209 + $0x9] sm:$0xff] %vm552, %v2178
      %2212 = vst.msk [vmem:[%s2209 + $0x19] sm:$0xff] %vm552, %v2179
      %2213 = vst.msk [vmem:[%s2209 + $0x21] sm:$0xff] %vm552, %v2180
      %2214 = vst.msk [vmem:[%s2209 + $0x31] sm:$0xff] %vm552, %v2181
      %2215 = vst.msk [vmem:[%s2209 + $0x39] sm:$0xff] %vm552, %v2182
      %2216 = vst.msk [vmem:[%s2209 + $0x49] sm:$0xff] %vm552, %v2183
      %2217 = vst.msk [vmem:[%s2209 + $0x51] sm:$0xff] %vm552, %v2184
      %2218 = vst.msk [vmem:[%s2209 + $0x61] sm:$0xff] %vm552, %v2185
      %2219 = vst.msk [vmem:[%s2209 + $0x69] sm:$0xff] %vm552, %v2186
      %2220 = vst.msk [vmem:[%s2209 + $0x79] sm:$0xff] %vm552, %v2187
      %2221 = vst.msk [vmem:[%s2209 + $0x81] sm:$0xff] %vm552, %v2188
      %2222 = vst.msk [vmem:[%s2209 + $0x91] sm:$0xff] %vm552, %v2189
      %2223 = vst.msk [vmem:[%s2209 + $0x99] sm:$0xff] %vm552, %v2190
      %2224 = vst.msk [vmem:[%s2209 + $0xa9] sm:$0xff] %vm552, %v2191
      %2225 = vst.msk [vmem:[%s2209 + $0xb1] sm:$0xff] %vm552, %v2192
      %2226 = vst.msk [vmem:[%s2209 + $0xc1] sm:$0xff] %vm552, %v2193
      %2227 = vst.msk [vmem:[%s2209 + $0xc9] sm:$0xff] %vm552, %v2194
      %2228 = vst.msk [vmem:[%s2209 + $0xd9] sm:$0xff] %vm552, %v2195
      %2229 = vst.msk [vmem:[%s2209 + $0xe1] sm:$0xff] %vm552, %v2196
      %2230 = vst.msk [vmem:[%s2209 + $0xf1] sm:$0xff] %vm552, %v2197
      %2231 = vst.msk [vmem:[%s2209 + $0xf9] sm:$0xff] %vm552, %v2198
      %2232 = vst.msk [vmem:[%s2209 + $0x109] sm:$0xff] %vm552, %v2199
      %2233 = vst.msk [vmem:[%s2209 + $0x111] sm:$0xff] %vm552, %v2200
      %2234 = vst.msk [vmem:[%s2209 + $0x121] sm:$0xff] %vm552, %v2201
      %2235 = vst.msk [vmem:[%s2209 + $0x129] sm:$0xff] %vm552, %v2202
      %2236 = vst.msk [vmem:[%s2209 + $0x139] sm:$0xff] %vm552, %v2203
      %2237 = vst.msk [vmem:[%s2209 + $0x141] sm:$0xff] %vm552, %v2204
      %2238 = vst.msk [vmem:[%s2209 + $0x151] sm:$0xff] %vm552, %v2205
      %2239 = vst.msk [vmem:[%s2209 + $0x159] sm:$0xff] %vm552, %v2206
      %2240 = vst.msk [vmem:[%s2209 + $0x169] sm:$0xff] %vm552, %v2207
      %2241 = vst.msk [vmem:[%s2209 + $0x171] sm:$0xff] %vm552, %v2208
      %s2242 = scalar_lea.vmem %s2209, 1 [#allocation4]
      %v2243 = vld [vmem:[%s2242] ss:$2 sm:$0xff]
      %s2244 = scalar_lea.vmem %s2209, 49 [#allocation4]
      %v2245 = vld [vmem:[%s2244] ss:$2 sm:$0xff]
      %s2246 = scalar_lea.vmem %s2209, 97 [#allocation4]
      %v2247 = vld [vmem:[%s2246] ss:$2 sm:$0xff]
      %s2248 = scalar_lea.vmem %s2209, 145 [#allocation4]
      %v2249 = vld [vmem:[%s2248] ss:$2 sm:$0xff]
      %s2250 = scalar_lea.vmem %s2209, 193 [#allocation4]
      %v2251 = vld [vmem:[%s2250] ss:$2 sm:$0xff]
      %s2252 = scalar_lea.vmem %s2209, 241 [#allocation4]
      %v2253 = vld [vmem:[%s2252] ss:$2 sm:$0xff]
      %s2254 = scalar_lea.vmem %s2209, 289 [#allocation4]
      %v2255 = vld [vmem:[%s2254] ss:$2 sm:$0xff]
      %s2256 = scalar_lea.vmem %s2209, 337 [#allocation4]
      %v2257 = vld [vmem:[%s2256] ss:$2 sm:$0xff]
      %s2258 = scalar_lea.vmem %s2209, 2 [#allocation4]
      %v2259 = vld [vmem:[%s2258] ss:$2 sm:$0xff]
      %s2260 = scalar_lea.vmem %s2209, 50 [#allocation4]
      %v2261 = vld [vmem:[%s2260] ss:$2 sm:$0xff]
      %s2262 = scalar_lea.vmem %s2209, 98 [#allocation4]
      %v2263 = vld [vmem:[%s2262] ss:$2 sm:$0xff]
      %s2264 = scalar_lea.vmem %s2209, 146 [#allocation4]
      %v2265 = vld [vmem:[%s2264] ss:$2 sm:$0xff]
      %s2266 = scalar_lea.vmem %s2209, 194 [#allocation4]
      %v2267 = vld [vmem:[%s2266] ss:$2 sm:$0xff]
      %s2268 = scalar_lea.vmem %s2209, 242 [#allocation4]
      %v2269 = vld [vmem:[%s2268] ss:$2 sm:$0xff]
      %s2270 = scalar_lea.vmem %s2209, 290 [#allocation4]
      %v2271 = vld [vmem:[%s2270] ss:$2 sm:$0xff]
      %s2272 = scalar_lea.vmem %s2209, 338 [#allocation4]
      %v2273 = vld [vmem:[%s2272] ss:$2 sm:$0xff]
      %v2274 = vmax.f32 %v2243, %v2259
      %v2275 = vmax.f32 %v2245, %v2261
      %v2276 = vmax.f32 %v2247, %v2263
      %v2277 = vmax.f32 %v2249, %v2265
      %v2278 = vmax.f32 %v2251, %v2267
      %v2279 = vmax.f32 %v2253, %v2269
      %v2280 = vmax.f32 %v2255, %v2271
      %v2281 = vmax.f32 %v2257, %v2273
      %s2282 = scalar_lea.vmem [#allocation4], 48
      %s2283 = scalar_lea.vmem %s2282, 1 [#allocation4]
      %v2284 = vld [vmem:[%s2283] ss:$2 sm:$0xff]
      %s2285 = scalar_lea.vmem %s2282, 49 [#allocation4]
      %v2286 = vld [vmem:[%s2285] ss:$2 sm:$0xff]
      %s2287 = scalar_lea.vmem %s2282, 97 [#allocation4]
      %v2288 = vld [vmem:[%s2287] ss:$2 sm:$0xff]
      %s2289 = scalar_lea.vmem %s2282, 145 [#allocation4]
      %v2290 = vld [vmem:[%s2289] ss:$2 sm:$0xff]
      %s2291 = scalar_lea.vmem %s2282, 193 [#allocation4]
      %v2292 = vld [vmem:[%s2291] ss:$2 sm:$0xff]
      %s2293 = scalar_lea.vmem %s2282, 241 [#allocation4]
      %v2294 = vld [vmem:[%s2293] ss:$2 sm:$0xff]
      %s2295 = scalar_lea.vmem %s2282, 289 [#allocation4]
      %v2296 = vld [vmem:[%s2295] ss:$2 sm:$0xff]
      %s2297 = scalar_lea.vmem %s2282, 337 [#allocation4]
      %v2298 = vld [vmem:[%s2297] ss:$2 sm:$0xff]
      %s2299 = scalar_lea.vmem %s2282, 2 [#allocation4]
      %v2300 = vld [vmem:[%s2299] ss:$2 sm:$0xff]
      %s2301 = scalar_lea.vmem %s2282, 50 [#allocation4]
      %v2302 = vld [vmem:[%s2301] ss:$2 sm:$0xff]
      %s2303 = scalar_lea.vmem %s2282, 98 [#allocation4]
      %v2304 = vld [vmem:[%s2303] ss:$2 sm:$0xff]
      %s2305 = scalar_lea.vmem %s2282, 146 [#allocation4]
      %v2306 = vld [vmem:[%s2305] ss:$2 sm:$0xff]
      %s2307 = scalar_lea.vmem %s2282, 194 [#allocation4]
      %v2308 = vld [vmem:[%s2307] ss:$2 sm:$0xff]
      %s2309 = scalar_lea.vmem %s2282, 242 [#allocation4]
      %v2310 = vld [vmem:[%s2309] ss:$2 sm:$0xff]
      %s2311 = scalar_lea.vmem %s2282, 290 [#allocation4]
      %v2312 = vld [vmem:[%s2311] ss:$2 sm:$0xff]
      %s2313 = scalar_lea.vmem %s2282, 338 [#allocation4]
      %v2314 = vld [vmem:[%s2313] ss:$2 sm:$0xff]
      %v2315 = vmax.f32 %v2284, %v2300
      %v2316 = vmax.f32 %v2286, %v2302
      %v2317 = vmax.f32 %v2288, %v2304
      %v2318 = vmax.f32 %v2290, %v2306
      %v2319 = vmax.f32 %v2292, %v2308
      %v2320 = vmax.f32 %v2294, %v2310
      %v2321 = vmax.f32 %v2296, %v2312
      %v2322 = vmax.f32 %v2298, %v2314
      %v2323 = vmax.f32 %v2274, %v2315
      %v2324 = vmax.f32 %v2275, %v2316
      %v2325 = vmax.f32 %v2276, %v2317
      %v2326 = vmax.f32 %v2277, %v2318
      %v2327 = vmax.f32 %v2278, %v2319
      %v2328 = vmax.f32 %v2279, %v2320
      %v2329 = vmax.f32 %v2280, %v2321
      %v2330 = vmax.f32 %v2281, %v2322
      %s2331 = scalar_lea.vmem [#allocation5], 16
      %2332 = vst.msk [vmem:[%s2331 + $0x1] sm:$0xff] %vm552, %v2323
      %2333 = vst.msk [vmem:[%s2331 + $0x11] sm:$0xff] %vm552, %v2324
      %2334 = vst.msk [vmem:[%s2331 + $0x21] sm:$0xff] %vm552, %v2325
      %2335 = vst.msk [vmem:[%s2331 + $0x31] sm:$0xff] %vm552, %v2326
      %2336 = vst.msk [vmem:[%s2331 + $0x41] sm:$0xff] %vm552, %v2327
      %2337 = vst.msk [vmem:[%s2331 + $0x51] sm:$0xff] %vm552, %v2328
      %2338 = vst.msk [vmem:[%s2331 + $0x61] sm:$0xff] %vm552, %v2329
      %2339 = vst.msk [vmem:[%s2331 + $0x71] sm:$0xff] %vm552, %v2330
      %v2340 = vld [vmem:[#allocation5] sm:$0xff]
      %v2341 = vld [vmem:[#allocation5 + $0x10] sm:$0xff]
      %v2342 = vld [vmem:[#allocation5 + $0x20] sm:$0xff]
      %v2343 = vld [vmem:[#allocation5 + $0x30] sm:$0xff]
      %v2344 = vld [vmem:[#allocation5 + $0x40] sm:$0xff]
      %v2345 = vld [vmem:[#allocation5 + $0x50] sm:$0xff]
      %v2346 = vld [vmem:[#allocation5 + $0x60] sm:$0xff]
      %v2347 = vld [vmem:[#allocation5 + $0x70] sm:$0xff]
      %v2348 = vpack.c.bf16 %v2341, %v2340
      %v2349 = vpack.c.bf16 %v2343, %v2342
      %v2350 = vpack.c.bf16 %v2345, %v2344
      %v2351 = vpack.c.bf16 %v2347, %v2346
      %2352 = vst.msk [vmem:[#allocation2] sm:$0xff] %vm552, %v2348
      %2353 = vst.msk [vmem:[#allocation2 + $0x18] sm:$0xff] %vm552, %v2349
      %2354 = vst.msk [vmem:[#allocation2 + $0x30] sm:$0xff] %vm552, %v2350
      %2355 = vst.msk [vmem:[#allocation2 + $0x48] sm:$0xff] %vm552, %v2351
      %v2356 = vld [vmem:[#allocation5 + $0x1] sm:$0xff]
      %v2357 = vld [vmem:[#allocation5 + $0x11] sm:$0xff]
      %v2358 = vld [vmem:[#allocation5 + $0x21] sm:$0xff]
      %v2359 = vld [vmem:[#allocation5 + $0x31] sm:$0xff]
      %v2360 = vld [vmem:[#allocation5 + $0x41] sm:$0xff]
      %v2361 = vld [vmem:[#allocation5 + $0x51] sm:$0xff]
      %v2362 = vld [vmem:[#allocation5 + $0x61] sm:$0xff]
      %v2363 = vld [vmem:[#allocation5 + $0x71] sm:$0xff]
      %v2364 = vpack.c.bf16 %v2357, %v2356
      %v2365 = vpack.c.bf16 %v2359, %v2358
      %v2366 = vpack.c.bf16 %v2361, %v2360
      %v2367 = vpack.c.bf16 %v2363, %v2362
      %2372 = vrot.lane.b32.xlu0 %v2364, 8
      %v2373 = vpop.permute.xlu0 %2372
      %2374 = vrot.lane.b32.xlu0 %v2365, 8
      %v2375 = vpop.permute.xlu0 %2374
      %2376 = vrot.lane.b32.xlu0 %v2366, 8
      %v2377 = vpop.permute.xlu0 %2376
      %2378 = vrot.lane.b32.xlu0 %v2367, 8
      %v2379 = vpop.permute.xlu0 %2378
      %vm2384 = vcmask 130112
      %2385 = vst.msk [vmem:[#allocation2] sm:$0xff] %vm2384, %v2373
      %2386 = vst.msk [vmem:[#allocation2 + $0x18] sm:$0xff] %vm2384, %v2375
      %2387 = vst.msk [vmem:[#allocation2 + $0x30] sm:$0xff] %vm2384, %v2377
      %2388 = vst.msk [vmem:[#allocation2 + $0x48] sm:$0xff] %vm2384, %v2379
      %v2389 = vld [vmem:[#allocation5 + $0x2] sm:$0xff]
      %v2390 = vld [vmem:[#allocation5 + $0x12] sm:$0xff]
      %v2391 = vld [vmem:[#allocation5 + $0x22] sm:$0xff]
      %v2392 = vld [vmem:[#allocation5 + $0x32] sm:$0xff]
      %v2393 = vld [vmem:[#allocation5 + $0x42] sm:$0xff]
      %v2394 = vld [vmem:[#allocation5 + $0x52] sm:$0xff]
      %v2395 = vld [vmem:[#allocation5 + $0x62] sm:$0xff]
      %v2396 = vld [vmem:[#allocation5 + $0x72] sm:$0xff]
      %v2397 = vpack.c.bf16 %v2390, %v2389
      %v2398 = vpack.c.bf16 %v2392, %v2391
      %v2399 = vpack.c.bf16 %v2394, %v2393
      %v2400 = vpack.c.bf16 %v2396, %v2395
      %2405 = vrot.lane.b32.xlu0 %v2397, 16
      %v2406 = vpop.permute.xlu0 %2405
      %2407 = vrot.lane.b32.xlu0 %v2398, 16
      %v2408 = vpop.permute.xlu0 %2407
      %2409 = vrot.lane.b32.xlu0 %v2399, 16
      %v2410 = vpop.permute.xlu0 %2409
      %2411 = vrot.lane.b32.xlu0 %v2400, 16
      %v2412 = vpop.permute.xlu0 %2411
      %vm2417 = vcmask 195712
      %2418 = vst.msk [vmem:[#allocation2] sm:$0xff] %vm2417, %v2406
      %2419 = vst.msk [vmem:[#allocation2 + $0x18] sm:$0xff] %vm2417, %v2408
      %2420 = vst.msk [vmem:[#allocation2 + $0x30] sm:$0xff] %vm2417, %v2410
      %2421 = vst.msk [vmem:[#allocation2 + $0x48] sm:$0xff] %vm2417, %v2412
      %v2422 = vld [vmem:[%s2331] sm:$0xff]
      %v2423 = vld [vmem:[%s2331 + $0x10] sm:$0xff]
      %v2424 = vld [vmem:[%s2331 + $0x20] sm:$0xff]
      %v2425 = vld [vmem:[%s2331 + $0x30] sm:$0xff]
      %v2426 = vld [vmem:[%s2331 + $0x40] sm:$0xff]
      %v2427 = vld [vmem:[%s2331 + $0x50] sm:$0xff]
      %v2428 = vld [vmem:[%s2331 + $0x60] sm:$0xff]
      %v2429 = vld [vmem:[%s2331 + $0x70] sm:$0xff]
      %v2430 = vpack.c.bf16 %v2423, %v2422
      %v2431 = vpack.c.bf16 %v2425, %v2424
      %v2432 = vpack.c.bf16 %v2427, %v2426
      %v2433 = vpack.c.bf16 %v2429, %v2428
      %2438 = vrot.lane.b32.xlu0 %v2430, 24
      %v2439 = vpop.permute.xlu0 %2438
      %2440 = vrot.lane.b32.xlu0 %v2431, 24
      %v2441 = vpop.permute.xlu0 %2440
      %2442 = vrot.lane.b32.xlu0 %v2432, 24
      %v2443 = vpop.permute.xlu0 %2442
      %2444 = vrot.lane.b32.xlu0 %v2433, 24
      %v2445 = vpop.permute.xlu0 %2444
      %vm2450 = vcmask 261312
      %2451 = vst.msk [vmem:[#allocation2] sm:$0xff] %vm2450, %v2439
      %2452 = vst.msk [vmem:[#allocation2 + $0x18] sm:$0xff] %vm2450, %v2441
      %2453 = vst.msk [vmem:[#allocation2 + $0x30] sm:$0xff] %vm2450, %v2443
      %2454 = vst.msk [vmem:[#allocation2 + $0x48] sm:$0xff] %vm2450, %v2445
      %v2455 = vld [vmem:[%s2331 + $0x1] sm:$0xff]
      %v2456 = vld [vmem:[%s2331 + $0x11] sm:$0xff]
      %v2457 = vld [vmem:[%s2331 + $0x21] sm:$0xff]
      %v2458 = vld [vmem:[%s2331 + $0x31] sm:$0xff]
      %v2459 = vld [vmem:[%s2331 + $0x41] sm:$0xff]
      %v2460 = vld [vmem:[%s2331 + $0x51] sm:$0xff]
      %v2461 = vld [vmem:[%s2331 + $0x61] sm:$0xff]
      %v2462 = vld [vmem:[%s2331 + $0x71] sm:$0xff]
      %v2463 = vpack.c.bf16 %v2456, %v2455
      %v2464 = vpack.c.bf16 %v2458, %v2457
      %v2465 = vpack.c.bf16 %v2460, %v2459
      %v2466 = vpack.c.bf16 %v2462, %v2461
      %2471 = vrot.lane.b32.xlu0 %v2463, 32
      %v2472 = vpop.permute.xlu0 %2471
      %2473 = vrot.lane.b32.xlu0 %v2464, 32
      %v2474 = vpop.permute.xlu0 %2473
      %2475 = vrot.lane.b32.xlu0 %v2465, 32
      %v2476 = vpop.permute.xlu0 %2475
      %2477 = vrot.lane.b32.xlu0 %v2466, 32
      %v2478 = vpop.permute.xlu0 %2477
      %vm2483 = vcmask 326912
      %2484 = vst.msk [vmem:[#allocation2] sm:$0xff] %vm2483, %v2472
      %2485 = vst.msk [vmem:[#allocation2 + $0x18] sm:$0xff] %vm2483, %v2474
      %2486 = vst.msk [vmem:[#allocation2 + $0x30] sm:$0xff] %vm2483, %v2476
      %2487 = vst.msk [vmem:[#allocation2 + $0x48] sm:$0xff] %vm2483, %v2478
      %v2488 = vld [vmem:[%s2331 + $0x2] sm:$0xff]
      %v2489 = vld [vmem:[%s2331 + $0x12] sm:$0xff]
      %v2490 = vld [vmem:[%s2331 + $0x22] sm:$0xff]
      %v2491 = vld [vmem:[%s2331 + $0x32] sm:$0xff]
      %v2492 = vld [vmem:[%s2331 + $0x42] sm:$0xff]
      %v2493 = vld [vmem:[%s2331 + $0x52] sm:$0xff]
      %v2494 = vld [vmem:[%s2331 + $0x62] sm:$0xff]
      %v2495 = vld [vmem:[%s2331 + $0x72] sm:$0xff]
      %v2496 = vpack.c.bf16 %v2489, %v2488
      %v2497 = vpack.c.bf16 %v2491, %v2490
      %v2498 = vpack.c.bf16 %v2493, %v2492
      %v2499 = vpack.c.bf16 %v2495, %v2494
      %2504 = vrot.lane.b32.xlu0 %v2496, 40
      %v2505 = vpop.permute.xlu0 %2504
      %2506 = vrot.lane.b32.xlu0 %v2497, 40
      %v2507 = vpop.permute.xlu0 %2506
      %2508 = vrot.lane.b32.xlu0 %v2498, 40
      %v2509 = vpop.permute.xlu0 %2508
      %2510 = vrot.lane.b32.xlu0 %v2499, 40
      %v2511 = vpop.permute.xlu0 %2510
      %vm2516 = vcmask 392512
      %2517 = vst.msk [vmem:[#allocation2] sm:$0xff] %vm2516, %v2505
      %2518 = vst.msk [vmem:[#allocation2 + $0x18] sm:$0xff] %vm2516, %v2507
      %2519 = vst.msk [vmem:[#allocation2 + $0x30] sm:$0xff] %vm2516, %v2509
      %2520 = vst.msk [vmem:[#allocation2 + $0x48] sm:$0xff] %vm2516, %v2511
      %s2521 = scalar_lea.vmem [#allocation5], 32
      %v2522 = vld [vmem:[%s2521] sm:$0xff]
      %v2523 = vld [vmem:[%s2521 + $0x10] sm:$0xff]
      %v2524 = vld [vmem:[%s2521 + $0x20] sm:$0xff]
      %v2525 = vld [vmem:[%s2521 + $0x30] sm:$0xff]
      %v2526 = vld [vmem:[%s2521 + $0x40] sm:$0xff]
      %v2527 = vld [vmem:[%s2521 + $0x50] sm:$0xff]
      %v2528 = vld [vmem:[%s2521 + $0x60] sm:$0xff]
      %v2529 = vld [vmem:[%s2521 + $0x70] sm:$0xff]
      %v2530 = vpack.c.bf16 %v2523, %v2522
      %v2531 = vpack.c.bf16 %v2525, %v2524
      %v2532 = vpack.c.bf16 %v2527, %v2526
      %v2533 = vpack.c.bf16 %v2529, %v2528
      %2538 = vrot.lane.b32.xlu0 %v2530, 48
      %v2539 = vpop.permute.xlu0 %2538
      %2540 = vrot.lane.b32.xlu0 %v2531, 48
      %v2541 = vpop.permute.xlu0 %2540
      %2542 = vrot.lane.b32.xlu0 %v2532, 48
      %v2543 = vpop.permute.xlu0 %2542
      %2544 = vrot.lane.b32.xlu0 %v2533, 48
      %v2545 = vpop.permute.xlu0 %2544
      %vm2550 = vcmask 458112
      %2551 = vst.msk [vmem:[#allocation2] sm:$0xff] %vm2550, %v2539
      %2552 = vst.msk [vmem:[#allocation2 + $0x18] sm:$0xff] %vm2550, %v2541
      %2553 = vst.msk [vmem:[#allocation2 + $0x30] sm:$0xff] %vm2550, %v2543
      %2554 = vst.msk [vmem:[#allocation2 + $0x48] sm:$0xff] %vm2550, %v2545
      %v2555 = vld [vmem:[%s2521 + $0x1] sm:$0xff]
      %v2556 = vld [vmem:[%s2521 + $0x11] sm:$0xff]
      %v2557 = vld [vmem:[%s2521 + $0x21] sm:$0xff]
      %v2558 = vld [vmem:[%s2521 + $0x31] sm:$0xff]
      %v2559 = vld [vmem:[%s2521 + $0x41] sm:$0xff]
      %v2560 = vld [vmem:[%s2521 + $0x51] sm:$0xff]
      %v2561 = vld [vmem:[%s2521 + $0x61] sm:$0xff]
      %v2562 = vld [vmem:[%s2521 + $0x71] sm:$0xff]
      %v2563 = vpack.c.bf16 %v2556, %v2555
      %v2564 = vpack.c.bf16 %v2558, %v2557
      %v2565 = vpack.c.bf16 %v2560, %v2559
      %v2566 = vpack.c.bf16 %v2562, %v2561
      %2571 = vrot.lane.b32.xlu0 %v2563, 56
      %v2572 = vpop.permute.xlu0 %2571
      %2573 = vrot.lane.b32.xlu0 %v2564, 56
      %v2574 = vpop.permute.xlu0 %2573
      %2575 = vrot.lane.b32.xlu0 %v2565, 56
      %v2576 = vpop.permute.xlu0 %2575
      %2577 = vrot.lane.b32.xlu0 %v2566, 56
      %v2578 = vpop.permute.xlu0 %2577
      %vm2583 = vcmask 523712
      %2584 = vst.msk [vmem:[#allocation2] sm:$0xff] %vm2583, %v2572
      %2585 = vst.msk [vmem:[#allocation2 + $0x18] sm:$0xff] %vm2583, %v2574
      %2586 = vst.msk [vmem:[#allocation2 + $0x30] sm:$0xff] %vm2583, %v2576
      %2587 = vst.msk [vmem:[#allocation2 + $0x48] sm:$0xff] %vm2583, %v2578
      %v2588 = vld [vmem:[%s2521 + $0x2] sm:$0xff]
      %v2589 = vld [vmem:[%s2521 + $0x12] sm:$0xff]
      %v2590 = vld [vmem:[%s2521 + $0x22] sm:$0xff]
      %v2591 = vld [vmem:[%s2521 + $0x32] sm:$0xff]
      %v2592 = vld [vmem:[%s2521 + $0x42] sm:$0xff]
      %v2593 = vld [vmem:[%s2521 + $0x52] sm:$0xff]
      %v2594 = vld [vmem:[%s2521 + $0x62] sm:$0xff]
      %v2595 = vld [vmem:[%s2521 + $0x72] sm:$0xff]
      %v2596 = vpack.c.bf16 %v2589, %v2588
      %v2597 = vpack.c.bf16 %v2591, %v2590
      %v2598 = vpack.c.bf16 %v2593, %v2592
      %v2599 = vpack.c.bf16 %v2595, %v2594
      %2604 = vrot.lane.b32.xlu0 %v2596, 64
      %v2605 = vpop.permute.xlu0 %2604
      %2606 = vrot.lane.b32.xlu0 %v2597, 64
      %v2607 = vpop.permute.xlu0 %2606
      %2608 = vrot.lane.b32.xlu0 %v2598, 64
      %v2609 = vpop.permute.xlu0 %2608
      %2610 = vrot.lane.b32.xlu0 %v2599, 64
      %v2611 = vpop.permute.xlu0 %2610
      %vm2616 = vcmask 589312
      %2617 = vst.msk [vmem:[#allocation2] sm:$0xff] %vm2616, %v2605
      %2618 = vst.msk [vmem:[#allocation2 + $0x18] sm:$0xff] %vm2616, %v2607
      %2619 = vst.msk [vmem:[#allocation2 + $0x30] sm:$0xff] %vm2616, %v2609
      %2620 = vst.msk [vmem:[#allocation2 + $0x48] sm:$0xff] %vm2616, %v2611
      %v2621 = vld [vmem:[#allocation2] sm:$0xff]
      %v2622 = vld [vmem:[#allocation2 + $0x18] sm:$0xff]
      %v2623 = vld [vmem:[#allocation2 + $0x30] sm:$0xff]
      %v2624 = vld [vmem:[#allocation2 + $0x48] sm:$0xff]
      %v2625 = vld [vmem:[%s3] sm:$0xf]
      %v2626 = vld [vmem:[%s3 + $0x4] sm:$0xf]
      %v2627 = vld [vmem:[%s3 + $0x8] sm:$0xf]
      %v2628 = vld [vmem:[%s3 + $0xc] sm:$0xf]
      %v2629 = vld [vmem:[%s3 + $0x10] sm:$0xf]
      %v2630 = vld [vmem:[%s3 + $0x14] sm:$0xf]
      %v2631 = vld [vmem:[%s3 + $0x18] sm:$0xf]
      %v2632 = vld [vmem:[%s3 + $0x1c] sm:$0xf]
      %v2633 = vld [vmem:[%s3 + $0x20] sm:$0xf]
      %v2634 = vld [vmem:[%s4] sm:$0x1]
      %v2636 = vlaneseq
      %v2637 = vshrl.u32 %v2636, 7
      %v2638 = vsub.s32 0, %v2637
      %v2639 = vrot.slane %v2634, %v2638
      %v2650 = vunpack.c.l.b16 %v2625
      %v2651 = vunpack.c.l.b16 %v2626
      %v2652 = vunpack.c.l.b16 %v2627
      %v2653 = vunpack.c.l.b16 %v2628
      %v2654 = vunpack.c.l.b16 %v2629
      %v2655 = vunpack.c.l.b16 %v2630
      %v2656 = vunpack.c.l.b16 %v2631
      %v2657 = vunpack.c.l.b16 %v2632
      %v2658 = vunpack.c.l.b16 %v2633
      %v2659 = vpack.c.b16 %v2651, %v2650
      %v2660 = vpack.c.b16 %v2653, %v2652
      %v2661 = vpack.c.b16 %v2655, %v2654
      %v2662 = vpack.c.b16 %v2657, %v2656
      %v2663 = vpack.c.b16 %v2658, %v2658
      %vm2668 = vcmask 588800
      %v2670 = vsel %vm2668, %v2621, 0
      %v2673 = vsel %vm2668, %v2622, 0
      %v2676 = vsel %vm2668, %v2623, 0
      %v2679 = vsel %vm2668, %v2624, 0
      %vm2681 = vcmask 1043456
      %v2683 = vsel %vm2681, %v2663, 0
      %2685 = vmatprep.subr.bf16.mxu0 0
      %2686 = vmatpush1.bf16.msra.mxu0 %v2659
      %2687 = vmatprep.subr.bf16.mxu0 0
      %2688 = vmatpush1.bf16.msra.mxu0 %v2660
      %2689 = vmatprep.subr.bf16.mxu0 0
      %2690 = vmatpush1.bf16.msra.mxu0 %v2661
      %2691 = vmatprep.subr.bf16.mxu0 0
      %2692 = vmatpush1.bf16.msra.mxu0 %v2662
      %2693 = vmatprep.subr.bf16.mxu0 0
      %2694 = vmatpush1.bf16.msra.mxu0 %v2683
      %2695 = vmatprep.subr.bf16.mxu0 0
      %2696 = vmatpush1.bf16.msra.mxu0 0
      %2697 = vmatprep.subr.bf16.mxu0 0
      %2698 = vmatpush1.bf16.msra.mxu0 0
      %2699 = vmatprep.subr.bf16.mxu0 0
      %2700 = vmatpush1.bf16.msra.mxu0 0
      %2701 = vmatprep.subr.bf16.mxu0 0
      %2702 = vmatpush1.bf16.msra.mxu0 0
      %2703 = vmatprep.subr.bf16.mxu0 0
      %2704 = vmatpush1.bf16.msra.mxu0 0
      %2705 = vmatprep.subr.bf16.mxu0 0
      %2706 = vmatpush1.bf16.msra.mxu0 0
      %2707 = vmatprep.subr.bf16.mxu0 0
      %2708 = vmatpush1.bf16.msra.mxu0 0
      %2709 = vmatprep.subr.bf16.mxu0 0
      %2710 = vmatpush1.bf16.msra.mxu0 0
      %2711 = vmatprep.subr.bf16.mxu0 0
      %2712 = vmatpush1.bf16.msra.mxu0 0
      %2713 = vmatprep.subr.bf16.mxu0 0
      %2714 = vmatpush1.bf16.msra.mxu0 0
      %2715 = vmatprep.subr.bf16.mxu0 0
      %2716 = vmatpush1.bf16.msra.mxu0 0
      %2717 = vmatprep.mubr.bf16.mxu0 0
      %2718 = vmatmul.mubr.bf16.gmra.mrb[0].mxu0 %v2670
      %v2719 = vpop.f32.mrb[0].mxu0
      %v2720 = vadd.f32 %v2639, %v2719
      %v2721 = vpop.f32.mrb[0].mxu0
      %v2722 = vpop.f32.mrb[0].mxu0
      %v2723 = vadd.f32 %v2639, %v2722
      %v2724 = vpop.f32.mrb[0].mxu0
      %2725 = vmatprep.mubr.bf16.mxu0 0
      %2726 = vmatmul.mubr.bf16.gmra.mrb[0].mxu0 %v2673
      %v2727 = vpop.f32.mrb[0].mxu0
      %v2728 = vadd.f32 %v2639, %v2727
      %v2729 = vpop.f32.mrb[0].mxu0
      %v2730 = vpop.f32.mrb[0].mxu0
      %v2731 = vadd.f32 %v2639, %v2730
      %v2732 = vpop.f32.mrb[0].mxu0
      %2733 = vmatprep.mubr.bf16.mxu0 0
      %2734 = vmatmul.mubr.bf16.gmra.mrb[0].mxu0 %v2676
      %v2735 = vpop.f32.mrb[0].mxu0
      %v2736 = vadd.f32 %v2639, %v2735
      %v2737 = vpop.f32.mrb[0].mxu0
      %v2738 = vpop.f32.mrb[0].mxu0
      %v2739 = vadd.f32 %v2639, %v2738
      %v2740 = vpop.f32.mrb[0].mxu0
      %2741 = vmatprep.mubr.bf16.mxu0 0
      %2742 = vmatmul.mubr.bf16.gmra.mrb[0].mxu0 %v2679
      %v2743 = vpop.f32.mrb[0].mxu0
      %v2744 = vadd.f32 %v2639, %v2743
      %v2745 = vpop.f32.mrb[0].mxu0
      %v2746 = vpop.f32.mrb[0].mxu0
      %v2747 = vadd.f32 %v2639, %v2746
      %v2748 = vpop.f32.mrb[0].mxu0
      %2749 = vdwg.mxu0
      %v2750 = vmax.f32 %v2720, 0.0
      %v2751 = vmax.f32 %v2723, 0.0
      %v2752 = vmax.f32 %v2728, 0.0
      %v2753 = vmax.f32 %v2731, 0.0
      %v2754 = vmax.f32 %v2736, 0.0
      %v2755 = vmax.f32 %v2739, 0.0
      %v2756 = vmax.f32 %v2744, 0.0
      %v2757 = vmax.f32 %v2747, 0.0
      %s2758 = scalar_lea.vmem [#allocation6], 16
      %2759 = vst.msk [vmem:[%s2758 + $0x1] sm:$0xff] %vm628, %v2750
      %2760 = vst.msk [vmem:[%s2758 + $0x11] sm:$0xff] %vm628, %v2751
      %2761 = vst.msk [vmem:[%s2758 + $0x21] sm:$0xff] %vm628, %v2752
      %2762 = vst.msk [vmem:[%s2758 + $0x31] sm:$0xff] %vm628, %v2753
      %2763 = vst.msk [vmem:[%s2758 + $0x41] sm:$0xff] %vm628, %v2754
      %2764 = vst.msk [vmem:[%s2758 + $0x51] sm:$0xff] %vm628, %v2755
      %2765 = vst.msk [vmem:[%s2758 + $0x61] sm:$0xff] %vm628, %v2756
      %2766 = vst.msk [vmem:[%s2758 + $0x71] sm:$0xff] %vm628, %v2757
      %s2767 = scalar_lea.vmem %s2758, 1 [#allocation6]
      %v2768 = vld [vmem:[%s2767] ss:$2 sm:$0xf]
      %s2769 = scalar_lea.vmem %s2758, 33 [#allocation6]
      %v2770 = vld [vmem:[%s2769] ss:$2 sm:$0xf]
      %s2771 = scalar_lea.vmem %s2758, 65 [#allocation6]
      %v2772 = vld [vmem:[%s2771] ss:$2 sm:$0xf]
      %s2773 = scalar_lea.vmem %s2758, 97 [#allocation6]
      %v2774 = vld [vmem:[%s2773] ss:$2 sm:$0xf]
      %s2775 = scalar_lea.vmem %s2758, 2 [#allocation6]
      %v2776 = vld [vmem:[%s2775] ss:$2 sm:$0xf]
      %s2777 = scalar_lea.vmem %s2758, 34 [#allocation6]
      %v2778 = vld [vmem:[%s2777] ss:$2 sm:$0xf]
      %s2779 = scalar_lea.vmem %s2758, 66 [#allocation6]
      %v2780 = vld [vmem:[%s2779] ss:$2 sm:$0xf]
      %s2781 = scalar_lea.vmem %s2758, 98 [#allocation6]
      %v2782 = vld [vmem:[%s2781] ss:$2 sm:$0xf]
      %v2783 = vmax.f32 %v2768, %v2776
      %v2784 = vmax.f32 %v2770, %v2778
      %v2785 = vmax.f32 %v2772, %v2780
      %v2786 = vmax.f32 %v2774, %v2782
      %s2787 = scalar_lea.vmem [#allocation6], 32
      %s2788 = scalar_lea.vmem %s2787, 1 [#allocation6]
      %v2789 = vld [vmem:[%s2788] ss:$2 sm:$0xf]
      %s2790 = scalar_lea.vmem %s2787, 33 [#allocation6]
      %v2791 = vld [vmem:[%s2790] ss:$2 sm:$0xf]
      %s2792 = scalar_lea.vmem %s2787, 65 [#allocation6]
      %v2793 = vld [vmem:[%s2792] ss:$2 sm:$0xf]
      %s2794 = scalar_lea.vmem %s2787, 97 [#allocation6]
      %v2795 = vld [vmem:[%s2794] ss:$2 sm:$0xf]
      %s2796 = scalar_lea.vmem %s2787, 2 [#allocation6]
      %v2797 = vld [vmem:[%s2796] ss:$2 sm:$0xf]
      %s2798 = scalar_lea.vmem %s2787, 34 [#allocation6]
      %v2799 = vld [vmem:[%s2798] ss:$2 sm:$0xf]
      %s2800 = scalar_lea.vmem %s2787, 66 [#allocation6]
      %v2801 = vld [vmem:[%s2800] ss:$2 sm:$0xf]
      %s2802 = scalar_lea.vmem %s2787, 98 [#allocation6]
      %v2803 = vld [vmem:[%s2802] ss:$2 sm:$0xf]
      %v2804 = vmax.f32 %v2789, %v2797
      %v2805 = vmax.f32 %v2791, %v2799
      %v2806 = vmax.f32 %v2793, %v2801
      %v2807 = vmax.f32 %v2795, %v2803
      %v2808 = vmax.f32 %v2783, %v2804
      %v2809 = vmax.f32 %v2784, %v2805
      %v2810 = vmax.f32 %v2785, %v2806
      %v2811 = vmax.f32 %v2786, %v2807
      %s2812 = scalar_lea.vmem [#allocation7], 8
      %vm2813 = vcmask 125952
      %2814 = vst.msk [vmem:[%s2812 + $0x1] sm:$0xf] %vm2813, %v2808
      %2815 = vst.msk [vmem:[%s2812 + $0x9] sm:$0xf] %vm2813, %v2809
      %2816 = vst.msk [vmem:[%s2812 + $0x11] sm:$0xf] %vm2813, %v2810
      %2817 = vst.msk [vmem:[%s2812 + $0x19] sm:$0xf] %vm2813, %v2811
      %v2818 = vld [vmem:[#allocation7] sm:$0xf]
      %v2819 = vld [vmem:[#allocation7 + $0x8] sm:$0xf]
      %v2820 = vld [vmem:[#allocation7 + $0x10] sm:$0xf]
      %v2821 = vld [vmem:[#allocation7 + $0x18] sm:$0xf]
      %v2826 = vcombine.low %v2818, %v2819
      %v2827 = vcombine.low %v2820, %v2821
      %v2830 = vpack.c.bf16 %v2827, %v2826
      %2831 = vst.msk [vmem:[#allocation2] sm:$0xff] %vm628, %v2830
      %v2832 = vld [vmem:[#allocation7 + $0x1] sm:$0xf]
      %v2833 = vld [vmem:[#allocation7 + $0x9] sm:$0xf]
      %v2834 = vld [vmem:[#allocation7 + $0x11] sm:$0xf]
      %v2835 = vld [vmem:[#allocation7 + $0x19] sm:$0xf]
      %v2840 = vcombine.low %v2832, %v2833
      %v2841 = vcombine.low %v2834, %v2835
      %v2844 = vpack.c.bf16 %v2841, %v2840
      %2846 = vrot.lane.b32.xlu0 %v2844, 16
      %v2847 = vpop.permute.xlu0 %2846
      %vm2849 = vcmask 261248
      %2850 = vst.msk [vmem:[#allocation2] sm:$0xff] %vm2849, %v2847
      %v2851 = vld [vmem:[#allocation7 + $0x2] sm:$0xf]
      %v2852 = vld [vmem:[#allocation7 + $0xa] sm:$0xf]
      %v2853 = vld [vmem:[#allocation7 + $0x12] sm:$0xf]
      %v2854 = vld [vmem:[#allocation7 + $0x1a] sm:$0xf]
      %v2859 = vcombine.low %v2851, %v2852
      %v2860 = vcombine.low %v2853, %v2854
      %v2863 = vpack.c.bf16 %v2860, %v2859
      %2865 = vrot.lane.b32.xlu0 %v2863, 32
      %v2866 = vpop.permute.xlu0 %2865
      %vm2868 = vcmask 392448
      %2869 = vst.msk [vmem:[#allocation2] sm:$0xff] %vm2868, %v2866
      %v2870 = vld [vmem:[%s2812] sm:$0xf]
      %v2871 = vld [vmem:[%s2812 + $0x8] sm:$0xf]
      %v2872 = vld [vmem:[%s2812 + $0x10] sm:$0xf]
      %v2873 = vld [vmem:[%s2812 + $0x18] sm:$0xf]
      %v2878 = vcombine.low %v2870, %v2871
      %v2879 = vcombine.low %v2872, %v2873
      %v2882 = vpack.c.bf16 %v2879, %v2878
      %2884 = vrot.lane.b32.xlu0 %v2882, 48
      %v2885 = vpop.permute.xlu0 %2884
      %vm2887 = vcmask 523648
      %2888 = vst.msk [vmem:[#allocation2] sm:$0xff] %vm2887, %v2885
      %v2889 = vld [vmem:[%s2812 + $0x1] sm:$0xf]
      %v2890 = vld [vmem:[%s2812 + $0x9] sm:$0xf]
      %v2891 = vld [vmem:[%s2812 + $0x11] sm:$0xf]
      %v2892 = vld [vmem:[%s2812 + $0x19] sm:$0xf]
      %v2897 = vcombine.low %v2889, %v2890
      %v2898 = vcombine.low %v2891, %v2892
      %v2901 = vpack.c.bf16 %v2898, %v2897
      %2903 = vrot.lane.b32.xlu0 %v2901, 64
      %v2904 = vpop.permute.xlu0 %2903
      %vm2906 = vcmask 654848
      %2907 = vst.msk [vmem:[#allocation2] sm:$0xff] %vm2906, %v2904
      %v2908 = vld [vmem:[%s2812 + $0x2] sm:$0xf]
      %v2909 = vld [vmem:[%s2812 + $0xa] sm:$0xf]
      %v2910 = vld [vmem:[%s2812 + $0x12] sm:$0xf]
      %v2911 = vld [vmem:[%s2812 + $0x1a] sm:$0xf]
      %v2916 = vcombine.low %v2908, %v2909
      %v2917 = vcombine.low %v2910, %v2911
      %v2920 = vpack.c.bf16 %v2917, %v2916
      %2922 = vrot.lane.b32.xlu0 %v2920, 80
      %v2923 = vpop.permute.xlu0 %2922
      %vm2925 = vcmask 786048
      %2926 = vst.msk [vmem:[#allocation2] sm:$0xff] %vm2925, %v2923
      %s2927 = scalar_lea.vmem [#allocation7], 16
      %v2928 = vld [vmem:[%s2927] sm:$0xf]
      %v2929 = vld [vmem:[%s2927 + $0x8] sm:$0xf]
      %v2930 = vld [vmem:[%s2927 + $0x10] sm:$0xf]
      %v2931 = vld [vmem:[%s2927 + $0x18] sm:$0xf]
      %v2936 = vcombine.low %v2928, %v2929
      %v2937 = vcombine.low %v2930, %v2931
      %v2940 = vpack.c.bf16 %v2937, %v2936
      %2942 = vrot.lane.b32.xlu0 %v2940, 96
      %v2943 = vpop.permute.xlu0 %2942
      %vm2945 = vcmask 917248
      %2946 = vst.msk [vmem:[#allocation2] sm:$0xff] %vm2945, %v2943
      %v2947 = vld [vmem:[%s2927 + $0x1] sm:$0xf]
      %v2948 = vld [vmem:[%s2927 + $0x9] sm:$0xf]
      %v2949 = vld [vmem:[%s2927 + $0x11] sm:$0xf]
      %v2950 = vld [vmem:[%s2927 + $0x19] sm:$0xf]
      %v2955 = vcombine.low %v2947, %v2948
      %v2956 = vcombine.low %v2949, %v2950
      %v2959 = vpack.c.bf16 %v2956, %v2955
      %2961 = vrot.lane.b32.xlu0 %v2959, 112
      %v2962 = vpop.permute.xlu0 %2961
      %vm2964 = vcmask 1048448
      %2965 = vst.msk [vmem:[#allocation2] sm:$0xff] %vm2964, %v2962
      %v2966 = vld [vmem:[%s2927 + $0x2] sm:$0xf]
      %v2967 = vld [vmem:[%s2927 + $0xa] sm:$0xf]
      %v2968 = vld [vmem:[%s2927 + $0x12] sm:$0xf]
      %v2969 = vld [vmem:[%s2927 + $0x1a] sm:$0xf]
      %v2974 = vcombine.low %v2966, %v2967
      %v2975 = vcombine.low %v2968, %v2969
      %v2978 = vpack.c.bf16 %v2975, %v2974
      %2979 = vst.msk [vmem:[#allocation2 + $0x8] sm:$0xff] %vm628, %v2978
      %v2980 = vld [vmem:[#allocation2] sm:$0xff]
      %v2981 = vld [vmem:[#allocation2 + $0x8] sm:$0xff]
      %v2982 = vld [vmem:[%s5] sm:$0xf]
      %v2983 = vld [vmem:[%s5 + $0x4] sm:$0xf]
      %v2984 = vld [vmem:[%s5 + $0x8] sm:$0xf]
      %v2985 = vld [vmem:[%s5 + $0xc] sm:$0xf]
      %v2986 = vld [vmem:[%s5 + $0x10] sm:$0xf]
      %v2987 = vld [vmem:[%s5 + $0x14] sm:$0xf]
      %v2988 = vld [vmem:[%s5 + $0x18] sm:$0xf]
      %v2989 = vld [vmem:[%s5 + $0x1c] sm:$0xf]
      %v2990 = vld [vmem:[%s5 + $0x20] sm:$0xf]
      %v2991 = vld [vmem:[%s5 + $0x24] sm:$0xf]
      %v2992 = vld [vmem:[%s5 + $0x28] sm:$0xf]
      %v2993 = vld [vmem:[%s5 + $0x2c] sm:$0xf]
      %v2994 = vld [vmem:[%s5 + $0x30] sm:$0xf]
      %v2995 = vld [vmem:[%s5 + $0x34] sm:$0xf]
      %v2996 = vld [vmem:[%s5 + $0x38] sm:$0xf]
      %v2997 = vld [vmem:[%s5 + $0x3c] sm:$0xf]
      %v2998 = vld [vmem:[%s5 + $0x40] sm:$0xf]
      %v2999 = vld [vmem:[%s5 + $0x44] sm:$0xf]
      %v3000 = vld [vmem:[%s6] sm:$0x1]
      %v3002 = vlaneseq
      %v3003 = vshrl.u32 %v3002, 7
      %v3004 = vsub.s32 0, %v3003
      %v3005 = vrot.slane %v3000, %v3004
      %v3025 = vunpack.c.l.b16 %v2982
      %v3026 = vunpack.c.l.b16 %v2983
      %v3027 = vunpack.c.l.b16 %v2984
      %v3028 = vunpack.c.l.b16 %v2985
      %v3029 = vunpack.c.l.b16 %v2986
      %v3030 = vunpack.c.l.b16 %v2987
      %v3031 = vunpack.c.l.b16 %v2988
      %v3032 = vunpack.c.l.b16 %v2989
      %v3033 = vunpack.c.l.b16 %v2990
      %v3034 = vunpack.c.l.b16 %v2991
      %v3035 = vunpack.c.l.b16 %v2992
      %v3036 = vunpack.c.l.b16 %v2993
      %v3037 = vunpack.c.l.b16 %v2994
      %v3038 = vunpack.c.l.b16 %v2995
      %v3039 = vunpack.c.l.b16 %v2996
      %v3040 = vunpack.c.l.b16 %v2997
      %v3041 = vunpack.c.l.b16 %v2998
      %v3042 = vunpack.c.l.b16 %v2999
      %v3043 = vpack.c.b16 %v3026, %v3025
      %v3044 = vpack.c.b16 %v3028, %v3027
      %v3045 = vpack.c.b16 %v3030, %v3029
      %v3046 = vpack.c.b16 %v3032, %v3031
      %v3047 = vpack.c.b16 %v3034, %v3033
      %v3048 = vpack.c.b16 %v3036, %v3035
      %v3049 = vpack.c.b16 %v3038, %v3037
      %v3050 = vpack.c.b16 %v3040, %v3039
      %v3051 = vpack.c.b16 %v3042, %v3041
      %v3062 = vsel %vm628, %v2981, 0
      %3064 = vmatprep.subr.bf16.mxu0 0
      %3065 = vmatpush1.bf16.msra.mxu0 %v3043
      %3066 = vmatprep.subr.bf16.mxu0 0
      %3067 = vmatpush1.bf16.msra.mxu0 %v3044
      %3068 = vmatprep.subr.bf16.mxu0 0
      %3069 = vmatpush1.bf16.msra.mxu0 %v3045
      %3070 = vmatprep.subr.bf16.mxu0 0
      %3071 = vmatpush1.bf16.msra.mxu0 %v3046
      %3072 = vmatprep.subr.bf16.mxu0 0
      %3073 = vmatpush1.bf16.msra.mxu0 %v3047
      %3074 = vmatprep.subr.bf16.mxu0 0
      %3075 = vmatpush1.bf16.msra.mxu0 %v3048
      %3076 = vmatprep.subr.bf16.mxu0 0
      %3077 = vmatpush1.bf16.msra.mxu0 %v3049
      %3078 = vmatprep.subr.bf16.mxu0 0
      %3079 = vmatpush1.bf16.msra.mxu0 %v3050
      %3080 = vmatprep.subr.bf16.mxu0 0
      %3081 = vmatpush1.bf16.msra.mxu0 %v3051
      %3082 = vmatprep.subr.bf16.mxu0 0
      %3083 = vmatpush1.bf16.msra.mxu0 0
      %3084 = vmatprep.subr.bf16.mxu0 0
      %3085 = vmatpush1.bf16.msra.mxu0 0
      %3086 = vmatprep.subr.bf16.mxu0 0
      %3087 = vmatpush1.bf16.msra.mxu0 0
      %3088 = vmatprep.subr.bf16.mxu0 0
      %3089 = vmatpush1.bf16.msra.mxu0 0
      %3090 = vmatprep.subr.bf16.mxu0 0
      %3091 = vmatpush1.bf16.msra.mxu0 0
      %3092 = vmatprep.subr.bf16.mxu0 0
      %3093 = vmatpush1.bf16.msra.mxu0 0
      %3094 = vmatprep.subr.bf16.mxu0 0
      %3095 = vmatpush1.bf16.msra.mxu0 0
      %3096 = vmatprep.mubr.bf16.mxu0 %v3062
      %3097 = vmatmul.mubr.bf16.gmra.mrb[0].mxu0 %v2980
      %v3098 = vpop.f32.mrb[0].mxu0
      %v3099 = vadd.f32 %v3005, %v3098
      %v3100 = vpop.f32.mrb[0].mxu0
      %v3101 = vpop.f32.mrb[0].mxu0
      %v3102 = vadd.f32 %v3005, %v3101
      %v3103 = vpop.f32.mrb[0].mxu0
      %3104 = vdwg.mxu0
      %v3105 = vmax.f32 %v3099, 0.0
      %v3106 = vmax.f32 %v3102, 0.0
      %v3109 = vcombine.high %v3105, %v3105
      %v3110 = vcombine.high %v3106, %v3106
      %s3113 = scalar_lea.vmem [#allocation8], 8
      %vm3114 = vcmask 257024
      %3115 = vst.msk [vmem:[%s3113 + $0x1] sm:$0xf] %vm3114, %v3105
      %3116 = vst.msk [vmem:[%s3113 + $0x9] sm:$0xf] %vm3114, %v3109
      %3117 = vst.msk [vmem:[%s3113 + $0x11] sm:$0xf] %vm3114, %v3106
      %3118 = vst.msk [vmem:[%s3113 + $0x19] sm:$0xf] %vm3114, %v3110
      %v3119 = vld [vmem:[%s3113 + $0x1] sm:$0xf]
      %v3120 = vld [vmem:[%s3113 + $0x9] sm:$0xf]
      %v3121 = vld [vmem:[%s3113 + $0x11] sm:$0xf]
      %v3122 = vld [vmem:[%s3113 + $0x19] sm:$0xf]
      %v3127 = vcombine.low %v3119, %v3120
      %v3128 = vcombine.low %v3121, %v3122
      %v3131 = vpack.c.bf16 %v3128, %v3127
      %vm3132 = vcmask 261120
      %3133 = vst.msk [vmem:[#allocation2] sm:$0xff] %vm3132, %v3131
      %v3134 = vld [vmem:[%s3113 + $0x2] sm:$0xf]
      %v3135 = vld [vmem:[%s3113 + $0xa] sm:$0xf]
      %v3136 = vld [vmem:[%s3113 + $0x12] sm:$0xf]
      %v3137 = vld [vmem:[%s3113 + $0x1a] sm:$0xf]
      %v3142 = vcombine.low %v3134, %v3135
      %v3143 = vcombine.low %v3136, %v3137
      %v3146 = vpack.c.bf16 %v3143, %v3142
      %3148 = vrot.lane.b32.xlu0 %v3146, 32
      %v3149 = vpop.permute.xlu0 %3148
      %vm3151 = vcmask 523520
      %3152 = vst.msk [vmem:[#allocation2] sm:$0xff] %vm3151, %v3149
      %s3153 = scalar_lea.vmem [#allocation8], 16
      %v3154 = vld [vmem:[%s3153 + $0x1] sm:$0xf]
      %v3155 = vld [vmem:[%s3153 + $0x9] sm:$0xf]
      %v3156 = vld [vmem:[%s3153 + $0x11] sm:$0xf]
      %v3157 = vld [vmem:[%s3153 + $0x19] sm:$0xf]
      %v3162 = vcombine.low %v3154, %v3155
      %v3163 = vcombine.low %v3156, %v3157
      %v3166 = vpack.c.bf16 %v3163, %v3162
      %3168 = vrot.lane.b32.xlu0 %v3166, 64
      %v3169 = vpop.permute.xlu0 %3168
      %vm3171 = vcmask 785920
      %3172 = vst.msk [vmem:[#allocation2] sm:$0xff] %vm3171, %v3169
      %v3173 = vld [vmem:[%s3153 + $0x2] sm:$0xf]
      %v3174 = vld [vmem:[%s3153 + $0xa] sm:$0xf]
      %v3175 = vld [vmem:[%s3153 + $0x12] sm:$0xf]
      %v3176 = vld [vmem:[%s3153 + $0x1a] sm:$0xf]
      %v3181 = vcombine.low %v3173, %v3174
      %v3182 = vcombine.low %v3175, %v3176
      %v3185 = vpack.c.bf16 %v3182, %v3181
      %3187 = vrot.lane.b32.xlu0 %v3185, 96
      %v3188 = vpop.permute.xlu0 %3187
      %vm3190 = vcmask 1048320
      %3191 = vst.msk [vmem:[#allocation2] sm:$0xff] %vm3190, %v3188
      %v3192 = vld [vmem:[#allocation2] sm:$0xff]
      %v3193 = vld [vmem:[%s7] sm:$0xf]
      %v3194 = vld [vmem:[%s7 + $0x4] sm:$0xf]
      %v3195 = vld [vmem:[%s7 + $0x8] sm:$0xf]
      %v3196 = vld [vmem:[%s7 + $0xc] sm:$0xf]
      %v3197 = vld [vmem:[%s7 + $0x10] sm:$0xf]
      %v3198 = vld [vmem:[%s7 + $0x14] sm:$0xf]
      %v3199 = vld [vmem:[%s7 + $0x18] sm:$0xf]
      %v3200 = vld [vmem:[%s7 + $0x1c] sm:$0xf]
      %v3201 = vld [vmem:[%s7 + $0x20] sm:$0xf]
      %v3202 = vld [vmem:[%s7 + $0x24] sm:$0xf]
      %v3203 = vld [vmem:[%s7 + $0x28] sm:$0xf]
      %v3204 = vld [vmem:[%s7 + $0x2c] sm:$0xf]
      %v3205 = vld [vmem:[%s7 + $0x30] sm:$0xf]
      %v3206 = vld [vmem:[%s7 + $0x34] sm:$0xf]
      %v3207 = vld [vmem:[%s7 + $0x38] sm:$0xf]
      %v3208 = vld [vmem:[%s7 + $0x3c] sm:$0xf]
      %v3209 = vld [vmem:[%s8] sm:$0x1]
      %v3211 = vlaneseq
      %v3212 = vshrl.u32 %v3211, 7
      %v3213 = vsub.s32 0, %v3212
      %v3214 = vrot.slane %v3209, %v3213
      %v3232 = vunpack.c.l.b16 %v3193
      %v3233 = vunpack.c.l.b16 %v3194
      %v3234 = vunpack.c.l.b16 %v3195
      %v3235 = vunpack.c.l.b16 %v3196
      %v3236 = vunpack.c.l.b16 %v3197
      %v3237 = vunpack.c.l.b16 %v3198
      %v3238 = vunpack.c.l.b16 %v3199
      %v3239 = vunpack.c.l.b16 %v3200
      %v3240 = vunpack.c.l.b16 %v3201
      %v3241 = vunpack.c.l.b16 %v3202
      %v3242 = vunpack.c.l.b16 %v3203
      %v3243 = vunpack.c.l.b16 %v3204
      %v3244 = vunpack.c.l.b16 %v3205
      %v3245 = vunpack.c.l.b16 %v3206
      %v3246 = vunpack.c.l.b16 %v3207
      %v3247 = vunpack.c.l.b16 %v3208
      %v3248 = vpack.c.b16 %v3233, %v3232
      %v3249 = vpack.c.b16 %v3235, %v3234
      %v3250 = vpack.c.b16 %v3237, %v3236
      %v3251 = vpack.c.b16 %v3239, %v3238
      %v3252 = vpack.c.b16 %v3241, %v3240
      %v3253 = vpack.c.b16 %v3243, %v3242
      %v3254 = vpack.c.b16 %v3245, %v3244
      %v3255 = vpack.c.b16 %v3247, %v3246
      %3264 = vmatprep.subr.bf16.mxu0 0
      %3265 = vmatpush1.bf16.msra.mxu0 %v3248
      %3266 = vmatprep.subr.bf16.mxu0 0
      %3267 = vmatpush1.bf16.msra.mxu0 %v3249
      %3268 = vmatprep.subr.bf16.mxu0 0
      %3269 = vmatpush1.bf16.msra.mxu0 %v3250
      %3270 = vmatprep.subr.bf16.mxu0 0
      %3271 = vmatpush1.bf16.msra.mxu0 %v3251
      %3272 = vmatprep.subr.bf16.mxu0 0
      %3273 = vmatpush1.bf16.msra.mxu0 %v3252
      %3274 = vmatprep.subr.bf16.mxu0 0
      %3275 = vmatpush1.bf16.msra.mxu0 %v3253
      %3276 = vmatprep.subr.bf16.mxu0 0
      %3277 = vmatpush1.bf16.msra.mxu0 %v3254
      %3278 = vmatprep.subr.bf16.mxu0 0
      %3279 = vmatpush1.bf16.msra.mxu0 %v3255
      %3280 = vmatprep.subr.bf16.mxu0 0
      %3281 = vmatpush1.bf16.msra.mxu0 0
      %3282 = vmatprep.subr.bf16.mxu0 0
      %3283 = vmatpush1.bf16.msra.mxu0 0
      %3284 = vmatprep.subr.bf16.mxu0 0
      %3285 = vmatpush1.bf16.msra.mxu0 0
      %3286 = vmatprep.subr.bf16.mxu0 0
      %3287 = vmatpush1.bf16.msra.mxu0 0
      %3288 = vmatprep.subr.bf16.mxu0 0
      %3289 = vmatpush1.bf16.msra.mxu0 0
      %3290 = vmatprep.subr.bf16.mxu0 0
      %3291 = vmatpush1.bf16.msra.mxu0 0
      %3292 = vmatprep.subr.bf16.mxu0 0
      %3293 = vmatpush1.bf16.msra.mxu0 0
      %3294 = vmatprep.subr.bf16.mxu0 0
      %3295 = vmatpush1.bf16.msra.mxu0 0
      %3296 = vmatprep.mubr.bf16.mxu0 0
      %3297 = vmatmul.mubr.bf16.gmra.mrb[0].mxu0 %v3192
      %v3298 = vpop.f32.mrb[0].mxu0
      %v3299 = vadd.f32 %v3214, %v3298
      %v3300 = vpop.f32.mrb[0].mxu0
      %v3301 = vpop.f32.mrb[0].mxu0
      %v3302 = vadd.f32 %v3214, %v3301
      %v3303 = vpop.f32.mrb[0].mxu0
      %3304 = vdwg.mxu0
      %v3307 = vcombine.high %v3299, %v3299
      %v3309 = vunpack.c.l.s4 1966171168
      %v3310 = vunpack.c.0.s8 %v3309
      %v3311 = vlaneseq
      %v3312 = vshrl.u32 %v3311, 7
      %v3313 = vsub.s32 %v3310, %v3312
      %v3314 = vrot.slane %v3299, %v3313
      %v3316 = vunpack.c.l.s4 1966171168
      %v3317 = vunpack.c.0.s8 %v3316
      %v3318 = vlaneseq
      %v3319 = vshrl.u32 %v3318, 7
      %v3320 = vsub.s32 %v3317, %v3319
      %v3321 = vrot.slane %v3307, %v3320
      %v3322 = vcombine.high %v3314, %v3314
      %v3323 = vcombine.high %v3321, %v3321
      %v3325 = vunpack.c.l.s4 1966171168
      %v3326 = vunpack.c.0.s8 %v3325
      %v3327 = vlaneseq
      %v3328 = vshrl.u32 %v3327, 7
      %v3329 = vsub.s32 %v3326, %v3328
      %v3330 = vrot.slane %v3314, %v3329
      %v3332 = vunpack.c.l.s4 1966171168
      %v3333 = vunpack.c.0.s8 %v3332
      %v3334 = vlaneseq
      %v3335 = vshrl.u32 %v3334, 7
      %v3336 = vsub.s32 %v3333, %v3335
      %v3337 = vrot.slane %v3321, %v3336
      %v3339 = vunpack.c.l.s4 1966171168
      %v3340 = vunpack.c.0.s8 %v3339
      %v3341 = vlaneseq
      %v3342 = vshrl.u32 %v3341, 7
      %v3343 = vsub.s32 %v3340, %v3342
      %v3344 = vrot.slane %v3322, %v3343
      %v3346 = vunpack.c.l.s4 1966171168
      %v3347 = vunpack.c.0.s8 %v3346
      %v3348 = vlaneseq
      %v3349 = vshrl.u32 %v3348, 7
      %v3350 = vsub.s32 %v3347, %v3349
      %v3351 = vrot.slane %v3323, %v3350
      %v3352 = vcombine.high %v3330, %v3330
      %v3353 = vcombine.high %v3337, %v3337
      %v3354 = vcombine.high %v3344, %v3344
      %v3355 = vcombine.high %v3351, %v3351
      %v3356 = vcombine.high %v3302, %v3302
      %v3358 = vunpack.c.l.s4 1966171168
      %v3359 = vunpack.c.0.s8 %v3358
      %v3360 = vlaneseq
      %v3361 = vshrl.u32 %v3360, 7
      %v3362 = vsub.s32 %v3359, %v3361
      %v3363 = vrot.slane %v3302, %v3362
      %v3365 = vunpack.c.l.s4 1966171168
      %v3366 = vunpack.c.0.s8 %v3365
      %v3367 = vlaneseq
      %v3368 = vshrl.u32 %v3367, 7
      %v3369 = vsub.s32 %v3366, %v3368
      %v3370 = vrot.slane %v3356, %v3369
      %v3371 = vcombine.high %v3363, %v3363
      %v3372 = vcombine.high %v3370, %v3370
      %v3374 = vunpack.c.l.s4 1966171168
      %v3375 = vunpack.c.0.s8 %v3374
      %v3376 = vlaneseq
      %v3377 = vshrl.u32 %v3376, 7
      %v3378 = vsub.s32 %v3375, %v3377
      %v3379 = vrot.slane %v3363, %v3378
      %v3381 = vunpack.c.l.s4 1966171168
      %v3382 = vunpack.c.0.s8 %v3381
      %v3383 = vlaneseq
      %v3384 = vshrl.u32 %v3383, 7
      %v3385 = vsub.s32 %v3382, %v3384
      %v3386 = vrot.slane %v3370, %v3385
      %v3388 = vunpack.c.l.s4 1966171168
      %v3389 = vunpack.c.0.s8 %v3388
      %v3390 = vlaneseq
      %v3391 = vshrl.u32 %v3390, 7
      %v3392 = vsub.s32 %v3389, %v3391
      %v3393 = vrot.slane %v3371, %v3392
      %v3395 = vunpack.c.l.s4 1966171168
      %v3396 = vunpack.c.0.s8 %v3395
      %v3397 = vlaneseq
      %v3398 = vshrl.u32 %v3397, 7
      %v3399 = vsub.s32 %v3396, %v3398
      %v3400 = vrot.slane %v3372, %v3399
      %v3401 = vcombine.high %v3379, %v3379
      %v3402 = vcombine.high %v3386, %v3386
      %v3403 = vcombine.high %v3393, %v3393
      %v3404 = vcombine.high %v3400, %v3400
      %vm3421 = vcmask 122880
      %3422 = vst.msk [vmem:[#allocation9] sm:$0x1] %vm3421, %v3330
      %3423 = vst.msk [vmem:[#allocation9 + $0x2] sm:$0x1] %vm3421, %v3344
      %3424 = vst.msk [vmem:[#allocation9 + $0x4] sm:$0x1] %vm3421, %v3352
      %3425 = vst.msk [vmem:[#allocation9 + $0x6] sm:$0x1] %vm3421, %v3354
      %3426 = vst.msk [vmem:[#allocation9 + $0x10] sm:$0x1] %vm3421, %v3337
      %3427 = vst.msk [vmem:[#allocation9 + $0x12] sm:$0x1] %vm3421, %v3351
      %3428 = vst.msk [vmem:[#allocation9 + $0x14] sm:$0x1] %vm3421, %v3353
      %3429 = vst.msk [vmem:[#allocation9 + $0x16] sm:$0x1] %vm3421, %v3355
      %3430 = vst.msk [vmem:[#allocation9 + $0x20] sm:$0x1] %vm3421, %v3379
      %3431 = vst.msk [vmem:[#allocation9 + $0x22] sm:$0x1] %vm3421, %v3393
      %3432 = vst.msk [vmem:[#allocation9 + $0x24] sm:$0x1] %vm3421, %v3401
      %3433 = vst.msk [vmem:[#allocation9 + $0x26] sm:$0x1] %vm3421, %v3403
      %3434 = vst.msk [vmem:[#allocation9 + $0x30] sm:$0x1] %vm3421, %v3386
      %3435 = vst.msk [vmem:[#allocation9 + $0x32] sm:$0x1] %vm3421, %v3400
      %3436 = vst.msk [vmem:[#allocation9 + $0x34] sm:$0x1] %vm3421, %v3402
      %3437 = vst.msk [vmem:[#allocation9 + $0x36] sm:$0x1] %vm3421, %v3404
      %v3438 = vlaneseq
      %v3439 = vshrl.u32 %v3438, 7
      %v3440 = vsub.s32 0, %v3439
      %v3441 = vrot.slane %v3330, %v3440
      %v3442 = vlaneseq
      %v3443 = vshrl.u32 %v3442, 7
      %v3444 = vsub.s32 0, %v3443
      %v3445 = vrot.slane %v3344, %v3444
      %v3446 = vlaneseq
      %v3447 = vshrl.u32 %v3446, 7
      %v3448 = vsub.s32 0, %v3447
      %v3449 = vrot.slane %v3352, %v3448
      %v3450 = vlaneseq
      %v3451 = vshrl.u32 %v3450, 7
      %v3452 = vsub.s32 0, %v3451
      %v3453 = vrot.slane %v3354, %v3452
      %v3454 = vlaneseq
      %v3455 = vshrl.u32 %v3454, 7
      %v3456 = vsub.s32 0, %v3455
      %v3457 = vrot.slane %v3337, %v3456
      %v3458 = vlaneseq
      %v3459 = vshrl.u32 %v3458, 7
      %v3460 = vsub.s32 0, %v3459
      %v3461 = vrot.slane %v3351, %v3460
      %v3462 = vlaneseq
      %v3463 = vshrl.u32 %v3462, 7
      %v3464 = vsub.s32 0, %v3463
      %v3465 = vrot.slane %v3353, %v3464
      %v3466 = vlaneseq
      %v3467 = vshrl.u32 %v3466, 7
      %v3468 = vsub.s32 0, %v3467
      %v3469 = vrot.slane %v3355, %v3468
      %v3470 = vlaneseq
      %v3471 = vshrl.u32 %v3470, 7
      %v3472 = vsub.s32 0, %v3471
      %v3473 = vrot.slane %v3379, %v3472
      %v3474 = vlaneseq
      %v3475 = vshrl.u32 %v3474, 7
      %v3476 = vsub.s32 0, %v3475
      %v3477 = vrot.slane %v3393, %v3476
      %v3478 = vlaneseq
      %v3479 = vshrl.u32 %v3478, 7
      %v3480 = vsub.s32 0, %v3479
      %v3481 = vrot.slane %v3401, %v3480
      %v3482 = vlaneseq
      %v3483 = vshrl.u32 %v3482, 7
      %v3484 = vsub.s32 0, %v3483
      %v3485 = vrot.slane %v3403, %v3484
      %v3486 = vlaneseq
      %v3487 = vshrl.u32 %v3486, 7
      %v3488 = vsub.s32 0, %v3487
      %v3489 = vrot.slane %v3386, %v3488
      %v3490 = vlaneseq
      %v3491 = vshrl.u32 %v3490, 7
      %v3492 = vsub.s32 0, %v3491
      %v3493 = vrot.slane %v3400, %v3492
      %v3494 = vlaneseq
      %v3495 = vshrl.u32 %v3494, 7
      %v3496 = vsub.s32 0, %v3495
      %v3497 = vrot.slane %v3402, %v3496
      %v3498 = vlaneseq
      %v3499 = vshrl.u32 %v3498, 7
      %v3500 = vsub.s32 0, %v3499
      %v3501 = vrot.slane %v3404, %v3500
      %3502 = vrot.lane.b32.xlu0 %v3441, 112
      %v3503 = vpop.permute.xlu0 %3502
      %3504 = vrot.lane.b32.xlu0 %v3445, 112
      %v3505 = vpop.permute.xlu0 %3504
      %3506 = vrot.lane.b32.xlu0 %v3449, 112
      %v3507 = vpop.permute.xlu0 %3506
      %3508 = vrot.lane.b32.xlu0 %v3453, 112
      %v3509 = vpop.permute.xlu0 %3508
      %3510 = vrot.lane.b32.xlu0 %v3457, 112
      %v3511 = vpop.permute.xlu0 %3510
      %3512 = vrot.lane.b32.xlu0 %v3461, 112
      %v3513 = vpop.permute.xlu0 %3512
      %3514 = vrot.lane.b32.xlu0 %v3465, 112
      %v3515 = vpop.permute.xlu0 %3514
      %3516 = vrot.lane.b32.xlu0 %v3469, 112
      %v3517 = vpop.permute.xlu0 %3516
      %3518 = vrot.lane.b32.xlu0 %v3473, 112
      %v3519 = vpop.permute.xlu0 %3518
      %3520 = vrot.lane.b32.xlu0 %v3477, 112
      %v3521 = vpop.permute.xlu0 %3520
      %3522 = vrot.lane.b32.xlu0 %v3481, 112
      %v3523 = vpop.permute.xlu0 %3522
      %3524 = vrot.lane.b32.xlu0 %v3485, 112
      %v3525 = vpop.permute.xlu0 %3524
      %3526 = vrot.lane.b32.xlu0 %v3489, 112
      %v3527 = vpop.permute.xlu0 %3526
      %3528 = vrot.lane.b32.xlu0 %v3493, 112
      %v3529 = vpop.permute.xlu0 %3528
      %3530 = vrot.lane.b32.xlu0 %v3497, 112
      %v3531 = vpop.permute.xlu0 %3530
      %3532 = vrot.lane.b32.xlu0 %v3501, 112
      %v3533 = vpop.permute.xlu0 %3532
      %3550 = vst.msk [vmem:[#allocation9 + $0x1] sm:$0x1] %vm3421, %v3503
      %3551 = vst.msk [vmem:[#allocation9 + $0x3] sm:$0x1] %vm3421, %v3505
      %3552 = vst.msk [vmem:[#allocation9 + $0x5] sm:$0x1] %vm3421, %v3507
      %3553 = vst.msk [vmem:[#allocation9 + $0x7] sm:$0x1] %vm3421, %v3509
      %3554 = vst.msk [vmem:[#allocation9 + $0x11] sm:$0x1] %vm3421, %v3511
      %3555 = vst.msk [vmem:[#allocation9 + $0x13] sm:$0x1] %vm3421, %v3513
      %3556 = vst.msk [vmem:[#allocation9 + $0x15] sm:$0x1] %vm3421, %v3515
      %3557 = vst.msk [vmem:[#allocation9 + $0x17] sm:$0x1] %vm3421, %v3517
      %3558 = vst.msk [vmem:[#allocation9 + $0x21] sm:$0x1] %vm3421, %v3519
      %3559 = vst.msk [vmem:[#allocation9 + $0x23] sm:$0x1] %vm3421, %v3521
      %3560 = vst.msk [vmem:[#allocation9 + $0x25] sm:$0x1] %vm3421, %v3523
      %3561 = vst.msk [vmem:[#allocation9 + $0x27] sm:$0x1] %vm3421, %v3525
      %3562 = vst.msk [vmem:[#allocation9 + $0x31] sm:$0x1] %vm3421, %v3527
      %3563 = vst.msk [vmem:[#allocation9 + $0x33] sm:$0x1] %vm3421, %v3529
      %3564 = vst.msk [vmem:[#allocation9 + $0x35] sm:$0x1] %vm3421, %v3531
      %3565 = vst.msk [vmem:[#allocation9 + $0x37] sm:$0x1] %vm3421, %v3533
      %3566 = vrot.lane.b32.xlu0 %v3441, 96
      %v3567 = vpop.permute.xlu0 %3566
      %3568 = vrot.lane.b32.xlu0 %v3445, 96
      %v3569 = vpop.permute.xlu0 %3568
      %3570 = vrot.lane.b32.xlu0 %v3449, 96
      %v3571 = vpop.permute.xlu0 %3570
      %3572 = vrot.lane.b32.xlu0 %v3453, 96
      %v3573 = vpop.permute.xlu0 %3572
      %3574 = vrot.lane.b32.xlu0 %v3457, 96
      %v3575 = vpop.permute.xlu0 %3574
      %3576 = vrot.lane.b32.xlu0 %v3461, 96
      %v3577 = vpop.permute.xlu0 %3576
      %3578 = vrot.lane.b32.xlu0 %v3465, 96
      %v3579 = vpop.permute.xlu0 %3578
      %3580 = vrot.lane.b32.xlu0 %v3469, 96
      %v3581 = vpop.permute.xlu0 %3580
      %3582 = vrot.lane.b32.xlu0 %v3473, 96
      %v3583 = vpop.permute.xlu0 %3582
      %3584 = vrot.lane.b32.xlu0 %v3477, 96
      %v3585 = vpop.permute.xlu0 %3584
      %3586 = vrot.lane.b32.xlu0 %v3481, 96
      %v3587 = vpop.permute.xlu0 %3586
      %3588 = vrot.lane.b32.xlu0 %v3485, 96
      %v3589 = vpop.permute.xlu0 %3588
      %3590 = vrot.lane.b32.xlu0 %v3489, 96
      %v3591 = vpop.permute.xlu0 %3590
      %3592 = vrot.lane.b32.xlu0 %v3493, 96
      %v3593 = vpop.permute.xlu0 %3592
      %3594 = vrot.lane.b32.xlu0 %v3497, 96
      %v3595 = vpop.permute.xlu0 %3594
      %3596 = vrot.lane.b32.xlu0 %v3501, 96
      %v3597 = vpop.permute.xlu0 %3596
      %s3614 = scalar_lea.vmem [#allocation9], 8
      %3615 = vst.msk [vmem:[%s3614] sm:$0x1] %vm3421, %v3567
      %3616 = vst.msk [vmem:[%s3614 + $0x2] sm:$0x1] %vm3421, %v3569
      %3617 = vst.msk [vmem:[%s3614 + $0x4] sm:$0x1] %vm3421, %v3571
      %3618 = vst.msk [vmem:[%s3614 + $0x6] sm:$0x1] %vm3421, %v3573
      %3619 = vst.msk [vmem:[%s3614 + $0x10] sm:$0x1] %vm3421, %v3575
      %3620 = vst.msk [vmem:[%s3614 + $0x12] sm:$0x1] %vm3421, %v3577
      %3621 = vst.msk [vmem:[%s3614 + $0x14] sm:$0x1] %vm3421, %v3579
      %3622 = vst.msk [vmem:[%s3614 + $0x16] sm:$0x1] %vm3421, %v3581
      %3623 = vst.msk [vmem:[%s3614 + $0x20] sm:$0x1] %vm3421, %v3583
      %3624 = vst.msk [vmem:[%s3614 + $0x22] sm:$0x1] %vm3421, %v3585
      %3625 = vst.msk [vmem:[%s3614 + $0x24] sm:$0x1] %vm3421, %v3587
      %3626 = vst.msk [vmem:[%s3614 + $0x26] sm:$0x1] %vm3421, %v3589
      %3627 = vst.msk [vmem:[%s3614 + $0x30] sm:$0x1] %vm3421, %v3591
      %3628 = vst.msk [vmem:[%s3614 + $0x32] sm:$0x1] %vm3421, %v3593
      %3629 = vst.msk [vmem:[%s3614 + $0x34] sm:$0x1] %vm3421, %v3595
      %3630 = vst.msk [vmem:[%s3614 + $0x36] sm:$0x1] %vm3421, %v3597
      %3631 = vrot.lane.b32.xlu0 %v3441, 80
      %v3632 = vpop.permute.xlu0 %3631
      %3633 = vrot.lane.b32.xlu0 %v3445, 80
      %v3634 = vpop.permute.xlu0 %3633
      %3635 = vrot.lane.b32.xlu0 %v3449, 80
      %v3636 = vpop.permute.xlu0 %3635
      %3637 = vrot.lane.b32.xlu0 %v3453, 80
      %v3638 = vpop.permute.xlu0 %3637
      %3639 = vrot.lane.b32.xlu0 %v3457, 80
      %v3640 = vpop.permute.xlu0 %3639
      %3641 = vrot.lane.b32.xlu0 %v3461, 80
      %v3642 = vpop.permute.xlu0 %3641
      %3643 = vrot.lane.b32.xlu0 %v3465, 80
      %v3644 = vpop.permute.xlu0 %3643
      %3645 = vrot.lane.b32.xlu0 %v3469, 80
      %v3646 = vpop.permute.xlu0 %3645
      %3647 = vrot.lane.b32.xlu0 %v3473, 80
      %v3648 = vpop.permute.xlu0 %3647
      %3649 = vrot.lane.b32.xlu0 %v3477, 80
      %v3650 = vpop.permute.xlu0 %3649
      %3651 = vrot.lane.b32.xlu0 %v3481, 80
      %v3652 = vpop.permute.xlu0 %3651
      %3653 = vrot.lane.b32.xlu0 %v3485, 80
      %v3654 = vpop.permute.xlu0 %3653
      %3655 = vrot.lane.b32.xlu0 %v3489, 80
      %v3656 = vpop.permute.xlu0 %3655
      %3657 = vrot.lane.b32.xlu0 %v3493, 80
      %v3658 = vpop.permute.xlu0 %3657
      %3659 = vrot.lane.b32.xlu0 %v3497, 80
      %v3660 = vpop.permute.xlu0 %3659
      %3661 = vrot.lane.b32.xlu0 %v3501, 80
      %v3662 = vpop.permute.xlu0 %3661
      %3679 = vst.msk [vmem:[%s3614 + $0x1] sm:$0x1] %vm3421, %v3632
      %3680 = vst.msk [vmem:[%s3614 + $0x3] sm:$0x1] %vm3421, %v3634
      %3681 = vst.msk [vmem:[%s3614 + $0x5] sm:$0x1] %vm3421, %v3636
      %3682 = vst.msk [vmem:[%s3614 + $0x7] sm:$0x1] %vm3421, %v3638
      %3683 = vst.msk [vmem:[%s3614 + $0x11] sm:$0x1] %vm3421, %v3640
      %3684 = vst.msk [vmem:[%s3614 + $0x13] sm:$0x1] %vm3421, %v3642
      %3685 = vst.msk [vmem:[%s3614 + $0x15] sm:$0x1] %vm3421, %v3644
      %3686 = vst.msk [vmem:[%s3614 + $0x17] sm:$0x1] %vm3421, %v3646
      %3687 = vst.msk [vmem:[%s3614 + $0x21] sm:$0x1] %vm3421, %v3648
      %3688 = vst.msk [vmem:[%s3614 + $0x23] sm:$0x1] %vm3421, %v3650
      %3689 = vst.msk [vmem:[%s3614 + $0x25] sm:$0x1] %vm3421, %v3652
      %3690 = vst.msk [vmem:[%s3614 + $0x27] sm:$0x1] %vm3421, %v3654
      %3691 = vst.msk [vmem:[%s3614 + $0x31] sm:$0x1] %vm3421, %v3656
      %3692 = vst.msk [vmem:[%s3614 + $0x33] sm:$0x1] %vm3421, %v3658
      %3693 = vst.msk [vmem:[%s3614 + $0x35] sm:$0x1] %vm3421, %v3660
      %3694 = vst.msk [vmem:[%s3614 + $0x37] sm:$0x1] %vm3421, %v3662
      %v3695 = vld [vmem:[#allocation9] sm:$0x3]
      %v3696 = vld [vmem:[#allocation9 + $0x2] sm:$0x3]
      %v3697 = vld [vmem:[#allocation9 + $0x4] sm:$0x3]
      %v3698 = vld [vmem:[#allocation9 + $0x6] sm:$0x3]
      %v3699 = vld [vmem:[#allocation9 + $0x8] sm:$0x3]
      %v3700 = vld [vmem:[#allocation9 + $0xa] sm:$0x3]
      %v3701 = vld [vmem:[#allocation9 + $0xc] sm:$0x3]
      %v3702 = vld [vmem:[#allocation9 + $0xe] sm:$0x3]
      %v3703 = vld [vmem:[#allocation9 + $0x10] sm:$0x3]
      %v3704 = vld [vmem:[#allocation9 + $0x12] sm:$0x3]
      %v3705 = vld [vmem:[#allocation9 + $0x14] sm:$0x3]
      %v3706 = vld [vmem:[#allocation9 + $0x16] sm:$0x3]
      %v3707 = vld [vmem:[#allocation9 + $0x18] sm:$0x3]
      %v3708 = vld [vmem:[#allocation9 + $0x1a] sm:$0x3]
      %v3709 = vld [vmem:[#allocation9 + $0x1c] sm:$0x3]
      %v3710 = vld [vmem:[#allocation9 + $0x1e] sm:$0x3]
      %v3711 = vld [vmem:[#allocation9 + $0x20] sm:$0x3]
      %v3712 = vld [vmem:[#allocation9 + $0x22] sm:$0x3]
      %v3713 = vld [vmem:[#allocation9 + $0x24] sm:$0x3]
      %v3714 = vld [vmem:[#allocation9 + $0x26] sm:$0x3]
      %v3715 = vld [vmem:[#allocation9 + $0x28] sm:$0x3]
      %v3716 = vld [vmem:[#allocation9 + $0x2a] sm:$0x3]
      %v3717 = vld [vmem:[#allocation9 + $0x2c] sm:$0x3]
      %v3718 = vld [vmem:[#allocation9 + $0x2e] sm:$0x3]
      %v3719 = vld [vmem:[#allocation9 + $0x30] sm:$0x3]
      %v3720 = vld [vmem:[#allocation9 + $0x32] sm:$0x3]
      %v3721 = vld [vmem:[#allocation9 + $0x34] sm:$0x3]
      %v3722 = vld [vmem:[#allocation9 + $0x36] sm:$0x3]
      %v3723 = vld [vmem:[#allocation9 + $0x38] sm:$0x3]
      %v3724 = vld [vmem:[#allocation9 + $0x3a] sm:$0x3]
      %v3725 = vld [vmem:[#allocation9 + $0x3c] sm:$0x3]
      %v3726 = vld [vmem:[#allocation9 + $0x3e] sm:$0x3]
      %v3759 = vcombine.low %v3695, %v3696
      %v3760 = vcombine.low %v3697, %v3698
      %v3762 = vunpack.c.l.s4 1983009808
      %v3763 = vunpack.c.0.s8 %v3762
      %v3764 = vlaneseq
      %v3765 = vshrl.u32 %v3764, 7
      %v3766 = vsub.s32 %v3763, %v3765
      %v3767 = vrot.slane %v3759, %v3766
      %v3769 = vunpack.c.l.s4 1983009808
      %v3770 = vunpack.c.0.s8 %v3769
      %v3771 = vlaneseq
      %v3772 = vshrl.u32 %v3771, 7
      %v3773 = vsub.s32 %v3770, %v3772
      %v3774 = vrot.slane %v3760, %v3773
      %v3775 = vcombine.low %v3767, %v3774
      %v3776 = vcombine.low %v3699, %v3700
      %v3777 = vcombine.low %v3701, %v3702
      %v3779 = vunpack.c.l.s4 1983009808
      %v3780 = vunpack.c.0.s8 %v3779
      %v3781 = vlaneseq
      %v3782 = vshrl.u32 %v3781, 7
      %v3783 = vsub.s32 %v3780, %v3782
      %v3784 = vrot.slane %v3776, %v3783
      %v3786 = vunpack.c.l.s4 1983009808
      %v3787 = vunpack.c.0.s8 %v3786
      %v3788 = vlaneseq
      %v3789 = vshrl.u32 %v3788, 7
      %v3790 = vsub.s32 %v3787, %v3789
      %v3791 = vrot.slane %v3777, %v3790
      %v3792 = vcombine.low %v3784, %v3791
      %v3793 = vcombine.low %v3703, %v3704
      %v3794 = vcombine.low %v3705, %v3706
      %v3796 = vunpack.c.l.s4 1983009808
      %v3797 = vunpack.c.0.s8 %v3796
      %v3798 = vlaneseq
      %v3799 = vshrl.u32 %v3798, 7
      %v3800 = vsub.s32 %v3797, %v3799
      %v3801 = vrot.slane %v3793, %v3800
      %v3803 = vunpack.c.l.s4 1983009808
      %v3804 = vunpack.c.0.s8 %v3803
      %v3805 = vlaneseq
      %v3806 = vshrl.u32 %v3805, 7
      %v3807 = vsub.s32 %v3804, %v3806
      %v3808 = vrot.slane %v3794, %v3807
      %v3809 = vcombine.low %v3801, %v3808
      %v3810 = vcombine.low %v3707, %v3708
      %v3811 = vcombine.low %v3709, %v3710
      %v3813 = vunpack.c.l.s4 1983009808
      %v3814 = vunpack.c.0.s8 %v3813
      %v3815 = vlaneseq
      %v3816 = vshrl.u32 %v3815, 7
      %v3817 = vsub.s32 %v3814, %v3816
      %v3818 = vrot.slane %v3810, %v3817
      %v3820 = vunpack.c.l.s4 1983009808
      %v3821 = vunpack.c.0.s8 %v3820
      %v3822 = vlaneseq
      %v3823 = vshrl.u32 %v3822, 7
      %v3824 = vsub.s32 %v3821, %v3823
      %v3825 = vrot.slane %v3811, %v3824
      %v3826 = vcombine.low %v3818, %v3825
      %v3827 = vcombine.low %v3711, %v3712
      %v3828 = vcombine.low %v3713, %v3714
      %v3830 = vunpack.c.l.s4 1983009808
      %v3831 = vunpack.c.0.s8 %v3830
      %v3832 = vlaneseq
      %v3833 = vshrl.u32 %v3832, 7
      %v3834 = vsub.s32 %v3831, %v3833
      %v3835 = vrot.slane %v3827, %v3834
      %v3837 = vunpack.c.l.s4 1983009808
      %v3838 = vunpack.c.0.s8 %v3837
      %v3839 = vlaneseq
      %v3840 = vshrl.u32 %v3839, 7
      %v3841 = vsub.s32 %v3838, %v3840
      %v3842 = vrot.slane %v3828, %v3841
      %v3843 = vcombine.low %v3835, %v3842
      %v3844 = vcombine.low %v3715, %v3716
      %v3845 = vcombine.low %v3717, %v3718
      %v3847 = vunpack.c.l.s4 1983009808
      %v3848 = vunpack.c.0.s8 %v3847
      %v3849 = vlaneseq
      %v3850 = vshrl.u32 %v3849, 7
      %v3851 = vsub.s32 %v3848, %v3850
      %v3852 = vrot.slane %v3844, %v3851
      %v3854 = vunpack.c.l.s4 1983009808
      %v3855 = vunpack.c.0.s8 %v3854
      %v3856 = vlaneseq
      %v3857 = vshrl.u32 %v3856, 7
      %v3858 = vsub.s32 %v3855, %v3857
      %v3859 = vrot.slane %v3845, %v3858
      %v3860 = vcombine.low %v3852, %v3859
      %v3861 = vcombine.low %v3719, %v3720
      %v3862 = vcombine.low %v3721, %v3722
      %v3864 = vunpack.c.l.s4 1983009808
      %v3865 = vunpack.c.0.s8 %v3864
      %v3866 = vlaneseq
      %v3867 = vshrl.u32 %v3866, 7
      %v3868 = vsub.s32 %v3865, %v3867
      %v3869 = vrot.slane %v3861, %v3868
      %v3871 = vunpack.c.l.s4 1983009808
      %v3872 = vunpack.c.0.s8 %v3871
      %v3873 = vlaneseq
      %v3874 = vshrl.u32 %v3873, 7
      %v3875 = vsub.s32 %v3872, %v3874
      %v3876 = vrot.slane %v3862, %v3875
      %v3877 = vcombine.low %v3869, %v3876
      %v3878 = vcombine.low %v3723, %v3724
      %v3879 = vcombine.low %v3725, %v3726
      %v3881 = vunpack.c.l.s4 1983009808
      %v3882 = vunpack.c.0.s8 %v3881
      %v3883 = vlaneseq
      %v3884 = vshrl.u32 %v3883, 7
      %v3885 = vsub.s32 %v3882, %v3884
      %v3886 = vrot.slane %v3878, %v3885
      %v3888 = vunpack.c.l.s4 1983009808
      %v3889 = vunpack.c.0.s8 %v3888
      %v3890 = vlaneseq
      %v3891 = vshrl.u32 %v3890, 7
      %v3892 = vsub.s32 %v3889, %v3891
      %v3893 = vrot.slane %v3879, %v3892
      %v3894 = vcombine.low %v3886, %v3893
      %s3903 = scalar_lea.vmem [#allocation10], 16
      %3904 = vst.msk [vmem:[%s3903 + $0x1] sm:$0xff] %vm628, %v3775
      %3905 = vst.msk [vmem:[%s3903 + $0x11] sm:$0xff] %vm628, %v3792
      %3906 = vst.msk [vmem:[%s3903 + $0x21] sm:$0xff] %vm628, %v3809
      %3907 = vst.msk [vmem:[%s3903 + $0x31] sm:$0xff] %vm628, %v3826
      %3908 = vst.msk [vmem:[%s3903 + $0x41] sm:$0xff] %vm628, %v3843
      %3909 = vst.msk [vmem:[%s3903 + $0x51] sm:$0xff] %vm628, %v3860
      %3910 = vst.msk [vmem:[%s3903 + $0x61] sm:$0xff] %vm628, %v3877
      %3911 = vst.msk [vmem:[%s3903 + $0x71] sm:$0xff] %vm628, %v3894
      %v3912 = vld [vmem:[#allocation10] sm:$0xff]
      %v3913 = vld [vmem:[#allocation10 + $0x10] sm:$0xff]
      %v3914 = vld [vmem:[#allocation10 + $0x20] sm:$0xff]
      %v3915 = vld [vmem:[#allocation10 + $0x30] sm:$0xff]
      %v3916 = vld [vmem:[#allocation10 + $0x40] sm:$0xff]
      %v3917 = vld [vmem:[#allocation10 + $0x50] sm:$0xff]
      %v3918 = vld [vmem:[#allocation10 + $0x60] sm:$0xff]
      %v3919 = vld [vmem:[#allocation10 + $0x70] sm:$0xff]
      %v3920 = vpack.c.bf16 %v3913, %v3912
      %v3921 = vpack.c.bf16 %v3915, %v3914
      %v3922 = vpack.c.bf16 %v3917, %v3916
      %v3923 = vpack.c.bf16 %v3919, %v3918
      %3924 = vst.msk [vmem:[#allocation2] sm:$0xff] %vm628, %v3920
      %3925 = vst.msk [vmem:[#allocation2 + $0x18] sm:$0xff] %vm628, %v3921
      %3926 = vst.msk [vmem:[#allocation2 + $0x30] sm:$0xff] %vm628, %v3922
      %3927 = vst.msk [vmem:[#allocation2 + $0x48] sm:$0xff] %vm628, %v3923
      %v3928 = vld [vmem:[#allocation10 + $0x1] sm:$0xff]
      %v3929 = vld [vmem:[#allocation10 + $0x11] sm:$0xff]
      %v3930 = vld [vmem:[#allocation10 + $0x21] sm:$0xff]
      %v3931 = vld [vmem:[#allocation10 + $0x31] sm:$0xff]
      %v3932 = vld [vmem:[#allocation10 + $0x41] sm:$0xff]
      %v3933 = vld [vmem:[#allocation10 + $0x51] sm:$0xff]
      %v3934 = vld [vmem:[#allocation10 + $0x61] sm:$0xff]
      %v3935 = vld [vmem:[#allocation10 + $0x71] sm:$0xff]
      %v3936 = vpack.c.bf16 %v3929, %v3928
      %v3937 = vpack.c.bf16 %v3931, %v3930
      %v3938 = vpack.c.bf16 %v3933, %v3932
      %v3939 = vpack.c.bf16 %v3935, %v3934
      %3944 = vrot.lane.b32.xlu0 %v3936, 16
      %v3945 = vpop.permute.xlu0 %3944
      %3946 = vrot.lane.b32.xlu0 %v3937, 16
      %v3947 = vpop.permute.xlu0 %3946
      %3948 = vrot.lane.b32.xlu0 %v3938, 16
      %v3949 = vpop.permute.xlu0 %3948
      %3950 = vrot.lane.b32.xlu0 %v3939, 16
      %v3951 = vpop.permute.xlu0 %3950
      %3956 = vst.msk [vmem:[#allocation2] sm:$0xff] %vm2849, %v3945
      %3957 = vst.msk [vmem:[#allocation2 + $0x18] sm:$0xff] %vm2849, %v3947
      %3958 = vst.msk [vmem:[#allocation2 + $0x30] sm:$0xff] %vm2849, %v3949
      %3959 = vst.msk [vmem:[#allocation2 + $0x48] sm:$0xff] %vm2849, %v3951
      %v3960 = vld [vmem:[#allocation10 + $0x2] sm:$0xff]
      %v3961 = vld [vmem:[#allocation10 + $0x12] sm:$0xff]
      %v3962 = vld [vmem:[#allocation10 + $0x22] sm:$0xff]
      %v3963 = vld [vmem:[#allocation10 + $0x32] sm:$0xff]
      %v3964 = vld [vmem:[#allocation10 + $0x42] sm:$0xff]
      %v3965 = vld [vmem:[#allocation10 + $0x52] sm:$0xff]
      %v3966 = vld [vmem:[#allocation10 + $0x62] sm:$0xff]
      %v3967 = vld [vmem:[#allocation10 + $0x72] sm:$0xff]
      %v3968 = vpack.c.bf16 %v3961, %v3960
      %v3969 = vpack.c.bf16 %v3963, %v3962
      %v3970 = vpack.c.bf16 %v3965, %v3964
      %v3971 = vpack.c.bf16 %v3967, %v3966
      %3976 = vrot.lane.b32.xlu0 %v3968, 32
      %v3977 = vpop.permute.xlu0 %3976
      %3978 = vrot.lane.b32.xlu0 %v3969, 32
      %v3979 = vpop.permute.xlu0 %3978
      %3980 = vrot.lane.b32.xlu0 %v3970, 32
      %v3981 = vpop.permute.xlu0 %3980
      %3982 = vrot.lane.b32.xlu0 %v3971, 32
      %v3983 = vpop.permute.xlu0 %3982
      %3988 = vst.msk [vmem:[#allocation2] sm:$0xff] %vm2868, %v3977
      %3989 = vst.msk [vmem:[#allocation2 + $0x18] sm:$0xff] %vm2868, %v3979
      %3990 = vst.msk [vmem:[#allocation2 + $0x30] sm:$0xff] %vm2868, %v3981
      %3991 = vst.msk [vmem:[#allocation2 + $0x48] sm:$0xff] %vm2868, %v3983
      %v3992 = vld [vmem:[%s3903] sm:$0xff]
      %v3993 = vld [vmem:[%s3903 + $0x10] sm:$0xff]
      %v3994 = vld [vmem:[%s3903 + $0x20] sm:$0xff]
      %v3995 = vld [vmem:[%s3903 + $0x30] sm:$0xff]
      %v3996 = vld [vmem:[%s3903 + $0x40] sm:$0xff]
      %v3997 = vld [vmem:[%s3903 + $0x50] sm:$0xff]
      %v3998 = vld [vmem:[%s3903 + $0x60] sm:$0xff]
      %v3999 = vld [vmem:[%s3903 + $0x70] sm:$0xff]
      %v4000 = vpack.c.bf16 %v3993, %v3992
      %v4001 = vpack.c.bf16 %v3995, %v3994
      %v4002 = vpack.c.bf16 %v3997, %v3996
      %v4003 = vpack.c.bf16 %v3999, %v3998
      %4008 = vrot.lane.b32.xlu0 %v4000, 48
      %v4009 = vpop.permute.xlu0 %4008
      %4010 = vrot.lane.b32.xlu0 %v4001, 48
      %v4011 = vpop.permute.xlu0 %4010
      %4012 = vrot.lane.b32.xlu0 %v4002, 48
      %v4013 = vpop.permute.xlu0 %4012
      %4014 = vrot.lane.b32.xlu0 %v4003, 48
      %v4015 = vpop.permute.xlu0 %4014
      %4020 = vst.msk [vmem:[#allocation2] sm:$0xff] %vm2887, %v4009
      %4021 = vst.msk [vmem:[#allocation2 + $0x18] sm:$0xff] %vm2887, %v4011
      %4022 = vst.msk [vmem:[#allocation2 + $0x30] sm:$0xff] %vm2887, %v4013
      %4023 = vst.msk [vmem:[#allocation2 + $0x48] sm:$0xff] %vm2887, %v4015
      %v4024 = vld [vmem:[%s3903 + $0x1] sm:$0xff]
      %v4025 = vld [vmem:[%s3903 + $0x11] sm:$0xff]
      %v4026 = vld [vmem:[%s3903 + $0x21] sm:$0xff]
      %v4027 = vld [vmem:[%s3903 + $0x31] sm:$0xff]
      %v4028 = vld [vmem:[%s3903 + $0x41] sm:$0xff]
      %v4029 = vld [vmem:[%s3903 + $0x51] sm:$0xff]
      %v4030 = vld [vmem:[%s3903 + $0x61] sm:$0xff]
      %v4031 = vld [vmem:[%s3903 + $0x71] sm:$0xff]
      %v4032 = vpack.c.bf16 %v4025, %v4024
      %v4033 = vpack.c.bf16 %v4027, %v4026
      %v4034 = vpack.c.bf16 %v4029, %v4028
      %v4035 = vpack.c.bf16 %v4031, %v4030
      %4040 = vrot.lane.b32.xlu0 %v4032, 64
      %v4041 = vpop.permute.xlu0 %4040
      %4042 = vrot.lane.b32.xlu0 %v4033, 64
      %v4043 = vpop.permute.xlu0 %4042
      %4044 = vrot.lane.b32.xlu0 %v4034, 64
      %v4045 = vpop.permute.xlu0 %4044
      %4046 = vrot.lane.b32.xlu0 %v4035, 64
      %v4047 = vpop.permute.xlu0 %4046
      %4052 = vst.msk [vmem:[#allocation2] sm:$0xff] %vm2906, %v4041
      %4053 = vst.msk [vmem:[#allocation2 + $0x18] sm:$0xff] %vm2906, %v4043
      %4054 = vst.msk [vmem:[#allocation2 + $0x30] sm:$0xff] %vm2906, %v4045
      %4055 = vst.msk [vmem:[#allocation2 + $0x48] sm:$0xff] %vm2906, %v4047
      %v4056 = vld [vmem:[%s3903 + $0x2] sm:$0xff]
      %v4057 = vld [vmem:[%s3903 + $0x12] sm:$0xff]
      %v4058 = vld [vmem:[%s3903 + $0x22] sm:$0xff]
      %v4059 = vld [vmem:[%s3903 + $0x32] sm:$0xff]
      %v4060 = vld [vmem:[%s3903 + $0x42] sm:$0xff]
      %v4061 = vld [vmem:[%s3903 + $0x52] sm:$0xff]
      %v4062 = vld [vmem:[%s3903 + $0x62] sm:$0xff]
      %v4063 = vld [vmem:[%s3903 + $0x72] sm:$0xff]
      %v4064 = vpack.c.bf16 %v4057, %v4056
      %v4065 = vpack.c.bf16 %v4059, %v4058
      %v4066 = vpack.c.bf16 %v4061, %v4060
      %v4067 = vpack.c.bf16 %v4063, %v4062
      %4072 = vrot.lane.b32.xlu0 %v4064, 80
      %v4073 = vpop.permute.xlu0 %4072
      %4074 = vrot.lane.b32.xlu0 %v4065, 80
      %v4075 = vpop.permute.xlu0 %4074
      %4076 = vrot.lane.b32.xlu0 %v4066, 80
      %v4077 = vpop.permute.xlu0 %4076
      %4078 = vrot.lane.b32.xlu0 %v4067, 80
      %v4079 = vpop.permute.xlu0 %4078
      %4084 = vst.msk [vmem:[#allocation2] sm:$0xff] %vm2925, %v4073
      %4085 = vst.msk [vmem:[#allocation2 + $0x18] sm:$0xff] %vm2925, %v4075
      %4086 = vst.msk [vmem:[#allocation2 + $0x30] sm:$0xff] %vm2925, %v4077
      %4087 = vst.msk [vmem:[#allocation2 + $0x48] sm:$0xff] %vm2925, %v4079
      %s4088 = scalar_lea.vmem [#allocation10], 32
      %v4089 = vld [vmem:[%s4088] sm:$0xff]
      %v4090 = vld [vmem:[%s4088 + $0x10] sm:$0xff]
      %v4091 = vld [vmem:[%s4088 + $0x20] sm:$0xff]
      %v4092 = vld [vmem:[%s4088 + $0x30] sm:$0xff]
      %v4093 = vld [vmem:[%s4088 + $0x40] sm:$0xff]
      %v4094 = vld [vmem:[%s4088 + $0x50] sm:$0xff]
      %v4095 = vld [vmem:[%s4088 + $0x60] sm:$0xff]
      %v4096 = vld [vmem:[%s4088 + $0x70] sm:$0xff]
      %v4097 = vpack.c.bf16 %v4090, %v4089
      %v4098 = vpack.c.bf16 %v4092, %v4091
      %v4099 = vpack.c.bf16 %v4094, %v4093
      %v4100 = vpack.c.bf16 %v4096, %v4095
      %4105 = vrot.lane.b32.xlu0 %v4097, 96
      %v4106 = vpop.permute.xlu0 %4105
      %4107 = vrot.lane.b32.xlu0 %v4098, 96
      %v4108 = vpop.permute.xlu0 %4107
      %4109 = vrot.lane.b32.xlu0 %v4099, 96
      %v4110 = vpop.permute.xlu0 %4109
      %4111 = vrot.lane.b32.xlu0 %v4100, 96
      %v4112 = vpop.permute.xlu0 %4111
      %4117 = vst.msk [vmem:[#allocation2] sm:$0xff] %vm2945, %v4106
      %4118 = vst.msk [vmem:[#allocation2 + $0x18] sm:$0xff] %vm2945, %v4108
      %4119 = vst.msk [vmem:[#allocation2 + $0x30] sm:$0xff] %vm2945, %v4110
      %4120 = vst.msk [vmem:[#allocation2 + $0x48] sm:$0xff] %vm2945, %v4112
      %v4121 = vld [vmem:[%s4088 + $0x1] sm:$0xff]
      %v4122 = vld [vmem:[%s4088 + $0x11] sm:$0xff]
      %v4123 = vld [vmem:[%s4088 + $0x21] sm:$0xff]
      %v4124 = vld [vmem:[%s4088 + $0x31] sm:$0xff]
      %v4125 = vld [vmem:[%s4088 + $0x41] sm:$0xff]
      %v4126 = vld [vmem:[%s4088 + $0x51] sm:$0xff]
      %v4127 = vld [vmem:[%s4088 + $0x61] sm:$0xff]
      %v4128 = vld [vmem:[%s4088 + $0x71] sm:$0xff]
      %v4129 = vpack.c.bf16 %v4122, %v4121
      %v4130 = vpack.c.bf16 %v4124, %v4123
      %v4131 = vpack.c.bf16 %v4126, %v4125
      %v4132 = vpack.c.bf16 %v4128, %v4127
      %4137 = vrot.lane.b32.xlu0 %v4129, 112
      %v4138 = vpop.permute.xlu0 %4137
      %4139 = vrot.lane.b32.xlu0 %v4130, 112
      %v4140 = vpop.permute.xlu0 %4139
      %4141 = vrot.lane.b32.xlu0 %v4131, 112
      %v4142 = vpop.permute.xlu0 %4141
      %4143 = vrot.lane.b32.xlu0 %v4132, 112
      %v4144 = vpop.permute.xlu0 %4143
      %4149 = vst.msk [vmem:[#allocation2] sm:$0xff] %vm2964, %v4138
      %4150 = vst.msk [vmem:[#allocation2 + $0x18] sm:$0xff] %vm2964, %v4140
      %4151 = vst.msk [vmem:[#allocation2 + $0x30] sm:$0xff] %vm2964, %v4142
      %4152 = vst.msk [vmem:[#allocation2 + $0x48] sm:$0xff] %vm2964, %v4144
      %v4153 = vld [vmem:[%s4088 + $0x2] sm:$0xff]
      %v4154 = vld [vmem:[%s4088 + $0x12] sm:$0xff]
      %v4155 = vld [vmem:[%s4088 + $0x22] sm:$0xff]
      %v4156 = vld [vmem:[%s4088 + $0x32] sm:$0xff]
      %v4157 = vld [vmem:[%s4088 + $0x42] sm:$0xff]
      %v4158 = vld [vmem:[%s4088 + $0x52] sm:$0xff]
      %v4159 = vld [vmem:[%s4088 + $0x62] sm:$0xff]
      %v4160 = vld [vmem:[%s4088 + $0x72] sm:$0xff]
      %v4161 = vpack.c.bf16 %v4154, %v4153
      %v4162 = vpack.c.bf16 %v4156, %v4155
      %v4163 = vpack.c.bf16 %v4158, %v4157
      %v4164 = vpack.c.bf16 %v4160, %v4159
      %4165 = vst.msk [vmem:[#allocation2 + $0x8] sm:$0xff] %vm628, %v4161
      %4166 = vst.msk [vmem:[#allocation2 + $0x20] sm:$0xff] %vm628, %v4162
      %4167 = vst.msk [vmem:[#allocation2 + $0x38] sm:$0xff] %vm628, %v4163
      %4168 = vst.msk [vmem:[#allocation2 + $0x50] sm:$0xff] %vm628, %v4164
      %v4169 = vld [vmem:[#allocation6] sm:$0xff]
      %v4170 = vld [vmem:[#allocation6 + $0x10] sm:$0xff]
      %v4171 = vld [vmem:[#allocation6 + $0x20] sm:$0xff]
      %v4172 = vld [vmem:[#allocation6 + $0x30] sm:$0xff]
      %v4173 = vld [vmem:[#allocation6 + $0x40] sm:$0xff]
      %v4174 = vld [vmem:[#allocation6 + $0x50] sm:$0xff]
      %v4175 = vld [vmem:[#allocation6 + $0x60] sm:$0xff]
      %v4176 = vld [vmem:[#allocation6 + $0x70] sm:$0xff]
      %v4177 = vpack.c.bf16 %v4170, %v4169
      %v4178 = vpack.c.bf16 %v4172, %v4171
      %v4179 = vpack.c.bf16 %v4174, %v4173
      %v4180 = vpack.c.bf16 %v4176, %v4175
      %4185 = vrot.lane.b32.xlu0 %v4177, 16
      %v4186 = vpop.permute.xlu0 %4185
      %4187 = vrot.lane.b32.xlu0 %v4178, 16
      %v4188 = vpop.permute.xlu0 %4187
      %4189 = vrot.lane.b32.xlu0 %v4179, 16
      %v4190 = vpop.permute.xlu0 %4189
      %4191 = vrot.lane.b32.xlu0 %v4180, 16
      %v4192 = vpop.permute.xlu0 %4191
      %4197 = vst.msk [vmem:[#allocation2 + $0x8] sm:$0xff] %vm2849, %v4186
      %4198 = vst.msk [vmem:[#allocation2 + $0x20] sm:$0xff] %vm2849, %v4188
      %4199 = vst.msk [vmem:[#allocation2 + $0x38] sm:$0xff] %vm2849, %v4190
      %4200 = vst.msk [vmem:[#allocation2 + $0x50] sm:$0xff] %vm2849, %v4192
      %v4201 = vld [vmem:[#allocation6 + $0x1] sm:$0xff]
      %v4202 = vld [vmem:[#allocation6 + $0x11] sm:$0xff]
      %v4203 = vld [vmem:[#allocation6 + $0x21] sm:$0xff]
      %v4204 = vld [vmem:[#allocation6 + $0x31] sm:$0xff]
      %v4205 = vld [vmem:[#allocation6 + $0x41] sm:$0xff]
      %v4206 = vld [vmem:[#allocation6 + $0x51] sm:$0xff]
      %v4207 = vld [vmem:[#allocation6 + $0x61] sm:$0xff]
      %v4208 = vld [vmem:[#allocation6 + $0x71] sm:$0xff]
      %v4209 = vpack.c.bf16 %v4202, %v4201
      %v4210 = vpack.c.bf16 %v4204, %v4203
      %v4211 = vpack.c.bf16 %v4206, %v4205
      %v4212 = vpack.c.bf16 %v4208, %v4207
      %4217 = vrot.lane.b32.xlu0 %v4209, 32
      %v4218 = vpop.permute.xlu0 %4217
      %4219 = vrot.lane.b32.xlu0 %v4210, 32
      %v4220 = vpop.permute.xlu0 %4219
      %4221 = vrot.lane.b32.xlu0 %v4211, 32
      %v4222 = vpop.permute.xlu0 %4221
      %4223 = vrot.lane.b32.xlu0 %v4212, 32
      %v4224 = vpop.permute.xlu0 %4223
      %4229 = vst.msk [vmem:[#allocation2 + $0x8] sm:$0xff] %vm2868, %v4218
      %4230 = vst.msk [vmem:[#allocation2 + $0x20] sm:$0xff] %vm2868, %v4220
      %4231 = vst.msk [vmem:[#allocation2 + $0x38] sm:$0xff] %vm2868, %v4222
      %4232 = vst.msk [vmem:[#allocation2 + $0x50] sm:$0xff] %vm2868, %v4224
      %v4233 = vld [vmem:[#allocation6 + $0x2] sm:$0xff]
      %v4234 = vld [vmem:[#allocation6 + $0x12] sm:$0xff]
      %v4235 = vld [vmem:[#allocation6 + $0x22] sm:$0xff]
      %v4236 = vld [vmem:[#allocation6 + $0x32] sm:$0xff]
      %v4237 = vld [vmem:[#allocation6 + $0x42] sm:$0xff]
      %v4238 = vld [vmem:[#allocation6 + $0x52] sm:$0xff]
      %v4239 = vld [vmem:[#allocation6 + $0x62] sm:$0xff]
      %v4240 = vld [vmem:[#allocation6 + $0x72] sm:$0xff]
      %v4241 = vpack.c.bf16 %v4234, %v4233
      %v4242 = vpack.c.bf16 %v4236, %v4235
      %v4243 = vpack.c.bf16 %v4238, %v4237
      %v4244 = vpack.c.bf16 %v4240, %v4239
      %4249 = vrot.lane.b32.xlu0 %v4241, 48
      %v4250 = vpop.permute.xlu0 %4249
      %4251 = vrot.lane.b32.xlu0 %v4242, 48
      %v4252 = vpop.permute.xlu0 %4251
      %4253 = vrot.lane.b32.xlu0 %v4243, 48
      %v4254 = vpop.permute.xlu0 %4253
      %4255 = vrot.lane.b32.xlu0 %v4244, 48
      %v4256 = vpop.permute.xlu0 %4255
      %4261 = vst.msk [vmem:[#allocation2 + $0x8] sm:$0xff] %vm2887, %v4250
      %4262 = vst.msk [vmem:[#allocation2 + $0x20] sm:$0xff] %vm2887, %v4252
      %4263 = vst.msk [vmem:[#allocation2 + $0x38] sm:$0xff] %vm2887, %v4254
      %4264 = vst.msk [vmem:[#allocation2 + $0x50] sm:$0xff] %vm2887, %v4256
      %v4265 = vld [vmem:[%s2758] sm:$0xff]
      %v4266 = vld [vmem:[%s2758 + $0x10] sm:$0xff]
      %v4267 = vld [vmem:[%s2758 + $0x20] sm:$0xff]
      %v4268 = vld [vmem:[%s2758 + $0x30] sm:$0xff]
      %v4269 = vld [vmem:[%s2758 + $0x40] sm:$0xff]
      %v4270 = vld [vmem:[%s2758 + $0x50] sm:$0xff]
      %v4271 = vld [vmem:[%s2758 + $0x60] sm:$0xff]
      %v4272 = vld [vmem:[%s2758 + $0x70] sm:$0xff]
      %v4273 = vpack.c.bf16 %v4266, %v4265
      %v4274 = vpack.c.bf16 %v4268, %v4267
      %v4275 = vpack.c.bf16 %v4270, %v4269
      %v4276 = vpack.c.bf16 %v4272, %v4271
      %4281 = vrot.lane.b32.xlu0 %v4273, 64
      %v4282 = vpop.permute.xlu0 %4281
      %4283 = vrot.lane.b32.xlu0 %v4274, 64
      %v4284 = vpop.permute.xlu0 %4283
      %4285 = vrot.lane.b32.xlu0 %v4275, 64
      %v4286 = vpop.permute.xlu0 %4285
      %4287 = vrot.lane.b32.xlu0 %v4276, 64
      %v4288 = vpop.permute.xlu0 %4287
      %4293 = vst.msk [vmem:[#allocation2 + $0x8] sm:$0xff] %vm2906, %v4282
      %4294 = vst.msk [vmem:[#allocation2 + $0x20] sm:$0xff] %vm2906, %v4284
      %4295 = vst.msk [vmem:[#allocation2 + $0x38] sm:$0xff] %vm2906, %v4286
      %4296 = vst.msk [vmem:[#allocation2 + $0x50] sm:$0xff] %vm2906, %v4288
      %v4297 = vld [vmem:[%s2758 + $0x1] sm:$0xff]
      %v4298 = vld [vmem:[%s2758 + $0x11] sm:$0xff]
      %v4299 = vld [vmem:[%s2758 + $0x21] sm:$0xff]
      %v4300 = vld [vmem:[%s2758 + $0x31] sm:$0xff]
      %v4301 = vld [vmem:[%s2758 + $0x41] sm:$0xff]
      %v4302 = vld [vmem:[%s2758 + $0x51] sm:$0xff]
      %v4303 = vld [vmem:[%s2758 + $0x61] sm:$0xff]
      %v4304 = vld [vmem:[%s2758 + $0x71] sm:$0xff]
      %v4305 = vpack.c.bf16 %v4298, %v4297
      %v4306 = vpack.c.bf16 %v4300, %v4299
      %v4307 = vpack.c.bf16 %v4302, %v4301
      %v4308 = vpack.c.bf16 %v4304, %v4303
      %4313 = vrot.lane.b32.xlu0 %v4305, 80
      %v4314 = vpop.permute.xlu0 %4313
      %4315 = vrot.lane.b32.xlu0 %v4306, 80
      %v4316 = vpop.permute.xlu0 %4315
      %4317 = vrot.lane.b32.xlu0 %v4307, 80
      %v4318 = vpop.permute.xlu0 %4317
      %4319 = vrot.lane.b32.xlu0 %v4308, 80
      %v4320 = vpop.permute.xlu0 %4319
      %4325 = vst.msk [vmem:[#allocation2 + $0x8] sm:$0xff] %vm2925, %v4314
      %4326 = vst.msk [vmem:[#allocation2 + $0x20] sm:$0xff] %vm2925, %v4316
      %4327 = vst.msk [vmem:[#allocation2 + $0x38] sm:$0xff] %vm2925, %v4318
      %4328 = vst.msk [vmem:[#allocation2 + $0x50] sm:$0xff] %vm2925, %v4320
      %v4329 = vld [vmem:[%s2758 + $0x2] sm:$0xff]
      %v4330 = vld [vmem:[%s2758 + $0x12] sm:$0xff]
      %v4331 = vld [vmem:[%s2758 + $0x22] sm:$0xff]
      %v4332 = vld [vmem:[%s2758 + $0x32] sm:$0xff]
      %v4333 = vld [vmem:[%s2758 + $0x42] sm:$0xff]
      %v4334 = vld [vmem:[%s2758 + $0x52] sm:$0xff]
      %v4335 = vld [vmem:[%s2758 + $0x62] sm:$0xff]
      %v4336 = vld [vmem:[%s2758 + $0x72] sm:$0xff]
      %v4337 = vpack.c.bf16 %v4330, %v4329
      %v4338 = vpack.c.bf16 %v4332, %v4331
      %v4339 = vpack.c.bf16 %v4334, %v4333
      %v4340 = vpack.c.bf16 %v4336, %v4335
      %4345 = vrot.lane.b32.xlu0 %v4337, 96
      %v4346 = vpop.permute.xlu0 %4345
      %4347 = vrot.lane.b32.xlu0 %v4338, 96
      %v4348 = vpop.permute.xlu0 %4347
      %4349 = vrot.lane.b32.xlu0 %v4339, 96
      %v4350 = vpop.permute.xlu0 %4349
      %4351 = vrot.lane.b32.xlu0 %v4340, 96
      %v4352 = vpop.permute.xlu0 %4351
      %4357 = vst.msk [vmem:[#allocation2 + $0x8] sm:$0xff] %vm2945, %v4346
      %4358 = vst.msk [vmem:[#allocation2 + $0x20] sm:$0xff] %vm2945, %v4348
      %4359 = vst.msk [vmem:[#allocation2 + $0x38] sm:$0xff] %vm2945, %v4350
      %4360 = vst.msk [vmem:[#allocation2 + $0x50] sm:$0xff] %vm2945, %v4352
      %v4361 = vld [vmem:[%s2787] sm:$0xff]
      %v4362 = vld [vmem:[%s2787 + $0x10] sm:$0xff]
      %v4363 = vld [vmem:[%s2787 + $0x20] sm:$0xff]
      %v4364 = vld [vmem:[%s2787 + $0x30] sm:$0xff]
      %v4365 = vld [vmem:[%s2787 + $0x40] sm:$0xff]
      %v4366 = vld [vmem:[%s2787 + $0x50] sm:$0xff]
      %v4367 = vld [vmem:[%s2787 + $0x60] sm:$0xff]
      %v4368 = vld [vmem:[%s2787 + $0x70] sm:$0xff]
      %v4369 = vpack.c.bf16 %v4362, %v4361
      %v4370 = vpack.c.bf16 %v4364, %v4363
      %v4371 = vpack.c.bf16 %v4366, %v4365
      %v4372 = vpack.c.bf16 %v4368, %v4367
      %4377 = vrot.lane.b32.xlu0 %v4369, 112
      %v4378 = vpop.permute.xlu0 %4377
      %4379 = vrot.lane.b32.xlu0 %v4370, 112
      %v4380 = vpop.permute.xlu0 %4379
      %4381 = vrot.lane.b32.xlu0 %v4371, 112
      %v4382 = vpop.permute.xlu0 %4381
      %4383 = vrot.lane.b32.xlu0 %v4372, 112
      %v4384 = vpop.permute.xlu0 %4383
      %4389 = vst.msk [vmem:[#allocation2 + $0x8] sm:$0xff] %vm2964, %v4378
      %4390 = vst.msk [vmem:[#allocation2 + $0x20] sm:$0xff] %vm2964, %v4380
      %4391 = vst.msk [vmem:[#allocation2 + $0x38] sm:$0xff] %vm2964, %v4382
      %4392 = vst.msk [vmem:[#allocation2 + $0x50] sm:$0xff] %vm2964, %v4384
      %v4393 = vld [vmem:[%s2787 + $0x1] sm:$0xff]
      %v4394 = vld [vmem:[%s2787 + $0x11] sm:$0xff]
      %v4395 = vld [vmem:[%s2787 + $0x21] sm:$0xff]
      %v4396 = vld [vmem:[%s2787 + $0x31] sm:$0xff]
      %v4397 = vld [vmem:[%s2787 + $0x41] sm:$0xff]
      %v4398 = vld [vmem:[%s2787 + $0x51] sm:$0xff]
      %v4399 = vld [vmem:[%s2787 + $0x61] sm:$0xff]
      %v4400 = vld [vmem:[%s2787 + $0x71] sm:$0xff]
      %v4401 = vpack.c.bf16 %v4394, %v4393
      %v4402 = vpack.c.bf16 %v4396, %v4395
      %v4403 = vpack.c.bf16 %v4398, %v4397
      %v4404 = vpack.c.bf16 %v4400, %v4399
      %4405 = vst.msk [vmem:[#allocation2 + $0x10] sm:$0xff] %vm628, %v4401
      %4406 = vst.msk [vmem:[#allocation2 + $0x28] sm:$0xff] %vm628, %v4402
      %4407 = vst.msk [vmem:[#allocation2 + $0x40] sm:$0xff] %vm628, %v4403
      %4408 = vst.msk [vmem:[#allocation2 + $0x58] sm:$0xff] %vm628, %v4404
      %v4409 = vld [vmem:[%s2787 + $0x2] sm:$0xff]
      %v4410 = vld [vmem:[%s2787 + $0x12] sm:$0xff]
      %v4411 = vld [vmem:[%s2787 + $0x22] sm:$0xff]
      %v4412 = vld [vmem:[%s2787 + $0x32] sm:$0xff]
      %v4413 = vld [vmem:[%s2787 + $0x42] sm:$0xff]
      %v4414 = vld [vmem:[%s2787 + $0x52] sm:$0xff]
      %v4415 = vld [vmem:[%s2787 + $0x62] sm:$0xff]
      %v4416 = vld [vmem:[%s2787 + $0x72] sm:$0xff]
      %v4417 = vpack.c.bf16 %v4410, %v4409
      %v4418 = vpack.c.bf16 %v4412, %v4411
      %v4419 = vpack.c.bf16 %v4414, %v4413
      %v4420 = vpack.c.bf16 %v4416, %v4415
      %4425 = vrot.lane.b32.xlu0 %v4417, 16
      %v4426 = vpop.permute.xlu0 %4425
      %4427 = vrot.lane.b32.xlu0 %v4418, 16
      %v4428 = vpop.permute.xlu0 %4427
      %4429 = vrot.lane.b32.xlu0 %v4419, 16
      %v4430 = vpop.permute.xlu0 %4429
      %4431 = vrot.lane.b32.xlu0 %v4420, 16
      %v4432 = vpop.permute.xlu0 %4431
      %4437 = vst.msk [vmem:[#allocation2 + $0x10] sm:$0xff] %vm2849, %v4426
      %4438 = vst.msk [vmem:[#allocation2 + $0x28] sm:$0xff] %vm2849, %v4428
      %4439 = vst.msk [vmem:[#allocation2 + $0x40] sm:$0xff] %vm2849, %v4430
      %4440 = vst.msk [vmem:[#allocation2 + $0x58] sm:$0xff] %vm2849, %v4432
      %v4441 = vld [vmem:[#allocation2] sm:$0xff]
      %v4442 = vld [vmem:[#allocation2 + $0x8] sm:$0xff]
      %v4443 = vld [vmem:[#allocation2 + $0x10] sm:$0xff]
      %v4444 = vld [vmem:[#allocation2 + $0x18] sm:$0xff]
      %v4445 = vld [vmem:[#allocation2 + $0x20] sm:$0xff]
      %v4446 = vld [vmem:[#allocation2 + $0x28] sm:$0xff]
      %v4447 = vld [vmem:[#allocation2 + $0x30] sm:$0xff]
      %v4448 = vld [vmem:[#allocation2 + $0x38] sm:$0xff]
      %v4449 = vld [vmem:[#allocation2 + $0x40] sm:$0xff]
      %v4450 = vld [vmem:[#allocation2 + $0x48] sm:$0xff]
      %v4451 = vld [vmem:[#allocation2 + $0x50] sm:$0xff]
      %v4452 = vld [vmem:[#allocation2 + $0x58] sm:$0xff]
      %v4453 = vld [vmem:[%s11] sm:$0xf]
      %v4454 = vld [vmem:[%s11 + $0x4] sm:$0xf]
      %v4455 = vld [vmem:[%s11 + $0x8] sm:$0xf]
      %v4456 = vld [vmem:[%s11 + $0xc] sm:$0xf]
      %v4457 = vld [vmem:[%s11 + $0x10] sm:$0xf]
      %v4458 = vld [vmem:[%s11 + $0x14] sm:$0xf]
      %v4459 = vld [vmem:[%s11 + $0x18] sm:$0xf]
      %v4460 = vld [vmem:[%s11 + $0x1c] sm:$0xf]
      %v4461 = vld [vmem:[%s11 + $0x20] sm:$0xf]
      %v4462 = vld [vmem:[%s11 + $0x24] sm:$0xf]
      %v4463 = vld [vmem:[%s11 + $0x28] sm:$0xf]
      %v4464 = vld [vmem:[%s11 + $0x2c] sm:$0xf]
      %v4465 = vld [vmem:[%s11 + $0x30] sm:$0xf]
      %v4466 = vld [vmem:[%s11 + $0x34] sm:$0xf]
      %v4467 = vld [vmem:[%s11 + $0x38] sm:$0xf]
      %v4468 = vld [vmem:[%s11 + $0x3c] sm:$0xf]
      %v4469 = vld [vmem:[%s11 + $0x40] sm:$0xf]
      %v4470 = vld [vmem:[%s11 + $0x44] sm:$0xf]
      %v4471 = vld [vmem:[%s11 + $0x48] sm:$0xf]
      %v4472 = vld [vmem:[%s11 + $0x4c] sm:$0xf]
      %v4473 = vld [vmem:[%s11 + $0x50] sm:$0xf]
      %v4474 = vld [vmem:[%s11 + $0x54] sm:$0xf]
      %v4475 = vld [vmem:[%s11 + $0x58] sm:$0xf]
      %v4476 = vld [vmem:[%s11 + $0x5c] sm:$0xf]
      %v4477 = vld [vmem:[%s11 + $0x60] sm:$0xf]
      %v4478 = vld [vmem:[%s11 + $0x64] sm:$0xf]
      %v4479 = vld [vmem:[%s11 + $0x68] sm:$0xf]
      %v4480 = vld [vmem:[%s11 + $0x6c] sm:$0xf]
      %v4481 = vld [vmem:[%s11 + $0x70] sm:$0xf]
      %v4482 = vld [vmem:[%s11 + $0x74] sm:$0xf]
      %v4483 = vld [vmem:[%s11 + $0x78] sm:$0xf]
      %v4484 = vld [vmem:[%s11 + $0x7c] sm:$0xf]
      %v4485 = vld [vmem:[%s11 + $0x80] sm:$0xf]
      %v4486 = vld [vmem:[%s11 + $0x84] sm:$0xf]
      %v4487 = vld [vmem:[%s11 + $0x88] sm:$0xf]
      %v4488 = vld [vmem:[%s11 + $0x8c] sm:$0xf]
      %v4489 = vld [vmem:[%s12] sm:$0x1]
      %v4491 = vlaneseq
      %v4492 = vshrl.u32 %v4491, 7
      %v4493 = vsub.s32 0, %v4492
      %v4494 = vrot.slane %v4489, %v4493
      %v4532 = vunpack.c.l.b16 %v4453
      %v4533 = vunpack.c.l.b16 %v4454
      %v4534 = vunpack.c.l.b16 %v4455
      %v4535 = vunpack.c.l.b16 %v4456
      %v4536 = vunpack.c.l.b16 %v4457
      %v4537 = vunpack.c.l.b16 %v4458
      %v4538 = vunpack.c.l.b16 %v4459
      %v4539 = vunpack.c.l.b16 %v4460
      %v4540 = vunpack.c.l.b16 %v4461
      %v4541 = vunpack.c.l.b16 %v4462
      %v4542 = vunpack.c.l.b16 %v4463
      %v4543 = vunpack.c.l.b16 %v4464
      %v4544 = vunpack.c.l.b16 %v4465
      %v4545 = vunpack.c.l.b16 %v4466
      %v4546 = vunpack.c.l.b16 %v4467
      %v4547 = vunpack.c.l.b16 %v4468
      %v4548 = vunpack.c.l.b16 %v4469
      %v4549 = vunpack.c.l.b16 %v4470
      %v4550 = vunpack.c.l.b16 %v4471
      %v4551 = vunpack.c.l.b16 %v4472
      %v4552 = vunpack.c.l.b16 %v4473
      %v4553 = vunpack.c.l.b16 %v4474
      %v4554 = vunpack.c.l.b16 %v4475
      %v4555 = vunpack.c.l.b16 %v4476
      %v4556 = vunpack.c.l.b16 %v4477
      %v4557 = vunpack.c.l.b16 %v4478
      %v4558 = vunpack.c.l.b16 %v4479
      %v4559 = vunpack.c.l.b16 %v4480
      %v4560 = vunpack.c.l.b16 %v4481
      %v4561 = vunpack.c.l.b16 %v4482
      %v4562 = vunpack.c.l.b16 %v4483
      %v4563 = vunpack.c.l.b16 %v4484
      %v4564 = vunpack.c.l.b16 %v4485
      %v4565 = vunpack.c.l.b16 %v4486
      %v4566 = vunpack.c.l.b16 %v4487
      %v4567 = vunpack.c.l.b16 %v4488
      %v4568 = vpack.c.b16 %v4533, %v4532
      %v4569 = vpack.c.b16 %v4535, %v4534
      %v4570 = vpack.c.b16 %v4537, %v4536
      %v4571 = vpack.c.b16 %v4539, %v4538
      %v4572 = vpack.c.b16 %v4541, %v4540
      %v4573 = vpack.c.b16 %v4543, %v4542
      %v4574 = vpack.c.b16 %v4545, %v4544
      %v4575 = vpack.c.b16 %v4547, %v4546
      %v4576 = vpack.c.b16 %v4549, %v4548
      %v4577 = vpack.c.b16 %v4551, %v4550
      %v4578 = vpack.c.b16 %v4553, %v4552
      %v4579 = vpack.c.b16 %v4555, %v4554
      %v4580 = vpack.c.b16 %v4557, %v4556
      %v4581 = vpack.c.b16 %v4559, %v4558
      %v4582 = vpack.c.b16 %v4561, %v4560
      %v4583 = vpack.c.b16 %v4563, %v4562
      %v4584 = vpack.c.b16 %v4565, %v4564
      %v4585 = vpack.c.b16 %v4567, %v4566
      %v4605 = vsel %vm3132, %v4443, 0
      %v4608 = vsel %vm3132, %v4446, 0
      %v4611 = vsel %vm3132, %v4449, 0
      %v4614 = vsel %vm3132, %v4452, 0
      %4616 = vmatprep.subr.bf16.mxu0 0
      %4617 = vmatpush1.bf16.msra.mxu0 %v4568
      %4618 = vmatprep.subr.bf16.mxu0 0
      %4619 = vmatpush1.bf16.msra.mxu0 %v4569
      %4620 = vmatprep.subr.bf16.mxu0 0
      %4621 = vmatpush1.bf16.msra.mxu0 %v4570
      %4622 = vmatprep.subr.bf16.mxu0 0
      %4623 = vmatpush1.bf16.msra.mxu0 %v4571
      %4624 = vmatprep.subr.bf16.mxu0 0
      %4625 = vmatpush1.bf16.msra.mxu0 %v4572
      %4626 = vmatprep.subr.bf16.mxu0 0
      %4627 = vmatpush1.bf16.msra.mxu0 %v4573
      %4628 = vmatprep.subr.bf16.mxu0 0
      %4629 = vmatpush1.bf16.msra.mxu0 %v4574
      %4630 = vmatprep.subr.bf16.mxu0 0
      %4631 = vmatpush1.bf16.msra.mxu0 %v4575
      %4632 = vmatprep.subr.bf16.mxu0 0
      %4633 = vmatpush1.bf16.msra.mxu0 %v4576
      %4634 = vmatprep.subr.bf16.mxu0 0
      %4635 = vmatpush1.bf16.msra.mxu0 %v4577
      %4636 = vmatprep.subr.bf16.mxu0 0
      %4637 = vmatpush1.bf16.msra.mxu0 %v4578
      %4638 = vmatprep.subr.bf16.mxu0 0
      %4639 = vmatpush1.bf16.msra.mxu0 %v4579
      %4640 = vmatprep.subr.bf16.mxu0 0
      %4641 = vmatpush1.bf16.msra.mxu0 %v4580
      %4642 = vmatprep.subr.bf16.mxu0 0
      %4643 = vmatpush1.bf16.msra.mxu0 %v4581
      %4644 = vmatprep.subr.bf16.mxu0 0
      %4645 = vmatpush1.bf16.msra.mxu0 %v4582
      %4646 = vmatprep.subr.bf16.mxu0 0
      %4647 = vmatpush1.bf16.msra.mxu0 %v4583
      %4648 = vmatprep.mubr.bf16.mxu0 %v4442
      %4649 = vmatmul.mubr.bf16.gmra.mrb[0].mxu0 %v4441
      %v4650 = vpop.f32.mrb[0].mxu0
      %v4651 = vadd.f32 %v4494, %v4650
      %v4652 = vpop.f32.mrb[0].mxu0
      %v4653 = vpop.f32.mrb[0].mxu0
      %v4654 = vadd.f32 %v4494, %v4653
      %v4655 = vpop.f32.mrb[0].mxu0
      %4656 = vmatprep.mubr.bf16.mxu0 %v4445
      %4657 = vmatmul.mubr.bf16.gmra.mrb[0].mxu0 %v4444
      %v4658 = vpop.f32.mrb[0].mxu0
      %v4659 = vadd.f32 %v4494, %v4658
      %v4660 = vpop.f32.mrb[0].mxu0
      %v4661 = vpop.f32.mrb[0].mxu0
      %v4662 = vadd.f32 %v4494, %v4661
      %v4663 = vpop.f32.mrb[0].mxu0
      %4664 = vmatprep.mubr.bf16.mxu0 %v4448
      %4665 = vmatmul.mubr.bf16.gmra.mrb[0].mxu0 %v4447
      %v4666 = vpop.f32.mrb[0].mxu0
      %v4667 = vadd.f32 %v4494, %v4666
      %v4668 = vpop.f32.mrb[0].mxu0
      %v4669 = vpop.f32.mrb[0].mxu0
      %v4670 = vadd.f32 %v4494, %v4669
      %v4671 = vpop.f32.mrb[0].mxu0
      %4672 = vmatprep.mubr.bf16.mxu0 %v4451
      %4673 = vmatmul.mubr.bf16.gmra.mrb[0].mxu0 %v4450
      %v4674 = vpop.f32.mrb[0].mxu0
      %v4675 = vadd.f32 %v4494, %v4674
      %v4676 = vpop.f32.mrb[0].mxu0
      %v4677 = vpop.f32.mrb[0].mxu0
      %v4678 = vadd.f32 %v4494, %v4677
      %v4679 = vpop.f32.mrb[0].mxu0
      %4680 = vdwg.mxu0
      %4681 = vmatprep.subr.bf16.mxu0 0
      %4682 = vmatpush1.bf16.msra.mxu0 %v4584
      %4683 = vmatprep.subr.bf16.mxu0 0
      %4684 = vmatpush1.bf16.msra.mxu0 %v4585
      %4685 = vmatprep.subr.bf16.mxu0 0
      %4686 = vmatpush1.bf16.msra.mxu0 0
      %4687 = vmatprep.subr.bf16.mxu0 0
      %4688 = vmatpush1.bf16.msra.mxu0 0
      %4689 = vmatprep.subr.bf16.mxu0 0
      %4690 = vmatpush1.bf16.msra.mxu0 0
      %4691 = vmatprep.subr.bf16.mxu0 0
      %4692 = vmatpush1.bf16.msra.mxu0 0
      %4693 = vmatprep.subr.bf16.mxu0 0
      %4694 = vmatpush1.bf16.msra.mxu0 0
      %4695 = vmatprep.subr.bf16.mxu0 0
      %4696 = vmatpush1.bf16.msra.mxu0 0
      %4697 = vmatprep.subr.bf16.mxu0 0
      %4698 = vmatpush1.bf16.msra.mxu0 0
      %4699 = vmatprep.subr.bf16.mxu0 0
      %4700 = vmatpush1.bf16.msra.mxu0 0
      %4701 = vmatprep.subr.bf16.mxu0 0
      %4702 = vmatpush1.bf16.msra.mxu0 0
      %4703 = vmatprep.subr.bf16.mxu0 0
      %4704 = vmatpush1.bf16.msra.mxu0 0
      %4705 = vmatprep.subr.bf16.mxu0 0
      %4706 = vmatpush1.bf16.msra.mxu0 0
      %4707 = vmatprep.subr.bf16.mxu0 0
      %4708 = vmatpush1.bf16.msra.mxu0 0
      %4709 = vmatprep.subr.bf16.mxu0 0
      %4710 = vmatpush1.bf16.msra.mxu0 0
      %4711 = vmatprep.subr.bf16.mxu0 0
      %4712 = vmatpush1.bf16.msra.mxu0 0
      %4713 = vmatprep.mubr.bf16.mxu0 0
      %4714 = vmatmul.mubr.bf16.gmra.mrb[0].mxu0 %v4605
      %v4715 = vpop.f32.mrb[0].mxu0
      %v4716 = vadd.f32 %v4651, %v4715
      %v4717 = vpop.f32.mrb[0].mxu0
      %v4718 = vpop.f32.mrb[0].mxu0
      %v4719 = vadd.f32 %v4654, %v4718
      %v4720 = vpop.f32.mrb[0].mxu0
      %4721 = vmatprep.mubr.bf16.mxu0 0
      %4722 = vmatmul.mubr.bf16.gmra.mrb[0].mxu0 %v4608
      %v4723 = vpop.f32.mrb[0].mxu0
      %v4724 = vadd.f32 %v4659, %v4723
      %v4725 = vpop.f32.mrb[0].mxu0
      %v4726 = vpop.f32.mrb[0].mxu0
      %v4727 = vadd.f32 %v4662, %v4726
      %v4728 = vpop.f32.mrb[0].mxu0
      %4729 = vmatprep.mubr.bf16.mxu0 0
      %4730 = vmatmul.mubr.bf16.gmra.mrb[0].mxu0 %v4611
      %v4731 = vpop.f32.mrb[0].mxu0
      %v4732 = vadd.f32 %v4667, %v4731
      %v4733 = vpop.f32.mrb[0].mxu0
      %v4734 = vpop.f32.mrb[0].mxu0
      %v4735 = vadd.f32 %v4670, %v4734
      %v4736 = vpop.f32.mrb[0].mxu0
      %4737 = vmatprep.mubr.bf16.mxu0 0
      %4738 = vmatmul.mubr.bf16.gmra.mrb[0].mxu0 %v4614
      %v4739 = vpop.f32.mrb[0].mxu0
      %v4740 = vadd.f32 %v4675, %v4739
      %v4741 = vpop.f32.mrb[0].mxu0
      %v4742 = vpop.f32.mrb[0].mxu0
      %v4743 = vadd.f32 %v4678, %v4742
      %v4744 = vpop.f32.mrb[0].mxu0
      %4745 = vdwg.mxu0
      %v4746 = vmax.f32 %v4716, 0.0
      %v4747 = vmax.f32 %v4719, 0.0
      %v4748 = vmax.f32 %v4724, 0.0
      %v4749 = vmax.f32 %v4727, 0.0
      %v4750 = vmax.f32 %v4732, 0.0
      %v4751 = vmax.f32 %v4735, 0.0
      %v4752 = vmax.f32 %v4740, 0.0
      %v4753 = vmax.f32 %v4743, 0.0
      %s4754 = scalar_lea.vmem [#allocation11], 16
      %4755 = vst.msk [vmem:[%s4754 + $0x1] sm:$0xff] %vm628, %v4746
      %4756 = vst.msk [vmem:[%s4754 + $0x11] sm:$0xff] %vm628, %v4747
      %4757 = vst.msk [vmem:[%s4754 + $0x21] sm:$0xff] %vm628, %v4748
      %4758 = vst.msk [vmem:[%s4754 + $0x31] sm:$0xff] %vm628, %v4749
      %4759 = vst.msk [vmem:[%s4754 + $0x41] sm:$0xff] %vm628, %v4750
      %4760 = vst.msk [vmem:[%s4754 + $0x51] sm:$0xff] %vm628, %v4751
      %4761 = vst.msk [vmem:[%s4754 + $0x61] sm:$0xff] %vm628, %v4752
      %4762 = vst.msk [vmem:[%s4754 + $0x71] sm:$0xff] %vm628, %v4753
      %v4763 = vld [vmem:[%s4754 + $0x1] sm:$0xff]
      %v4764 = vld [vmem:[%s4754 + $0x11] sm:$0xff]
      %v4765 = vld [vmem:[%s4754 + $0x21] sm:$0xff]
      %v4766 = vld [vmem:[%s4754 + $0x31] sm:$0xff]
      %v4767 = vld [vmem:[%s4754 + $0x41] sm:$0xff]
      %v4768 = vld [vmem:[%s4754 + $0x51] sm:$0xff]
      %v4769 = vld [vmem:[%s4754 + $0x61] sm:$0xff]
      %v4770 = vld [vmem:[%s4754 + $0x71] sm:$0xff]
      %v4771 = vpack.c.bf16 %v4764, %v4763
      %v4772 = vpack.c.bf16 %v4766, %v4765
      %v4773 = vpack.c.bf16 %v4768, %v4767
      %v4774 = vpack.c.bf16 %v4770, %v4769
      %4775 = vst.msk [vmem:[#allocation2] sm:$0xff] %vm628, %v4771
      %4776 = vst.msk [vmem:[#allocation2 + $0x18] sm:$0xff] %vm628, %v4772
      %4777 = vst.msk [vmem:[#allocation2 + $0x30] sm:$0xff] %vm628, %v4773
      %4778 = vst.msk [vmem:[#allocation2 + $0x48] sm:$0xff] %vm628, %v4774
      %v4779 = vld [vmem:[%s4754 + $0x2] sm:$0xff]
      %v4780 = vld [vmem:[%s4754 + $0x12] sm:$0xff]
      %v4781 = vld [vmem:[%s4754 + $0x22] sm:$0xff]
      %v4782 = vld [vmem:[%s4754 + $0x32] sm:$0xff]
      %v4783 = vld [vmem:[%s4754 + $0x42] sm:$0xff]
      %v4784 = vld [vmem:[%s4754 + $0x52] sm:$0xff]
      %v4785 = vld [vmem:[%s4754 + $0x62] sm:$0xff]
      %v4786 = vld [vmem:[%s4754 + $0x72] sm:$0xff]
      %v4787 = vpack.c.bf16 %v4780, %v4779
      %v4788 = vpack.c.bf16 %v4782, %v4781
      %v4789 = vpack.c.bf16 %v4784, %v4783
      %v4790 = vpack.c.bf16 %v4786, %v4785
      %4795 = vrot.lane.b32.xlu0 %v4787, 16
      %v4796 = vpop.permute.xlu0 %4795
      %4797 = vrot.lane.b32.xlu0 %v4788, 16
      %v4798 = vpop.permute.xlu0 %4797
      %4799 = vrot.lane.b32.xlu0 %v4789, 16
      %v4800 = vpop.permute.xlu0 %4799
      %4801 = vrot.lane.b32.xlu0 %v4790, 16
      %v4802 = vpop.permute.xlu0 %4801
      %4807 = vst.msk [vmem:[#allocation2] sm:$0xff] %vm2849, %v4796
      %4808 = vst.msk [vmem:[#allocation2 + $0x18] sm:$0xff] %vm2849, %v4798
      %4809 = vst.msk [vmem:[#allocation2 + $0x30] sm:$0xff] %vm2849, %v4800
      %4810 = vst.msk [vmem:[#allocation2 + $0x48] sm:$0xff] %vm2849, %v4802
      %s4811 = scalar_lea.vmem [#allocation11], 32
      %v4812 = vld [vmem:[%s4811 + $0x1] sm:$0xff]
      %v4813 = vld [vmem:[%s4811 + $0x11] sm:$0xff]
      %v4814 = vld [vmem:[%s4811 + $0x21] sm:$0xff]
      %v4815 = vld [vmem:[%s4811 + $0x31] sm:$0xff]
      %v4816 = vld [vmem:[%s4811 + $0x41] sm:$0xff]
      %v4817 = vld [vmem:[%s4811 + $0x51] sm:$0xff]
      %v4818 = vld [vmem:[%s4811 + $0x61] sm:$0xff]
      %v4819 = vld [vmem:[%s4811 + $0x71] sm:$0xff]
      %v4820 = vpack.c.bf16 %v4813, %v4812
      %v4821 = vpack.c.bf16 %v4815, %v4814
      %v4822 = vpack.c.bf16 %v4817, %v4816
      %v4823 = vpack.c.bf16 %v4819, %v4818
      %4828 = vrot.lane.b32.xlu0 %v4820, 32
      %v4829 = vpop.permute.xlu0 %4828
      %4830 = vrot.lane.b32.xlu0 %v4821, 32
      %v4831 = vpop.permute.xlu0 %4830
      %4832 = vrot.lane.b32.xlu0 %v4822, 32
      %v4833 = vpop.permute.xlu0 %4832
      %4834 = vrot.lane.b32.xlu0 %v4823, 32
      %v4835 = vpop.permute.xlu0 %4834
      %4840 = vst.msk [vmem:[#allocation2] sm:$0xff] %vm2868, %v4829
      %4841 = vst.msk [vmem:[#allocation2 + $0x18] sm:$0xff] %vm2868, %v4831
      %4842 = vst.msk [vmem:[#allocation2 + $0x30] sm:$0xff] %vm2868, %v4833
      %4843 = vst.msk [vmem:[#allocation2 + $0x48] sm:$0xff] %vm2868, %v4835
      %v4844 = vld [vmem:[%s4811 + $0x2] sm:$0xff]
      %v4845 = vld [vmem:[%s4811 + $0x12] sm:$0xff]
      %v4846 = vld [vmem:[%s4811 + $0x22] sm:$0xff]
      %v4847 = vld [vmem:[%s4811 + $0x32] sm:$0xff]
      %v4848 = vld [vmem:[%s4811 + $0x42] sm:$0xff]
      %v4849 = vld [vmem:[%s4811 + $0x52] sm:$0xff]
      %v4850 = vld [vmem:[%s4811 + $0x62] sm:$0xff]
      %v4851 = vld [vmem:[%s4811 + $0x72] sm:$0xff]
      %v4852 = vpack.c.bf16 %v4845, %v4844
      %v4853 = vpack.c.bf16 %v4847, %v4846
      %v4854 = vpack.c.bf16 %v4849, %v4848
      %v4855 = vpack.c.bf16 %v4851, %v4850
      %4860 = vrot.lane.b32.xlu0 %v4852, 48
      %v4861 = vpop.permute.xlu0 %4860
      %4862 = vrot.lane.b32.xlu0 %v4853, 48
      %v4863 = vpop.permute.xlu0 %4862
      %4864 = vrot.lane.b32.xlu0 %v4854, 48
      %v4865 = vpop.permute.xlu0 %4864
      %4866 = vrot.lane.b32.xlu0 %v4855, 48
      %v4867 = vpop.permute.xlu0 %4866
      %4872 = vst.msk [vmem:[#allocation2] sm:$0xff] %vm2887, %v4861
      %4873 = vst.msk [vmem:[#allocation2 + $0x18] sm:$0xff] %vm2887, %v4863
      %4874 = vst.msk [vmem:[#allocation2 + $0x30] sm:$0xff] %vm2887, %v4865
      %4875 = vst.msk [vmem:[#allocation2 + $0x48] sm:$0xff] %vm2887, %v4867
      %v4876 = vld [vmem:[#allocation2] sm:$0xff]
      %v4877 = vld [vmem:[#allocation2 + $0x18] sm:$0xff]
      %v4878 = vld [vmem:[#allocation2 + $0x30] sm:$0xff]
      %v4879 = vld [vmem:[#allocation2 + $0x48] sm:$0xff]
      %v4880 = vld [vmem:[%s9] sm:$0xf]
      %v4881 = vld [vmem:[%s9 + $0x4] sm:$0xf]
      %v4882 = vld [vmem:[%s9 + $0x8] sm:$0xf]
      %v4883 = vld [vmem:[%s9 + $0xc] sm:$0xf]
      %v4884 = vld [vmem:[%s9 + $0x10] sm:$0xf]
      %v4885 = vld [vmem:[%s9 + $0x14] sm:$0xf]
      %v4886 = vld [vmem:[%s9 + $0x18] sm:$0xf]
      %v4887 = vld [vmem:[%s9 + $0x1c] sm:$0xf]
      %v4888 = vld [vmem:[%s10] sm:$0x1]
      %v4890 = vlaneseq
      %v4891 = vshrl.u32 %v4890, 7
      %v4892 = vsub.s32 0, %v4891
      %v4893 = vrot.slane %v4888, %v4892
      %v4903 = vunpack.c.l.b16 %v4880
      %v4904 = vunpack.c.l.b16 %v4881
      %v4905 = vunpack.c.l.b16 %v4882
      %v4906 = vunpack.c.l.b16 %v4883
      %v4907 = vunpack.c.l.b16 %v4884
      %v4908 = vunpack.c.l.b16 %v4885
      %v4909 = vunpack.c.l.b16 %v4886
      %v4910 = vunpack.c.l.b16 %v4887
      %v4911 = vpack.c.b16 %v4904, %v4903
      %v4912 = vpack.c.b16 %v4906, %v4905
      %v4913 = vpack.c.b16 %v4908, %v4907
      %v4914 = vpack.c.b16 %v4910, %v4909
      %vm4919 = vcmask 523264
      %v4921 = vsel %vm4919, %v4876, 0
      %v4924 = vsel %vm4919, %v4877, 0
      %v4927 = vsel %vm4919, %v4878, 0
      %v4930 = vsel %vm4919, %v4879, 0
      %4932 = vmatprep.subr.bf16.mxu0 0
      %4933 = vmatpush1.bf16.msra.mxu0 %v4911
      %4934 = vmatprep.subr.bf16.mxu0 0
      %4935 = vmatpush1.bf16.msra.mxu0 %v4912
      %4936 = vmatprep.subr.bf16.mxu0 0
      %4937 = vmatpush1.bf16.msra.mxu0 %v4913
      %4938 = vmatprep.subr.bf16.mxu0 0
      %4939 = vmatpush1.bf16.msra.mxu0 %v4914
      %4940 = vmatprep.subr.bf16.mxu0 0
      %4941 = vmatpush1.bf16.msra.mxu0 0
      %4942 = vmatprep.subr.bf16.mxu0 0
      %4943 = vmatpush1.bf16.msra.mxu0 0
      %4944 = vmatprep.subr.bf16.mxu0 0
      %4945 = vmatpush1.bf16.msra.mxu0 0
      %4946 = vmatprep.subr.bf16.mxu0 0
      %4947 = vmatpush1.bf16.msra.mxu0 0
      %4948 = vmatprep.subr.bf16.mxu0 0
      %4949 = vmatpush1.bf16.msra.mxu0 0
      %4950 = vmatprep.subr.bf16.mxu0 0
      %4951 = vmatpush1.bf16.msra.mxu0 0
      %4952 = vmatprep.subr.bf16.mxu0 0
      %4953 = vmatpush1.bf16.msra.mxu0 0
      %4954 = vmatprep.subr.bf16.mxu0 0
      %4955 = vmatpush1.bf16.msra.mxu0 0
      %4956 = vmatprep.subr.bf16.mxu0 0
      %4957 = vmatpush1.bf16.msra.mxu0 0
      %4958 = vmatprep.subr.bf16.mxu0 0
      %4959 = vmatpush1.bf16.msra.mxu0 0
      %4960 = vmatprep.subr.bf16.mxu0 0
      %4961 = vmatpush1.bf16.msra.mxu0 0
      %4962 = vmatprep.subr.bf16.mxu0 0
      %4963 = vmatpush1.bf16.msra.mxu0 0
      %4964 = vmatprep.mubr.bf16.mxu0 0
      %4965 = vmatmul.mubr.bf16.gmra.mrb[0].mxu0 %v4921
      %v4966 = vpop.f32.mrb[0].mxu0
      %v4967 = vadd.f32 %v4893, %v4966
      %v4968 = vpop.f32.mrb[0].mxu0
      %v4969 = vpop.f32.mrb[0].mxu0
      %v4970 = vadd.f32 %v4893, %v4969
      %v4971 = vpop.f32.mrb[0].mxu0
      %4972 = vmatprep.mubr.bf16.mxu0 0
      %4973 = vmatmul.mubr.bf16.gmra.mrb[0].mxu0 %v4924
      %v4974 = vpop.f32.mrb[0].mxu0
      %v4975 = vadd.f32 %v4893, %v4974
      %v4976 = vpop.f32.mrb[0].mxu0
      %v4977 = vpop.f32.mrb[0].mxu0
      %v4978 = vadd.f32 %v4893, %v4977
      %v4979 = vpop.f32.mrb[0].mxu0
      %4980 = vmatprep.mubr.bf16.mxu0 0
      %4981 = vmatmul.mubr.bf16.gmra.mrb[0].mxu0 %v4927
      %v4982 = vpop.f32.mrb[0].mxu0
      %v4983 = vadd.f32 %v4893, %v4982
      %v4984 = vpop.f32.mrb[0].mxu0
      %v4985 = vpop.f32.mrb[0].mxu0
      %v4986 = vadd.f32 %v4893, %v4985
      %v4987 = vpop.f32.mrb[0].mxu0
      %4988 = vmatprep.mubr.bf16.mxu0 0
      %4989 = vmatmul.mubr.bf16.gmra.mrb[0].mxu0 %v4930
      %v4990 = vpop.f32.mrb[0].mxu0
      %v4991 = vadd.f32 %v4893, %v4990
      %v4992 = vpop.f32.mrb[0].mxu0
      %v4993 = vpop.f32.mrb[0].mxu0
      %v4994 = vadd.f32 %v4893, %v4993
      %v4995 = vpop.f32.mrb[0].mxu0
      %4996 = vdwg.mxu0
      %v5005 = vcombine.high %v4967, %v4967
      %v5007 = vunpack.c.l.s4 1966171168
      %v5008 = vunpack.c.0.s8 %v5007
      %v5009 = vlaneseq
      %v5010 = vshrl.u32 %v5009, 7
      %v5011 = vsub.s32 %v5008, %v5010
      %v5012 = vrot.slane %v4967, %v5011
      %v5014 = vunpack.c.l.s4 1966171168
      %v5015 = vunpack.c.0.s8 %v5014
      %v5016 = vlaneseq
      %v5017 = vshrl.u32 %v5016, 7
      %v5018 = vsub.s32 %v5015, %v5017
      %v5019 = vrot.slane %v5005, %v5018
      %v5020 = vcombine.high %v5012, %v5012
      %v5021 = vcombine.high %v5019, %v5019
      %v5023 = vunpack.c.l.s4 1966171168
      %v5024 = vunpack.c.0.s8 %v5023
      %v5025 = vlaneseq
      %v5026 = vshrl.u32 %v5025, 7
      %v5027 = vsub.s32 %v5024, %v5026
      %v5028 = vrot.slane %v5012, %v5027
      %v5030 = vunpack.c.l.s4 1966171168
      %v5031 = vunpack.c.0.s8 %v5030
      %v5032 = vlaneseq
      %v5033 = vshrl.u32 %v5032, 7
      %v5034 = vsub.s32 %v5031, %v5033
      %v5035 = vrot.slane %v5019, %v5034
      %v5037 = vunpack.c.l.s4 1966171168
      %v5038 = vunpack.c.0.s8 %v5037
      %v5039 = vlaneseq
      %v5040 = vshrl.u32 %v5039, 7
      %v5041 = vsub.s32 %v5038, %v5040
      %v5042 = vrot.slane %v5020, %v5041
      %v5044 = vunpack.c.l.s4 1966171168
      %v5045 = vunpack.c.0.s8 %v5044
      %v5046 = vlaneseq
      %v5047 = vshrl.u32 %v5046, 7
      %v5048 = vsub.s32 %v5045, %v5047
      %v5049 = vrot.slane %v5021, %v5048
      %v5050 = vcombine.high %v5028, %v5028
      %v5051 = vcombine.high %v5035, %v5035
      %v5052 = vcombine.high %v5042, %v5042
      %v5053 = vcombine.high %v5049, %v5049
      %v5054 = vcombine.high %v4970, %v4970
      %v5056 = vunpack.c.l.s4 1966171168
      %v5057 = vunpack.c.0.s8 %v5056
      %v5058 = vlaneseq
      %v5059 = vshrl.u32 %v5058, 7
      %v5060 = vsub.s32 %v5057, %v5059
      %v5061 = vrot.slane %v4970, %v5060
      %v5063 = vunpack.c.l.s4 1966171168
      %v5064 = vunpack.c.0.s8 %v5063
      %v5065 = vlaneseq
      %v5066 = vshrl.u32 %v5065, 7
      %v5067 = vsub.s32 %v5064, %v5066
      %v5068 = vrot.slane %v5054, %v5067
      %v5069 = vcombine.high %v5061, %v5061
      %v5070 = vcombine.high %v5068, %v5068
      %v5072 = vunpack.c.l.s4 1966171168
      %v5073 = vunpack.c.0.s8 %v5072
      %v5074 = vlaneseq
      %v5075 = vshrl.u32 %v5074, 7
      %v5076 = vsub.s32 %v5073, %v5075
      %v5077 = vrot.slane %v5061, %v5076
      %v5079 = vunpack.c.l.s4 1966171168
      %v5080 = vunpack.c.0.s8 %v5079
      %v5081 = vlaneseq
      %v5082 = vshrl.u32 %v5081, 7
      %v5083 = vsub.s32 %v5080, %v5082
      %v5084 = vrot.slane %v5068, %v5083
      %v5086 = vunpack.c.l.s4 1966171168
      %v5087 = vunpack.c.0.s8 %v5086
      %v5088 = vlaneseq
      %v5089 = vshrl.u32 %v5088, 7
      %v5090 = vsub.s32 %v5087, %v5089
      %v5091 = vrot.slane %v5069, %v5090
      %v5093 = vunpack.c.l.s4 1966171168
      %v5094 = vunpack.c.0.s8 %v5093
      %v5095 = vlaneseq
      %v5096 = vshrl.u32 %v5095, 7
      %v5097 = vsub.s32 %v5094, %v5096
      %v5098 = vrot.slane %v5070, %v5097
      %v5099 = vcombine.high %v5077, %v5077
      %v5100 = vcombine.high %v5084, %v5084
      %v5101 = vcombine.high %v5091, %v5091
      %v5102 = vcombine.high %v5098, %v5098
      %v5103 = vcombine.high %v4975, %v4975
      %v5105 = vunpack.c.l.s4 1966171168
      %v5106 = vunpack.c.0.s8 %v5105
      %v5107 = vlaneseq
      %v5108 = vshrl.u32 %v5107, 7
      %v5109 = vsub.s32 %v5106, %v5108
      %v5110 = vrot.slane %v4975, %v5109
      %v5112 = vunpack.c.l.s4 1966171168
      %v5113 = vunpack.c.0.s8 %v5112
      %v5114 = vlaneseq
      %v5115 = vshrl.u32 %v5114, 7
      %v5116 = vsub.s32 %v5113, %v5115
      %v5117 = vrot.slane %v5103, %v5116
      %v5118 = vcombine.high %v5110, %v5110
      %v5119 = vcombine.high %v5117, %v5117
      %v5121 = vunpack.c.l.s4 1966171168
      %v5122 = vunpack.c.0.s8 %v5121
      %v5123 = vlaneseq
      %v5124 = vshrl.u32 %v5123, 7
      %v5125 = vsub.s32 %v5122, %v5124
      %v5126 = vrot.slane %v5110, %v5125
      %v5128 = vunpack.c.l.s4 1966171168
      %v5129 = vunpack.c.0.s8 %v5128
      %v5130 = vlaneseq
      %v5131 = vshrl.u32 %v5130, 7
      %v5132 = vsub.s32 %v5129, %v5131
      %v5133 = vrot.slane %v5117, %v5132
      %v5135 = vunpack.c.l.s4 1966171168
      %v5136 = vunpack.c.0.s8 %v5135
      %v5137 = vlaneseq
      %v5138 = vshrl.u32 %v5137, 7
      %v5139 = vsub.s32 %v5136, %v5138
      %v5140 = vrot.slane %v5118, %v5139
      %v5142 = vunpack.c.l.s4 1966171168
      %v5143 = vunpack.c.0.s8 %v5142
      %v5144 = vlaneseq
      %v5145 = vshrl.u32 %v5144, 7
      %v5146 = vsub.s32 %v5143, %v5145
      %v5147 = vrot.slane %v5119, %v5146
      %v5148 = vcombine.high %v5126, %v5126
      %v5149 = vcombine.high %v5133, %v5133
      %v5150 = vcombine.high %v5140, %v5140
      %v5151 = vcombine.high %v5147, %v5147
      %v5152 = vcombine.high %v4978, %v4978
      %v5154 = vunpack.c.l.s4 1966171168
      %v5155 = vunpack.c.0.s8 %v5154
      %v5156 = vlaneseq
      %v5157 = vshrl.u32 %v5156, 7
      %v5158 = vsub.s32 %v5155, %v5157
      %v5159 = vrot.slane %v4978, %v5158
      %v5161 = vunpack.c.l.s4 1966171168
      %v5162 = vunpack.c.0.s8 %v5161
      %v5163 = vlaneseq
      %v5164 = vshrl.u32 %v5163, 7
      %v5165 = vsub.s32 %v5162, %v5164
      %v5166 = vrot.slane %v5152, %v5165
      %v5167 = vcombine.high %v5159, %v5159
      %v5168 = vcombine.high %v5166, %v5166
      %v5170 = vunpack.c.l.s4 1966171168
      %v5171 = vunpack.c.0.s8 %v5170
      %v5172 = vlaneseq
      %v5173 = vshrl.u32 %v5172, 7
      %v5174 = vsub.s32 %v5171, %v5173
      %v5175 = vrot.slane %v5159, %v5174
      %v5177 = vunpack.c.l.s4 1966171168
      %v5178 = vunpack.c.0.s8 %v5177
      %v5179 = vlaneseq
      %v5180 = vshrl.u32 %v5179, 7
      %v5181 = vsub.s32 %v5178, %v5180
      %v5182 = vrot.slane %v5166, %v5181
      %v5184 = vunpack.c.l.s4 1966171168
      %v5185 = vunpack.c.0.s8 %v5184
      %v5186 = vlaneseq
      %v5187 = vshrl.u32 %v5186, 7
      %v5188 = vsub.s32 %v5185, %v5187
      %v5189 = vrot.slane %v5167, %v5188
      %v5191 = vunpack.c.l.s4 1966171168
      %v5192 = vunpack.c.0.s8 %v5191
      %v5193 = vlaneseq
      %v5194 = vshrl.u32 %v5193, 7
      %v5195 = vsub.s32 %v5192, %v5194
      %v5196 = vrot.slane %v5168, %v5195
      %v5197 = vcombine.high %v5175, %v5175
      %v5198 = vcombine.high %v5182, %v5182
      %v5199 = vcombine.high %v5189, %v5189
      %v5200 = vcombine.high %v5196, %v5196
      %v5201 = vcombine.high %v4983, %v4983
      %v5203 = vunpack.c.l.s4 1966171168
      %v5204 = vunpack.c.0.s8 %v5203
      %v5205 = vlaneseq
      %v5206 = vshrl.u32 %v5205, 7
      %v5207 = vsub.s32 %v5204, %v5206
      %v5208 = vrot.slane %v4983, %v5207
      %v5210 = vunpack.c.l.s4 1966171168
      %v5211 = vunpack.c.0.s8 %v5210
      %v5212 = vlaneseq
      %v5213 = vshrl.u32 %v5212, 7
      %v5214 = vsub.s32 %v5211, %v5213
      %v5215 = vrot.slane %v5201, %v5214
      %v5216 = vcombine.high %v5208, %v5208
      %v5217 = vcombine.high %v5215, %v5215
      %v5219 = vunpack.c.l.s4 1966171168
      %v5220 = vunpack.c.0.s8 %v5219
      %v5221 = vlaneseq
      %v5222 = vshrl.u32 %v5221, 7
      %v5223 = vsub.s32 %v5220, %v5222
      %v5224 = vrot.slane %v5208, %v5223
      %v5226 = vunpack.c.l.s4 1966171168
      %v5227 = vunpack.c.0.s8 %v5226
      %v5228 = vlaneseq
      %v5229 = vshrl.u32 %v5228, 7
      %v5230 = vsub.s32 %v5227, %v5229
      %v5231 = vrot.slane %v5215, %v5230
      %v5233 = vunpack.c.l.s4 1966171168
      %v5234 = vunpack.c.0.s8 %v5233
      %v5235 = vlaneseq
      %v5236 = vshrl.u32 %v5235, 7
      %v5237 = vsub.s32 %v5234, %v5236
      %v5238 = vrot.slane %v5216, %v5237
      %v5240 = vunpack.c.l.s4 1966171168
      %v5241 = vunpack.c.0.s8 %v5240
      %v5242 = vlaneseq
      %v5243 = vshrl.u32 %v5242, 7
      %v5244 = vsub.s32 %v5241, %v5243
      %v5245 = vrot.slane %v5217, %v5244
      %v5246 = vcombine.high %v5224, %v5224
      %v5247 = vcombine.high %v5231, %v5231
      %v5248 = vcombine.high %v5238, %v5238
      %v5249 = vcombine.high %v5245, %v5245
      %v5250 = vcombine.high %v4986, %v4986
      %v5252 = vunpack.c.l.s4 1966171168
      %v5253 = vunpack.c.0.s8 %v5252
      %v5254 = vlaneseq
      %v5255 = vshrl.u32 %v5254, 7
      %v5256 = vsub.s32 %v5253, %v5255
      %v5257 = vrot.slane %v4986, %v5256
      %v5259 = vunpack.c.l.s4 1966171168
      %v5260 = vunpack.c.0.s8 %v5259
      %v5261 = vlaneseq
      %v5262 = vshrl.u32 %v5261, 7
      %v5263 = vsub.s32 %v5260, %v5262
      %v5264 = vrot.slane %v5250, %v5263
      %v5265 = vcombine.high %v5257, %v5257
      %v5266 = vcombine.high %v5264, %v5264
      %v5268 = vunpack.c.l.s4 1966171168
      %v5269 = vunpack.c.0.s8 %v5268
      %v5270 = vlaneseq
      %v5271 = vshrl.u32 %v5270, 7
      %v5272 = vsub.s32 %v5269, %v5271
      %v5273 = vrot.slane %v5257, %v5272
      %v5275 = vunpack.c.l.s4 1966171168
      %v5276 = vunpack.c.0.s8 %v5275
      %v5277 = vlaneseq
      %v5278 = vshrl.u32 %v5277, 7
      %v5279 = vsub.s32 %v5276, %v5278
      %v5280 = vrot.slane %v5264, %v5279
      %v5282 = vunpack.c.l.s4 1966171168
      %v5283 = vunpack.c.0.s8 %v5282
      %v5284 = vlaneseq
      %v5285 = vshrl.u32 %v5284, 7
      %v5286 = vsub.s32 %v5283, %v5285
      %v5287 = vrot.slane %v5265, %v5286
      %v5289 = vunpack.c.l.s4 1966171168
      %v5290 = vunpack.c.0.s8 %v5289
      %v5291 = vlaneseq
      %v5292 = vshrl.u32 %v5291, 7
      %v5293 = vsub.s32 %v5290, %v5292
      %v5294 = vrot.slane %v5266, %v5293
      %v5295 = vcombine.high %v5273, %v5273
      %v5296 = vcombine.high %v5280, %v5280
      %v5297 = vcombine.high %v5287, %v5287
      %v5298 = vcombine.high %v5294, %v5294
      %v5299 = vcombine.high %v4991, %v4991
      %v5301 = vunpack.c.l.s4 1966171168
      %v5302 = vunpack.c.0.s8 %v5301
      %v5303 = vlaneseq
      %v5304 = vshrl.u32 %v5303, 7
      %v5305 = vsub.s32 %v5302, %v5304
      %v5306 = vrot.slane %v4991, %v5305
      %v5308 = vunpack.c.l.s4 1966171168
      %v5309 = vunpack.c.0.s8 %v5308
      %v5310 = vlaneseq
      %v5311 = vshrl.u32 %v5310, 7
      %v5312 = vsub.s32 %v5309, %v5311
      %v5313 = vrot.slane %v5299, %v5312
      %v5314 = vcombine.high %v5306, %v5306
      %v5315 = vcombine.high %v5313, %v5313
      %v5317 = vunpack.c.l.s4 1966171168
      %v5318 = vunpack.c.0.s8 %v5317
      %v5319 = vlaneseq
      %v5320 = vshrl.u32 %v5319, 7
      %v5321 = vsub.s32 %v5318, %v5320
      %v5322 = vrot.slane %v5306, %v5321
      %v5324 = vunpack.c.l.s4 1966171168
      %v5325 = vunpack.c.0.s8 %v5324
      %v5326 = vlaneseq
      %v5327 = vshrl.u32 %v5326, 7
      %v5328 = vsub.s32 %v5325, %v5327
      %v5329 = vrot.slane %v5313, %v5328
      %v5331 = vunpack.c.l.s4 1966171168
      %v5332 = vunpack.c.0.s8 %v5331
      %v5333 = vlaneseq
      %v5334 = vshrl.u32 %v5333, 7
      %v5335 = vsub.s32 %v5332, %v5334
      %v5336 = vrot.slane %v5314, %v5335
      %v5338 = vunpack.c.l.s4 1966171168
      %v5339 = vunpack.c.0.s8 %v5338
      %v5340 = vlaneseq
      %v5341 = vshrl.u32 %v5340, 7
      %v5342 = vsub.s32 %v5339, %v5341
      %v5343 = vrot.slane %v5315, %v5342
      %v5344 = vcombine.high %v5322, %v5322
      %v5345 = vcombine.high %v5329, %v5329
      %v5346 = vcombine.high %v5336, %v5336
      %v5347 = vcombine.high %v5343, %v5343
      %v5348 = vcombine.high %v4994, %v4994
      %v5350 = vunpack.c.l.s4 1966171168
      %v5351 = vunpack.c.0.s8 %v5350
      %v5352 = vlaneseq
      %v5353 = vshrl.u32 %v5352, 7
      %v5354 = vsub.s32 %v5351, %v5353
      %v5355 = vrot.slane %v4994, %v5354
      %v5357 = vunpack.c.l.s4 1966171168
      %v5358 = vunpack.c.0.s8 %v5357
      %v5359 = vlaneseq
      %v5360 = vshrl.u32 %v5359, 7
      %v5361 = vsub.s32 %v5358, %v5360
      %v5362 = vrot.slane %v5348, %v5361
      %v5363 = vcombine.high %v5355, %v5355
      %v5364 = vcombine.high %v5362, %v5362
      %v5366 = vunpack.c.l.s4 1966171168
      %v5367 = vunpack.c.0.s8 %v5366
      %v5368 = vlaneseq
      %v5369 = vshrl.u32 %v5368, 7
      %v5370 = vsub.s32 %v5367, %v5369
      %v5371 = vrot.slane %v5355, %v5370
      %v5373 = vunpack.c.l.s4 1966171168
      %v5374 = vunpack.c.0.s8 %v5373
      %v5375 = vlaneseq
      %v5376 = vshrl.u32 %v5375, 7
      %v5377 = vsub.s32 %v5374, %v5376
      %v5378 = vrot.slane %v5362, %v5377
      %v5380 = vunpack.c.l.s4 1966171168
      %v5381 = vunpack.c.0.s8 %v5380
      %v5382 = vlaneseq
      %v5383 = vshrl.u32 %v5382, 7
      %v5384 = vsub.s32 %v5381, %v5383
      %v5385 = vrot.slane %v5363, %v5384
      %v5387 = vunpack.c.l.s4 1966171168
      %v5388 = vunpack.c.0.s8 %v5387
      %v5389 = vlaneseq
      %v5390 = vshrl.u32 %v5389, 7
      %v5391 = vsub.s32 %v5388, %v5390
      %v5392 = vrot.slane %v5364, %v5391
      %v5393 = vcombine.high %v5371, %v5371
      %v5394 = vcombine.high %v5378, %v5378
      %v5395 = vcombine.high %v5385, %v5385
      %v5396 = vcombine.high %v5392, %v5392
      %vm5461 = vcmask 57344
      %5462 = vst.msk [vmem:[#allocation12] sm:$0x1] %vm5461, %v5028
      %5463 = vst.msk [vmem:[#allocation12 + $0x2] sm:$0x1] %vm5461, %v5042
      %5464 = vst.msk [vmem:[#allocation12 + $0x4] sm:$0x1] %vm5461, %v5050
      %5465 = vst.msk [vmem:[#allocation12 + $0x6] sm:$0x1] %vm5461, %v5052
      %5466 = vst.msk [vmem:[#allocation12 + $0x8] sm:$0x1] %vm5461, %v5035
      %5467 = vst.msk [vmem:[#allocation12 + $0xa] sm:$0x1] %vm5461, %v5049
      %5468 = vst.msk [vmem:[#allocation12 + $0xc] sm:$0x1] %vm5461, %v5051
      %5469 = vst.msk [vmem:[#allocation12 + $0xe] sm:$0x1] %vm5461, %v5053
      %5470 = vst.msk [vmem:[#allocation12 + $0x20] sm:$0x1] %vm5461, %v5077
      %5471 = vst.msk [vmem:[#allocation12 + $0x22] sm:$0x1] %vm5461, %v5091
      %5472 = vst.msk [vmem:[#allocation12 + $0x24] sm:$0x1] %vm5461, %v5099
      %5473 = vst.msk [vmem:[#allocation12 + $0x26] sm:$0x1] %vm5461, %v5101
      %5474 = vst.msk [vmem:[#allocation12 + $0x28] sm:$0x1] %vm5461, %v5084
      %5475 = vst.msk [vmem:[#allocation12 + $0x2a] sm:$0x1] %vm5461, %v5098
      %5476 = vst.msk [vmem:[#allocation12 + $0x2c] sm:$0x1] %vm5461, %v5100
      %5477 = vst.msk [vmem:[#allocation12 + $0x2e] sm:$0x1] %vm5461, %v5102
      %5478 = vst.msk [vmem:[#allocation12 + $0x40] sm:$0x1] %vm5461, %v5126
      %5479 = vst.msk [vmem:[#allocation12 + $0x42] sm:$0x1] %vm5461, %v5140
      %5480 = vst.msk [vmem:[#allocation12 + $0x44] sm:$0x1] %vm5461, %v5148
      %5481 = vst.msk [vmem:[#allocation12 + $0x46] sm:$0x1] %vm5461, %v5150
      %5482 = vst.msk [vmem:[#allocation12 + $0x48] sm:$0x1] %vm5461, %v5133
      %5483 = vst.msk [vmem:[#allocation12 + $0x4a] sm:$0x1] %vm5461, %v5147
      %5484 = vst.msk [vmem:[#allocation12 + $0x4c] sm:$0x1] %vm5461, %v5149
      %5485 = vst.msk [vmem:[#allocation12 + $0x4e] sm:$0x1] %vm5461, %v5151
      %5486 = vst.msk [vmem:[#allocation12 + $0x60] sm:$0x1] %vm5461, %v5175
      %5487 = vst.msk [vmem:[#allocation12 + $0x62] sm:$0x1] %vm5461, %v5189
      %5488 = vst.msk [vmem:[#allocation12 + $0x64] sm:$0x1] %vm5461, %v5197
      %5489 = vst.msk [vmem:[#allocation12 + $0x66] sm:$0x1] %vm5461, %v5199
      %5490 = vst.msk [vmem:[#allocation12 + $0x68] sm:$0x1] %vm5461, %v5182
      %5491 = vst.msk [vmem:[#allocation12 + $0x6a] sm:$0x1] %vm5461, %v5196
      %5492 = vst.msk [vmem:[#allocation12 + $0x6c] sm:$0x1] %vm5461, %v5198
      %5493 = vst.msk [vmem:[#allocation12 + $0x6e] sm:$0x1] %vm5461, %v5200
      %5494 = vst.msk [vmem:[#allocation12 + $0x80] sm:$0x1] %vm5461, %v5224
      %5495 = vst.msk [vmem:[#allocation12 + $0x82] sm:$0x1] %vm5461, %v5238
      %5496 = vst.msk [vmem:[#allocation12 + $0x84] sm:$0x1] %vm5461, %v5246
      %5497 = vst.msk [vmem:[#allocation12 + $0x86] sm:$0x1] %vm5461, %v5248
      %5498 = vst.msk [vmem:[#allocation12 + $0x88] sm:$0x1] %vm5461, %v5231
      %5499 = vst.msk [vmem:[#allocation12 + $0x8a] sm:$0x1] %vm5461, %v5245
      %5500 = vst.msk [vmem:[#allocation12 + $0x8c] sm:$0x1] %vm5461, %v5247
      %5501 = vst.msk [vmem:[#allocation12 + $0x8e] sm:$0x1] %vm5461, %v5249
      %5502 = vst.msk [vmem:[#allocation12 + $0xa0] sm:$0x1] %vm5461, %v5273
      %5503 = vst.msk [vmem:[#allocation12 + $0xa2] sm:$0x1] %vm5461, %v5287
      %5504 = vst.msk [vmem:[#allocation12 + $0xa4] sm:$0x1] %vm5461, %v5295
      %5505 = vst.msk [vmem:[#allocation12 + $0xa6] sm:$0x1] %vm5461, %v5297
      %5506 = vst.msk [vmem:[#allocation12 + $0xa8] sm:$0x1] %vm5461, %v5280
      %5507 = vst.msk [vmem:[#allocation12 + $0xaa] sm:$0x1] %vm5461, %v5294
      %5508 = vst.msk [vmem:[#allocation12 + $0xac] sm:$0x1] %vm5461, %v5296
      %5509 = vst.msk [vmem:[#allocation12 + $0xae] sm:$0x1] %vm5461, %v5298
      %5510 = vst.msk [vmem:[#allocation12 + $0xc0] sm:$0x1] %vm5461, %v5322
      %5511 = vst.msk [vmem:[#allocation12 + $0xc2] sm:$0x1] %vm5461, %v5336
      %5512 = vst.msk [vmem:[#allocation12 + $0xc4] sm:$0x1] %vm5461, %v5344
      %5513 = vst.msk [vmem:[#allocation12 + $0xc6] sm:$0x1] %vm5461, %v5346
      %5514 = vst.msk [vmem:[#allocation12 + $0xc8] sm:$0x1] %vm5461, %v5329
      %5515 = vst.msk [vmem:[#allocation12 + $0xca] sm:$0x1] %vm5461, %v5343
      %5516 = vst.msk [vmem:[#allocation12 + $0xcc] sm:$0x1] %vm5461, %v5345
      %5517 = vst.msk [vmem:[#allocation12 + $0xce] sm:$0x1] %vm5461, %v5347
      %5518 = vst.msk [vmem:[#allocation12 + $0xe0] sm:$0x1] %vm5461, %v5371
      %5519 = vst.msk [vmem:[#allocation12 + $0xe2] sm:$0x1] %vm5461, %v5385
      %5520 = vst.msk [vmem:[#allocation12 + $0xe4] sm:$0x1] %vm5461, %v5393
      %5521 = vst.msk [vmem:[#allocation12 + $0xe6] sm:$0x1] %vm5461, %v5395
      %5522 = vst.msk [vmem:[#allocation12 + $0xe8] sm:$0x1] %vm5461, %v5378
      %5523 = vst.msk [vmem:[#allocation12 + $0xea] sm:$0x1] %vm5461, %v5392
      %5524 = vst.msk [vmem:[#allocation12 + $0xec] sm:$0x1] %vm5461, %v5394
      %5525 = vst.msk [vmem:[#allocation12 + $0xee] sm:$0x1] %vm5461, %v5396
      %v5526 = vlaneseq
      %v5527 = vshrl.u32 %v5526, 7
      %v5528 = vsub.s32 0, %v5527
      %v5529 = vrot.slane %v5028, %v5528
      %v5530 = vlaneseq
      %v5531 = vshrl.u32 %v5530, 7
      %v5532 = vsub.s32 0, %v5531
      %v5533 = vrot.slane %v5042, %v5532
      %v5534 = vlaneseq
      %v5535 = vshrl.u32 %v5534, 7
      %v5536 = vsub.s32 0, %v5535
      %v5537 = vrot.slane %v5050, %v5536
      %v5538 = vlaneseq
      %v5539 = vshrl.u32 %v5538, 7
      %v5540 = vsub.s32 0, %v5539
      %v5541 = vrot.slane %v5052, %v5540
      %v5542 = vlaneseq
      %v5543 = vshrl.u32 %v5542, 7
      %v5544 = vsub.s32 0, %v5543
      %v5545 = vrot.slane %v5035, %v5544
      %v5546 = vlaneseq
      %v5547 = vshrl.u32 %v5546, 7
      %v5548 = vsub.s32 0, %v5547
      %v5549 = vrot.slane %v5049, %v5548
      %v5550 = vlaneseq
      %v5551 = vshrl.u32 %v5550, 7
      %v5552 = vsub.s32 0, %v5551
      %v5553 = vrot.slane %v5051, %v5552
      %v5554 = vlaneseq
      %v5555 = vshrl.u32 %v5554, 7
      %v5556 = vsub.s32 0, %v5555
      %v5557 = vrot.slane %v5053, %v5556
      %v5558 = vlaneseq
      %v5559 = vshrl.u32 %v5558, 7
      %v5560 = vsub.s32 0, %v5559
      %v5561 = vrot.slane %v5077, %v5560
      %v5562 = vlaneseq
      %v5563 = vshrl.u32 %v5562, 7
      %v5564 = vsub.s32 0, %v5563
      %v5565 = vrot.slane %v5091, %v5564
      %v5566 = vlaneseq
      %v5567 = vshrl.u32 %v5566, 7
      %v5568 = vsub.s32 0, %v5567
      %v5569 = vrot.slane %v5099, %v5568
      %v5570 = vlaneseq
      %v5571 = vshrl.u32 %v5570, 7
      %v5572 = vsub.s32 0, %v5571
      %v5573 = vrot.slane %v5101, %v5572
      %v5574 = vlaneseq
      %v5575 = vshrl.u32 %v5574, 7
      %v5576 = vsub.s32 0, %v5575
      %v5577 = vrot.slane %v5084, %v5576
      %v5578 = vlaneseq
      %v5579 = vshrl.u32 %v5578, 7
      %v5580 = vsub.s32 0, %v5579
      %v5581 = vrot.slane %v5098, %v5580
      %v5582 = vlaneseq
      %v5583 = vshrl.u32 %v5582, 7
      %v5584 = vsub.s32 0, %v5583
      %v5585 = vrot.slane %v5100, %v5584
      %v5586 = vlaneseq
      %v5587 = vshrl.u32 %v5586, 7
      %v5588 = vsub.s32 0, %v5587
      %v5589 = vrot.slane %v5102, %v5588
      %v5590 = vlaneseq
      %v5591 = vshrl.u32 %v5590, 7
      %v5592 = vsub.s32 0, %v5591
      %v5593 = vrot.slane %v5126, %v5592
      %v5594 = vlaneseq
      %v5595 = vshrl.u32 %v5594, 7
      %v5596 = vsub.s32 0, %v5595
      %v5597 = vrot.slane %v5140, %v5596
      %v5598 = vlaneseq
      %v5599 = vshrl.u32 %v5598, 7
      %v5600 = vsub.s32 0, %v5599
      %v5601 = vrot.slane %v5148, %v5600
      %v5602 = vlaneseq
      %v5603 = vshrl.u32 %v5602, 7
      %v5604 = vsub.s32 0, %v5603
      %v5605 = vrot.slane %v5150, %v5604
      %v5606 = vlaneseq
      %v5607 = vshrl.u32 %v5606, 7
      %v5608 = vsub.s32 0, %v5607
      %v5609 = vrot.slane %v5133, %v5608
      %v5610 = vlaneseq
      %v5611 = vshrl.u32 %v5610, 7
      %v5612 = vsub.s32 0, %v5611
      %v5613 = vrot.slane %v5147, %v5612
      %v5614 = vlaneseq
      %v5615 = vshrl.u32 %v5614, 7
      %v5616 = vsub.s32 0, %v5615
      %v5617 = vrot.slane %v5149, %v5616
      %v5618 = vlaneseq
      %v5619 = vshrl.u32 %v5618, 7
      %v5620 = vsub.s32 0, %v5619
      %v5621 = vrot.slane %v5151, %v5620
      %v5622 = vlaneseq
      %v5623 = vshrl.u32 %v5622, 7
      %v5624 = vsub.s32 0, %v5623
      %v5625 = vrot.slane %v5175, %v5624
      %v5626 = vlaneseq
      %v5627 = vshrl.u32 %v5626, 7
      %v5628 = vsub.s32 0, %v5627
      %v5629 = vrot.slane %v5189, %v5628
      %v5630 = vlaneseq
      %v5631 = vshrl.u32 %v5630, 7
      %v5632 = vsub.s32 0, %v5631
      %v5633 = vrot.slane %v5197, %v5632
      %v5634 = vlaneseq
      %v5635 = vshrl.u32 %v5634, 7
      %v5636 = vsub.s32 0, %v5635
      %v5637 = vrot.slane %v5199, %v5636
      %v5638 = vlaneseq
      %v5639 = vshrl.u32 %v5638, 7
      %v5640 = vsub.s32 0, %v5639
      %v5641 = vrot.slane %v5182, %v5640
      %v5642 = vlaneseq
      %v5643 = vshrl.u32 %v5642, 7
      %v5644 = vsub.s32 0, %v5643
      %v5645 = vrot.slane %v5196, %v5644
      %v5646 = vlaneseq
      %v5647 = vshrl.u32 %v5646, 7
      %v5648 = vsub.s32 0, %v5647
      %v5649 = vrot.slane %v5198, %v5648
      %v5650 = vlaneseq
      %v5651 = vshrl.u32 %v5650, 7
      %v5652 = vsub.s32 0, %v5651
      %v5653 = vrot.slane %v5200, %v5652
      %v5654 = vlaneseq
      %v5655 = vshrl.u32 %v5654, 7
      %v5656 = vsub.s32 0, %v5655
      %v5657 = vrot.slane %v5224, %v5656
      %v5658 = vlaneseq
      %v5659 = vshrl.u32 %v5658, 7
      %v5660 = vsub.s32 0, %v5659
      %v5661 = vrot.slane %v5238, %v5660
      %v5662 = vlaneseq
      %v5663 = vshrl.u32 %v5662, 7
      %v5664 = vsub.s32 0, %v5663
      %v5665 = vrot.slane %v5246, %v5664
      %v5666 = vlaneseq
      %v5667 = vshrl.u32 %v5666, 7
      %v5668 = vsub.s32 0, %v5667
      %v5669 = vrot.slane %v5248, %v5668
      %v5670 = vlaneseq
      %v5671 = vshrl.u32 %v5670, 7
      %v5672 = vsub.s32 0, %v5671
      %v5673 = vrot.slane %v5231, %v5672
      %v5674 = vlaneseq
      %v5675 = vshrl.u32 %v5674, 7
      %v5676 = vsub.s32 0, %v5675
      %v5677 = vrot.slane %v5245, %v5676
      %v5678 = vlaneseq
      %v5679 = vshrl.u32 %v5678, 7
      %v5680 = vsub.s32 0, %v5679
      %v5681 = vrot.slane %v5247, %v5680
      %v5682 = vlaneseq
      %v5683 = vshrl.u32 %v5682, 7
      %v5684 = vsub.s32 0, %v5683
      %v5685 = vrot.slane %v5249, %v5684
      %v5686 = vlaneseq
      %v5687 = vshrl.u32 %v5686, 7
      %v5688 = vsub.s32 0, %v5687
      %v5689 = vrot.slane %v5273, %v5688
      %v5690 = vlaneseq
      %v5691 = vshrl.u32 %v5690, 7
      %v5692 = vsub.s32 0, %v5691
      %v5693 = vrot.slane %v5287, %v5692
      %v5694 = vlaneseq
      %v5695 = vshrl.u32 %v5694, 7
      %v5696 = vsub.s32 0, %v5695
      %v5697 = vrot.slane %v5295, %v5696
      %v5698 = vlaneseq
      %v5699 = vshrl.u32 %v5698, 7
      %v5700 = vsub.s32 0, %v5699
      %v5701 = vrot.slane %v5297, %v5700
      %v5702 = vlaneseq
      %v5703 = vshrl.u32 %v5702, 7
      %v5704 = vsub.s32 0, %v5703
      %v5705 = vrot.slane %v5280, %v5704
      %v5706 = vlaneseq
      %v5707 = vshrl.u32 %v5706, 7
      %v5708 = vsub.s32 0, %v5707
      %v5709 = vrot.slane %v5294, %v5708
      %v5710 = vlaneseq
      %v5711 = vshrl.u32 %v5710, 7
      %v5712 = vsub.s32 0, %v5711
      %v5713 = vrot.slane %v5296, %v5712
      %v5714 = vlaneseq
      %v5715 = vshrl.u32 %v5714, 7
      %v5716 = vsub.s32 0, %v5715
      %v5717 = vrot.slane %v5298, %v5716
      %v5718 = vlaneseq
      %v5719 = vshrl.u32 %v5718, 7
      %v5720 = vsub.s32 0, %v5719
      %v5721 = vrot.slane %v5322, %v5720
      %v5722 = vlaneseq
      %v5723 = vshrl.u32 %v5722, 7
      %v5724 = vsub.s32 0, %v5723
      %v5725 = vrot.slane %v5336, %v5724
      %v5726 = vlaneseq
      %v5727 = vshrl.u32 %v5726, 7
      %v5728 = vsub.s32 0, %v5727
      %v5729 = vrot.slane %v5344, %v5728
      %v5730 = vlaneseq
      %v5731 = vshrl.u32 %v5730, 7
      %v5732 = vsub.s32 0, %v5731
      %v5733 = vrot.slane %v5346, %v5732
      %v5734 = vlaneseq
      %v5735 = vshrl.u32 %v5734, 7
      %v5736 = vsub.s32 0, %v5735
      %v5737 = vrot.slane %v5329, %v5736
      %v5738 = vlaneseq
      %v5739 = vshrl.u32 %v5738, 7
      %v5740 = vsub.s32 0, %v5739
      %v5741 = vrot.slane %v5343, %v5740
      %v5742 = vlaneseq
      %v5743 = vshrl.u32 %v5742, 7
      %v5744 = vsub.s32 0, %v5743
      %v5745 = vrot.slane %v5345, %v5744
      %v5746 = vlaneseq
      %v5747 = vshrl.u32 %v5746, 7
      %v5748 = vsub.s32 0, %v5747
      %v5749 = vrot.slane %v5347, %v5748
      %v5750 = vlaneseq
      %v5751 = vshrl.u32 %v5750, 7
      %v5752 = vsub.s32 0, %v5751
      %v5753 = vrot.slane %v5371, %v5752
      %v5754 = vlaneseq
      %v5755 = vshrl.u32 %v5754, 7
      %v5756 = vsub.s32 0, %v5755
      %v5757 = vrot.slane %v5385, %v5756
      %v5758 = vlaneseq
      %v5759 = vshrl.u32 %v5758, 7
      %v5760 = vsub.s32 0, %v5759
      %v5761 = vrot.slane %v5393, %v5760
      %v5762 = vlaneseq
      %v5763 = vshrl.u32 %v5762, 7
      %v5764 = vsub.s32 0, %v5763
      %v5765 = vrot.slane %v5395, %v5764
      %v5766 = vlaneseq
      %v5767 = vshrl.u32 %v5766, 7
      %v5768 = vsub.s32 0, %v5767
      %v5769 = vrot.slane %v5378, %v5768
      %v5770 = vlaneseq
      %v5771 = vshrl.u32 %v5770, 7
      %v5772 = vsub.s32 0, %v5771
      %v5773 = vrot.slane %v5392, %v5772
      %v5774 = vlaneseq
      %v5775 = vshrl.u32 %v5774, 7
      %v5776 = vsub.s32 0, %v5775
      %v5777 = vrot.slane %v5394, %v5776
      %v5778 = vlaneseq
      %v5779 = vshrl.u32 %v5778, 7
      %v5780 = vsub.s32 0, %v5779
      %v5781 = vrot.slane %v5396, %v5780
      %5782 = vrot.lane.b32.xlu0 %v5529, 120
      %v5783 = vpop.permute.xlu0 %5782
      %5784 = vrot.lane.b32.xlu0 %v5533, 120
      %v5785 = vpop.permute.xlu0 %5784
      %5786 = vrot.lane.b32.xlu0 %v5537, 120
      %v5787 = vpop.permute.xlu0 %5786
      %5788 = vrot.lane.b32.xlu0 %v5541, 120
      %v5789 = vpop.permute.xlu0 %5788
      %5790 = vrot.lane.b32.xlu0 %v5545, 120
      %v5791 = vpop.permute.xlu0 %5790
      %5792 = vrot.lane.b32.xlu0 %v5549, 120
      %v5793 = vpop.permute.xlu0 %5792
      %5794 = vrot.lane.b32.xlu0 %v5553, 120
      %v5795 = vpop.permute.xlu0 %5794
      %5796 = vrot.lane.b32.xlu0 %v5557, 120
      %v5797 = vpop.permute.xlu0 %5796
      %5798 = vrot.lane.b32.xlu0 %v5561, 120
      %v5799 = vpop.permute.xlu0 %5798
      %5800 = vrot.lane.b32.xlu0 %v5565, 120
      %v5801 = vpop.permute.xlu0 %5800
      %5802 = vrot.lane.b32.xlu0 %v5569, 120
      %v5803 = vpop.permute.xlu0 %5802
      %5804 = vrot.lane.b32.xlu0 %v5573, 120
      %v5805 = vpop.permute.xlu0 %5804
      %5806 = vrot.lane.b32.xlu0 %v5577, 120
      %v5807 = vpop.permute.xlu0 %5806
      %5808 = vrot.lane.b32.xlu0 %v5581, 120
      %v5809 = vpop.permute.xlu0 %5808
      %5810 = vrot.lane.b32.xlu0 %v5585, 120
      %v5811 = vpop.permute.xlu0 %5810
      %5812 = vrot.lane.b32.xlu0 %v5589, 120
      %v5813 = vpop.permute.xlu0 %5812
      %5814 = vrot.lane.b32.xlu0 %v5593, 120
      %v5815 = vpop.permute.xlu0 %5814
      %5816 = vrot.lane.b32.xlu0 %v5597, 120
      %v5817 = vpop.permute.xlu0 %5816
      %5818 = vrot.lane.b32.xlu0 %v5601, 120
      %v5819 = vpop.permute.xlu0 %5818
      %5820 = vrot.lane.b32.xlu0 %v5605, 120
      %v5821 = vpop.permute.xlu0 %5820
      %5822 = vrot.lane.b32.xlu0 %v5609, 120
      %v5823 = vpop.permute.xlu0 %5822
      %5824 = vrot.lane.b32.xlu0 %v5613, 120
      %v5825 = vpop.permute.xlu0 %5824
      %5826 = vrot.lane.b32.xlu0 %v5617, 120
      %v5827 = vpop.permute.xlu0 %5826
      %5828 = vrot.lane.b32.xlu0 %v5621, 120
      %v5829 = vpop.permute.xlu0 %5828
      %5830 = vrot.lane.b32.xlu0 %v5625, 120
      %v5831 = vpop.permute.xlu0 %5830
      %5832 = vrot.lane.b32.xlu0 %v5629, 120
      %v5833 = vpop.permute.xlu0 %5832
      %5834 = vrot.lane.b32.xlu0 %v5633, 120
      %v5835 = vpop.permute.xlu0 %5834
      %5836 = vrot.lane.b32.xlu0 %v5637, 120
      %v5837 = vpop.permute.xlu0 %5836
      %5838 = vrot.lane.b32.xlu0 %v5641, 120
      %v5839 = vpop.permute.xlu0 %5838
      %5840 = vrot.lane.b32.xlu0 %v5645, 120
      %v5841 = vpop.permute.xlu0 %5840
      %5842 = vrot.lane.b32.xlu0 %v5649, 120
      %v5843 = vpop.permute.xlu0 %5842
      %5844 = vrot.lane.b32.xlu0 %v5653, 120
      %v5845 = vpop.permute.xlu0 %5844
      %5846 = vrot.lane.b32.xlu0 %v5657, 120
      %v5847 = vpop.permute.xlu0 %5846
      %5848 = vrot.lane.b32.xlu0 %v5661, 120
      %v5849 = vpop.permute.xlu0 %5848
      %5850 = vrot.lane.b32.xlu0 %v5665, 120
      %v5851 = vpop.permute.xlu0 %5850
      %5852 = vrot.lane.b32.xlu0 %v5669, 120
      %v5853 = vpop.permute.xlu0 %5852
      %5854 = vrot.lane.b32.xlu0 %v5673, 120
      %v5855 = vpop.permute.xlu0 %5854
      %5856 = vrot.lane.b32.xlu0 %v5677, 120
      %v5857 = vpop.permute.xlu0 %5856
      %5858 = vrot.lane.b32.xlu0 %v5681, 120
      %v5859 = vpop.permute.xlu0 %5858
      %5860 = vrot.lane.b32.xlu0 %v5685, 120
      %v5861 = vpop.permute.xlu0 %5860
      %5862 = vrot.lane.b32.xlu0 %v5689, 120
      %v5863 = vpop.permute.xlu0 %5862
      %5864 = vrot.lane.b32.xlu0 %v5693, 120
      %v5865 = vpop.permute.xlu0 %5864
      %5866 = vrot.lane.b32.xlu0 %v5697, 120
      %v5867 = vpop.permute.xlu0 %5866
      %5868 = vrot.lane.b32.xlu0 %v5701, 120
      %v5869 = vpop.permute.xlu0 %5868
      %5870 = vrot.lane.b32.xlu0 %v5705, 120
      %v5871 = vpop.permute.xlu0 %5870
      %5872 = vrot.lane.b32.xlu0 %v5709, 120
      %v5873 = vpop.permute.xlu0 %5872
      %5874 = vrot.lane.b32.xlu0 %v5713, 120
      %v5875 = vpop.permute.xlu0 %5874
      %5876 = vrot.lane.b32.xlu0 %v5717, 120
      %v5877 = vpop.permute.xlu0 %5876
      %5878 = vrot.lane.b32.xlu0 %v5721, 120
      %v5879 = vpop.permute.xlu0 %5878
      %5880 = vrot.lane.b32.xlu0 %v5725, 120
      %v5881 = vpop.permute.xlu0 %5880
      %5882 = vrot.lane.b32.xlu0 %v5729, 120
      %v5883 = vpop.permute.xlu0 %5882
      %5884 = vrot.lane.b32.xlu0 %v5733, 120
      %v5885 = vpop.permute.xlu0 %5884
      %5886 = vrot.lane.b32.xlu0 %v5737, 120
      %v5887 = vpop.permute.xlu0 %5886
      %5888 = vrot.lane.b32.xlu0 %v5741, 120
      %v5889 = vpop.permute.xlu0 %5888
      %5890 = vrot.lane.b32.xlu0 %v5745, 120
      %v5891 = vpop.permute.xlu0 %5890
      %5892 = vrot.lane.b32.xlu0 %v5749, 120
      %v5893 = vpop.permute.xlu0 %5892
      %5894 = vrot.lane.b32.xlu0 %v5753, 120
      %v5895 = vpop.permute.xlu0 %5894
      %5896 = vrot.lane.b32.xlu0 %v5757, 120
      %v5897 = vpop.permute.xlu0 %5896
      %5898 = vrot.lane.b32.xlu0 %v5761, 120
      %v5899 = vpop.permute.xlu0 %5898
      %5900 = vrot.lane.b32.xlu0 %v5765, 120
      %v5901 = vpop.permute.xlu0 %5900
      %5902 = vrot.lane.b32.xlu0 %v5769, 120
      %v5903 = vpop.permute.xlu0 %5902
      %5904 = vrot.lane.b32.xlu0 %v5773, 120
      %v5905 = vpop.permute.xlu0 %5904
      %5906 = vrot.lane.b32.xlu0 %v5777, 120
      %v5907 = vpop.permute.xlu0 %5906
      %5908 = vrot.lane.b32.xlu0 %v5781, 120
      %v5909 = vpop.permute.xlu0 %5908
      %5974 = vst.msk [vmem:[#allocation12 + $0x1] sm:$0x1] %vm5461, %v5783
      %5975 = vst.msk [vmem:[#allocation12 + $0x3] sm:$0x1] %vm5461, %v5785
      %5976 = vst.msk [vmem:[#allocation12 + $0x5] sm:$0x1] %vm5461, %v5787
      %5977 = vst.msk [vmem:[#allocation12 + $0x7] sm:$0x1] %vm5461, %v5789
      %5978 = vst.msk [vmem:[#allocation12 + $0x9] sm:$0x1] %vm5461, %v5791
      %5979 = vst.msk [vmem:[#allocation12 + $0xb] sm:$0x1] %vm5461, %v5793
      %5980 = vst.msk [vmem:[#allocation12 + $0xd] sm:$0x1] %vm5461, %v5795
      %5981 = vst.msk [vmem:[#allocation12 + $0xf] sm:$0x1] %vm5461, %v5797
      %5982 = vst.msk [vmem:[#allocation12 + $0x21] sm:$0x1] %vm5461, %v5799
      %5983 = vst.msk [vmem:[#allocation12 + $0x23] sm:$0x1] %vm5461, %v5801
      %5984 = vst.msk [vmem:[#allocation12 + $0x25] sm:$0x1] %vm5461, %v5803
      %5985 = vst.msk [vmem:[#allocation12 + $0x27] sm:$0x1] %vm5461, %v5805
      %5986 = vst.msk [vmem:[#allocation12 + $0x29] sm:$0x1] %vm5461, %v5807
      %5987 = vst.msk [vmem:[#allocation12 + $0x2b] sm:$0x1] %vm5461, %v5809
      %5988 = vst.msk [vmem:[#allocation12 + $0x2d] sm:$0x1] %vm5461, %v5811
      %5989 = vst.msk [vmem:[#allocation12 + $0x2f] sm:$0x1] %vm5461, %v5813
      %5990 = vst.msk [vmem:[#allocation12 + $0x41] sm:$0x1] %vm5461, %v5815
      %5991 = vst.msk [vmem:[#allocation12 + $0x43] sm:$0x1] %vm5461, %v5817
      %5992 = vst.msk [vmem:[#allocation12 + $0x45] sm:$0x1] %vm5461, %v5819
      %5993 = vst.msk [vmem:[#allocation12 + $0x47] sm:$0x1] %vm5461, %v5821
      %5994 = vst.msk [vmem:[#allocation12 + $0x49] sm:$0x1] %vm5461, %v5823
      %5995 = vst.msk [vmem:[#allocation12 + $0x4b] sm:$0x1] %vm5461, %v5825
      %5996 = vst.msk [vmem:[#allocation12 + $0x4d] sm:$0x1] %vm5461, %v5827
      %5997 = vst.msk [vmem:[#allocation12 + $0x4f] sm:$0x1] %vm5461, %v5829
      %5998 = vst.msk [vmem:[#allocation12 + $0x61] sm:$0x1] %vm5461, %v5831
      %5999 = vst.msk [vmem:[#allocation12 + $0x63] sm:$0x1] %vm5461, %v5833
      %6000 = vst.msk [vmem:[#allocation12 + $0x65] sm:$0x1] %vm5461, %v5835
      %6001 = vst.msk [vmem:[#allocation12 + $0x67] sm:$0x1] %vm5461, %v5837
      %6002 = vst.msk [vmem:[#allocation12 + $0x69] sm:$0x1] %vm5461, %v5839
      %6003 = vst.msk [vmem:[#allocation12 + $0x6b] sm:$0x1] %vm5461, %v5841
      %6004 = vst.msk [vmem:[#allocation12 + $0x6d] sm:$0x1] %vm5461, %v5843
      %6005 = vst.msk [vmem:[#allocation12 + $0x6f] sm:$0x1] %vm5461, %v5845
      %6006 = vst.msk [vmem:[#allocation12 + $0x81] sm:$0x1] %vm5461, %v5847
      %6007 = vst.msk [vmem:[#allocation12 + $0x83] sm:$0x1] %vm5461, %v5849
      %6008 = vst.msk [vmem:[#allocation12 + $0x85] sm:$0x1] %vm5461, %v5851
      %6009 = vst.msk [vmem:[#allocation12 + $0x87] sm:$0x1] %vm5461, %v5853
      %6010 = vst.msk [vmem:[#allocation12 + $0x89] sm:$0x1] %vm5461, %v5855
      %6011 = vst.msk [vmem:[#allocation12 + $0x8b] sm:$0x1] %vm5461, %v5857
      %6012 = vst.msk [vmem:[#allocation12 + $0x8d] sm:$0x1] %vm5461, %v5859
      %6013 = vst.msk [vmem:[#allocation12 + $0x8f] sm:$0x1] %vm5461, %v5861
      %6014 = vst.msk [vmem:[#allocation12 + $0xa1] sm:$0x1] %vm5461, %v5863
      %6015 = vst.msk [vmem:[#allocation12 + $0xa3] sm:$0x1] %vm5461, %v5865
      %6016 = vst.msk [vmem:[#allocation12 + $0xa5] sm:$0x1] %vm5461, %v5867
      %6017 = vst.msk [vmem:[#allocation12 + $0xa7] sm:$0x1] %vm5461, %v5869
      %6018 = vst.msk [vmem:[#allocation12 + $0xa9] sm:$0x1] %vm5461, %v5871
      %6019 = vst.msk [vmem:[#allocation12 + $0xab] sm:$0x1] %vm5461, %v5873
      %6020 = vst.msk [vmem:[#allocation12 + $0xad] sm:$0x1] %vm5461, %v5875
      %6021 = vst.msk [vmem:[#allocation12 + $0xaf] sm:$0x1] %vm5461, %v5877
      %6022 = vst.msk [vmem:[#allocation12 + $0xc1] sm:$0x1] %vm5461, %v5879
      %6023 = vst.msk [vmem:[#allocation12 + $0xc3] sm:$0x1] %vm5461, %v5881
      %6024 = vst.msk [vmem:[#allocation12 + $0xc5] sm:$0x1] %vm5461, %v5883
      %6025 = vst.msk [vmem:[#allocation12 + $0xc7] sm:$0x1] %vm5461, %v5885
      %6026 = vst.msk [vmem:[#allocation12 + $0xc9] sm:$0x1] %vm5461, %v5887
      %6027 = vst.msk [vmem:[#allocation12 + $0xcb] sm:$0x1] %vm5461, %v5889
      %6028 = vst.msk [vmem:[#allocation12 + $0xcd] sm:$0x1] %vm5461, %v5891
      %6029 = vst.msk [vmem:[#allocation12 + $0xcf] sm:$0x1] %vm5461, %v5893
      %6030 = vst.msk [vmem:[#allocation12 + $0xe1] sm:$0x1] %vm5461, %v5895
      %6031 = vst.msk [vmem:[#allocation12 + $0xe3] sm:$0x1] %vm5461, %v5897
      %6032 = vst.msk [vmem:[#allocation12 + $0xe5] sm:$0x1] %vm5461, %v5899
      %6033 = vst.msk [vmem:[#allocation12 + $0xe7] sm:$0x1] %vm5461, %v5901
      %6034 = vst.msk [vmem:[#allocation12 + $0xe9] sm:$0x1] %vm5461, %v5903
      %6035 = vst.msk [vmem:[#allocation12 + $0xeb] sm:$0x1] %vm5461, %v5905
      %6036 = vst.msk [vmem:[#allocation12 + $0xed] sm:$0x1] %vm5461, %v5907
      %6037 = vst.msk [vmem:[#allocation12 + $0xef] sm:$0x1] %vm5461, %v5909
      %6038 = vrot.lane.b32.xlu0 %v5529, 112
      %v6039 = vpop.permute.xlu0 %6038
      %6040 = vrot.lane.b32.xlu0 %v5533, 112
      %v6041 = vpop.permute.xlu0 %6040
      %6042 = vrot.lane.b32.xlu0 %v5537, 112
      %v6043 = vpop.permute.xlu0 %6042
      %6044 = vrot.lane.b32.xlu0 %v5541, 112
      %v6045 = vpop.permute.xlu0 %6044
      %6046 = vrot.lane.b32.xlu0 %v5545, 112
      %v6047 = vpop.permute.xlu0 %6046
      %6048 = vrot.lane.b32.xlu0 %v5549, 112
      %v6049 = vpop.permute.xlu0 %6048
      %6050 = vrot.lane.b32.xlu0 %v5553, 112
      %v6051 = vpop.permute.xlu0 %6050
      %6052 = vrot.lane.b32.xlu0 %v5557, 112
      %v6053 = vpop.permute.xlu0 %6052
      %6054 = vrot.lane.b32.xlu0 %v5561, 112
      %v6055 = vpop.permute.xlu0 %6054
      %6056 = vrot.lane.b32.xlu0 %v5565, 112
      %v6057 = vpop.permute.xlu0 %6056
      %6058 = vrot.lane.b32.xlu0 %v5569, 112
      %v6059 = vpop.permute.xlu0 %6058
      %6060 = vrot.lane.b32.xlu0 %v5573, 112
      %v6061 = vpop.permute.xlu0 %6060
      %6062 = vrot.lane.b32.xlu0 %v5577, 112
      %v6063 = vpop.permute.xlu0 %6062
      %6064 = vrot.lane.b32.xlu0 %v5581, 112
      %v6065 = vpop.permute.xlu0 %6064
      %6066 = vrot.lane.b32.xlu0 %v5585, 112
      %v6067 = vpop.permute.xlu0 %6066
      %6068 = vrot.lane.b32.xlu0 %v5589, 112
      %v6069 = vpop.permute.xlu0 %6068
      %6070 = vrot.lane.b32.xlu0 %v5593, 112
      %v6071 = vpop.permute.xlu0 %6070
      %6072 = vrot.lane.b32.xlu0 %v5597, 112
      %v6073 = vpop.permute.xlu0 %6072
      %6074 = vrot.lane.b32.xlu0 %v5601, 112
      %v6075 = vpop.permute.xlu0 %6074
      %6076 = vrot.lane.b32.xlu0 %v5605, 112
      %v6077 = vpop.permute.xlu0 %6076
      %6078 = vrot.lane.b32.xlu0 %v5609, 112
      %v6079 = vpop.permute.xlu0 %6078
      %6080 = vrot.lane.b32.xlu0 %v5613, 112
      %v6081 = vpop.permute.xlu0 %6080
      %6082 = vrot.lane.b32.xlu0 %v5617, 112
      %v6083 = vpop.permute.xlu0 %6082
      %6084 = vrot.lane.b32.xlu0 %v5621, 112
      %v6085 = vpop.permute.xlu0 %6084
      %6086 = vrot.lane.b32.xlu0 %v5625, 112
      %v6087 = vpop.permute.xlu0 %6086
      %6088 = vrot.lane.b32.xlu0 %v5629, 112
      %v6089 = vpop.permute.xlu0 %6088
      %6090 = vrot.lane.b32.xlu0 %v5633, 112
      %v6091 = vpop.permute.xlu0 %6090
      %6092 = vrot.lane.b32.xlu0 %v5637, 112
      %v6093 = vpop.permute.xlu0 %6092
      %6094 = vrot.lane.b32.xlu0 %v5641, 112
      %v6095 = vpop.permute.xlu0 %6094
      %6096 = vrot.lane.b32.xlu0 %v5645, 112
      %v6097 = vpop.permute.xlu0 %6096
      %6098 = vrot.lane.b32.xlu0 %v5649, 112
      %v6099 = vpop.permute.xlu0 %6098
      %6100 = vrot.lane.b32.xlu0 %v5653, 112
      %v6101 = vpop.permute.xlu0 %6100
      %6102 = vrot.lane.b32.xlu0 %v5657, 112
      %v6103 = vpop.permute.xlu0 %6102
      %6104 = vrot.lane.b32.xlu0 %v5661, 112
      %v6105 = vpop.permute.xlu0 %6104
      %6106 = vrot.lane.b32.xlu0 %v5665, 112
      %v6107 = vpop.permute.xlu0 %6106
      %6108 = vrot.lane.b32.xlu0 %v5669, 112
      %v6109 = vpop.permute.xlu0 %6108
      %6110 = vrot.lane.b32.xlu0 %v5673, 112
      %v6111 = vpop.permute.xlu0 %6110
      %6112 = vrot.lane.b32.xlu0 %v5677, 112
      %v6113 = vpop.permute.xlu0 %6112
      %6114 = vrot.lane.b32.xlu0 %v5681, 112
      %v6115 = vpop.permute.xlu0 %6114
      %6116 = vrot.lane.b32.xlu0 %v5685, 112
      %v6117 = vpop.permute.xlu0 %6116
      %6118 = vrot.lane.b32.xlu0 %v5689, 112
      %v6119 = vpop.permute.xlu0 %6118
      %6120 = vrot.lane.b32.xlu0 %v5693, 112
      %v6121 = vpop.permute.xlu0 %6120
      %6122 = vrot.lane.b32.xlu0 %v5697, 112
      %v6123 = vpop.permute.xlu0 %6122
      %6124 = vrot.lane.b32.xlu0 %v5701, 112
      %v6125 = vpop.permute.xlu0 %6124
      %6126 = vrot.lane.b32.xlu0 %v5705, 112
      %v6127 = vpop.permute.xlu0 %6126
      %6128 = vrot.lane.b32.xlu0 %v5709, 112
      %v6129 = vpop.permute.xlu0 %6128
      %6130 = vrot.lane.b32.xlu0 %v5713, 112
      %v6131 = vpop.permute.xlu0 %6130
      %6132 = vrot.lane.b32.xlu0 %v5717, 112
      %v6133 = vpop.permute.xlu0 %6132
      %6134 = vrot.lane.b32.xlu0 %v5721, 112
      %v6135 = vpop.permute.xlu0 %6134
      %6136 = vrot.lane.b32.xlu0 %v5725, 112
      %v6137 = vpop.permute.xlu0 %6136
      %6138 = vrot.lane.b32.xlu0 %v5729, 112
      %v6139 = vpop.permute.xlu0 %6138
      %6140 = vrot.lane.b32.xlu0 %v5733, 112
      %v6141 = vpop.permute.xlu0 %6140
      %6142 = vrot.lane.b32.xlu0 %v5737, 112
      %v6143 = vpop.permute.xlu0 %6142
      %6144 = vrot.lane.b32.xlu0 %v5741, 112
      %v6145 = vpop.permute.xlu0 %6144
      %6146 = vrot.lane.b32.xlu0 %v5745, 112
      %v6147 = vpop.permute.xlu0 %6146
      %6148 = vrot.lane.b32.xlu0 %v5749, 112
      %v6149 = vpop.permute.xlu0 %6148
      %6150 = vrot.lane.b32.xlu0 %v5753, 112
      %v6151 = vpop.permute.xlu0 %6150
      %6152 = vrot.lane.b32.xlu0 %v5757, 112
      %v6153 = vpop.permute.xlu0 %6152
      %6154 = vrot.lane.b32.xlu0 %v5761, 112
      %v6155 = vpop.permute.xlu0 %6154
      %6156 = vrot.lane.b32.xlu0 %v5765, 112
      %v6157 = vpop.permute.xlu0 %6156
      %6158 = vrot.lane.b32.xlu0 %v5769, 112
      %v6159 = vpop.permute.xlu0 %6158
      %6160 = vrot.lane.b32.xlu0 %v5773, 112
      %v6161 = vpop.permute.xlu0 %6160
      %6162 = vrot.lane.b32.xlu0 %v5777, 112
      %v6163 = vpop.permute.xlu0 %6162
      %6164 = vrot.lane.b32.xlu0 %v5781, 112
      %v6165 = vpop.permute.xlu0 %6164
      %s6230 = scalar_lea.vmem [#allocation12], 16
      %6231 = vst.msk [vmem:[%s6230] sm:$0x1] %vm5461, %v6039
      %6232 = vst.msk [vmem:[%s6230 + $0x2] sm:$0x1] %vm5461, %v6041
      %6233 = vst.msk [vmem:[%s6230 + $0x4] sm:$0x1] %vm5461, %v6043
      %6234 = vst.msk [vmem:[%s6230 + $0x6] sm:$0x1] %vm5461, %v6045
      %6235 = vst.msk [vmem:[%s6230 + $0x8] sm:$0x1] %vm5461, %v6047
      %6236 = vst.msk [vmem:[%s6230 + $0xa] sm:$0x1] %vm5461, %v6049
      %6237 = vst.msk [vmem:[%s6230 + $0xc] sm:$0x1] %vm5461, %v6051
      %6238 = vst.msk [vmem:[%s6230 + $0xe] sm:$0x1] %vm5461, %v6053
      %6239 = vst.msk [vmem:[%s6230 + $0x20] sm:$0x1] %vm5461, %v6055
      %6240 = vst.msk [vmem:[%s6230 + $0x22] sm:$0x1] %vm5461, %v6057
      %6241 = vst.msk [vmem:[%s6230 + $0x24] sm:$0x1] %vm5461, %v6059
      %6242 = vst.msk [vmem:[%s6230 + $0x26] sm:$0x1] %vm5461, %v6061
      %6243 = vst.msk [vmem:[%s6230 + $0x28] sm:$0x1] %vm5461, %v6063
      %6244 = vst.msk [vmem:[%s6230 + $0x2a] sm:$0x1] %vm5461, %v6065
      %6245 = vst.msk [vmem:[%s6230 + $0x2c] sm:$0x1] %vm5461, %v6067
      %6246 = vst.msk [vmem:[%s6230 + $0x2e] sm:$0x1] %vm5461, %v6069
      %6247 = vst.msk [vmem:[%s6230 + $0x40] sm:$0x1] %vm5461, %v6071
      %6248 = vst.msk [vmem:[%s6230 + $0x42] sm:$0x1] %vm5461, %v6073
      %6249 = vst.msk [vmem:[%s6230 + $0x44] sm:$0x1] %vm5461, %v6075
      %6250 = vst.msk [vmem:[%s6230 + $0x46] sm:$0x1] %vm5461, %v6077
      %6251 = vst.msk [vmem:[%s6230 + $0x48] sm:$0x1] %vm5461, %v6079
      %6252 = vst.msk [vmem:[%s6230 + $0x4a] sm:$0x1] %vm5461, %v6081
      %6253 = vst.msk [vmem:[%s6230 + $0x4c] sm:$0x1] %vm5461, %v6083
      %6254 = vst.msk [vmem:[%s6230 + $0x4e] sm:$0x1] %vm5461, %v6085
      %6255 = vst.msk [vmem:[%s6230 + $0x60] sm:$0x1] %vm5461, %v6087
      %6256 = vst.msk [vmem:[%s6230 + $0x62] sm:$0x1] %vm5461, %v6089
      %6257 = vst.msk [vmem:[%s6230 + $0x64] sm:$0x1] %vm5461, %v6091
      %6258 = vst.msk [vmem:[%s6230 + $0x66] sm:$0x1] %vm5461, %v6093
      %6259 = vst.msk [vmem:[%s6230 + $0x68] sm:$0x1] %vm5461, %v6095
      %6260 = vst.msk [vmem:[%s6230 + $0x6a] sm:$0x1] %vm5461, %v6097
      %6261 = vst.msk [vmem:[%s6230 + $0x6c] sm:$0x1] %vm5461, %v6099
      %6262 = vst.msk [vmem:[%s6230 + $0x6e] sm:$0x1] %vm5461, %v6101
      %6263 = vst.msk [vmem:[%s6230 + $0x80] sm:$0x1] %vm5461, %v6103
      %6264 = vst.msk [vmem:[%s6230 + $0x82] sm:$0x1] %vm5461, %v6105
      %6265 = vst.msk [vmem:[%s6230 + $0x84] sm:$0x1] %vm5461, %v6107
      %6266 = vst.msk [vmem:[%s6230 + $0x86] sm:$0x1] %vm5461, %v6109
      %6267 = vst.msk [vmem:[%s6230 + $0x88] sm:$0x1] %vm5461, %v6111
      %6268 = vst.msk [vmem:[%s6230 + $0x8a] sm:$0x1] %vm5461, %v6113
      %6269 = vst.msk [vmem:[%s6230 + $0x8c] sm:$0x1] %vm5461, %v6115
      %6270 = vst.msk [vmem:[%s6230 + $0x8e] sm:$0x1] %vm5461, %v6117
      %6271 = vst.msk [vmem:[%s6230 + $0xa0] sm:$0x1] %vm5461, %v6119
      %6272 = vst.msk [vmem:[%s6230 + $0xa2] sm:$0x1] %vm5461, %v6121
      %6273 = vst.msk [vmem:[%s6230 + $0xa4] sm:$0x1] %vm5461, %v6123
      %6274 = vst.msk [vmem:[%s6230 + $0xa6] sm:$0x1] %vm5461, %v6125
      %6275 = vst.msk [vmem:[%s6230 + $0xa8] sm:$0x1] %vm5461, %v6127
      %6276 = vst.msk [vmem:[%s6230 + $0xaa] sm:$0x1] %vm5461, %v6129
      %6277 = vst.msk [vmem:[%s6230 + $0xac] sm:$0x1] %vm5461, %v6131
      %6278 = vst.msk [vmem:[%s6230 + $0xae] sm:$0x1] %vm5461, %v6133
      %6279 = vst.msk [vmem:[%s6230 + $0xc0] sm:$0x1] %vm5461, %v6135
      %6280 = vst.msk [vmem:[%s6230 + $0xc2] sm:$0x1] %vm5461, %v6137
      %6281 = vst.msk [vmem:[%s6230 + $0xc4] sm:$0x1] %vm5461, %v6139
      %6282 = vst.msk [vmem:[%s6230 + $0xc6] sm:$0x1] %vm5461, %v6141
      %6283 = vst.msk [vmem:[%s6230 + $0xc8] sm:$0x1] %vm5461, %v6143
      %6284 = vst.msk [vmem:[%s6230 + $0xca] sm:$0x1] %vm5461, %v6145
      %6285 = vst.msk [vmem:[%s6230 + $0xcc] sm:$0x1] %vm5461, %v6147
      %6286 = vst.msk [vmem:[%s6230 + $0xce] sm:$0x1] %vm5461, %v6149
      %6287 = vst.msk [vmem:[%s6230 + $0xe0] sm:$0x1] %vm5461, %v6151
      %6288 = vst.msk [vmem:[%s6230 + $0xe2] sm:$0x1] %vm5461, %v6153
      %6289 = vst.msk [vmem:[%s6230 + $0xe4] sm:$0x1] %vm5461, %v6155
      %6290 = vst.msk [vmem:[%s6230 + $0xe6] sm:$0x1] %vm5461, %v6157
      %6291 = vst.msk [vmem:[%s6230 + $0xe8] sm:$0x1] %vm5461, %v6159
      %6292 = vst.msk [vmem:[%s6230 + $0xea] sm:$0x1] %vm5461, %v6161
      %6293 = vst.msk [vmem:[%s6230 + $0xec] sm:$0x1] %vm5461, %v6163
      %6294 = vst.msk [vmem:[%s6230 + $0xee] sm:$0x1] %vm5461, %v6165
      %6295 = vrot.lane.b32.xlu0 %v5529, 104
      %v6296 = vpop.permute.xlu0 %6295
      %6297 = vrot.lane.b32.xlu0 %v5533, 104
      %v6298 = vpop.permute.xlu0 %6297
      %6299 = vrot.lane.b32.xlu0 %v5537, 104
      %v6300 = vpop.permute.xlu0 %6299
      %6301 = vrot.lane.b32.xlu0 %v5541, 104
      %v6302 = vpop.permute.xlu0 %6301
      %6303 = vrot.lane.b32.xlu0 %v5545, 104
      %v6304 = vpop.permute.xlu0 %6303
      %6305 = vrot.lane.b32.xlu0 %v5549, 104
      %v6306 = vpop.permute.xlu0 %6305
      %6307 = vrot.lane.b32.xlu0 %v5553, 104
      %v6308 = vpop.permute.xlu0 %6307
      %6309 = vrot.lane.b32.xlu0 %v5557, 104
      %v6310 = vpop.permute.xlu0 %6309
      %6311 = vrot.lane.b32.xlu0 %v5561, 104
      %v6312 = vpop.permute.xlu0 %6311
      %6313 = vrot.lane.b32.xlu0 %v5565, 104
      %v6314 = vpop.permute.xlu0 %6313
      %6315 = vrot.lane.b32.xlu0 %v5569, 104
      %v6316 = vpop.permute.xlu0 %6315
      %6317 = vrot.lane.b32.xlu0 %v5573, 104
      %v6318 = vpop.permute.xlu0 %6317
      %6319 = vrot.lane.b32.xlu0 %v5577, 104
      %v6320 = vpop.permute.xlu0 %6319
      %6321 = vrot.lane.b32.xlu0 %v5581, 104
      %v6322 = vpop.permute.xlu0 %6321
      %6323 = vrot.lane.b32.xlu0 %v5585, 104
      %v6324 = vpop.permute.xlu0 %6323
      %6325 = vrot.lane.b32.xlu0 %v5589, 104
      %v6326 = vpop.permute.xlu0 %6325
      %6327 = vrot.lane.b32.xlu0 %v5593, 104
      %v6328 = vpop.permute.xlu0 %6327
      %6329 = vrot.lane.b32.xlu0 %v5597, 104
      %v6330 = vpop.permute.xlu0 %6329
      %6331 = vrot.lane.b32.xlu0 %v5601, 104
      %v6332 = vpop.permute.xlu0 %6331
      %6333 = vrot.lane.b32.xlu0 %v5605, 104
      %v6334 = vpop.permute.xlu0 %6333
      %6335 = vrot.lane.b32.xlu0 %v5609, 104
      %v6336 = vpop.permute.xlu0 %6335
      %6337 = vrot.lane.b32.xlu0 %v5613, 104
      %v6338 = vpop.permute.xlu0 %6337
      %6339 = vrot.lane.b32.xlu0 %v5617, 104
      %v6340 = vpop.permute.xlu0 %6339
      %6341 = vrot.lane.b32.xlu0 %v5621, 104
      %v6342 = vpop.permute.xlu0 %6341
      %6343 = vrot.lane.b32.xlu0 %v5625, 104
      %v6344 = vpop.permute.xlu0 %6343
      %6345 = vrot.lane.b32.xlu0 %v5629, 104
      %v6346 = vpop.permute.xlu0 %6345
      %6347 = vrot.lane.b32.xlu0 %v5633, 104
      %v6348 = vpop.permute.xlu0 %6347
      %6349 = vrot.lane.b32.xlu0 %v5637, 104
      %v6350 = vpop.permute.xlu0 %6349
      %6351 = vrot.lane.b32.xlu0 %v5641, 104
      %v6352 = vpop.permute.xlu0 %6351
      %6353 = vrot.lane.b32.xlu0 %v5645, 104
      %v6354 = vpop.permute.xlu0 %6353
      %6355 = vrot.lane.b32.xlu0 %v5649, 104
      %v6356 = vpop.permute.xlu0 %6355
      %6357 = vrot.lane.b32.xlu0 %v5653, 104
      %v6358 = vpop.permute.xlu0 %6357
      %6359 = vrot.lane.b32.xlu0 %v5657, 104
      %v6360 = vpop.permute.xlu0 %6359
      %6361 = vrot.lane.b32.xlu0 %v5661, 104
      %v6362 = vpop.permute.xlu0 %6361
      %6363 = vrot.lane.b32.xlu0 %v5665, 104
      %v6364 = vpop.permute.xlu0 %6363
      %6365 = vrot.lane.b32.xlu0 %v5669, 104
      %v6366 = vpop.permute.xlu0 %6365
      %6367 = vrot.lane.b32.xlu0 %v5673, 104
      %v6368 = vpop.permute.xlu0 %6367
      %6369 = vrot.lane.b32.xlu0 %v5677, 104
      %v6370 = vpop.permute.xlu0 %6369
      %6371 = vrot.lane.b32.xlu0 %v5681, 104
      %v6372 = vpop.permute.xlu0 %6371
      %6373 = vrot.lane.b32.xlu0 %v5685, 104
      %v6374 = vpop.permute.xlu0 %6373
      %6375 = vrot.lane.b32.xlu0 %v5689, 104
      %v6376 = vpop.permute.xlu0 %6375
      %6377 = vrot.lane.b32.xlu0 %v5693, 104
      %v6378 = vpop.permute.xlu0 %6377
      %6379 = vrot.lane.b32.xlu0 %v5697, 104
      %v6380 = vpop.permute.xlu0 %6379
      %6381 = vrot.lane.b32.xlu0 %v5701, 104
      %v6382 = vpop.permute.xlu0 %6381
      %6383 = vrot.lane.b32.xlu0 %v5705, 104
      %v6384 = vpop.permute.xlu0 %6383
      %6385 = vrot.lane.b32.xlu0 %v5709, 104
      %v6386 = vpop.permute.xlu0 %6385
      %6387 = vrot.lane.b32.xlu0 %v5713, 104
      %v6388 = vpop.permute.xlu0 %6387
      %6389 = vrot.lane.b32.xlu0 %v5717, 104
      %v6390 = vpop.permute.xlu0 %6389
      %6391 = vrot.lane.b32.xlu0 %v5721, 104
      %v6392 = vpop.permute.xlu0 %6391
      %6393 = vrot.lane.b32.xlu0 %v5725, 104
      %v6394 = vpop.permute.xlu0 %6393
      %6395 = vrot.lane.b32.xlu0 %v5729, 104
      %v6396 = vpop.permute.xlu0 %6395
      %6397 = vrot.lane.b32.xlu0 %v5733, 104
      %v6398 = vpop.permute.xlu0 %6397
      %6399 = vrot.lane.b32.xlu0 %v5737, 104
      %v6400 = vpop.permute.xlu0 %6399
      %6401 = vrot.lane.b32.xlu0 %v5741, 104
      %v6402 = vpop.permute.xlu0 %6401
      %6403 = vrot.lane.b32.xlu0 %v5745, 104
      %v6404 = vpop.permute.xlu0 %6403
      %6405 = vrot.lane.b32.xlu0 %v5749, 104
      %v6406 = vpop.permute.xlu0 %6405
      %6407 = vrot.lane.b32.xlu0 %v5753, 104
      %v6408 = vpop.permute.xlu0 %6407
      %6409 = vrot.lane.b32.xlu0 %v5757, 104
      %v6410 = vpop.permute.xlu0 %6409
      %6411 = vrot.lane.b32.xlu0 %v5761, 104
      %v6412 = vpop.permute.xlu0 %6411
      %6413 = vrot.lane.b32.xlu0 %v5765, 104
      %v6414 = vpop.permute.xlu0 %6413
      %6415 = vrot.lane.b32.xlu0 %v5769, 104
      %v6416 = vpop.permute.xlu0 %6415
      %6417 = vrot.lane.b32.xlu0 %v5773, 104
      %v6418 = vpop.permute.xlu0 %6417
      %6419 = vrot.lane.b32.xlu0 %v5777, 104
      %v6420 = vpop.permute.xlu0 %6419
      %6421 = vrot.lane.b32.xlu0 %v5781, 104
      %v6422 = vpop.permute.xlu0 %6421
      %6487 = vst.msk [vmem:[%s6230 + $0x1] sm:$0x1] %vm5461, %v6296
      %6488 = vst.msk [vmem:[%s6230 + $0x3] sm:$0x1] %vm5461, %v6298
      %6489 = vst.msk [vmem:[%s6230 + $0x5] sm:$0x1] %vm5461, %v6300
      %6490 = vst.msk [vmem:[%s6230 + $0x7] sm:$0x1] %vm5461, %v6302
      %6491 = vst.msk [vmem:[%s6230 + $0x9] sm:$0x1] %vm5461, %v6304
      %6492 = vst.msk [vmem:[%s6230 + $0xb] sm:$0x1] %vm5461, %v6306
      %6493 = vst.msk [vmem:[%s6230 + $0xd] sm:$0x1] %vm5461, %v6308
      %6494 = vst.msk [vmem:[%s6230 + $0xf] sm:$0x1] %vm5461, %v6310
      %6495 = vst.msk [vmem:[%s6230 + $0x21] sm:$0x1] %vm5461, %v6312
      %6496 = vst.msk [vmem:[%s6230 + $0x23] sm:$0x1] %vm5461, %v6314
      %6497 = vst.msk [vmem:[%s6230 + $0x25] sm:$0x1] %vm5461, %v6316
      %6498 = vst.msk [vmem:[%s6230 + $0x27] sm:$0x1] %vm5461, %v6318
      %6499 = vst.msk [vmem:[%s6230 + $0x29] sm:$0x1] %vm5461, %v6320
      %6500 = vst.msk [vmem:[%s6230 + $0x2b] sm:$0x1] %vm5461, %v6322
      %6501 = vst.msk [vmem:[%s6230 + $0x2d] sm:$0x1] %vm5461, %v6324
      %6502 = vst.msk [vmem:[%s6230 + $0x2f] sm:$0x1] %vm5461, %v6326
      %6503 = vst.msk [vmem:[%s6230 + $0x41] sm:$0x1] %vm5461, %v6328
      %6504 = vst.msk [vmem:[%s6230 + $0x43] sm:$0x1] %vm5461, %v6330
      %6505 = vst.msk [vmem:[%s6230 + $0x45] sm:$0x1] %vm5461, %v6332
      %6506 = vst.msk [vmem:[%s6230 + $0x47] sm:$0x1] %vm5461, %v6334
      %6507 = vst.msk [vmem:[%s6230 + $0x49] sm:$0x1] %vm5461, %v6336
      %6508 = vst.msk [vmem:[%s6230 + $0x4b] sm:$0x1] %vm5461, %v6338
      %6509 = vst.msk [vmem:[%s6230 + $0x4d] sm:$0x1] %vm5461, %v6340
      %6510 = vst.msk [vmem:[%s6230 + $0x4f] sm:$0x1] %vm5461, %v6342
      %6511 = vst.msk [vmem:[%s6230 + $0x61] sm:$0x1] %vm5461, %v6344
      %6512 = vst.msk [vmem:[%s6230 + $0x63] sm:$0x1] %vm5461, %v6346
      %6513 = vst.msk [vmem:[%s6230 + $0x65] sm:$0x1] %vm5461, %v6348
      %6514 = vst.msk [vmem:[%s6230 + $0x67] sm:$0x1] %vm5461, %v6350
      %6515 = vst.msk [vmem:[%s6230 + $0x69] sm:$0x1] %vm5461, %v6352
      %6516 = vst.msk [vmem:[%s6230 + $0x6b] sm:$0x1] %vm5461, %v6354
      %6517 = vst.msk [vmem:[%s6230 + $0x6d] sm:$0x1] %vm5461, %v6356
      %6518 = vst.msk [vmem:[%s6230 + $0x6f] sm:$0x1] %vm5461, %v6358
      %6519 = vst.msk [vmem:[%s6230 + $0x81] sm:$0x1] %vm5461, %v6360
      %6520 = vst.msk [vmem:[%s6230 + $0x83] sm:$0x1] %vm5461, %v6362
      %6521 = vst.msk [vmem:[%s6230 + $0x85] sm:$0x1] %vm5461, %v6364
      %6522 = vst.msk [vmem:[%s6230 + $0x87] sm:$0x1] %vm5461, %v6366
      %6523 = vst.msk [vmem:[%s6230 + $0x89] sm:$0x1] %vm5461, %v6368
      %6524 = vst.msk [vmem:[%s6230 + $0x8b] sm:$0x1] %vm5461, %v6370
      %6525 = vst.msk [vmem:[%s6230 + $0x8d] sm:$0x1] %vm5461, %v6372
      %6526 = vst.msk [vmem:[%s6230 + $0x8f] sm:$0x1] %vm5461, %v6374
      %6527 = vst.msk [vmem:[%s6230 + $0xa1] sm:$0x1] %vm5461, %v6376
      %6528 = vst.msk [vmem:[%s6230 + $0xa3] sm:$0x1] %vm5461, %v6378
      %6529 = vst.msk [vmem:[%s6230 + $0xa5] sm:$0x1] %vm5461, %v6380
      %6530 = vst.msk [vmem:[%s6230 + $0xa7] sm:$0x1] %vm5461, %v6382
      %6531 = vst.msk [vmem:[%s6230 + $0xa9] sm:$0x1] %vm5461, %v6384
      %6532 = vst.msk [vmem:[%s6230 + $0xab] sm:$0x1] %vm5461, %v6386
      %6533 = vst.msk [vmem:[%s6230 + $0xad] sm:$0x1] %vm5461, %v6388
      %6534 = vst.msk [vmem:[%s6230 + $0xaf] sm:$0x1] %vm5461, %v6390
      %6535 = vst.msk [vmem:[%s6230 + $0xc1] sm:$0x1] %vm5461, %v6392
      %6536 = vst.msk [vmem:[%s6230 + $0xc3] sm:$0x1] %vm5461, %v6394
      %6537 = vst.msk [vmem:[%s6230 + $0xc5] sm:$0x1] %vm5461, %v6396
      %6538 = vst.msk [vmem:[%s6230 + $0xc7] sm:$0x1] %vm5461, %v6398
      %6539 = vst.msk [vmem:[%s6230 + $0xc9] sm:$0x1] %vm5461, %v6400
      %6540 = vst.msk [vmem:[%s6230 + $0xcb] sm:$0x1] %vm5461, %v6402
      %6541 = vst.msk [vmem:[%s6230 + $0xcd] sm:$0x1] %vm5461, %v6404
      %6542 = vst.msk [vmem:[%s6230 + $0xcf] sm:$0x1] %vm5461, %v6406
      %6543 = vst.msk [vmem:[%s6230 + $0xe1] sm:$0x1] %vm5461, %v6408
      %6544 = vst.msk [vmem:[%s6230 + $0xe3] sm:$0x1] %vm5461, %v6410
      %6545 = vst.msk [vmem:[%s6230 + $0xe5] sm:$0x1] %vm5461, %v6412
      %6546 = vst.msk [vmem:[%s6230 + $0xe7] sm:$0x1] %vm5461, %v6414
      %6547 = vst.msk [vmem:[%s6230 + $0xe9] sm:$0x1] %vm5461, %v6416
      %6548 = vst.msk [vmem:[%s6230 + $0xeb] sm:$0x1] %vm5461, %v6418
      %6549 = vst.msk [vmem:[%s6230 + $0xed] sm:$0x1] %vm5461, %v6420
      %6550 = vst.msk [vmem:[%s6230 + $0xef] sm:$0x1] %vm5461, %v6422
      %v6551 = vld [vmem:[#allocation12] sm:$0x3]
      %v6552 = vld [vmem:[#allocation12 + $0x2] sm:$0x3]
      %v6553 = vld [vmem:[#allocation12 + $0x4] sm:$0x3]
      %v6554 = vld [vmem:[#allocation12 + $0x6] sm:$0x3]
      %v6555 = vld [vmem:[#allocation12 + $0x8] sm:$0x3]
      %v6556 = vld [vmem:[#allocation12 + $0xa] sm:$0x3]
      %v6557 = vld [vmem:[#allocation12 + $0xc] sm:$0x3]
      %v6558 = vld [vmem:[#allocation12 + $0xe] sm:$0x3]
      %v6559 = vld [vmem:[#allocation12 + $0x10] sm:$0x3]
      %v6560 = vld [vmem:[#allocation12 + $0x12] sm:$0x3]
      %v6561 = vld [vmem:[#allocation12 + $0x14] sm:$0x3]
      %v6562 = vld [vmem:[#allocation12 + $0x16] sm:$0x3]
      %v6563 = vld [vmem:[#allocation12 + $0x18] sm:$0x3]
      %v6564 = vld [vmem:[#allocation12 + $0x1a] sm:$0x3]
      %v6565 = vld [vmem:[#allocation12 + $0x1c] sm:$0x3]
      %v6566 = vld [vmem:[#allocation12 + $0x1e] sm:$0x3]
      %v6567 = vld [vmem:[#allocation12 + $0x20] sm:$0x3]
      %v6568 = vld [vmem:[#allocation12 + $0x22] sm:$0x3]
      %v6569 = vld [vmem:[#allocation12 + $0x24] sm:$0x3]
      %v6570 = vld [vmem:[#allocation12 + $0x26] sm:$0x3]
      %v6571 = vld [vmem:[#allocation12 + $0x28] sm:$0x3]
      %v6572 = vld [vmem:[#allocation12 + $0x2a] sm:$0x3]
      %v6573 = vld [vmem:[#allocation12 + $0x2c] sm:$0x3]
      %v6574 = vld [vmem:[#allocation12 + $0x2e] sm:$0x3]
      %v6575 = vld [vmem:[#allocation12 + $0x30] sm:$0x3]
      %v6576 = vld [vmem:[#allocation12 + $0x32] sm:$0x3]
      %v6577 = vld [vmem:[#allocation12 + $0x34] sm:$0x3]
      %v6578 = vld [vmem:[#allocation12 + $0x36] sm:$0x3]
      %v6579 = vld [vmem:[#allocation12 + $0x38] sm:$0x3]
      %v6580 = vld [vmem:[#allocation12 + $0x3a] sm:$0x3]
      %v6581 = vld [vmem:[#allocation12 + $0x3c] sm:$0x3]
      %v6582 = vld [vmem:[#allocation12 + $0x3e] sm:$0x3]
      %v6583 = vld [vmem:[#allocation12 + $0x40] sm:$0x3]
      %v6584 = vld [vmem:[#allocation12 + $0x42] sm:$0x3]
      %v6585 = vld [vmem:[#allocation12 + $0x44] sm:$0x3]
      %v6586 = vld [vmem:[#allocation12 + $0x46] sm:$0x3]
      %v6587 = vld [vmem:[#allocation12 + $0x48] sm:$0x3]
      %v6588 = vld [vmem:[#allocation12 + $0x4a] sm:$0x3]
      %v6589 = vld [vmem:[#allocation12 + $0x4c] sm:$0x3]
      %v6590 = vld [vmem:[#allocation12 + $0x4e] sm:$0x3]
      %v6591 = vld [vmem:[#allocation12 + $0x50] sm:$0x3]
      %v6592 = vld [vmem:[#allocation12 + $0x52] sm:$0x3]
      %v6593 = vld [vmem:[#allocation12 + $0x54] sm:$0x3]
      %v6594 = vld [vmem:[#allocation12 + $0x56] sm:$0x3]
      %v6595 = vld [vmem:[#allocation12 + $0x58] sm:$0x3]
      %v6596 = vld [vmem:[#allocation12 + $0x5a] sm:$0x3]
      %v6597 = vld [vmem:[#allocation12 + $0x5c] sm:$0x3]
      %v6598 = vld [vmem:[#allocation12 + $0x5e] sm:$0x3]
      %v6599 = vld [vmem:[#allocation12 + $0x60] sm:$0x3]
      %v6600 = vld [vmem:[#allocation12 + $0x62] sm:$0x3]
      %v6601 = vld [vmem:[#allocation12 + $0x64] sm:$0x3]
      %v6602 = vld [vmem:[#allocation12 + $0x66] sm:$0x3]
      %v6603 = vld [vmem:[#allocation12 + $0x68] sm:$0x3]
      %v6604 = vld [vmem:[#allocation12 + $0x6a] sm:$0x3]
      %v6605 = vld [vmem:[#allocation12 + $0x6c] sm:$0x3]
      %v6606 = vld [vmem:[#allocation12 + $0x6e] sm:$0x3]
      %v6607 = vld [vmem:[#allocation12 + $0x70] sm:$0x3]
      %v6608 = vld [vmem:[#allocation12 + $0x72] sm:$0x3]
      %v6609 = vld [vmem:[#allocation12 + $0x74] sm:$0x3]
      %v6610 = vld [vmem:[#allocation12 + $0x76] sm:$0x3]
      %v6611 = vld [vmem:[#allocation12 + $0x78] sm:$0x3]
      %v6612 = vld [vmem:[#allocation12 + $0x7a] sm:$0x3]
      %v6613 = vld [vmem:[#allocation12 + $0x7c] sm:$0x3]
      %v6614 = vld [vmem:[#allocation12 + $0x7e] sm:$0x3]
      %v6615 = vld [vmem:[#allocation12 + $0x80] sm:$0x3]
      %v6616 = vld [vmem:[#allocation12 + $0x82] sm:$0x3]
      %v6617 = vld [vmem:[#allocation12 + $0x84] sm:$0x3]
      %v6618 = vld [vmem:[#allocation12 + $0x86] sm:$0x3]
      %v6619 = vld [vmem:[#allocation12 + $0x88] sm:$0x3]
      %v6620 = vld [vmem:[#allocation12 + $0x8a] sm:$0x3]
      %v6621 = vld [vmem:[#allocation12 + $0x8c] sm:$0x3]
      %v6622 = vld [vmem:[#allocation12 + $0x8e] sm:$0x3]
      %v6623 = vld [vmem:[#allocation12 + $0x90] sm:$0x3]
      %v6624 = vld [vmem:[#allocation12 + $0x92] sm:$0x3]
      %v6625 = vld [vmem:[#allocation12 + $0x94] sm:$0x3]
      %v6626 = vld [vmem:[#allocation12 + $0x96] sm:$0x3]
      %v6627 = vld [vmem:[#allocation12 + $0x98] sm:$0x3]
      %v6628 = vld [vmem:[#allocation12 + $0x9a] sm:$0x3]
      %v6629 = vld [vmem:[#allocation12 + $0x9c] sm:$0x3]
      %v6630 = vld [vmem:[#allocation12 + $0x9e] sm:$0x3]
      %v6631 = vld [vmem:[#allocation12 + $0xa0] sm:$0x3]
      %v6632 = vld [vmem:[#allocation12 + $0xa2] sm:$0x3]
      %v6633 = vld [vmem:[#allocation12 + $0xa4] sm:$0x3]
      %v6634 = vld [vmem:[#allocation12 + $0xa6] sm:$0x3]
      %v6635 = vld [vmem:[#allocation12 + $0xa8] sm:$0x3]
      %v6636 = vld [vmem:[#allocation12 + $0xaa] sm:$0x3]
      %v6637 = vld [vmem:[#allocation12 + $0xac] sm:$0x3]
      %v6638 = vld [vmem:[#allocation12 + $0xae] sm:$0x3]
      %v6639 = vld [vmem:[#allocation12 + $0xb0] sm:$0x3]
      %v6640 = vld [vmem:[#allocation12 + $0xb2] sm:$0x3]
      %v6641 = vld [vmem:[#allocation12 + $0xb4] sm:$0x3]
      %v6642 = vld [vmem:[#allocation12 + $0xb6] sm:$0x3]
      %v6643 = vld [vmem:[#allocation12 + $0xb8] sm:$0x3]
      %v6644 = vld [vmem:[#allocation12 + $0xba] sm:$0x3]
      %v6645 = vld [vmem:[#allocation12 + $0xbc] sm:$0x3]
      %v6646 = vld [vmem:[#allocation12 + $0xbe] sm:$0x3]
      %v6647 = vld [vmem:[#allocation12 + $0xc0] sm:$0x3]
      %v6648 = vld [vmem:[#allocation12 + $0xc2] sm:$0x3]
      %v6649 = vld [vmem:[#allocation12 + $0xc4] sm:$0x3]
      %v6650 = vld [vmem:[#allocation12 + $0xc6] sm:$0x3]
      %v6651 = vld [vmem:[#allocation12 + $0xc8] sm:$0x3]
      %v6652 = vld [vmem:[#allocation12 + $0xca] sm:$0x3]
      %v6653 = vld [vmem:[#allocation12 + $0xcc] sm:$0x3]
      %v6654 = vld [vmem:[#allocation12 + $0xce] sm:$0x3]
      %v6655 = vld [vmem:[#allocation12 + $0xd0] sm:$0x3]
      %v6656 = vld [vmem:[#allocation12 + $0xd2] sm:$0x3]
      %v6657 = vld [vmem:[#allocation12 + $0xd4] sm:$0x3]
      %v6658 = vld [vmem:[#allocation12 + $0xd6] sm:$0x3]
      %v6659 = vld [vmem:[#allocation12 + $0xd8] sm:$0x3]
      %v6660 = vld [vmem:[#allocation12 + $0xda] sm:$0x3]
      %v6661 = vld [vmem:[#allocation12 + $0xdc] sm:$0x3]
      %v6662 = vld [vmem:[#allocation12 + $0xde] sm:$0x3]
      %v6663 = vld [vmem:[#allocation12 + $0xe0] sm:$0x3]
      %v6664 = vld [vmem:[#allocation12 + $0xe2] sm:$0x3]
      %v6665 = vld [vmem:[#allocation12 + $0xe4] sm:$0x3]
      %v6666 = vld [vmem:[#allocation12 + $0xe6] sm:$0x3]
      %v6667 = vld [vmem:[#allocation12 + $0xe8] sm:$0x3]
      %v6668 = vld [vmem:[#allocation12 + $0xea] sm:$0x3]
      %v6669 = vld [vmem:[#allocation12 + $0xec] sm:$0x3]
      %v6670 = vld [vmem:[#allocation12 + $0xee] sm:$0x3]
      %v6671 = vld [vmem:[#allocation12 + $0xf0] sm:$0x3]
      %v6672 = vld [vmem:[#allocation12 + $0xf2] sm:$0x3]
      %v6673 = vld [vmem:[#allocation12 + $0xf4] sm:$0x3]
      %v6674 = vld [vmem:[#allocation12 + $0xf6] sm:$0x3]
      %v6675 = vld [vmem:[#allocation12 + $0xf8] sm:$0x3]
      %v6676 = vld [vmem:[#allocation12 + $0xfa] sm:$0x3]
      %v6677 = vld [vmem:[#allocation12 + $0xfc] sm:$0x3]
      %v6678 = vld [vmem:[#allocation12 + $0xfe] sm:$0x3]
      %v6807 = vcombine.low %v6551, %v6552
      %v6808 = vcombine.low %v6553, %v6554
      %v6810 = vunpack.c.l.s4 1983009808
      %v6811 = vunpack.c.0.s8 %v6810
      %v6812 = vlaneseq
      %v6813 = vshrl.u32 %v6812, 7
      %v6814 = vsub.s32 %v6811, %v6813
      %v6815 = vrot.slane %v6807, %v6814
      %v6817 = vunpack.c.l.s4 1983009808
      %v6818 = vunpack.c.0.s8 %v6817
      %v6819 = vlaneseq
      %v6820 = vshrl.u32 %v6819, 7
      %v6821 = vsub.s32 %v6818, %v6820
      %v6822 = vrot.slane %v6808, %v6821
      %v6823 = vcombine.low %v6815, %v6822
      %v6824 = vcombine.low %v6555, %v6556
      %v6825 = vcombine.low %v6557, %v6558
      %v6827 = vunpack.c.l.s4 1983009808
      %v6828 = vunpack.c.0.s8 %v6827
      %v6829 = vlaneseq
      %v6830 = vshrl.u32 %v6829, 7
      %v6831 = vsub.s32 %v6828, %v6830
      %v6832 = vrot.slane %v6824, %v6831
      %v6834 = vunpack.c.l.s4 1983009808
      %v6835 = vunpack.c.0.s8 %v6834
      %v6836 = vlaneseq
      %v6837 = vshrl.u32 %v6836, 7
      %v6838 = vsub.s32 %v6835, %v6837
      %v6839 = vrot.slane %v6825, %v6838
      %v6840 = vcombine.low %v6832, %v6839
      %v6841 = vcombine.low %v6559, %v6560
      %v6842 = vcombine.low %v6561, %v6562
      %v6844 = vunpack.c.l.s4 1983009808
      %v6845 = vunpack.c.0.s8 %v6844
      %v6846 = vlaneseq
      %v6847 = vshrl.u32 %v6846, 7
      %v6848 = vsub.s32 %v6845, %v6847
      %v6849 = vrot.slane %v6841, %v6848
      %v6851 = vunpack.c.l.s4 1983009808
      %v6852 = vunpack.c.0.s8 %v6851
      %v6853 = vlaneseq
      %v6854 = vshrl.u32 %v6853, 7
      %v6855 = vsub.s32 %v6852, %v6854
      %v6856 = vrot.slane %v6842, %v6855
      %v6857 = vcombine.low %v6849, %v6856
      %v6858 = vcombine.low %v6563, %v6564
      %v6859 = vcombine.low %v6565, %v6566
      %v6861 = vunpack.c.l.s4 1983009808
      %v6862 = vunpack.c.0.s8 %v6861
      %v6863 = vlaneseq
      %v6864 = vshrl.u32 %v6863, 7
      %v6865 = vsub.s32 %v6862, %v6864
      %v6866 = vrot.slane %v6858, %v6865
      %v6868 = vunpack.c.l.s4 1983009808
      %v6869 = vunpack.c.0.s8 %v6868
      %v6870 = vlaneseq
      %v6871 = vshrl.u32 %v6870, 7
      %v6872 = vsub.s32 %v6869, %v6871
      %v6873 = vrot.slane %v6859, %v6872
      %v6874 = vcombine.low %v6866, %v6873
      %v6875 = vcombine.low %v6567, %v6568
      %v6876 = vcombine.low %v6569, %v6570
      %v6878 = vunpack.c.l.s4 1983009808
      %v6879 = vunpack.c.0.s8 %v6878
      %v6880 = vlaneseq
      %v6881 = vshrl.u32 %v6880, 7
      %v6882 = vsub.s32 %v6879, %v6881
      %v6883 = vrot.slane %v6875, %v6882
      %v6885 = vunpack.c.l.s4 1983009808
      %v6886 = vunpack.c.0.s8 %v6885
      %v6887 = vlaneseq
      %v6888 = vshrl.u32 %v6887, 7
      %v6889 = vsub.s32 %v6886, %v6888
      %v6890 = vrot.slane %v6876, %v6889
      %v6891 = vcombine.low %v6883, %v6890
      %v6892 = vcombine.low %v6571, %v6572
      %v6893 = vcombine.low %v6573, %v6574
      %v6895 = vunpack.c.l.s4 1983009808
      %v6896 = vunpack.c.0.s8 %v6895
      %v6897 = vlaneseq
      %v6898 = vshrl.u32 %v6897, 7
      %v6899 = vsub.s32 %v6896, %v6898
      %v6900 = vrot.slane %v6892, %v6899
      %v6902 = vunpack.c.l.s4 1983009808
      %v6903 = vunpack.c.0.s8 %v6902
      %v6904 = vlaneseq
      %v6905 = vshrl.u32 %v6904, 7
      %v6906 = vsub.s32 %v6903, %v6905
      %v6907 = vrot.slane %v6893, %v6906
      %v6908 = vcombine.low %v6900, %v6907
      %v6909 = vcombine.low %v6575, %v6576
      %v6910 = vcombine.low %v6577, %v6578
      %v6912 = vunpack.c.l.s4 1983009808
      %v6913 = vunpack.c.0.s8 %v6912
      %v6914 = vlaneseq
      %v6915 = vshrl.u32 %v6914, 7
      %v6916 = vsub.s32 %v6913, %v6915
      %v6917 = vrot.slane %v6909, %v6916
      %v6919 = vunpack.c.l.s4 1983009808
      %v6920 = vunpack.c.0.s8 %v6919
      %v6921 = vlaneseq
      %v6922 = vshrl.u32 %v6921, 7
      %v6923 = vsub.s32 %v6920, %v6922
      %v6924 = vrot.slane %v6910, %v6923
      %v6925 = vcombine.low %v6917, %v6924
      %v6926 = vcombine.low %v6579, %v6580
      %v6927 = vcombine.low %v6581, %v6582
      %v6929 = vunpack.c.l.s4 1983009808
      %v6930 = vunpack.c.0.s8 %v6929
      %v6931 = vlaneseq
      %v6932 = vshrl.u32 %v6931, 7
      %v6933 = vsub.s32 %v6930, %v6932
      %v6934 = vrot.slane %v6926, %v6933
      %v6936 = vunpack.c.l.s4 1983009808
      %v6937 = vunpack.c.0.s8 %v6936
      %v6938 = vlaneseq
      %v6939 = vshrl.u32 %v6938, 7
      %v6940 = vsub.s32 %v6937, %v6939
      %v6941 = vrot.slane %v6927, %v6940
      %v6942 = vcombine.low %v6934, %v6941
      %v6943 = vcombine.low %v6583, %v6584
      %v6944 = vcombine.low %v6585, %v6586
      %v6946 = vunpack.c.l.s4 1983009808
      %v6947 = vunpack.c.0.s8 %v6946
      %v6948 = vlaneseq
      %v6949 = vshrl.u32 %v6948, 7
      %v6950 = vsub.s32 %v6947, %v6949
      %v6951 = vrot.slane %v6943, %v6950
      %v6953 = vunpack.c.l.s4 1983009808
      %v6954 = vunpack.c.0.s8 %v6953
      %v6955 = vlaneseq
      %v6956 = vshrl.u32 %v6955, 7
      %v6957 = vsub.s32 %v6954, %v6956
      %v6958 = vrot.slane %v6944, %v6957
      %v6959 = vcombine.low %v6951, %v6958
      %v6960 = vcombine.low %v6587, %v6588
      %v6961 = vcombine.low %v6589, %v6590
      %v6963 = vunpack.c.l.s4 1983009808
      %v6964 = vunpack.c.0.s8 %v6963
      %v6965 = vlaneseq
      %v6966 = vshrl.u32 %v6965, 7
      %v6967 = vsub.s32 %v6964, %v6966
      %v6968 = vrot.slane %v6960, %v6967
      %v6970 = vunpack.c.l.s4 1983009808
      %v6971 = vunpack.c.0.s8 %v6970
      %v6972 = vlaneseq
      %v6973 = vshrl.u32 %v6972, 7
      %v6974 = vsub.s32 %v6971, %v6973
      %v6975 = vrot.slane %v6961, %v6974
      %v6976 = vcombine.low %v6968, %v6975
      %v6977 = vcombine.low %v6591, %v6592
      %v6978 = vcombine.low %v6593, %v6594
      %v6980 = vunpack.c.l.s4 1983009808
      %v6981 = vunpack.c.0.s8 %v6980
      %v6982 = vlaneseq
      %v6983 = vshrl.u32 %v6982, 7
      %v6984 = vsub.s32 %v6981, %v6983
      %v6985 = vrot.slane %v6977, %v6984
      %v6987 = vunpack.c.l.s4 1983009808
      %v6988 = vunpack.c.0.s8 %v6987
      %v6989 = vlaneseq
      %v6990 = vshrl.u32 %v6989, 7
      %v6991 = vsub.s32 %v6988, %v6990
      %v6992 = vrot.slane %v6978, %v6991
      %v6993 = vcombine.low %v6985, %v6992
      %v6994 = vcombine.low %v6595, %v6596
      %v6995 = vcombine.low %v6597, %v6598
      %v6997 = vunpack.c.l.s4 1983009808
      %v6998 = vunpack.c.0.s8 %v6997
      %v6999 = vlaneseq
      %v7000 = vshrl.u32 %v6999, 7
      %v7001 = vsub.s32 %v6998, %v7000
      %v7002 = vrot.slane %v6994, %v7001
      %v7004 = vunpack.c.l.s4 1983009808
      %v7005 = vunpack.c.0.s8 %v7004
      %v7006 = vlaneseq
      %v7007 = vshrl.u32 %v7006, 7
      %v7008 = vsub.s32 %v7005, %v7007
      %v7009 = vrot.slane %v6995, %v7008
      %v7010 = vcombine.low %v7002, %v7009
      %v7011 = vcombine.low %v6599, %v6600
      %v7012 = vcombine.low %v6601, %v6602
      %v7014 = vunpack.c.l.s4 1983009808
      %v7015 = vunpack.c.0.s8 %v7014
      %v7016 = vlaneseq
      %v7017 = vshrl.u32 %v7016, 7
      %v7018 = vsub.s32 %v7015, %v7017
      %v7019 = vrot.slane %v7011, %v7018
      %v7021 = vunpack.c.l.s4 1983009808
      %v7022 = vunpack.c.0.s8 %v7021
      %v7023 = vlaneseq
      %v7024 = vshrl.u32 %v7023, 7
      %v7025 = vsub.s32 %v7022, %v7024
      %v7026 = vrot.slane %v7012, %v7025
      %v7027 = vcombine.low %v7019, %v7026
      %v7028 = vcombine.low %v6603, %v6604
      %v7029 = vcombine.low %v6605, %v6606
      %v7031 = vunpack.c.l.s4 1983009808
      %v7032 = vunpack.c.0.s8 %v7031
      %v7033 = vlaneseq
      %v7034 = vshrl.u32 %v7033, 7
      %v7035 = vsub.s32 %v7032, %v7034
      %v7036 = vrot.slane %v7028, %v7035
      %v7038 = vunpack.c.l.s4 1983009808
      %v7039 = vunpack.c.0.s8 %v7038
      %v7040 = vlaneseq
      %v7041 = vshrl.u32 %v7040, 7
      %v7042 = vsub.s32 %v7039, %v7041
      %v7043 = vrot.slane %v7029, %v7042
      %v7044 = vcombine.low %v7036, %v7043
      %v7045 = vcombine.low %v6607, %v6608
      %v7046 = vcombine.low %v6609, %v6610
      %v7048 = vunpack.c.l.s4 1983009808
      %v7049 = vunpack.c.0.s8 %v7048
      %v7050 = vlaneseq
      %v7051 = vshrl.u32 %v7050, 7
      %v7052 = vsub.s32 %v7049, %v7051
      %v7053 = vrot.slane %v7045, %v7052
      %v7055 = vunpack.c.l.s4 1983009808
      %v7056 = vunpack.c.0.s8 %v7055
      %v7057 = vlaneseq
      %v7058 = vshrl.u32 %v7057, 7
      %v7059 = vsub.s32 %v7056, %v7058
      %v7060 = vrot.slane %v7046, %v7059
      %v7061 = vcombine.low %v7053, %v7060
      %v7062 = vcombine.low %v6611, %v6612
      %v7063 = vcombine.low %v6613, %v6614
      %v7065 = vunpack.c.l.s4 1983009808
      %v7066 = vunpack.c.0.s8 %v7065
      %v7067 = vlaneseq
      %v7068 = vshrl.u32 %v7067, 7
      %v7069 = vsub.s32 %v7066, %v7068
      %v7070 = vrot.slane %v7062, %v7069
      %v7072 = vunpack.c.l.s4 1983009808
      %v7073 = vunpack.c.0.s8 %v7072
      %v7074 = vlaneseq
      %v7075 = vshrl.u32 %v7074, 7
      %v7076 = vsub.s32 %v7073, %v7075
      %v7077 = vrot.slane %v7063, %v7076
      %v7078 = vcombine.low %v7070, %v7077
      %v7079 = vcombine.low %v6615, %v6616
      %v7080 = vcombine.low %v6617, %v6618
      %v7082 = vunpack.c.l.s4 1983009808
      %v7083 = vunpack.c.0.s8 %v7082
      %v7084 = vlaneseq
      %v7085 = vshrl.u32 %v7084, 7
      %v7086 = vsub.s32 %v7083, %v7085
      %v7087 = vrot.slane %v7079, %v7086
      %v7089 = vunpack.c.l.s4 1983009808
      %v7090 = vunpack.c.0.s8 %v7089
      %v7091 = vlaneseq
      %v7092 = vshrl.u32 %v7091, 7
      %v7093 = vsub.s32 %v7090, %v7092
      %v7094 = vrot.slane %v7080, %v7093
      %v7095 = vcombine.low %v7087, %v7094
      %v7096 = vcombine.low %v6619, %v6620
      %v7097 = vcombine.low %v6621, %v6622
      %v7099 = vunpack.c.l.s4 1983009808
      %v7100 = vunpack.c.0.s8 %v7099
      %v7101 = vlaneseq
      %v7102 = vshrl.u32 %v7101, 7
      %v7103 = vsub.s32 %v7100, %v7102
      %v7104 = vrot.slane %v7096, %v7103
      %v7106 = vunpack.c.l.s4 1983009808
      %v7107 = vunpack.c.0.s8 %v7106
      %v7108 = vlaneseq
      %v7109 = vshrl.u32 %v7108, 7
      %v7110 = vsub.s32 %v7107, %v7109
      %v7111 = vrot.slane %v7097, %v7110
      %v7112 = vcombine.low %v7104, %v7111
      %v7113 = vcombine.low %v6623, %v6624
      %v7114 = vcombine.low %v6625, %v6626
      %v7116 = vunpack.c.l.s4 1983009808
      %v7117 = vunpack.c.0.s8 %v7116
      %v7118 = vlaneseq
      %v7119 = vshrl.u32 %v7118, 7
      %v7120 = vsub.s32 %v7117, %v7119
      %v7121 = vrot.slane %v7113, %v7120
      %v7123 = vunpack.c.l.s4 1983009808
      %v7124 = vunpack.c.0.s8 %v7123
      %v7125 = vlaneseq
      %v7126 = vshrl.u32 %v7125, 7
      %v7127 = vsub.s32 %v7124, %v7126
      %v7128 = vrot.slane %v7114, %v7127
      %v7129 = vcombine.low %v7121, %v7128
      %v7130 = vcombine.low %v6627, %v6628
      %v7131 = vcombine.low %v6629, %v6630
      %v7133 = vunpack.c.l.s4 1983009808
      %v7134 = vunpack.c.0.s8 %v7133
      %v7135 = vlaneseq
      %v7136 = vshrl.u32 %v7135, 7
      %v7137 = vsub.s32 %v7134, %v7136
      %v7138 = vrot.slane %v7130, %v7137
      %v7140 = vunpack.c.l.s4 1983009808
      %v7141 = vunpack.c.0.s8 %v7140
      %v7142 = vlaneseq
      %v7143 = vshrl.u32 %v7142, 7
      %v7144 = vsub.s32 %v7141, %v7143
      %v7145 = vrot.slane %v7131, %v7144
      %v7146 = vcombine.low %v7138, %v7145
      %v7147 = vcombine.low %v6631, %v6632
      %v7148 = vcombine.low %v6633, %v6634
      %v7150 = vunpack.c.l.s4 1983009808
      %v7151 = vunpack.c.0.s8 %v7150
      %v7152 = vlaneseq
      %v7153 = vshrl.u32 %v7152, 7
      %v7154 = vsub.s32 %v7151, %v7153
      %v7155 = vrot.slane %v7147, %v7154
      %v7157 = vunpack.c.l.s4 1983009808
      %v7158 = vunpack.c.0.s8 %v7157
      %v7159 = vlaneseq
      %v7160 = vshrl.u32 %v7159, 7
      %v7161 = vsub.s32 %v7158, %v7160
      %v7162 = vrot.slane %v7148, %v7161
      %v7163 = vcombine.low %v7155, %v7162
      %v7164 = vcombine.low %v6635, %v6636
      %v7165 = vcombine.low %v6637, %v6638
      %v7167 = vunpack.c.l.s4 1983009808
      %v7168 = vunpack.c.0.s8 %v7167
      %v7169 = vlaneseq
      %v7170 = vshrl.u32 %v7169, 7
      %v7171 = vsub.s32 %v7168, %v7170
      %v7172 = vrot.slane %v7164, %v7171
      %v7174 = vunpack.c.l.s4 1983009808
      %v7175 = vunpack.c.0.s8 %v7174
      %v7176 = vlaneseq
      %v7177 = vshrl.u32 %v7176, 7
      %v7178 = vsub.s32 %v7175, %v7177
      %v7179 = vrot.slane %v7165, %v7178
      %v7180 = vcombine.low %v7172, %v7179
      %v7181 = vcombine.low %v6639, %v6640
      %v7182 = vcombine.low %v6641, %v6642
      %v7184 = vunpack.c.l.s4 1983009808
      %v7185 = vunpack.c.0.s8 %v7184
      %v7186 = vlaneseq
      %v7187 = vshrl.u32 %v7186, 7
      %v7188 = vsub.s32 %v7185, %v7187
      %v7189 = vrot.slane %v7181, %v7188
      %v7191 = vunpack.c.l.s4 1983009808
      %v7192 = vunpack.c.0.s8 %v7191
      %v7193 = vlaneseq
      %v7194 = vshrl.u32 %v7193, 7
      %v7195 = vsub.s32 %v7192, %v7194
      %v7196 = vrot.slane %v7182, %v7195
      %v7197 = vcombine.low %v7189, %v7196
      %v7198 = vcombine.low %v6643, %v6644
      %v7199 = vcombine.low %v6645, %v6646
      %v7201 = vunpack.c.l.s4 1983009808
      %v7202 = vunpack.c.0.s8 %v7201
      %v7203 = vlaneseq
      %v7204 = vshrl.u32 %v7203, 7
      %v7205 = vsub.s32 %v7202, %v7204
      %v7206 = vrot.slane %v7198, %v7205
      %v7208 = vunpack.c.l.s4 1983009808
      %v7209 = vunpack.c.0.s8 %v7208
      %v7210 = vlaneseq
      %v7211 = vshrl.u32 %v7210, 7
      %v7212 = vsub.s32 %v7209, %v7211
      %v7213 = vrot.slane %v7199, %v7212
      %v7214 = vcombine.low %v7206, %v7213
      %v7215 = vcombine.low %v6647, %v6648
      %v7216 = vcombine.low %v6649, %v6650
      %v7218 = vunpack.c.l.s4 1983009808
      %v7219 = vunpack.c.0.s8 %v7218
      %v7220 = vlaneseq
      %v7221 = vshrl.u32 %v7220, 7
      %v7222 = vsub.s32 %v7219, %v7221
      %v7223 = vrot.slane %v7215, %v7222
      %v7225 = vunpack.c.l.s4 1983009808
      %v7226 = vunpack.c.0.s8 %v7225
      %v7227 = vlaneseq
      %v7228 = vshrl.u32 %v7227, 7
      %v7229 = vsub.s32 %v7226, %v7228
      %v7230 = vrot.slane %v7216, %v7229
      %v7231 = vcombine.low %v7223, %v7230
      %v7232 = vcombine.low %v6651, %v6652
      %v7233 = vcombine.low %v6653, %v6654
      %v7235 = vunpack.c.l.s4 1983009808
      %v7236 = vunpack.c.0.s8 %v7235
      %v7237 = vlaneseq
      %v7238 = vshrl.u32 %v7237, 7
      %v7239 = vsub.s32 %v7236, %v7238
      %v7240 = vrot.slane %v7232, %v7239
      %v7242 = vunpack.c.l.s4 1983009808
      %v7243 = vunpack.c.0.s8 %v7242
      %v7244 = vlaneseq
      %v7245 = vshrl.u32 %v7244, 7
      %v7246 = vsub.s32 %v7243, %v7245
      %v7247 = vrot.slane %v7233, %v7246
      %v7248 = vcombine.low %v7240, %v7247
      %v7249 = vcombine.low %v6655, %v6656
      %v7250 = vcombine.low %v6657, %v6658
      %v7252 = vunpack.c.l.s4 1983009808
      %v7253 = vunpack.c.0.s8 %v7252
      %v7254 = vlaneseq
      %v7255 = vshrl.u32 %v7254, 7
      %v7256 = vsub.s32 %v7253, %v7255
      %v7257 = vrot.slane %v7249, %v7256
      %v7259 = vunpack.c.l.s4 1983009808
      %v7260 = vunpack.c.0.s8 %v7259
      %v7261 = vlaneseq
      %v7262 = vshrl.u32 %v7261, 7
      %v7263 = vsub.s32 %v7260, %v7262
      %v7264 = vrot.slane %v7250, %v7263
      %v7265 = vcombine.low %v7257, %v7264
      %v7266 = vcombine.low %v6659, %v6660
      %v7267 = vcombine.low %v6661, %v6662
      %v7269 = vunpack.c.l.s4 1983009808
      %v7270 = vunpack.c.0.s8 %v7269
      %v7271 = vlaneseq
      %v7272 = vshrl.u32 %v7271, 7
      %v7273 = vsub.s32 %v7270, %v7272
      %v7274 = vrot.slane %v7266, %v7273
      %v7276 = vunpack.c.l.s4 1983009808
      %v7277 = vunpack.c.0.s8 %v7276
      %v7278 = vlaneseq
      %v7279 = vshrl.u32 %v7278, 7
      %v7280 = vsub.s32 %v7277, %v7279
      %v7281 = vrot.slane %v7267, %v7280
      %v7282 = vcombine.low %v7274, %v7281
      %v7283 = vcombine.low %v6663, %v6664
      %v7284 = vcombine.low %v6665, %v6666
      %v7286 = vunpack.c.l.s4 1983009808
      %v7287 = vunpack.c.0.s8 %v7286
      %v7288 = vlaneseq
      %v7289 = vshrl.u32 %v7288, 7
      %v7290 = vsub.s32 %v7287, %v7289
      %v7291 = vrot.slane %v7283, %v7290
      %v7293 = vunpack.c.l.s4 1983009808
      %v7294 = vunpack.c.0.s8 %v7293
      %v7295 = vlaneseq
      %v7296 = vshrl.u32 %v7295, 7
      %v7297 = vsub.s32 %v7294, %v7296
      %v7298 = vrot.slane %v7284, %v7297
      %v7299 = vcombine.low %v7291, %v7298
      %v7300 = vcombine.low %v6667, %v6668
      %v7301 = vcombine.low %v6669, %v6670
      %v7303 = vunpack.c.l.s4 1983009808
      %v7304 = vunpack.c.0.s8 %v7303
      %v7305 = vlaneseq
      %v7306 = vshrl.u32 %v7305, 7
      %v7307 = vsub.s32 %v7304, %v7306
      %v7308 = vrot.slane %v7300, %v7307
      %v7310 = vunpack.c.l.s4 1983009808
      %v7311 = vunpack.c.0.s8 %v7310
      %v7312 = vlaneseq
      %v7313 = vshrl.u32 %v7312, 7
      %v7314 = vsub.s32 %v7311, %v7313
      %v7315 = vrot.slane %v7301, %v7314
      %v7316 = vcombine.low %v7308, %v7315
      %v7317 = vcombine.low %v6671, %v6672
      %v7318 = vcombine.low %v6673, %v6674
      %v7320 = vunpack.c.l.s4 1983009808
      %v7321 = vunpack.c.0.s8 %v7320
      %v7322 = vlaneseq
      %v7323 = vshrl.u32 %v7322, 7
      %v7324 = vsub.s32 %v7321, %v7323
      %v7325 = vrot.slane %v7317, %v7324
      %v7327 = vunpack.c.l.s4 1983009808
      %v7328 = vunpack.c.0.s8 %v7327
      %v7329 = vlaneseq
      %v7330 = vshrl.u32 %v7329, 7
      %v7331 = vsub.s32 %v7328, %v7330
      %v7332 = vrot.slane %v7318, %v7331
      %v7333 = vcombine.low %v7325, %v7332
      %v7334 = vcombine.low %v6675, %v6676
      %v7335 = vcombine.low %v6677, %v6678
      %v7337 = vunpack.c.l.s4 1983009808
      %v7338 = vunpack.c.0.s8 %v7337
      %v7339 = vlaneseq
      %v7340 = vshrl.u32 %v7339, 7
      %v7341 = vsub.s32 %v7338, %v7340
      %v7342 = vrot.slane %v7334, %v7341
      %v7344 = vunpack.c.l.s4 1983009808
      %v7345 = vunpack.c.0.s8 %v7344
      %v7346 = vlaneseq
      %v7347 = vshrl.u32 %v7346, 7
      %v7348 = vsub.s32 %v7345, %v7347
      %v7349 = vrot.slane %v7335, %v7348
      %v7350 = vcombine.low %v7342, %v7349
      %s7383 = scalar_lea.vmem [#allocation13], 24
      %7384 = vst.msk [vmem:[%s7383 + $0x1] sm:$0xff] %vm552, %v6823
      %7385 = vst.msk [vmem:[%s7383 + $0x9] sm:$0xff] %vm552, %v6840
      %7386 = vst.msk [vmem:[%s7383 + $0x19] sm:$0xff] %vm552, %v6857
      %7387 = vst.msk [vmem:[%s7383 + $0x21] sm:$0xff] %vm552, %v6874
      %7388 = vst.msk [vmem:[%s7383 + $0x31] sm:$0xff] %vm552, %v6891
      %7389 = vst.msk [vmem:[%s7383 + $0x39] sm:$0xff] %vm552, %v6908
      %7390 = vst.msk [vmem:[%s7383 + $0x49] sm:$0xff] %vm552, %v6925
      %7391 = vst.msk [vmem:[%s7383 + $0x51] sm:$0xff] %vm552, %v6942
      %7392 = vst.msk [vmem:[%s7383 + $0x61] sm:$0xff] %vm552, %v6959
      %7393 = vst.msk [vmem:[%s7383 + $0x69] sm:$0xff] %vm552, %v6976
      %7394 = vst.msk [vmem:[%s7383 + $0x79] sm:$0xff] %vm552, %v6993
      %7395 = vst.msk [vmem:[%s7383 + $0x81] sm:$0xff] %vm552, %v7010
      %7396 = vst.msk [vmem:[%s7383 + $0x91] sm:$0xff] %vm552, %v7027
      %7397 = vst.msk [vmem:[%s7383 + $0x99] sm:$0xff] %vm552, %v7044
      %7398 = vst.msk [vmem:[%s7383 + $0xa9] sm:$0xff] %vm552, %v7061
      %7399 = vst.msk [vmem:[%s7383 + $0xb1] sm:$0xff] %vm552, %v7078
      %7400 = vst.msk [vmem:[%s7383 + $0xc1] sm:$0xff] %vm552, %v7095
      %7401 = vst.msk [vmem:[%s7383 + $0xc9] sm:$0xff] %vm552, %v7112
      %7402 = vst.msk [vmem:[%s7383 + $0xd9] sm:$0xff] %vm552, %v7129
      %7403 = vst.msk [vmem:[%s7383 + $0xe1] sm:$0xff] %vm552, %v7146
      %7404 = vst.msk [vmem:[%s7383 + $0xf1] sm:$0xff] %vm552, %v7163
      %7405 = vst.msk [vmem:[%s7383 + $0xf9] sm:$0xff] %vm552, %v7180
      %7406 = vst.msk [vmem:[%s7383 + $0x109] sm:$0xff] %vm552, %v7197
      %7407 = vst.msk [vmem:[%s7383 + $0x111] sm:$0xff] %vm552, %v7214
      %7408 = vst.msk [vmem:[%s7383 + $0x121] sm:$0xff] %vm552, %v7231
      %7409 = vst.msk [vmem:[%s7383 + $0x129] sm:$0xff] %vm552, %v7248
      %7410 = vst.msk [vmem:[%s7383 + $0x139] sm:$0xff] %vm552, %v7265
      %7411 = vst.msk [vmem:[%s7383 + $0x141] sm:$0xff] %vm552, %v7282
      %7412 = vst.msk [vmem:[%s7383 + $0x151] sm:$0xff] %vm552, %v7299
      %7413 = vst.msk [vmem:[%s7383 + $0x159] sm:$0xff] %vm552, %v7316
      %7414 = vst.msk [vmem:[%s7383 + $0x169] sm:$0xff] %vm552, %v7333
      %7415 = vst.msk [vmem:[%s7383 + $0x171] sm:$0xff] %vm552, %v7350
      %v7416 = vld [vmem:[#allocation13] sm:$0xff]
      %v7417 = vld [vmem:[#allocation13 + $0x8] sm:$0xff]
      %v7418 = vld [vmem:[#allocation13 + $0x18] sm:$0xff]
      %v7419 = vld [vmem:[#allocation13 + $0x20] sm:$0xff]
      %v7420 = vld [vmem:[#allocation13 + $0x30] sm:$0xff]
      %v7421 = vld [vmem:[#allocation13 + $0x38] sm:$0xff]
      %v7422 = vld [vmem:[#allocation13 + $0x48] sm:$0xff]
      %v7423 = vld [vmem:[#allocation13 + $0x50] sm:$0xff]
      %v7424 = vld [vmem:[#allocation13 + $0x60] sm:$0xff]
      %v7425 = vld [vmem:[#allocation13 + $0x68] sm:$0xff]
      %v7426 = vld [vmem:[#allocation13 + $0x78] sm:$0xff]
      %v7427 = vld [vmem:[#allocation13 + $0x80] sm:$0xff]
      %v7428 = vld [vmem:[#allocation13 + $0x90] sm:$0xff]
      %v7429 = vld [vmem:[#allocation13 + $0x98] sm:$0xff]
      %v7430 = vld [vmem:[#allocation13 + $0xa8] sm:$0xff]
      %v7431 = vld [vmem:[#allocation13 + $0xb0] sm:$0xff]
      %v7432 = vld [vmem:[#allocation13 + $0xc0] sm:$0xff]
      %v7433 = vld [vmem:[#allocation13 + $0xc8] sm:$0xff]
      %v7434 = vld [vmem:[#allocation13 + $0xd8] sm:$0xff]
      %v7435 = vld [vmem:[#allocation13 + $0xe0] sm:$0xff]
      %v7436 = vld [vmem:[#allocation13 + $0xf0] sm:$0xff]
      %v7437 = vld [vmem:[#allocation13 + $0xf8] sm:$0xff]
      %v7438 = vld [vmem:[#allocation13 + $0x108] sm:$0xff]
      %v7439 = vld [vmem:[#allocation13 + $0x110] sm:$0xff]
      %v7440 = vld [vmem:[#allocation13 + $0x120] sm:$0xff]
      %v7441 = vld [vmem:[#allocation13 + $0x128] sm:$0xff]
      %v7442 = vld [vmem:[#allocation13 + $0x138] sm:$0xff]
      %v7443 = vld [vmem:[#allocation13 + $0x140] sm:$0xff]
      %v7444 = vld [vmem:[#allocation13 + $0x150] sm:$0xff]
      %v7445 = vld [vmem:[#allocation13 + $0x158] sm:$0xff]
      %v7446 = vld [vmem:[#allocation13 + $0x168] sm:$0xff]
      %v7447 = vld [vmem:[#allocation13 + $0x170] sm:$0xff]
      %v7448 = vpack.c.bf16 %v7417, %v7416
      %v7449 = vpack.c.bf16 %v7419, %v7418
      %v7450 = vpack.c.bf16 %v7421, %v7420
      %v7451 = vpack.c.bf16 %v7423, %v7422
      %v7452 = vpack.c.bf16 %v7425, %v7424
      %v7453 = vpack.c.bf16 %v7427, %v7426
      %v7454 = vpack.c.bf16 %v7429, %v7428
      %v7455 = vpack.c.bf16 %v7431, %v7430
      %v7456 = vpack.c.bf16 %v7433, %v7432
      %v7457 = vpack.c.bf16 %v7435, %v7434
      %v7458 = vpack.c.bf16 %v7437, %v7436
      %v7459 = vpack.c.bf16 %v7439, %v7438
      %v7460 = vpack.c.bf16 %v7441, %v7440
      %v7461 = vpack.c.bf16 %v7443, %v7442
      %v7462 = vpack.c.bf16 %v7445, %v7444
      %v7463 = vpack.c.bf16 %v7447, %v7446
      %7464 = vst.msk [vmem:[#allocation2] sm:$0xff] %vm552, %v7448
      %7465 = vst.msk [vmem:[#allocation2 + $0x18] sm:$0xff] %vm552, %v7449
      %7466 = vst.msk [vmem:[#allocation2 + $0x30] sm:$0xff] %vm552, %v7450
      %7467 = vst.msk [vmem:[#allocation2 + $0x48] sm:$0xff] %vm552, %v7451
      %7468 = vst.msk [vmem:[#allocation2 + $0x60] sm:$0xff] %vm552, %v7452
      %7469 = vst.msk [vmem:[#allocation2 + $0x78] sm:$0xff] %vm552, %v7453
      %7470 = vst.msk [vmem:[#allocation2 + $0x90] sm:$0xff] %vm552, %v7454
      %7471 = vst.msk [vmem:[#allocation2 + $0xa8] sm:$0xff] %vm552, %v7455
      %7472 = vst.msk [vmem:[#allocation2 + $0xc0] sm:$0xff] %vm552, %v7456
      %7473 = vst.msk [vmem:[#allocation2 + $0xd8] sm:$0xff] %vm552, %v7457
      %7474 = vst.msk [vmem:[#allocation2 + $0xf0] sm:$0xff] %vm552, %v7458
      %7475 = vst.msk [vmem:[#allocation2 + $0x108] sm:$0xff] %vm552, %v7459
      %7476 = vst.msk [vmem:[#allocation2 + $0x120] sm:$0xff] %vm552, %v7460
      %7477 = vst.msk [vmem:[#allocation2 + $0x138] sm:$0xff] %vm552, %v7461
      %7478 = vst.msk [vmem:[#allocation2 + $0x150] sm:$0xff] %vm552, %v7462
      %7479 = vst.msk [vmem:[#allocation2 + $0x168] sm:$0xff] %vm552, %v7463
      %v7480 = vld [vmem:[#allocation13 + $0x1] sm:$0xff]
      %v7481 = vld [vmem:[#allocation13 + $0x9] sm:$0xff]
      %v7482 = vld [vmem:[#allocation13 + $0x19] sm:$0xff]
      %v7483 = vld [vmem:[#allocation13 + $0x21] sm:$0xff]
      %v7484 = vld [vmem:[#allocation13 + $0x31] sm:$0xff]
      %v7485 = vld [vmem:[#allocation13 + $0x39] sm:$0xff]
      %v7486 = vld [vmem:[#allocation13 + $0x49] sm:$0xff]
      %v7487 = vld [vmem:[#allocation13 + $0x51] sm:$0xff]
      %v7488 = vld [vmem:[#allocation13 + $0x61] sm:$0xff]
      %v7489 = vld [vmem:[#allocation13 + $0x69] sm:$0xff]
      %v7490 = vld [vmem:[#allocation13 + $0x79] sm:$0xff]
      %v7491 = vld [vmem:[#allocation13 + $0x81] sm:$0xff]
      %v7492 = vld [vmem:[#allocation13 + $0x91] sm:$0xff]
      %v7493 = vld [vmem:[#allocation13 + $0x99] sm:$0xff]
      %v7494 = vld [vmem:[#allocation13 + $0xa9] sm:$0xff]
      %v7495 = vld [vmem:[#allocation13 + $0xb1] sm:$0xff]
      %v7496 = vld [vmem:[#allocation13 + $0xc1] sm:$0xff]
      %v7497 = vld [vmem:[#allocation13 + $0xc9] sm:$0xff]
      %v7498 = vld [vmem:[#allocation13 + $0xd9] sm:$0xff]
      %v7499 = vld [vmem:[#allocation13 + $0xe1] sm:$0xff]
      %v7500 = vld [vmem:[#allocation13 + $0xf1] sm:$0xff]
      %v7501 = vld [vmem:[#allocation13 + $0xf9] sm:$0xff]
      %v7502 = vld [vmem:[#allocation13 + $0x109] sm:$0xff]
      %v7503 = vld [vmem:[#allocation13 + $0x111] sm:$0xff]
      %v7504 = vld [vmem:[#allocation13 + $0x121] sm:$0xff]
      %v7505 = vld [vmem:[#allocation13 + $0x129] sm:$0xff]
      %v7506 = vld [vmem:[#allocation13 + $0x139] sm:$0xff]
      %v7507 = vld [vmem:[#allocation13 + $0x141] sm:$0xff]
      %v7508 = vld [vmem:[#allocation13 + $0x151] sm:$0xff]
      %v7509 = vld [vmem:[#allocation13 + $0x159] sm:$0xff]
      %v7510 = vld [vmem:[#allocation13 + $0x169] sm:$0xff]
      %v7511 = vld [vmem:[#allocation13 + $0x171] sm:$0xff]
      %v7512 = vpack.c.bf16 %v7481, %v7480
      %v7513 = vpack.c.bf16 %v7483, %v7482
      %v7514 = vpack.c.bf16 %v7485, %v7484
      %v7515 = vpack.c.bf16 %v7487, %v7486
      %v7516 = vpack.c.bf16 %v7489, %v7488
      %v7517 = vpack.c.bf16 %v7491, %v7490
      %v7518 = vpack.c.bf16 %v7493, %v7492
      %v7519 = vpack.c.bf16 %v7495, %v7494
      %v7520 = vpack.c.bf16 %v7497, %v7496
      %v7521 = vpack.c.bf16 %v7499, %v7498
      %v7522 = vpack.c.bf16 %v7501, %v7500
      %v7523 = vpack.c.bf16 %v7503, %v7502
      %v7524 = vpack.c.bf16 %v7505, %v7504
      %v7525 = vpack.c.bf16 %v7507, %v7506
      %v7526 = vpack.c.bf16 %v7509, %v7508
      %v7527 = vpack.c.bf16 %v7511, %v7510
      %7544 = vrot.lane.b32.xlu0 %v7512, 8
      %v7545 = vpop.permute.xlu0 %7544
      %7546 = vrot.lane.b32.xlu0 %v7513, 8
      %v7547 = vpop.permute.xlu0 %7546
      %7548 = vrot.lane.b32.xlu0 %v7514, 8
      %v7549 = vpop.permute.xlu0 %7548
      %7550 = vrot.lane.b32.xlu0 %v7515, 8
      %v7551 = vpop.permute.xlu0 %7550
      %7552 = vrot.lane.b32.xlu0 %v7516, 8
      %v7553 = vpop.permute.xlu0 %7552
      %7554 = vrot.lane.b32.xlu0 %v7517, 8
      %v7555 = vpop.permute.xlu0 %7554
      %7556 = vrot.lane.b32.xlu0 %v7518, 8
      %v7557 = vpop.permute.xlu0 %7556
      %7558 = vrot.lane.b32.xlu0 %v7519, 8
      %v7559 = vpop.permute.xlu0 %7558
      %7560 = vrot.lane.b32.xlu0 %v7520, 8
      %v7561 = vpop.permute.xlu0 %7560
      %7562 = vrot.lane.b32.xlu0 %v7521, 8
      %v7563 = vpop.permute.xlu0 %7562
      %7564 = vrot.lane.b32.xlu0 %v7522, 8
      %v7565 = vpop.permute.xlu0 %7564
      %7566 = vrot.lane.b32.xlu0 %v7523, 8
      %v7567 = vpop.permute.xlu0 %7566
      %7568 = vrot.lane.b32.xlu0 %v7524, 8
      %v7569 = vpop.permute.xlu0 %7568
      %7570 = vrot.lane.b32.xlu0 %v7525, 8
      %v7571 = vpop.permute.xlu0 %7570
      %7572 = vrot.lane.b32.xlu0 %v7526, 8
      %v7573 = vpop.permute.xlu0 %7572
      %7574 = vrot.lane.b32.xlu0 %v7527, 8
      %v7575 = vpop.permute.xlu0 %7574
      %7592 = vst.msk [vmem:[#allocation2] sm:$0xff] %vm2384, %v7545
      %7593 = vst.msk [vmem:[#allocation2 + $0x18] sm:$0xff] %vm2384, %v7547
      %7594 = vst.msk [vmem:[#allocation2 + $0x30] sm:$0xff] %vm2384, %v7549
      %7595 = vst.msk [vmem:[#allocation2 + $0x48] sm:$0xff] %vm2384, %v7551
      %7596 = vst.msk [vmem:[#allocation2 + $0x60] sm:$0xff] %vm2384, %v7553
      %7597 = vst.msk [vmem:[#allocation2 + $0x78] sm:$0xff] %vm2384, %v7555
      %7598 = vst.msk [vmem:[#allocation2 + $0x90] sm:$0xff] %vm2384, %v7557
      %7599 = vst.msk [vmem:[#allocation2 + $0xa8] sm:$0xff] %vm2384, %v7559
      %7600 = vst.msk [vmem:[#allocation2 + $0xc0] sm:$0xff] %vm2384, %v7561
      %7601 = vst.msk [vmem:[#allocation2 + $0xd8] sm:$0xff] %vm2384, %v7563
      %7602 = vst.msk [vmem:[#allocation2 + $0xf0] sm:$0xff] %vm2384, %v7565
      %7603 = vst.msk [vmem:[#allocation2 + $0x108] sm:$0xff] %vm2384, %v7567
      %7604 = vst.msk [vmem:[#allocation2 + $0x120] sm:$0xff] %vm2384, %v7569
      %7605 = vst.msk [vmem:[#allocation2 + $0x138] sm:$0xff] %vm2384, %v7571
      %7606 = vst.msk [vmem:[#allocation2 + $0x150] sm:$0xff] %vm2384, %v7573
      %7607 = vst.msk [vmem:[#allocation2 + $0x168] sm:$0xff] %vm2384, %v7575
      %v7608 = vld [vmem:[#allocation13 + $0x2] sm:$0xff]
      %v7609 = vld [vmem:[#allocation13 + $0xa] sm:$0xff]
      %v7610 = vld [vmem:[#allocation13 + $0x1a] sm:$0xff]
      %v7611 = vld [vmem:[#allocation13 + $0x22] sm:$0xff]
      %v7612 = vld [vmem:[#allocation13 + $0x32] sm:$0xff]
      %v7613 = vld [vmem:[#allocation13 + $0x3a] sm:$0xff]
      %v7614 = vld [vmem:[#allocation13 + $0x4a] sm:$0xff]
      %v7615 = vld [vmem:[#allocation13 + $0x52] sm:$0xff]
      %v7616 = vld [vmem:[#allocation13 + $0x62] sm:$0xff]
      %v7617 = vld [vmem:[#allocation13 + $0x6a] sm:$0xff]
      %v7618 = vld [vmem:[#allocation13 + $0x7a] sm:$0xff]
      %v7619 = vld [vmem:[#allocation13 + $0x82] sm:$0xff]
      %v7620 = vld [vmem:[#allocation13 + $0x92] sm:$0xff]
      %v7621 = vld [vmem:[#allocation13 + $0x9a] sm:$0xff]
      %v7622 = vld [vmem:[#allocation13 + $0xaa] sm:$0xff]
      %v7623 = vld [vmem:[#allocation13 + $0xb2] sm:$0xff]
      %v7624 = vld [vmem:[#allocation13 + $0xc2] sm:$0xff]
      %v7625 = vld [vmem:[#allocation13 + $0xca] sm:$0xff]
      %v7626 = vld [vmem:[#allocation13 + $0xda] sm:$0xff]
      %v7627 = vld [vmem:[#allocation13 + $0xe2] sm:$0xff]
      %v7628 = vld [vmem:[#allocation13 + $0xf2] sm:$0xff]
      %v7629 = vld [vmem:[#allocation13 + $0xfa] sm:$0xff]
      %v7630 = vld [vmem:[#allocation13 + $0x10a] sm:$0xff]
      %v7631 = vld [vmem:[#allocation13 + $0x112] sm:$0xff]
      %v7632 = vld [vmem:[#allocation13 + $0x122] sm:$0xff]
      %v7633 = vld [vmem:[#allocation13 + $0x12a] sm:$0xff]
      %v7634 = vld [vmem:[#allocation13 + $0x13a] sm:$0xff]
      %v7635 = vld [vmem:[#allocation13 + $0x142] sm:$0xff]
      %v7636 = vld [vmem:[#allocation13 + $0x152] sm:$0xff]
      %v7637 = vld [vmem:[#allocation13 + $0x15a] sm:$0xff]
      %v7638 = vld [vmem:[#allocation13 + $0x16a] sm:$0xff]
      %v7639 = vld [vmem:[#allocation13 + $0x172] sm:$0xff]
      %v7640 = vpack.c.bf16 %v7609, %v7608
      %v7641 = vpack.c.bf16 %v7611, %v7610
      %v7642 = vpack.c.bf16 %v7613, %v7612
      %v7643 = vpack.c.bf16 %v7615, %v7614
      %v7644 = vpack.c.bf16 %v7617, %v7616
      %v7645 = vpack.c.bf16 %v7619, %v7618
      %v7646 = vpack.c.bf16 %v7621, %v7620
      %v7647 = vpack.c.bf16 %v7623, %v7622
      %v7648 = vpack.c.bf16 %v7625, %v7624
      %v7649 = vpack.c.bf16 %v7627, %v7626
      %v7650 = vpack.c.bf16 %v7629, %v7628
      %v7651 = vpack.c.bf16 %v7631, %v7630
      %v7652 = vpack.c.bf16 %v7633, %v7632
      %v7653 = vpack.c.bf16 %v7635, %v7634
      %v7654 = vpack.c.bf16 %v7637, %v7636
      %v7655 = vpack.c.bf16 %v7639, %v7638
      %7672 = vrot.lane.b32.xlu0 %v7640, 16
      %v7673 = vpop.permute.xlu0 %7672
      %7674 = vrot.lane.b32.xlu0 %v7641, 16
      %v7675 = vpop.permute.xlu0 %7674
      %7676 = vrot.lane.b32.xlu0 %v7642, 16
      %v7677 = vpop.permute.xlu0 %7676
      %7678 = vrot.lane.b32.xlu0 %v7643, 16
      %v7679 = vpop.permute.xlu0 %7678
      %7680 = vrot.lane.b32.xlu0 %v7644, 16
      %v7681 = vpop.permute.xlu0 %7680
      %7682 = vrot.lane.b32.xlu0 %v7645, 16
      %v7683 = vpop.permute.xlu0 %7682
      %7684 = vrot.lane.b32.xlu0 %v7646, 16
      %v7685 = vpop.permute.xlu0 %7684
      %7686 = vrot.lane.b32.xlu0 %v7647, 16
      %v7687 = vpop.permute.xlu0 %7686
      %7688 = vrot.lane.b32.xlu0 %v7648, 16
      %v7689 = vpop.permute.xlu0 %7688
      %7690 = vrot.lane.b32.xlu0 %v7649, 16
      %v7691 = vpop.permute.xlu0 %7690
      %7692 = vrot.lane.b32.xlu0 %v7650, 16
      %v7693 = vpop.permute.xlu0 %7692
      %7694 = vrot.lane.b32.xlu0 %v7651, 16
      %v7695 = vpop.permute.xlu0 %7694
      %7696 = vrot.lane.b32.xlu0 %v7652, 16
      %v7697 = vpop.permute.xlu0 %7696
      %7698 = vrot.lane.b32.xlu0 %v7653, 16
      %v7699 = vpop.permute.xlu0 %7698
      %7700 = vrot.lane.b32.xlu0 %v7654, 16
      %v7701 = vpop.permute.xlu0 %7700
      %7702 = vrot.lane.b32.xlu0 %v7655, 16
      %v7703 = vpop.permute.xlu0 %7702
      %7720 = vst.msk [vmem:[#allocation2] sm:$0xff] %vm2417, %v7673
      %7721 = vst.msk [vmem:[#allocation2 + $0x18] sm:$0xff] %vm2417, %v7675
      %7722 = vst.msk [vmem:[#allocation2 + $0x30] sm:$0xff] %vm2417, %v7677
      %7723 = vst.msk [vmem:[#allocation2 + $0x48] sm:$0xff] %vm2417, %v7679
      %7724 = vst.msk [vmem:[#allocation2 + $0x60] sm:$0xff] %vm2417, %v7681
      %7725 = vst.msk [vmem:[#allocation2 + $0x78] sm:$0xff] %vm2417, %v7683
      %7726 = vst.msk [vmem:[#allocation2 + $0x90] sm:$0xff] %vm2417, %v7685
      %7727 = vst.msk [vmem:[#allocation2 + $0xa8] sm:$0xff] %vm2417, %v7687
      %7728 = vst.msk [vmem:[#allocation2 + $0xc0] sm:$0xff] %vm2417, %v7689
      %7729 = vst.msk [vmem:[#allocation2 + $0xd8] sm:$0xff] %vm2417, %v7691
      %7730 = vst.msk [vmem:[#allocation2 + $0xf0] sm:$0xff] %vm2417, %v7693
      %7731 = vst.msk [vmem:[#allocation2 + $0x108] sm:$0xff] %vm2417, %v7695
      %7732 = vst.msk [vmem:[#allocation2 + $0x120] sm:$0xff] %vm2417, %v7697
      %7733 = vst.msk [vmem:[#allocation2 + $0x138] sm:$0xff] %vm2417, %v7699
      %7734 = vst.msk [vmem:[#allocation2 + $0x150] sm:$0xff] %vm2417, %v7701
      %7735 = vst.msk [vmem:[#allocation2 + $0x168] sm:$0xff] %vm2417, %v7703
      %v7736 = vld [vmem:[%s7383] sm:$0xff]
      %v7737 = vld [vmem:[%s7383 + $0x8] sm:$0xff]
      %v7738 = vld [vmem:[%s7383 + $0x18] sm:$0xff]
      %v7739 = vld [vmem:[%s7383 + $0x20] sm:$0xff]
      %v7740 = vld [vmem:[%s7383 + $0x30] sm:$0xff]
      %v7741 = vld [vmem:[%s7383 + $0x38] sm:$0xff]
      %v7742 = vld [vmem:[%s7383 + $0x48] sm:$0xff]
      %v7743 = vld [vmem:[%s7383 + $0x50] sm:$0xff]
      %v7744 = vld [vmem:[%s7383 + $0x60] sm:$0xff]
      %v7745 = vld [vmem:[%s7383 + $0x68] sm:$0xff]
      %v7746 = vld [vmem:[%s7383 + $0x78] sm:$0xff]
      %v7747 = vld [vmem:[%s7383 + $0x80] sm:$0xff]
      %v7748 = vld [vmem:[%s7383 + $0x90] sm:$0xff]
      %v7749 = vld [vmem:[%s7383 + $0x98] sm:$0xff]
      %v7750 = vld [vmem:[%s7383 + $0xa8] sm:$0xff]
      %v7751 = vld [vmem:[%s7383 + $0xb0] sm:$0xff]
      %v7752 = vld [vmem:[%s7383 + $0xc0] sm:$0xff]
      %v7753 = vld [vmem:[%s7383 + $0xc8] sm:$0xff]
      %v7754 = vld [vmem:[%s7383 + $0xd8] sm:$0xff]
      %v7755 = vld [vmem:[%s7383 + $0xe0] sm:$0xff]
      %v7756 = vld [vmem:[%s7383 + $0xf0] sm:$0xff]
      %v7757 = vld [vmem:[%s7383 + $0xf8] sm:$0xff]
      %v7758 = vld [vmem:[%s7383 + $0x108] sm:$0xff]
      %v7759 = vld [vmem:[%s7383 + $0x110] sm:$0xff]
      %v7760 = vld [vmem:[%s7383 + $0x120] sm:$0xff]
      %v7761 = vld [vmem:[%s7383 + $0x128] sm:$0xff]
      %v7762 = vld [vmem:[%s7383 + $0x138] sm:$0xff]
      %v7763 = vld [vmem:[%s7383 + $0x140] sm:$0xff]
      %v7764 = vld [vmem:[%s7383 + $0x150] sm:$0xff]
      %v7765 = vld [vmem:[%s7383 + $0x158] sm:$0xff]
      %v7766 = vld [vmem:[%s7383 + $0x168] sm:$0xff]
      %v7767 = vld [vmem:[%s7383 + $0x170] sm:$0xff]
      %v7768 = vpack.c.bf16 %v7737, %v7736
      %v7769 = vpack.c.bf16 %v7739, %v7738
      %v7770 = vpack.c.bf16 %v7741, %v7740
      %v7771 = vpack.c.bf16 %v7743, %v7742
      %v7772 = vpack.c.bf16 %v7745, %v7744
      %v7773 = vpack.c.bf16 %v7747, %v7746
      %v7774 = vpack.c.bf16 %v7749, %v7748
      %v7775 = vpack.c.bf16 %v7751, %v7750
      %v7776 = vpack.c.bf16 %v7753, %v7752
      %v7777 = vpack.c.bf16 %v7755, %v7754
      %v7778 = vpack.c.bf16 %v7757, %v7756
      %v7779 = vpack.c.bf16 %v7759, %v7758
      %v7780 = vpack.c.bf16 %v7761, %v7760
      %v7781 = vpack.c.bf16 %v7763, %v7762
      %v7782 = vpack.c.bf16 %v7765, %v7764
      %v7783 = vpack.c.bf16 %v7767, %v7766
      %7800 = vrot.lane.b32.xlu0 %v7768, 24
      %v7801 = vpop.permute.xlu0 %7800
      %7802 = vrot.lane.b32.xlu0 %v7769, 24
      %v7803 = vpop.permute.xlu0 %7802
      %7804 = vrot.lane.b32.xlu0 %v7770, 24
      %v7805 = vpop.permute.xlu0 %7804
      %7806 = vrot.lane.b32.xlu0 %v7771, 24
      %v7807 = vpop.permute.xlu0 %7806
      %7808 = vrot.lane.b32.xlu0 %v7772, 24
      %v7809 = vpop.permute.xlu0 %7808
      %7810 = vrot.lane.b32.xlu0 %v7773, 24
      %v7811 = vpop.permute.xlu0 %7810
      %7812 = vrot.lane.b32.xlu0 %v7774, 24
      %v7813 = vpop.permute.xlu0 %7812
      %7814 = vrot.lane.b32.xlu0 %v7775, 24
      %v7815 = vpop.permute.xlu0 %7814
      %7816 = vrot.lane.b32.xlu0 %v7776, 24
      %v7817 = vpop.permute.xlu0 %7816
      %7818 = vrot.lane.b32.xlu0 %v7777, 24
      %v7819 = vpop.permute.xlu0 %7818
      %7820 = vrot.lane.b32.xlu0 %v7778, 24
      %v7821 = vpop.permute.xlu0 %7820
      %7822 = vrot.lane.b32.xlu0 %v7779, 24
      %v7823 = vpop.permute.xlu0 %7822
      %7824 = vrot.lane.b32.xlu0 %v7780, 24
      %v7825 = vpop.permute.xlu0 %7824
      %7826 = vrot.lane.b32.xlu0 %v7781, 24
      %v7827 = vpop.permute.xlu0 %7826
      %7828 = vrot.lane.b32.xlu0 %v7782, 24
      %v7829 = vpop.permute.xlu0 %7828
      %7830 = vrot.lane.b32.xlu0 %v7783, 24
      %v7831 = vpop.permute.xlu0 %7830
      %7848 = vst.msk [vmem:[#allocation2] sm:$0xff] %vm2450, %v7801
      %7849 = vst.msk [vmem:[#allocation2 + $0x18] sm:$0xff] %vm2450, %v7803
      %7850 = vst.msk [vmem:[#allocation2 + $0x30] sm:$0xff] %vm2450, %v7805
      %7851 = vst.msk [vmem:[#allocation2 + $0x48] sm:$0xff] %vm2450, %v7807
      %7852 = vst.msk [vmem:[#allocation2 + $0x60] sm:$0xff] %vm2450, %v7809
      %7853 = vst.msk [vmem:[#allocation2 + $0x78] sm:$0xff] %vm2450, %v7811
      %7854 = vst.msk [vmem:[#allocation2 + $0x90] sm:$0xff] %vm2450, %v7813
      %7855 = vst.msk [vmem:[#allocation2 + $0xa8] sm:$0xff] %vm2450, %v7815
      %7856 = vst.msk [vmem:[#allocation2 + $0xc0] sm:$0xff] %vm2450, %v7817
      %7857 = vst.msk [vmem:[#allocation2 + $0xd8] sm:$0xff] %vm2450, %v7819
      %7858 = vst.msk [vmem:[#allocation2 + $0xf0] sm:$0xff] %vm2450, %v7821
      %7859 = vst.msk [vmem:[#allocation2 + $0x108] sm:$0xff] %vm2450, %v7823
      %7860 = vst.msk [vmem:[#allocation2 + $0x120] sm:$0xff] %vm2450, %v7825
      %7861 = vst.msk [vmem:[#allocation2 + $0x138] sm:$0xff] %vm2450, %v7827
      %7862 = vst.msk [vmem:[#allocation2 + $0x150] sm:$0xff] %vm2450, %v7829
      %7863 = vst.msk [vmem:[#allocation2 + $0x168] sm:$0xff] %vm2450, %v7831
      %v7864 = vld [vmem:[%s7383 + $0x1] sm:$0xff]
      %v7865 = vld [vmem:[%s7383 + $0x9] sm:$0xff]
      %v7866 = vld [vmem:[%s7383 + $0x19] sm:$0xff]
      %v7867 = vld [vmem:[%s7383 + $0x21] sm:$0xff]
      %v7868 = vld [vmem:[%s7383 + $0x31] sm:$0xff]
      %v7869 = vld [vmem:[%s7383 + $0x39] sm:$0xff]
      %v7870 = vld [vmem:[%s7383 + $0x49] sm:$0xff]
      %v7871 = vld [vmem:[%s7383 + $0x51] sm:$0xff]
      %v7872 = vld [vmem:[%s7383 + $0x61] sm:$0xff]
      %v7873 = vld [vmem:[%s7383 + $0x69] sm:$0xff]
      %v7874 = vld [vmem:[%s7383 + $0x79] sm:$0xff]
      %v7875 = vld [vmem:[%s7383 + $0x81] sm:$0xff]
      %v7876 = vld [vmem:[%s7383 + $0x91] sm:$0xff]
      %v7877 = vld [vmem:[%s7383 + $0x99] sm:$0xff]
      %v7878 = vld [vmem:[%s7383 + $0xa9] sm:$0xff]
      %v7879 = vld [vmem:[%s7383 + $0xb1] sm:$0xff]
      %v7880 = vld [vmem:[%s7383 + $0xc1] sm:$0xff]
      %v7881 = vld [vmem:[%s7383 + $0xc9] sm:$0xff]
      %v7882 = vld [vmem:[%s7383 + $0xd9] sm:$0xff]
      %v7883 = vld [vmem:[%s7383 + $0xe1] sm:$0xff]
      %v7884 = vld [vmem:[%s7383 + $0xf1] sm:$0xff]
      %v7885 = vld [vmem:[%s7383 + $0xf9] sm:$0xff]
      %v7886 = vld [vmem:[%s7383 + $0x109] sm:$0xff]
      %v7887 = vld [vmem:[%s7383 + $0x111] sm:$0xff]
      %v7888 = vld [vmem:[%s7383 + $0x121] sm:$0xff]
      %v7889 = vld [vmem:[%s7383 + $0x129] sm:$0xff]
      %v7890 = vld [vmem:[%s7383 + $0x139] sm:$0xff]
      %v7891 = vld [vmem:[%s7383 + $0x141] sm:$0xff]
      %v7892 = vld [vmem:[%s7383 + $0x151] sm:$0xff]
      %v7893 = vld [vmem:[%s7383 + $0x159] sm:$0xff]
      %v7894 = vld [vmem:[%s7383 + $0x169] sm:$0xff]
      %v7895 = vld [vmem:[%s7383 + $0x171] sm:$0xff]
      %v7896 = vpack.c.bf16 %v7865, %v7864
      %v7897 = vpack.c.bf16 %v7867, %v7866
      %v7898 = vpack.c.bf16 %v7869, %v7868
      %v7899 = vpack.c.bf16 %v7871, %v7870
      %v7900 = vpack.c.bf16 %v7873, %v7872
      %v7901 = vpack.c.bf16 %v7875, %v7874
      %v7902 = vpack.c.bf16 %v7877, %v7876
      %v7903 = vpack.c.bf16 %v7879, %v7878
      %v7904 = vpack.c.bf16 %v7881, %v7880
      %v7905 = vpack.c.bf16 %v7883, %v7882
      %v7906 = vpack.c.bf16 %v7885, %v7884
      %v7907 = vpack.c.bf16 %v7887, %v7886
      %v7908 = vpack.c.bf16 %v7889, %v7888
      %v7909 = vpack.c.bf16 %v7891, %v7890
      %v7910 = vpack.c.bf16 %v7893, %v7892
      %v7911 = vpack.c.bf16 %v7895, %v7894
      %7928 = vrot.lane.b32.xlu0 %v7896, 32
      %v7929 = vpop.permute.xlu0 %7928
      %7930 = vrot.lane.b32.xlu0 %v7897, 32
      %v7931 = vpop.permute.xlu0 %7930
      %7932 = vrot.lane.b32.xlu0 %v7898, 32
      %v7933 = vpop.permute.xlu0 %7932
      %7934 = vrot.lane.b32.xlu0 %v7899, 32
      %v7935 = vpop.permute.xlu0 %7934
      %7936 = vrot.lane.b32.xlu0 %v7900, 32
      %v7937 = vpop.permute.xlu0 %7936
      %7938 = vrot.lane.b32.xlu0 %v7901, 32
      %v7939 = vpop.permute.xlu0 %7938
      %7940 = vrot.lane.b32.xlu0 %v7902, 32
      %v7941 = vpop.permute.xlu0 %7940
      %7942 = vrot.lane.b32.xlu0 %v7903, 32
      %v7943 = vpop.permute.xlu0 %7942
      %7944 = vrot.lane.b32.xlu0 %v7904, 32
      %v7945 = vpop.permute.xlu0 %7944
      %7946 = vrot.lane.b32.xlu0 %v7905, 32
      %v7947 = vpop.permute.xlu0 %7946
      %7948 = vrot.lane.b32.xlu0 %v7906, 32
      %v7949 = vpop.permute.xlu0 %7948
      %7950 = vrot.lane.b32.xlu0 %v7907, 32
      %v7951 = vpop.permute.xlu0 %7950
      %7952 = vrot.lane.b32.xlu0 %v7908, 32
      %v7953 = vpop.permute.xlu0 %7952
      %7954 = vrot.lane.b32.xlu0 %v7909, 32
      %v7955 = vpop.permute.xlu0 %7954
      %7956 = vrot.lane.b32.xlu0 %v7910, 32
      %v7957 = vpop.permute.xlu0 %7956
      %7958 = vrot.lane.b32.xlu0 %v7911, 32
      %v7959 = vpop.permute.xlu0 %7958
      %7976 = vst.msk [vmem:[#allocation2] sm:$0xff] %vm2483, %v7929
      %7977 = vst.msk [vmem:[#allocation2 + $0x18] sm:$0xff] %vm2483, %v7931
      %7978 = vst.msk [vmem:[#allocation2 + $0x30] sm:$0xff] %vm2483, %v7933
      %7979 = vst.msk [vmem:[#allocation2 + $0x48] sm:$0xff] %vm2483, %v7935
      %7980 = vst.msk [vmem:[#allocation2 + $0x60] sm:$0xff] %vm2483, %v7937
      %7981 = vst.msk [vmem:[#allocation2 + $0x78] sm:$0xff] %vm2483, %v7939
      %7982 = vst.msk [vmem:[#allocation2 + $0x90] sm:$0xff] %vm2483, %v7941
      %7983 = vst.msk [vmem:[#allocation2 + $0xa8] sm:$0xff] %vm2483, %v7943
      %7984 = vst.msk [vmem:[#allocation2 + $0xc0] sm:$0xff] %vm2483, %v7945
      %7985 = vst.msk [vmem:[#allocation2 + $0xd8] sm:$0xff] %vm2483, %v7947
      %7986 = vst.msk [vmem:[#allocation2 + $0xf0] sm:$0xff] %vm2483, %v7949
      %7987 = vst.msk [vmem:[#allocation2 + $0x108] sm:$0xff] %vm2483, %v7951
      %7988 = vst.msk [vmem:[#allocation2 + $0x120] sm:$0xff] %vm2483, %v7953
      %7989 = vst.msk [vmem:[#allocation2 + $0x138] sm:$0xff] %vm2483, %v7955
      %7990 = vst.msk [vmem:[#allocation2 + $0x150] sm:$0xff] %vm2483, %v7957
      %7991 = vst.msk [vmem:[#allocation2 + $0x168] sm:$0xff] %vm2483, %v7959
      %v7992 = vld [vmem:[%s7383 + $0x2] sm:$0xff]
      %v7993 = vld [vmem:[%s7383 + $0xa] sm:$0xff]
      %v7994 = vld [vmem:[%s7383 + $0x1a] sm:$0xff]
      %v7995 = vld [vmem:[%s7383 + $0x22] sm:$0xff]
      %v7996 = vld [vmem:[%s7383 + $0x32] sm:$0xff]
      %v7997 = vld [vmem:[%s7383 + $0x3a] sm:$0xff]
      %v7998 = vld [vmem:[%s7383 + $0x4a] sm:$0xff]
      %v7999 = vld [vmem:[%s7383 + $0x52] sm:$0xff]
      %v8000 = vld [vmem:[%s7383 + $0x62] sm:$0xff]
      %v8001 = vld [vmem:[%s7383 + $0x6a] sm:$0xff]
      %v8002 = vld [vmem:[%s7383 + $0x7a] sm:$0xff]
      %v8003 = vld [vmem:[%s7383 + $0x82] sm:$0xff]
      %v8004 = vld [vmem:[%s7383 + $0x92] sm:$0xff]
      %v8005 = vld [vmem:[%s7383 + $0x9a] sm:$0xff]
      %v8006 = vld [vmem:[%s7383 + $0xaa] sm:$0xff]
      %v8007 = vld [vmem:[%s7383 + $0xb2] sm:$0xff]
      %v8008 = vld [vmem:[%s7383 + $0xc2] sm:$0xff]
      %v8009 = vld [vmem:[%s7383 + $0xca] sm:$0xff]
      %v8010 = vld [vmem:[%s7383 + $0xda] sm:$0xff]
      %v8011 = vld [vmem:[%s7383 + $0xe2] sm:$0xff]
      %v8012 = vld [vmem:[%s7383 + $0xf2] sm:$0xff]
      %v8013 = vld [vmem:[%s7383 + $0xfa] sm:$0xff]
      %v8014 = vld [vmem:[%s7383 + $0x10a] sm:$0xff]
      %v8015 = vld [vmem:[%s7383 + $0x112] sm:$0xff]
      %v8016 = vld [vmem:[%s7383 + $0x122] sm:$0xff]
      %v8017 = vld [vmem:[%s7383 + $0x12a] sm:$0xff]
      %v8018 = vld [vmem:[%s7383 + $0x13a] sm:$0xff]
      %v8019 = vld [vmem:[%s7383 + $0x142] sm:$0xff]
      %v8020 = vld [vmem:[%s7383 + $0x152] sm:$0xff]
      %v8021 = vld [vmem:[%s7383 + $0x15a] sm:$0xff]
      %v8022 = vld [vmem:[%s7383 + $0x16a] sm:$0xff]
      %v8023 = vld [vmem:[%s7383 + $0x172] sm:$0xff]
      %v8024 = vpack.c.bf16 %v7993, %v7992
      %v8025 = vpack.c.bf16 %v7995, %v7994
      %v8026 = vpack.c.bf16 %v7997, %v7996
      %v8027 = vpack.c.bf16 %v7999, %v7998
      %v8028 = vpack.c.bf16 %v8001, %v8000
      %v8029 = vpack.c.bf16 %v8003, %v8002
      %v8030 = vpack.c.bf16 %v8005, %v8004
      %v8031 = vpack.c.bf16 %v8007, %v8006
      %v8032 = vpack.c.bf16 %v8009, %v8008
      %v8033 = vpack.c.bf16 %v8011, %v8010
      %v8034 = vpack.c.bf16 %v8013, %v8012
      %v8035 = vpack.c.bf16 %v8015, %v8014
      %v8036 = vpack.c.bf16 %v8017, %v8016
      %v8037 = vpack.c.bf16 %v8019, %v8018
      %v8038 = vpack.c.bf16 %v8021, %v8020
      %v8039 = vpack.c.bf16 %v8023, %v8022
      %8056 = vrot.lane.b32.xlu0 %v8024, 40
      %v8057 = vpop.permute.xlu0 %8056
      %8058 = vrot.lane.b32.xlu0 %v8025, 40
      %v8059 = vpop.permute.xlu0 %8058
      %8060 = vrot.lane.b32.xlu0 %v8026, 40
      %v8061 = vpop.permute.xlu0 %8060
      %8062 = vrot.lane.b32.xlu0 %v8027, 40
      %v8063 = vpop.permute.xlu0 %8062
      %8064 = vrot.lane.b32.xlu0 %v8028, 40
      %v8065 = vpop.permute.xlu0 %8064
      %8066 = vrot.lane.b32.xlu0 %v8029, 40
      %v8067 = vpop.permute.xlu0 %8066
      %8068 = vrot.lane.b32.xlu0 %v8030, 40
      %v8069 = vpop.permute.xlu0 %8068
      %8070 = vrot.lane.b32.xlu0 %v8031, 40
      %v8071 = vpop.permute.xlu0 %8070
      %8072 = vrot.lane.b32.xlu0 %v8032, 40
      %v8073 = vpop.permute.xlu0 %8072
      %8074 = vrot.lane.b32.xlu0 %v8033, 40
      %v8075 = vpop.permute.xlu0 %8074
      %8076 = vrot.lane.b32.xlu0 %v8034, 40
      %v8077 = vpop.permute.xlu0 %8076
      %8078 = vrot.lane.b32.xlu0 %v8035, 40
      %v8079 = vpop.permute.xlu0 %8078
      %8080 = vrot.lane.b32.xlu0 %v8036, 40
      %v8081 = vpop.permute.xlu0 %8080
      %8082 = vrot.lane.b32.xlu0 %v8037, 40
      %v8083 = vpop.permute.xlu0 %8082
      %8084 = vrot.lane.b32.xlu0 %v8038, 40
      %v8085 = vpop.permute.xlu0 %8084
      %8086 = vrot.lane.b32.xlu0 %v8039, 40
      %v8087 = vpop.permute.xlu0 %8086
      %8104 = vst.msk [vmem:[#allocation2] sm:$0xff] %vm2516, %v8057
      %8105 = vst.msk [vmem:[#allocation2 + $0x18] sm:$0xff] %vm2516, %v8059
      %8106 = vst.msk [vmem:[#allocation2 + $0x30] sm:$0xff] %vm2516, %v8061
      %8107 = vst.msk [vmem:[#allocation2 + $0x48] sm:$0xff] %vm2516, %v8063
      %8108 = vst.msk [vmem:[#allocation2 + $0x60] sm:$0xff] %vm2516, %v8065
      %8109 = vst.msk [vmem:[#allocation2 + $0x78] sm:$0xff] %vm2516, %v8067
      %8110 = vst.msk [vmem:[#allocation2 + $0x90] sm:$0xff] %vm2516, %v8069
      %8111 = vst.msk [vmem:[#allocation2 + $0xa8] sm:$0xff] %vm2516, %v8071
      %8112 = vst.msk [vmem:[#allocation2 + $0xc0] sm:$0xff] %vm2516, %v8073
      %8113 = vst.msk [vmem:[#allocation2 + $0xd8] sm:$0xff] %vm2516, %v8075
      %8114 = vst.msk [vmem:[#allocation2 + $0xf0] sm:$0xff] %vm2516, %v8077
      %8115 = vst.msk [vmem:[#allocation2 + $0x108] sm:$0xff] %vm2516, %v8079
      %8116 = vst.msk [vmem:[#allocation2 + $0x120] sm:$0xff] %vm2516, %v8081
      %8117 = vst.msk [vmem:[#allocation2 + $0x138] sm:$0xff] %vm2516, %v8083
      %8118 = vst.msk [vmem:[#allocation2 + $0x150] sm:$0xff] %vm2516, %v8085
      %8119 = vst.msk [vmem:[#allocation2 + $0x168] sm:$0xff] %vm2516, %v8087
      %s8120 = scalar_lea.vmem [#allocation13], 48
      %v8121 = vld [vmem:[%s8120] sm:$0xff]
      %v8122 = vld [vmem:[%s8120 + $0x8] sm:$0xff]
      %v8123 = vld [vmem:[%s8120 + $0x18] sm:$0xff]
      %v8124 = vld [vmem:[%s8120 + $0x20] sm:$0xff]
      %v8125 = vld [vmem:[%s8120 + $0x30] sm:$0xff]
      %v8126 = vld [vmem:[%s8120 + $0x38] sm:$0xff]
      %v8127 = vld [vmem:[%s8120 + $0x48] sm:$0xff]
      %v8128 = vld [vmem:[%s8120 + $0x50] sm:$0xff]
      %v8129 = vld [vmem:[%s8120 + $0x60] sm:$0xff]
      %v8130 = vld [vmem:[%s8120 + $0x68] sm:$0xff]
      %v8131 = vld [vmem:[%s8120 + $0x78] sm:$0xff]
      %v8132 = vld [vmem:[%s8120 + $0x80] sm:$0xff]
      %v8133 = vld [vmem:[%s8120 + $0x90] sm:$0xff]
      %v8134 = vld [vmem:[%s8120 + $0x98] sm:$0xff]
      %v8135 = vld [vmem:[%s8120 + $0xa8] sm:$0xff]
      %v8136 = vld [vmem:[%s8120 + $0xb0] sm:$0xff]
      %v8137 = vld [vmem:[%s8120 + $0xc0] sm:$0xff]
      %v8138 = vld [vmem:[%s8120 + $0xc8] sm:$0xff]
      %v8139 = vld [vmem:[%s8120 + $0xd8] sm:$0xff]
      %v8140 = vld [vmem:[%s8120 + $0xe0] sm:$0xff]
      %v8141 = vld [vmem:[%s8120 + $0xf0] sm:$0xff]
      %v8142 = vld [vmem:[%s8120 + $0xf8] sm:$0xff]
      %v8143 = vld [vmem:[%s8120 + $0x108] sm:$0xff]
      %v8144 = vld [vmem:[%s8120 + $0x110] sm:$0xff]
      %v8145 = vld [vmem:[%s8120 + $0x120] sm:$0xff]
      %v8146 = vld [vmem:[%s8120 + $0x128] sm:$0xff]
      %v8147 = vld [vmem:[%s8120 + $0x138] sm:$0xff]
      %v8148 = vld [vmem:[%s8120 + $0x140] sm:$0xff]
      %v8149 = vld [vmem:[%s8120 + $0x150] sm:$0xff]
      %v8150 = vld [vmem:[%s8120 + $0x158] sm:$0xff]
      %v8151 = vld [vmem:[%s8120 + $0x168] sm:$0xff]
      %v8152 = vld [vmem:[%s8120 + $0x170] sm:$0xff]
      %v8153 = vpack.c.bf16 %v8122, %v8121
      %v8154 = vpack.c.bf16 %v8124, %v8123
      %v8155 = vpack.c.bf16 %v8126, %v8125
      %v8156 = vpack.c.bf16 %v8128, %v8127
      %v8157 = vpack.c.bf16 %v8130, %v8129
      %v8158 = vpack.c.bf16 %v8132, %v8131
      %v8159 = vpack.c.bf16 %v8134, %v8133
      %v8160 = vpack.c.bf16 %v8136, %v8135
      %v8161 = vpack.c.bf16 %v8138, %v8137
      %v8162 = vpack.c.bf16 %v8140, %v8139
      %v8163 = vpack.c.bf16 %v8142, %v8141
      %v8164 = vpack.c.bf16 %v8144, %v8143
      %v8165 = vpack.c.bf16 %v8146, %v8145
      %v8166 = vpack.c.bf16 %v8148, %v8147
      %v8167 = vpack.c.bf16 %v8150, %v8149
      %v8168 = vpack.c.bf16 %v8152, %v8151
      %8185 = vrot.lane.b32.xlu0 %v8153, 48
      %v8186 = vpop.permute.xlu0 %8185
      %8187 = vrot.lane.b32.xlu0 %v8154, 48
      %v8188 = vpop.permute.xlu0 %8187
      %8189 = vrot.lane.b32.xlu0 %v8155, 48
      %v8190 = vpop.permute.xlu0 %8189
      %8191 = vrot.lane.b32.xlu0 %v8156, 48
      %v8192 = vpop.permute.xlu0 %8191
      %8193 = vrot.lane.b32.xlu0 %v8157, 48
      %v8194 = vpop.permute.xlu0 %8193
      %8195 = vrot.lane.b32.xlu0 %v8158, 48
      %v8196 = vpop.permute.xlu0 %8195
      %8197 = vrot.lane.b32.xlu0 %v8159, 48
      %v8198 = vpop.permute.xlu0 %8197
      %8199 = vrot.lane.b32.xlu0 %v8160, 48
      %v8200 = vpop.permute.xlu0 %8199
      %8201 = vrot.lane.b32.xlu0 %v8161, 48
      %v8202 = vpop.permute.xlu0 %8201
      %8203 = vrot.lane.b32.xlu0 %v8162, 48
      %v8204 = vpop.permute.xlu0 %8203
      %8205 = vrot.lane.b32.xlu0 %v8163, 48
      %v8206 = vpop.permute.xlu0 %8205
      %8207 = vrot.lane.b32.xlu0 %v8164, 48
      %v8208 = vpop.permute.xlu0 %8207
      %8209 = vrot.lane.b32.xlu0 %v8165, 48
      %v8210 = vpop.permute.xlu0 %8209
      %8211 = vrot.lane.b32.xlu0 %v8166, 48
      %v8212 = vpop.permute.xlu0 %8211
      %8213 = vrot.lane.b32.xlu0 %v8167, 48
      %v8214 = vpop.permute.xlu0 %8213
      %8215 = vrot.lane.b32.xlu0 %v8168, 48
      %v8216 = vpop.permute.xlu0 %8215
      %8233 = vst.msk [vmem:[#allocation2] sm:$0xff] %vm2550, %v8186
      %8234 = vst.msk [vmem:[#allocation2 + $0x18] sm:$0xff] %vm2550, %v8188
      %8235 = vst.msk [vmem:[#allocation2 + $0x30] sm:$0xff] %vm2550, %v8190
      %8236 = vst.msk [vmem:[#allocation2 + $0x48] sm:$0xff] %vm2550, %v8192
      %8237 = vst.msk [vmem:[#allocation2 + $0x60] sm:$0xff] %vm2550, %v8194
      %8238 = vst.msk [vmem:[#allocation2 + $0x78] sm:$0xff] %vm2550, %v8196
      %8239 = vst.msk [vmem:[#allocation2 + $0x90] sm:$0xff] %vm2550, %v8198
      %8240 = vst.msk [vmem:[#allocation2 + $0xa8] sm:$0xff] %vm2550, %v8200
      %8241 = vst.msk [vmem:[#allocation2 + $0xc0] sm:$0xff] %vm2550, %v8202
      %8242 = vst.msk [vmem:[#allocation2 + $0xd8] sm:$0xff] %vm2550, %v8204
      %8243 = vst.msk [vmem:[#allocation2 + $0xf0] sm:$0xff] %vm2550, %v8206
      %8244 = vst.msk [vmem:[#allocation2 + $0x108] sm:$0xff] %vm2550, %v8208
      %8245 = vst.msk [vmem:[#allocation2 + $0x120] sm:$0xff] %vm2550, %v8210
      %8246 = vst.msk [vmem:[#allocation2 + $0x138] sm:$0xff] %vm2550, %v8212
      %8247 = vst.msk [vmem:[#allocation2 + $0x150] sm:$0xff] %vm2550, %v8214
      %8248 = vst.msk [vmem:[#allocation2 + $0x168] sm:$0xff] %vm2550, %v8216
      %v8249 = vld [vmem:[%s8120 + $0x1] sm:$0xff]
      %v8250 = vld [vmem:[%s8120 + $0x9] sm:$0xff]
      %v8251 = vld [vmem:[%s8120 + $0x19] sm:$0xff]
      %v8252 = vld [vmem:[%s8120 + $0x21] sm:$0xff]
      %v8253 = vld [vmem:[%s8120 + $0x31] sm:$0xff]
      %v8254 = vld [vmem:[%s8120 + $0x39] sm:$0xff]
      %v8255 = vld [vmem:[%s8120 + $0x49] sm:$0xff]
      %v8256 = vld [vmem:[%s8120 + $0x51] sm:$0xff]
      %v8257 = vld [vmem:[%s8120 + $0x61] sm:$0xff]
      %v8258 = vld [vmem:[%s8120 + $0x69] sm:$0xff]
      %v8259 = vld [vmem:[%s8120 + $0x79] sm:$0xff]
      %v8260 = vld [vmem:[%s8120 + $0x81] sm:$0xff]
      %v8261 = vld [vmem:[%s8120 + $0x91] sm:$0xff]
      %v8262 = vld [vmem:[%s8120 + $0x99] sm:$0xff]
      %v8263 = vld [vmem:[%s8120 + $0xa9] sm:$0xff]
      %v8264 = vld [vmem:[%s8120 + $0xb1] sm:$0xff]
      %v8265 = vld [vmem:[%s8120 + $0xc1] sm:$0xff]
      %v8266 = vld [vmem:[%s8120 + $0xc9] sm:$0xff]
      %v8267 = vld [vmem:[%s8120 + $0xd9] sm:$0xff]
      %v8268 = vld [vmem:[%s8120 + $0xe1] sm:$0xff]
      %v8269 = vld [vmem:[%s8120 + $0xf1] sm:$0xff]
      %v8270 = vld [vmem:[%s8120 + $0xf9] sm:$0xff]
      %v8271 = vld [vmem:[%s8120 + $0x109] sm:$0xff]
      %v8272 = vld [vmem:[%s8120 + $0x111] sm:$0xff]
      %v8273 = vld [vmem:[%s8120 + $0x121] sm:$0xff]
      %v8274 = vld [vmem:[%s8120 + $0x129] sm:$0xff]
      %v8275 = vld [vmem:[%s8120 + $0x139] sm:$0xff]
      %v8276 = vld [vmem:[%s8120 + $0x141] sm:$0xff]
      %v8277 = vld [vmem:[%s8120 + $0x151] sm:$0xff]
      %v8278 = vld [vmem:[%s8120 + $0x159] sm:$0xff]
      %v8279 = vld [vmem:[%s8120 + $0x169] sm:$0xff]
      %v8280 = vld [vmem:[%s8120 + $0x171] sm:$0xff]
      %v8281 = vpack.c.bf16 %v8250, %v8249
      %v8282 = vpack.c.bf16 %v8252, %v8251
      %v8283 = vpack.c.bf16 %v8254, %v8253
      %v8284 = vpack.c.bf16 %v8256, %v8255
      %v8285 = vpack.c.bf16 %v8258, %v8257
      %v8286 = vpack.c.bf16 %v8260, %v8259
      %v8287 = vpack.c.bf16 %v8262, %v8261
      %v8288 = vpack.c.bf16 %v8264, %v8263
      %v8289 = vpack.c.bf16 %v8266, %v8265
      %v8290 = vpack.c.bf16 %v8268, %v8267
      %v8291 = vpack.c.bf16 %v8270, %v8269
      %v8292 = vpack.c.bf16 %v8272, %v8271
      %v8293 = vpack.c.bf16 %v8274, %v8273
      %v8294 = vpack.c.bf16 %v8276, %v8275
      %v8295 = vpack.c.bf16 %v8278, %v8277
      %v8296 = vpack.c.bf16 %v8280, %v8279
      %8313 = vrot.lane.b32.xlu0 %v8281, 56
      %v8314 = vpop.permute.xlu0 %8313
      %8315 = vrot.lane.b32.xlu0 %v8282, 56
      %v8316 = vpop.permute.xlu0 %8315
      %8317 = vrot.lane.b32.xlu0 %v8283, 56
      %v8318 = vpop.permute.xlu0 %8317
      %8319 = vrot.lane.b32.xlu0 %v8284, 56
      %v8320 = vpop.permute.xlu0 %8319
      %8321 = vrot.lane.b32.xlu0 %v8285, 56
      %v8322 = vpop.permute.xlu0 %8321
      %8323 = vrot.lane.b32.xlu0 %v8286, 56
      %v8324 = vpop.permute.xlu0 %8323
      %8325 = vrot.lane.b32.xlu0 %v8287, 56
      %v8326 = vpop.permute.xlu0 %8325
      %8327 = vrot.lane.b32.xlu0 %v8288, 56
      %v8328 = vpop.permute.xlu0 %8327
      %8329 = vrot.lane.b32.xlu0 %v8289, 56
      %v8330 = vpop.permute.xlu0 %8329
      %8331 = vrot.lane.b32.xlu0 %v8290, 56
      %v8332 = vpop.permute.xlu0 %8331
      %8333 = vrot.lane.b32.xlu0 %v8291, 56
      %v8334 = vpop.permute.xlu0 %8333
      %8335 = vrot.lane.b32.xlu0 %v8292, 56
      %v8336 = vpop.permute.xlu0 %8335
      %8337 = vrot.lane.b32.xlu0 %v8293, 56
      %v8338 = vpop.permute.xlu0 %8337
      %8339 = vrot.lane.b32.xlu0 %v8294, 56
      %v8340 = vpop.permute.xlu0 %8339
      %8341 = vrot.lane.b32.xlu0 %v8295, 56
      %v8342 = vpop.permute.xlu0 %8341
      %8343 = vrot.lane.b32.xlu0 %v8296, 56
      %v8344 = vpop.permute.xlu0 %8343
      %8361 = vst.msk [vmem:[#allocation2] sm:$0xff] %vm2583, %v8314
      %8362 = vst.msk [vmem:[#allocation2 + $0x18] sm:$0xff] %vm2583, %v8316
      %8363 = vst.msk [vmem:[#allocation2 + $0x30] sm:$0xff] %vm2583, %v8318
      %8364 = vst.msk [vmem:[#allocation2 + $0x48] sm:$0xff] %vm2583, %v8320
      %8365 = vst.msk [vmem:[#allocation2 + $0x60] sm:$0xff] %vm2583, %v8322
      %8366 = vst.msk [vmem:[#allocation2 + $0x78] sm:$0xff] %vm2583, %v8324
      %8367 = vst.msk [vmem:[#allocation2 + $0x90] sm:$0xff] %vm2583, %v8326
      %8368 = vst.msk [vmem:[#allocation2 + $0xa8] sm:$0xff] %vm2583, %v8328
      %8369 = vst.msk [vmem:[#allocation2 + $0xc0] sm:$0xff] %vm2583, %v8330
      %8370 = vst.msk [vmem:[#allocation2 + $0xd8] sm:$0xff] %vm2583, %v8332
      %8371 = vst.msk [vmem:[#allocation2 + $0xf0] sm:$0xff] %vm2583, %v8334
      %8372 = vst.msk [vmem:[#allocation2 + $0x108] sm:$0xff] %vm2583, %v8336
      %8373 = vst.msk [vmem:[#allocation2 + $0x120] sm:$0xff] %vm2583, %v8338
      %8374 = vst.msk [vmem:[#allocation2 + $0x138] sm:$0xff] %vm2583, %v8340
      %8375 = vst.msk [vmem:[#allocation2 + $0x150] sm:$0xff] %vm2583, %v8342
      %8376 = vst.msk [vmem:[#allocation2 + $0x168] sm:$0xff] %vm2583, %v8344
      %v8377 = vld [vmem:[%s8120 + $0x2] sm:$0xff]
      %v8378 = vld [vmem:[%s8120 + $0xa] sm:$0xff]
      %v8379 = vld [vmem:[%s8120 + $0x1a] sm:$0xff]
      %v8380 = vld [vmem:[%s8120 + $0x22] sm:$0xff]
      %v8381 = vld [vmem:[%s8120 + $0x32] sm:$0xff]
      %v8382 = vld [vmem:[%s8120 + $0x3a] sm:$0xff]
      %v8383 = vld [vmem:[%s8120 + $0x4a] sm:$0xff]
      %v8384 = vld [vmem:[%s8120 + $0x52] sm:$0xff]
      %v8385 = vld [vmem:[%s8120 + $0x62] sm:$0xff]
      %v8386 = vld [vmem:[%s8120 + $0x6a] sm:$0xff]
      %v8387 = vld [vmem:[%s8120 + $0x7a] sm:$0xff]
      %v8388 = vld [vmem:[%s8120 + $0x82] sm:$0xff]
      %v8389 = vld [vmem:[%s8120 + $0x92] sm:$0xff]
      %v8390 = vld [vmem:[%s8120 + $0x9a] sm:$0xff]
      %v8391 = vld [vmem:[%s8120 + $0xaa] sm:$0xff]
      %v8392 = vld [vmem:[%s8120 + $0xb2] sm:$0xff]
      %v8393 = vld [vmem:[%s8120 + $0xc2] sm:$0xff]
      %v8394 = vld [vmem:[%s8120 + $0xca] sm:$0xff]
      %v8395 = vld [vmem:[%s8120 + $0xda] sm:$0xff]
      %v8396 = vld [vmem:[%s8120 + $0xe2] sm:$0xff]
      %v8397 = vld [vmem:[%s8120 + $0xf2] sm:$0xff]
      %v8398 = vld [vmem:[%s8120 + $0xfa] sm:$0xff]
      %v8399 = vld [vmem:[%s8120 + $0x10a] sm:$0xff]
      %v8400 = vld [vmem:[%s8120 + $0x112] sm:$0xff]
      %v8401 = vld [vmem:[%s8120 + $0x122] sm:$0xff]
      %v8402 = vld [vmem:[%s8120 + $0x12a] sm:$0xff]
      %v8403 = vld [vmem:[%s8120 + $0x13a] sm:$0xff]
      %v8404 = vld [vmem:[%s8120 + $0x142] sm:$0xff]
      %v8405 = vld [vmem:[%s8120 + $0x152] sm:$0xff]
      %v8406 = vld [vmem:[%s8120 + $0x15a] sm:$0xff]
      %v8407 = vld [vmem:[%s8120 + $0x16a] sm:$0xff]
      %v8408 = vld [vmem:[%s8120 + $0x172] sm:$0xff]
      %v8409 = vpack.c.bf16 %v8378, %v8377
      %v8410 = vpack.c.bf16 %v8380, %v8379
      %v8411 = vpack.c.bf16 %v8382, %v8381
      %v8412 = vpack.c.bf16 %v8384, %v8383
      %v8413 = vpack.c.bf16 %v8386, %v8385
      %v8414 = vpack.c.bf16 %v8388, %v8387
      %v8415 = vpack.c.bf16 %v8390, %v8389
      %v8416 = vpack.c.bf16 %v8392, %v8391
      %v8417 = vpack.c.bf16 %v8394, %v8393
      %v8418 = vpack.c.bf16 %v8396, %v8395
      %v8419 = vpack.c.bf16 %v8398, %v8397
      %v8420 = vpack.c.bf16 %v8400, %v8399
      %v8421 = vpack.c.bf16 %v8402, %v8401
      %v8422 = vpack.c.bf16 %v8404, %v8403
      %v8423 = vpack.c.bf16 %v8406, %v8405
      %v8424 = vpack.c.bf16 %v8408, %v8407
      %8441 = vrot.lane.b32.xlu0 %v8409, 64
      %v8442 = vpop.permute.xlu0 %8441
      %8443 = vrot.lane.b32.xlu0 %v8410, 64
      %v8444 = vpop.permute.xlu0 %8443
      %8445 = vrot.lane.b32.xlu0 %v8411, 64
      %v8446 = vpop.permute.xlu0 %8445
      %8447 = vrot.lane.b32.xlu0 %v8412, 64
      %v8448 = vpop.permute.xlu0 %8447
      %8449 = vrot.lane.b32.xlu0 %v8413, 64
      %v8450 = vpop.permute.xlu0 %8449
      %8451 = vrot.lane.b32.xlu0 %v8414, 64
      %v8452 = vpop.permute.xlu0 %8451
      %8453 = vrot.lane.b32.xlu0 %v8415, 64
      %v8454 = vpop.permute.xlu0 %8453
      %8455 = vrot.lane.b32.xlu0 %v8416, 64
      %v8456 = vpop.permute.xlu0 %8455
      %8457 = vrot.lane.b32.xlu0 %v8417, 64
      %v8458 = vpop.permute.xlu0 %8457
      %8459 = vrot.lane.b32.xlu0 %v8418, 64
      %v8460 = vpop.permute.xlu0 %8459
      %8461 = vrot.lane.b32.xlu0 %v8419, 64
      %v8462 = vpop.permute.xlu0 %8461
      %8463 = vrot.lane.b32.xlu0 %v8420, 64
      %v8464 = vpop.permute.xlu0 %8463
      %8465 = vrot.lane.b32.xlu0 %v8421, 64
      %v8466 = vpop.permute.xlu0 %8465
      %8467 = vrot.lane.b32.xlu0 %v8422, 64
      %v8468 = vpop.permute.xlu0 %8467
      %8469 = vrot.lane.b32.xlu0 %v8423, 64
      %v8470 = vpop.permute.xlu0 %8469
      %8471 = vrot.lane.b32.xlu0 %v8424, 64
      %v8472 = vpop.permute.xlu0 %8471
      %8489 = vst.msk [vmem:[#allocation2] sm:$0xff] %vm2616, %v8442
      %8490 = vst.msk [vmem:[#allocation2 + $0x18] sm:$0xff] %vm2616, %v8444
      %8491 = vst.msk [vmem:[#allocation2 + $0x30] sm:$0xff] %vm2616, %v8446
      %8492 = vst.msk [vmem:[#allocation2 + $0x48] sm:$0xff] %vm2616, %v8448
      %8493 = vst.msk [vmem:[#allocation2 + $0x60] sm:$0xff] %vm2616, %v8450
      %8494 = vst.msk [vmem:[#allocation2 + $0x78] sm:$0xff] %vm2616, %v8452
      %8495 = vst.msk [vmem:[#allocation2 + $0x90] sm:$0xff] %vm2616, %v8454
      %8496 = vst.msk [vmem:[#allocation2 + $0xa8] sm:$0xff] %vm2616, %v8456
      %8497 = vst.msk [vmem:[#allocation2 + $0xc0] sm:$0xff] %vm2616, %v8458
      %8498 = vst.msk [vmem:[#allocation2 + $0xd8] sm:$0xff] %vm2616, %v8460
      %8499 = vst.msk [vmem:[#allocation2 + $0xf0] sm:$0xff] %vm2616, %v8462
      %8500 = vst.msk [vmem:[#allocation2 + $0x108] sm:$0xff] %vm2616, %v8464
      %8501 = vst.msk [vmem:[#allocation2 + $0x120] sm:$0xff] %vm2616, %v8466
      %8502 = vst.msk [vmem:[#allocation2 + $0x138] sm:$0xff] %vm2616, %v8468
      %8503 = vst.msk [vmem:[#allocation2 + $0x150] sm:$0xff] %vm2616, %v8470
      %8504 = vst.msk [vmem:[#allocation2 + $0x168] sm:$0xff] %vm2616, %v8472
      %v8505 = vld [vmem:[#allocation4] sm:$0xff]
      %v8506 = vld [vmem:[#allocation4 + $0x8] sm:$0xff]
      %v8507 = vld [vmem:[#allocation4 + $0x18] sm:$0xff]
      %v8508 = vld [vmem:[#allocation4 + $0x20] sm:$0xff]
      %v8509 = vld [vmem:[#allocation4 + $0x30] sm:$0xff]
      %v8510 = vld [vmem:[#allocation4 + $0x38] sm:$0xff]
      %v8511 = vld [vmem:[#allocation4 + $0x48] sm:$0xff]
      %v8512 = vld [vmem:[#allocation4 + $0x50] sm:$0xff]
      %v8513 = vld [vmem:[#allocation4 + $0x60] sm:$0xff]
      %v8514 = vld [vmem:[#allocation4 + $0x68] sm:$0xff]
      %v8515 = vld [vmem:[#allocation4 + $0x78] sm:$0xff]
      %v8516 = vld [vmem:[#allocation4 + $0x80] sm:$0xff]
      %v8517 = vld [vmem:[#allocation4 + $0x90] sm:$0xff]
      %v8518 = vld [vmem:[#allocation4 + $0x98] sm:$0xff]
      %v8519 = vld [vmem:[#allocation4 + $0xa8] sm:$0xff]
      %v8520 = vld [vmem:[#allocation4 + $0xb0] sm:$0xff]
      %v8521 = vld [vmem:[#allocation4 + $0xc0] sm:$0xff]
      %v8522 = vld [vmem:[#allocation4 + $0xc8] sm:$0xff]
      %v8523 = vld [vmem:[#allocation4 + $0xd8] sm:$0xff]
      %v8524 = vld [vmem:[#allocation4 + $0xe0] sm:$0xff]
      %v8525 = vld [vmem:[#allocation4 + $0xf0] sm:$0xff]
      %v8526 = vld [vmem:[#allocation4 + $0xf8] sm:$0xff]
      %v8527 = vld [vmem:[#allocation4 + $0x108] sm:$0xff]
      %v8528 = vld [vmem:[#allocation4 + $0x110] sm:$0xff]
      %v8529 = vld [vmem:[#allocation4 + $0x120] sm:$0xff]
      %v8530 = vld [vmem:[#allocation4 + $0x128] sm:$0xff]
      %v8531 = vld [vmem:[#allocation4 + $0x138] sm:$0xff]
      %v8532 = vld [vmem:[#allocation4 + $0x140] sm:$0xff]
      %v8533 = vld [vmem:[#allocation4 + $0x150] sm:$0xff]
      %v8534 = vld [vmem:[#allocation4 + $0x158] sm:$0xff]
      %v8535 = vld [vmem:[#allocation4 + $0x168] sm:$0xff]
      %v8536 = vld [vmem:[#allocation4 + $0x170] sm:$0xff]
      %v8537 = vpack.c.bf16 %v8506, %v8505
      %v8538 = vpack.c.bf16 %v8508, %v8507
      %v8539 = vpack.c.bf16 %v8510, %v8509
      %v8540 = vpack.c.bf16 %v8512, %v8511
      %v8541 = vpack.c.bf16 %v8514, %v8513
      %v8542 = vpack.c.bf16 %v8516, %v8515
      %v8543 = vpack.c.bf16 %v8518, %v8517
      %v8544 = vpack.c.bf16 %v8520, %v8519
      %v8545 = vpack.c.bf16 %v8522, %v8521
      %v8546 = vpack.c.bf16 %v8524, %v8523
      %v8547 = vpack.c.bf16 %v8526, %v8525
      %v8548 = vpack.c.bf16 %v8528, %v8527
      %v8549 = vpack.c.bf16 %v8530, %v8529
      %v8550 = vpack.c.bf16 %v8532, %v8531
      %v8551 = vpack.c.bf16 %v8534, %v8533
      %v8552 = vpack.c.bf16 %v8536, %v8535
      %8569 = vrot.lane.b32.xlu0 %v8537, 72
      %v8570 = vpop.permute.xlu0 %8569
      %8571 = vrot.lane.b32.xlu0 %v8538, 72
      %v8572 = vpop.permute.xlu0 %8571
      %8573 = vrot.lane.b32.xlu0 %v8539, 72
      %v8574 = vpop.permute.xlu0 %8573
      %8575 = vrot.lane.b32.xlu0 %v8540, 72
      %v8576 = vpop.permute.xlu0 %8575
      %8577 = vrot.lane.b32.xlu0 %v8541, 72
      %v8578 = vpop.permute.xlu0 %8577
      %8579 = vrot.lane.b32.xlu0 %v8542, 72
      %v8580 = vpop.permute.xlu0 %8579
      %8581 = vrot.lane.b32.xlu0 %v8543, 72
      %v8582 = vpop.permute.xlu0 %8581
      %8583 = vrot.lane.b32.xlu0 %v8544, 72
      %v8584 = vpop.permute.xlu0 %8583
      %8585 = vrot.lane.b32.xlu0 %v8545, 72
      %v8586 = vpop.permute.xlu0 %8585
      %8587 = vrot.lane.b32.xlu0 %v8546, 72
      %v8588 = vpop.permute.xlu0 %8587
      %8589 = vrot.lane.b32.xlu0 %v8547, 72
      %v8590 = vpop.permute.xlu0 %8589
      %8591 = vrot.lane.b32.xlu0 %v8548, 72
      %v8592 = vpop.permute.xlu0 %8591
      %8593 = vrot.lane.b32.xlu0 %v8549, 72
      %v8594 = vpop.permute.xlu0 %8593
      %8595 = vrot.lane.b32.xlu0 %v8550, 72
      %v8596 = vpop.permute.xlu0 %8595
      %8597 = vrot.lane.b32.xlu0 %v8551, 72
      %v8598 = vpop.permute.xlu0 %8597
      %8599 = vrot.lane.b32.xlu0 %v8552, 72
      %v8600 = vpop.permute.xlu0 %8599
      %vm8617 = vcmask 654912
      %8618 = vst.msk [vmem:[#allocation2] sm:$0xff] %vm8617, %v8570
      %8619 = vst.msk [vmem:[#allocation2 + $0x18] sm:$0xff] %vm8617, %v8572
      %8620 = vst.msk [vmem:[#allocation2 + $0x30] sm:$0xff] %vm8617, %v8574
      %8621 = vst.msk [vmem:[#allocation2 + $0x48] sm:$0xff] %vm8617, %v8576
      %8622 = vst.msk [vmem:[#allocation2 + $0x60] sm:$0xff] %vm8617, %v8578
      %8623 = vst.msk [vmem:[#allocation2 + $0x78] sm:$0xff] %vm8617, %v8580
      %8624 = vst.msk [vmem:[#allocation2 + $0x90] sm:$0xff] %vm8617, %v8582
      %8625 = vst.msk [vmem:[#allocation2 + $0xa8] sm:$0xff] %vm8617, %v8584
      %8626 = vst.msk [vmem:[#allocation2 + $0xc0] sm:$0xff] %vm8617, %v8586
      %8627 = vst.msk [vmem:[#allocation2 + $0xd8] sm:$0xff] %vm8617, %v8588
      %8628 = vst.msk [vmem:[#allocation2 + $0xf0] sm:$0xff] %vm8617, %v8590
      %8629 = vst.msk [vmem:[#allocation2 + $0x108] sm:$0xff] %vm8617, %v8592
      %8630 = vst.msk [vmem:[#allocation2 + $0x120] sm:$0xff] %vm8617, %v8594
      %8631 = vst.msk [vmem:[#allocation2 + $0x138] sm:$0xff] %vm8617, %v8596
      %8632 = vst.msk [vmem:[#allocation2 + $0x150] sm:$0xff] %vm8617, %v8598
      %8633 = vst.msk [vmem:[#allocation2 + $0x168] sm:$0xff] %vm8617, %v8600
      %v8634 = vld [vmem:[#allocation4 + $0x1] sm:$0xff]
      %v8635 = vld [vmem:[#allocation4 + $0x9] sm:$0xff]
      %v8636 = vld [vmem:[#allocation4 + $0x19] sm:$0xff]
      %v8637 = vld [vmem:[#allocation4 + $0x21] sm:$0xff]
      %v8638 = vld [vmem:[#allocation4 + $0x31] sm:$0xff]
      %v8639 = vld [vmem:[#allocation4 + $0x39] sm:$0xff]
      %v8640 = vld [vmem:[#allocation4 + $0x49] sm:$0xff]
      %v8641 = vld [vmem:[#allocation4 + $0x51] sm:$0xff]
      %v8642 = vld [vmem:[#allocation4 + $0x61] sm:$0xff]
      %v8643 = vld [vmem:[#allocation4 + $0x69] sm:$0xff]
      %v8644 = vld [vmem:[#allocation4 + $0x79] sm:$0xff]
      %v8645 = vld [vmem:[#allocation4 + $0x81] sm:$0xff]
      %v8646 = vld [vmem:[#allocation4 + $0x91] sm:$0xff]
      %v8647 = vld [vmem:[#allocation4 + $0x99] sm:$0xff]
      %v8648 = vld [vmem:[#allocation4 + $0xa9] sm:$0xff]
      %v8649 = vld [vmem:[#allocation4 + $0xb1] sm:$0xff]
      %v8650 = vld [vmem:[#allocation4 + $0xc1] sm:$0xff]
      %v8651 = vld [vmem:[#allocation4 + $0xc9] sm:$0xff]
      %v8652 = vld [vmem:[#allocation4 + $0xd9] sm:$0xff]
      %v8653 = vld [vmem:[#allocation4 + $0xe1] sm:$0xff]
      %v8654 = vld [vmem:[#allocation4 + $0xf1] sm:$0xff]
      %v8655 = vld [vmem:[#allocation4 + $0xf9] sm:$0xff]
      %v8656 = vld [vmem:[#allocation4 + $0x109] sm:$0xff]
      %v8657 = vld [vmem:[#allocation4 + $0x111] sm:$0xff]
      %v8658 = vld [vmem:[#allocation4 + $0x121] sm:$0xff]
      %v8659 = vld [vmem:[#allocation4 + $0x129] sm:$0xff]
      %v8660 = vld [vmem:[#allocation4 + $0x139] sm:$0xff]
      %v8661 = vld [vmem:[#allocation4 + $0x141] sm:$0xff]
      %v8662 = vld [vmem:[#allocation4 + $0x151] sm:$0xff]
      %v8663 = vld [vmem:[#allocation4 + $0x159] sm:$0xff]
      %v8664 = vld [vmem:[#allocation4 + $0x169] sm:$0xff]
      %v8665 = vld [vmem:[#allocation4 + $0x171] sm:$0xff]
      %v8666 = vpack.c.bf16 %v8635, %v8634
      %v8667 = vpack.c.bf16 %v8637, %v8636
      %v8668 = vpack.c.bf16 %v8639, %v8638
      %v8669 = vpack.c.bf16 %v8641, %v8640
      %v8670 = vpack.c.bf16 %v8643, %v8642
      %v8671 = vpack.c.bf16 %v8645, %v8644
      %v8672 = vpack.c.bf16 %v8647, %v8646
      %v8673 = vpack.c.bf16 %v8649, %v8648
      %v8674 = vpack.c.bf16 %v8651, %v8650
      %v8675 = vpack.c.bf16 %v8653, %v8652
      %v8676 = vpack.c.bf16 %v8655, %v8654
      %v8677 = vpack.c.bf16 %v8657, %v8656
      %v8678 = vpack.c.bf16 %v8659, %v8658
      %v8679 = vpack.c.bf16 %v8661, %v8660
      %v8680 = vpack.c.bf16 %v8663, %v8662
      %v8681 = vpack.c.bf16 %v8665, %v8664
      %8698 = vrot.lane.b32.xlu0 %v8666, 80
      %v8699 = vpop.permute.xlu0 %8698
      %8700 = vrot.lane.b32.xlu0 %v8667, 80
      %v8701 = vpop.permute.xlu0 %8700
      %8702 = vrot.lane.b32.xlu0 %v8668, 80
      %v8703 = vpop.permute.xlu0 %8702
      %8704 = vrot.lane.b32.xlu0 %v8669, 80
      %v8705 = vpop.permute.xlu0 %8704
      %8706 = vrot.lane.b32.xlu0 %v8670, 80
      %v8707 = vpop.permute.xlu0 %8706
      %8708 = vrot.lane.b32.xlu0 %v8671, 80
      %v8709 = vpop.permute.xlu0 %8708
      %8710 = vrot.lane.b32.xlu0 %v8672, 80
      %v8711 = vpop.permute.xlu0 %8710
      %8712 = vrot.lane.b32.xlu0 %v8673, 80
      %v8713 = vpop.permute.xlu0 %8712
      %8714 = vrot.lane.b32.xlu0 %v8674, 80
      %v8715 = vpop.permute.xlu0 %8714
      %8716 = vrot.lane.b32.xlu0 %v8675, 80
      %v8717 = vpop.permute.xlu0 %8716
      %8718 = vrot.lane.b32.xlu0 %v8676, 80
      %v8719 = vpop.permute.xlu0 %8718
      %8720 = vrot.lane.b32.xlu0 %v8677, 80
      %v8721 = vpop.permute.xlu0 %8720
      %8722 = vrot.lane.b32.xlu0 %v8678, 80
      %v8723 = vpop.permute.xlu0 %8722
      %8724 = vrot.lane.b32.xlu0 %v8679, 80
      %v8725 = vpop.permute.xlu0 %8724
      %8726 = vrot.lane.b32.xlu0 %v8680, 80
      %v8727 = vpop.permute.xlu0 %8726
      %8728 = vrot.lane.b32.xlu0 %v8681, 80
      %v8729 = vpop.permute.xlu0 %8728
      %vm8746 = vcmask 720512
      %8747 = vst.msk [vmem:[#allocation2] sm:$0xff] %vm8746, %v8699
      %8748 = vst.msk [vmem:[#allocation2 + $0x18] sm:$0xff] %vm8746, %v8701
      %8749 = vst.msk [vmem:[#allocation2 + $0x30] sm:$0xff] %vm8746, %v8703
      %8750 = vst.msk [vmem:[#allocation2 + $0x48] sm:$0xff] %vm8746, %v8705
      %8751 = vst.msk [vmem:[#allocation2 + $0x60] sm:$0xff] %vm8746, %v8707
      %8752 = vst.msk [vmem:[#allocation2 + $0x78] sm:$0xff] %vm8746, %v8709
      %8753 = vst.msk [vmem:[#allocation2 + $0x90] sm:$0xff] %vm8746, %v8711
      %8754 = vst.msk [vmem:[#allocation2 + $0xa8] sm:$0xff] %vm8746, %v8713
      %8755 = vst.msk [vmem:[#allocation2 + $0xc0] sm:$0xff] %vm8746, %v8715
      %8756 = vst.msk [vmem:[#allocation2 + $0xd8] sm:$0xff] %vm8746, %v8717
      %8757 = vst.msk [vmem:[#allocation2 + $0xf0] sm:$0xff] %vm8746, %v8719
      %8758 = vst.msk [vmem:[#allocation2 + $0x108] sm:$0xff] %vm8746, %v8721
      %8759 = vst.msk [vmem:[#allocation2 + $0x120] sm:$0xff] %vm8746, %v8723
      %8760 = vst.msk [vmem:[#allocation2 + $0x138] sm:$0xff] %vm8746, %v8725
      %8761 = vst.msk [vmem:[#allocation2 + $0x150] sm:$0xff] %vm8746, %v8727
      %8762 = vst.msk [vmem:[#allocation2 + $0x168] sm:$0xff] %vm8746, %v8729
      %v8763 = vld [vmem:[#allocation4 + $0x2] sm:$0xff]
      %v8764 = vld [vmem:[#allocation4 + $0xa] sm:$0xff]
      %v8765 = vld [vmem:[#allocation4 + $0x1a] sm:$0xff]
      %v8766 = vld [vmem:[#allocation4 + $0x22] sm:$0xff]
      %v8767 = vld [vmem:[#allocation4 + $0x32] sm:$0xff]
      %v8768 = vld [vmem:[#allocation4 + $0x3a] sm:$0xff]
      %v8769 = vld [vmem:[#allocation4 + $0x4a] sm:$0xff]
      %v8770 = vld [vmem:[#allocation4 + $0x52] sm:$0xff]
      %v8771 = vld [vmem:[#allocation4 + $0x62] sm:$0xff]
      %v8772 = vld [vmem:[#allocation4 + $0x6a] sm:$0xff]
      %v8773 = vld [vmem:[#allocation4 + $0x7a] sm:$0xff]
      %v8774 = vld [vmem:[#allocation4 + $0x82] sm:$0xff]
      %v8775 = vld [vmem:[#allocation4 + $0x92] sm:$0xff]
      %v8776 = vld [vmem:[#allocation4 + $0x9a] sm:$0xff]
      %v8777 = vld [vmem:[#allocation4 + $0xaa] sm:$0xff]
      %v8778 = vld [vmem:[#allocation4 + $0xb2] sm:$0xff]
      %v8779 = vld [vmem:[#allocation4 + $0xc2] sm:$0xff]
      %v8780 = vld [vmem:[#allocation4 + $0xca] sm:$0xff]
      %v8781 = vld [vmem:[#allocation4 + $0xda] sm:$0xff]
      %v8782 = vld [vmem:[#allocation4 + $0xe2] sm:$0xff]
      %v8783 = vld [vmem:[#allocation4 + $0xf2] sm:$0xff]
      %v8784 = vld [vmem:[#allocation4 + $0xfa] sm:$0xff]
      %v8785 = vld [vmem:[#allocation4 + $0x10a] sm:$0xff]
      %v8786 = vld [vmem:[#allocation4 + $0x112] sm:$0xff]
      %v8787 = vld [vmem:[#allocation4 + $0x122] sm:$0xff]
      %v8788 = vld [vmem:[#allocation4 + $0x12a] sm:$0xff]
      %v8789 = vld [vmem:[#allocation4 + $0x13a] sm:$0xff]
      %v8790 = vld [vmem:[#allocation4 + $0x142] sm:$0xff]
      %v8791 = vld [vmem:[#allocation4 + $0x152] sm:$0xff]
      %v8792 = vld [vmem:[#allocation4 + $0x15a] sm:$0xff]
      %v8793 = vld [vmem:[#allocation4 + $0x16a] sm:$0xff]
      %v8794 = vld [vmem:[#allocation4 + $0x172] sm:$0xff]
      %v8795 = vpack.c.bf16 %v8764, %v8763
      %v8796 = vpack.c.bf16 %v8766, %v8765
      %v8797 = vpack.c.bf16 %v8768, %v8767
      %v8798 = vpack.c.bf16 %v8770, %v8769
      %v8799 = vpack.c.bf16 %v8772, %v8771
      %v8800 = vpack.c.bf16 %v8774, %v8773
      %v8801 = vpack.c.bf16 %v8776, %v8775
      %v8802 = vpack.c.bf16 %v8778, %v8777
      %v8803 = vpack.c.bf16 %v8780, %v8779
      %v8804 = vpack.c.bf16 %v8782, %v8781
      %v8805 = vpack.c.bf16 %v8784, %v8783
      %v8806 = vpack.c.bf16 %v8786, %v8785
      %v8807 = vpack.c.bf16 %v8788, %v8787
      %v8808 = vpack.c.bf16 %v8790, %v8789
      %v8809 = vpack.c.bf16 %v8792, %v8791
      %v8810 = vpack.c.bf16 %v8794, %v8793
      %8827 = vrot.lane.b32.xlu0 %v8795, 88
      %v8828 = vpop.permute.xlu0 %8827
      %8829 = vrot.lane.b32.xlu0 %v8796, 88
      %v8830 = vpop.permute.xlu0 %8829
      %8831 = vrot.lane.b32.xlu0 %v8797, 88
      %v8832 = vpop.permute.xlu0 %8831
      %8833 = vrot.lane.b32.xlu0 %v8798, 88
      %v8834 = vpop.permute.xlu0 %8833
      %8835 = vrot.lane.b32.xlu0 %v8799, 88
      %v8836 = vpop.permute.xlu0 %8835
      %8837 = vrot.lane.b32.xlu0 %v8800, 88
      %v8838 = vpop.permute.xlu0 %8837
      %8839 = vrot.lane.b32.xlu0 %v8801, 88
      %v8840 = vpop.permute.xlu0 %8839
      %8841 = vrot.lane.b32.xlu0 %v8802, 88
      %v8842 = vpop.permute.xlu0 %8841
      %8843 = vrot.lane.b32.xlu0 %v8803, 88
      %v8844 = vpop.permute.xlu0 %8843
      %8845 = vrot.lane.b32.xlu0 %v8804, 88
      %v8846 = vpop.permute.xlu0 %8845
      %8847 = vrot.lane.b32.xlu0 %v8805, 88
      %v8848 = vpop.permute.xlu0 %8847
      %8849 = vrot.lane.b32.xlu0 %v8806, 88
      %v8850 = vpop.permute.xlu0 %8849
      %8851 = vrot.lane.b32.xlu0 %v8807, 88
      %v8852 = vpop.permute.xlu0 %8851
      %8853 = vrot.lane.b32.xlu0 %v8808, 88
      %v8854 = vpop.permute.xlu0 %8853
      %8855 = vrot.lane.b32.xlu0 %v8809, 88
      %v8856 = vpop.permute.xlu0 %8855
      %8857 = vrot.lane.b32.xlu0 %v8810, 88
      %v8858 = vpop.permute.xlu0 %8857
      %vm8875 = vcmask 786112
      %8876 = vst.msk [vmem:[#allocation2] sm:$0xff] %vm8875, %v8828
      %8877 = vst.msk [vmem:[#allocation2 + $0x18] sm:$0xff] %vm8875, %v8830
      %8878 = vst.msk [vmem:[#allocation2 + $0x30] sm:$0xff] %vm8875, %v8832
      %8879 = vst.msk [vmem:[#allocation2 + $0x48] sm:$0xff] %vm8875, %v8834
      %8880 = vst.msk [vmem:[#allocation2 + $0x60] sm:$0xff] %vm8875, %v8836
      %8881 = vst.msk [vmem:[#allocation2 + $0x78] sm:$0xff] %vm8875, %v8838
      %8882 = vst.msk [vmem:[#allocation2 + $0x90] sm:$0xff] %vm8875, %v8840
      %8883 = vst.msk [vmem:[#allocation2 + $0xa8] sm:$0xff] %vm8875, %v8842
      %8884 = vst.msk [vmem:[#allocation2 + $0xc0] sm:$0xff] %vm8875, %v8844
      %8885 = vst.msk [vmem:[#allocation2 + $0xd8] sm:$0xff] %vm8875, %v8846
      %8886 = vst.msk [vmem:[#allocation2 + $0xf0] sm:$0xff] %vm8875, %v8848
      %8887 = vst.msk [vmem:[#allocation2 + $0x108] sm:$0xff] %vm8875, %v8850
      %8888 = vst.msk [vmem:[#allocation2 + $0x120] sm:$0xff] %vm8875, %v8852
      %8889 = vst.msk [vmem:[#allocation2 + $0x138] sm:$0xff] %vm8875, %v8854
      %8890 = vst.msk [vmem:[#allocation2 + $0x150] sm:$0xff] %vm8875, %v8856
      %8891 = vst.msk [vmem:[#allocation2 + $0x168] sm:$0xff] %vm8875, %v8858
      %v8892 = vld [vmem:[%s2209] sm:$0xff]
      %v8893 = vld [vmem:[%s2209 + $0x8] sm:$0xff]
      %v8894 = vld [vmem:[%s2209 + $0x18] sm:$0xff]
      %v8895 = vld [vmem:[%s2209 + $0x20] sm:$0xff]
      %v8896 = vld [vmem:[%s2209 + $0x30] sm:$0xff]
      %v8897 = vld [vmem:[%s2209 + $0x38] sm:$0xff]
      %v8898 = vld [vmem:[%s2209 + $0x48] sm:$0xff]
      %v8899 = vld [vmem:[%s2209 + $0x50] sm:$0xff]
      %v8900 = vld [vmem:[%s2209 + $0x60] sm:$0xff]
      %v8901 = vld [vmem:[%s2209 + $0x68] sm:$0xff]
      %v8902 = vld [vmem:[%s2209 + $0x78] sm:$0xff]
      %v8903 = vld [vmem:[%s2209 + $0x80] sm:$0xff]
      %v8904 = vld [vmem:[%s2209 + $0x90] sm:$0xff]
      %v8905 = vld [vmem:[%s2209 + $0x98] sm:$0xff]
      %v8906 = vld [vmem:[%s2209 + $0xa8] sm:$0xff]
      %v8907 = vld [vmem:[%s2209 + $0xb0] sm:$0xff]
      %v8908 = vld [vmem:[%s2209 + $0xc0] sm:$0xff]
      %v8909 = vld [vmem:[%s2209 + $0xc8] sm:$0xff]
      %v8910 = vld [vmem:[%s2209 + $0xd8] sm:$0xff]
      %v8911 = vld [vmem:[%s2209 + $0xe0] sm:$0xff]
      %v8912 = vld [vmem:[%s2209 + $0xf0] sm:$0xff]
      %v8913 = vld [vmem:[%s2209 + $0xf8] sm:$0xff]
      %v8914 = vld [vmem:[%s2209 + $0x108] sm:$0xff]
      %v8915 = vld [vmem:[%s2209 + $0x110] sm:$0xff]
      %v8916 = vld [vmem:[%s2209 + $0x120] sm:$0xff]
      %v8917 = vld [vmem:[%s2209 + $0x128] sm:$0xff]
      %v8918 = vld [vmem:[%s2209 + $0x138] sm:$0xff]
      %v8919 = vld [vmem:[%s2209 + $0x140] sm:$0xff]
      %v8920 = vld [vmem:[%s2209 + $0x150] sm:$0xff]
      %v8921 = vld [vmem:[%s2209 + $0x158] sm:$0xff]
      %v8922 = vld [vmem:[%s2209 + $0x168] sm:$0xff]
      %v8923 = vld [vmem:[%s2209 + $0x170] sm:$0xff]
      %v8924 = vpack.c.bf16 %v8893, %v8892
      %v8925 = vpack.c.bf16 %v8895, %v8894
      %v8926 = vpack.c.bf16 %v8897, %v8896
      %v8927 = vpack.c.bf16 %v8899, %v8898
      %v8928 = vpack.c.bf16 %v8901, %v8900
      %v8929 = vpack.c.bf16 %v8903, %v8902
      %v8930 = vpack.c.bf16 %v8905, %v8904
      %v8931 = vpack.c.bf16 %v8907, %v8906
      %v8932 = vpack.c.bf16 %v8909, %v8908
      %v8933 = vpack.c.bf16 %v8911, %v8910
      %v8934 = vpack.c.bf16 %v8913, %v8912
      %v8935 = vpack.c.bf16 %v8915, %v8914
      %v8936 = vpack.c.bf16 %v8917, %v8916
      %v8937 = vpack.c.bf16 %v8919, %v8918
      %v8938 = vpack.c.bf16 %v8921, %v8920
      %v8939 = vpack.c.bf16 %v8923, %v8922
      %8956 = vrot.lane.b32.xlu0 %v8924, 96
      %v8957 = vpop.permute.xlu0 %8956
      %8958 = vrot.lane.b32.xlu0 %v8925, 96
      %v8959 = vpop.permute.xlu0 %8958
      %8960 = vrot.lane.b32.xlu0 %v8926, 96
      %v8961 = vpop.permute.xlu0 %8960
      %8962 = vrot.lane.b32.xlu0 %v8927, 96
      %v8963 = vpop.permute.xlu0 %8962
      %8964 = vrot.lane.b32.xlu0 %v8928, 96
      %v8965 = vpop.permute.xlu0 %8964
      %8966 = vrot.lane.b32.xlu0 %v8929, 96
      %v8967 = vpop.permute.xlu0 %8966
      %8968 = vrot.lane.b32.xlu0 %v8930, 96
      %v8969 = vpop.permute.xlu0 %8968
      %8970 = vrot.lane.b32.xlu0 %v8931, 96
      %v8971 = vpop.permute.xlu0 %8970
      %8972 = vrot.lane.b32.xlu0 %v8932, 96
      %v8973 = vpop.permute.xlu0 %8972
      %8974 = vrot.lane.b32.xlu0 %v8933, 96
      %v8975 = vpop.permute.xlu0 %8974
      %8976 = vrot.lane.b32.xlu0 %v8934, 96
      %v8977 = vpop.permute.xlu0 %8976
      %8978 = vrot.lane.b32.xlu0 %v8935, 96
      %v8979 = vpop.permute.xlu0 %8978
      %8980 = vrot.lane.b32.xlu0 %v8936, 96
      %v8981 = vpop.permute.xlu0 %8980
      %8982 = vrot.lane.b32.xlu0 %v8937, 96
      %v8983 = vpop.permute.xlu0 %8982
      %8984 = vrot.lane.b32.xlu0 %v8938, 96
      %v8985 = vpop.permute.xlu0 %8984
      %8986 = vrot.lane.b32.xlu0 %v8939, 96
      %v8987 = vpop.permute.xlu0 %8986
      %vm9004 = vcmask 851712
      %9005 = vst.msk [vmem:[#allocation2] sm:$0xff] %vm9004, %v8957
      %9006 = vst.msk [vmem:[#allocation2 + $0x18] sm:$0xff] %vm9004, %v8959
      %9007 = vst.msk [vmem:[#allocation2 + $0x30] sm:$0xff] %vm9004, %v8961
      %9008 = vst.msk [vmem:[#allocation2 + $0x48] sm:$0xff] %vm9004, %v8963
      %9009 = vst.msk [vmem:[#allocation2 + $0x60] sm:$0xff] %vm9004, %v8965
      %9010 = vst.msk [vmem:[#allocation2 + $0x78] sm:$0xff] %vm9004, %v8967
      %9011 = vst.msk [vmem:[#allocation2 + $0x90] sm:$0xff] %vm9004, %v8969
      %9012 = vst.msk [vmem:[#allocation2 + $0xa8] sm:$0xff] %vm9004, %v8971
      %9013 = vst.msk [vmem:[#allocation2 + $0xc0] sm:$0xff] %vm9004, %v8973
      %9014 = vst.msk [vmem:[#allocation2 + $0xd8] sm:$0xff] %vm9004, %v8975
      %9015 = vst.msk [vmem:[#allocation2 + $0xf0] sm:$0xff] %vm9004, %v8977
      %9016 = vst.msk [vmem:[#allocation2 + $0x108] sm:$0xff] %vm9004, %v8979
      %9017 = vst.msk [vmem:[#allocation2 + $0x120] sm:$0xff] %vm9004, %v8981
      %9018 = vst.msk [vmem:[#allocation2 + $0x138] sm:$0xff] %vm9004, %v8983
      %9019 = vst.msk [vmem:[#allocation2 + $0x150] sm:$0xff] %vm9004, %v8985
      %9020 = vst.msk [vmem:[#allocation2 + $0x168] sm:$0xff] %vm9004, %v8987
      %v9021 = vld [vmem:[%s2209 + $0x1] sm:$0xff]
      %v9022 = vld [vmem:[%s2209 + $0x9] sm:$0xff]
      %v9023 = vld [vmem:[%s2209 + $0x19] sm:$0xff]
      %v9024 = vld [vmem:[%s2209 + $0x21] sm:$0xff]
      %v9025 = vld [vmem:[%s2209 + $0x31] sm:$0xff]
      %v9026 = vld [vmem:[%s2209 + $0x39] sm:$0xff]
      %v9027 = vld [vmem:[%s2209 + $0x49] sm:$0xff]
      %v9028 = vld [vmem:[%s2209 + $0x51] sm:$0xff]
      %v9029 = vld [vmem:[%s2209 + $0x61] sm:$0xff]
      %v9030 = vld [vmem:[%s2209 + $0x69] sm:$0xff]
      %v9031 = vld [vmem:[%s2209 + $0x79] sm:$0xff]
      %v9032 = vld [vmem:[%s2209 + $0x81] sm:$0xff]
      %v9033 = vld [vmem:[%s2209 + $0x91] sm:$0xff]
      %v9034 = vld [vmem:[%s2209 + $0x99] sm:$0xff]
      %v9035 = vld [vmem:[%s2209 + $0xa9] sm:$0xff]
      %v9036 = vld [vmem:[%s2209 + $0xb1] sm:$0xff]
      %v9037 = vld [vmem:[%s2209 + $0xc1] sm:$0xff]
      %v9038 = vld [vmem:[%s2209 + $0xc9] sm:$0xff]
      %v9039 = vld [vmem:[%s2209 + $0xd9] sm:$0xff]
      %v9040 = vld [vmem:[%s2209 + $0xe1] sm:$0xff]
      %v9041 = vld [vmem:[%s2209 + $0xf1] sm:$0xff]
      %v9042 = vld [vmem:[%s2209 + $0xf9] sm:$0xff]
      %v9043 = vld [vmem:[%s2209 + $0x109] sm:$0xff]
      %v9044 = vld [vmem:[%s2209 + $0x111] sm:$0xff]
      %v9045 = vld [vmem:[%s2209 + $0x121] sm:$0xff]
      %v9046 = vld [vmem:[%s2209 + $0x129] sm:$0xff]
      %v9047 = vld [vmem:[%s2209 + $0x139] sm:$0xff]
      %v9048 = vld [vmem:[%s2209 + $0x141] sm:$0xff]
      %v9049 = vld [vmem:[%s2209 + $0x151] sm:$0xff]
      %v9050 = vld [vmem:[%s2209 + $0x159] sm:$0xff]
      %v9051 = vld [vmem:[%s2209 + $0x169] sm:$0xff]
      %v9052 = vld [vmem:[%s2209 + $0x171] sm:$0xff]
      %v9053 = vpack.c.bf16 %v9022, %v9021
      %v9054 = vpack.c.bf16 %v9024, %v9023
      %v9055 = vpack.c.bf16 %v9026, %v9025
      %v9056 = vpack.c.bf16 %v9028, %v9027
      %v9057 = vpack.c.bf16 %v9030, %v9029
      %v9058 = vpack.c.bf16 %v9032, %v9031
      %v9059 = vpack.c.bf16 %v9034, %v9033
      %v9060 = vpack.c.bf16 %v9036, %v9035
      %v9061 = vpack.c.bf16 %v9038, %v9037
      %v9062 = vpack.c.bf16 %v9040, %v9039
      %v9063 = vpack.c.bf16 %v9042, %v9041
      %v9064 = vpack.c.bf16 %v9044, %v9043
      %v9065 = vpack.c.bf16 %v9046, %v9045
      %v9066 = vpack.c.bf16 %v9048, %v9047
      %v9067 = vpack.c.bf16 %v9050, %v9049
      %v9068 = vpack.c.bf16 %v9052, %v9051
      %9085 = vrot.lane.b32.xlu0 %v9053, 104
      %v9086 = vpop.permute.xlu0 %9085
      %9087 = vrot.lane.b32.xlu0 %v9054, 104
      %v9088 = vpop.permute.xlu0 %9087
      %9089 = vrot.lane.b32.xlu0 %v9055, 104
      %v9090 = vpop.permute.xlu0 %9089
      %9091 = vrot.lane.b32.xlu0 %v9056, 104
      %v9092 = vpop.permute.xlu0 %9091
      %9093 = vrot.lane.b32.xlu0 %v9057, 104
      %v9094 = vpop.permute.xlu0 %9093
      %9095 = vrot.lane.b32.xlu0 %v9058, 104
      %v9096 = vpop.permute.xlu0 %9095
      %9097 = vrot.lane.b32.xlu0 %v9059, 104
      %v9098 = vpop.permute.xlu0 %9097
      %9099 = vrot.lane.b32.xlu0 %v9060, 104
      %v9100 = vpop.permute.xlu0 %9099
      %9101 = vrot.lane.b32.xlu0 %v9061, 104
      %v9102 = vpop.permute.xlu0 %9101
      %9103 = vrot.lane.b32.xlu0 %v9062, 104
      %v9104 = vpop.permute.xlu0 %9103
      %9105 = vrot.lane.b32.xlu0 %v9063, 104
      %v9106 = vpop.permute.xlu0 %9105
      %9107 = vrot.lane.b32.xlu0 %v9064, 104
      %v9108 = vpop.permute.xlu0 %9107
      %9109 = vrot.lane.b32.xlu0 %v9065, 104
      %v9110 = vpop.permute.xlu0 %9109
      %9111 = vrot.lane.b32.xlu0 %v9066, 104
      %v9112 = vpop.permute.xlu0 %9111
      %9113 = vrot.lane.b32.xlu0 %v9067, 104
      %v9114 = vpop.permute.xlu0 %9113
      %9115 = vrot.lane.b32.xlu0 %v9068, 104
      %v9116 = vpop.permute.xlu0 %9115
      %vm9133 = vcmask 917312
      %9134 = vst.msk [vmem:[#allocation2] sm:$0xff] %vm9133, %v9086
      %9135 = vst.msk [vmem:[#allocation2 + $0x18] sm:$0xff] %vm9133, %v9088
      %9136 = vst.msk [vmem:[#allocation2 + $0x30] sm:$0xff] %vm9133, %v9090
      %9137 = vst.msk [vmem:[#allocation2 + $0x48] sm:$0xff] %vm9133, %v9092
      %9138 = vst.msk [vmem:[#allocation2 + $0x60] sm:$0xff] %vm9133, %v9094
      %9139 = vst.msk [vmem:[#allocation2 + $0x78] sm:$0xff] %vm9133, %v9096
      %9140 = vst.msk [vmem:[#allocation2 + $0x90] sm:$0xff] %vm9133, %v9098
      %9141 = vst.msk [vmem:[#allocation2 + $0xa8] sm:$0xff] %vm9133, %v9100
      %9142 = vst.msk [vmem:[#allocation2 + $0xc0] sm:$0xff] %vm9133, %v9102
      %9143 = vst.msk [vmem:[#allocation2 + $0xd8] sm:$0xff] %vm9133, %v9104
      %9144 = vst.msk [vmem:[#allocation2 + $0xf0] sm:$0xff] %vm9133, %v9106
      %9145 = vst.msk [vmem:[#allocation2 + $0x108] sm:$0xff] %vm9133, %v9108
      %9146 = vst.msk [vmem:[#allocation2 + $0x120] sm:$0xff] %vm9133, %v9110
      %9147 = vst.msk [vmem:[#allocation2 + $0x138] sm:$0xff] %vm9133, %v9112
      %9148 = vst.msk [vmem:[#allocation2 + $0x150] sm:$0xff] %vm9133, %v9114
      %9149 = vst.msk [vmem:[#allocation2 + $0x168] sm:$0xff] %vm9133, %v9116
      %v9150 = vld [vmem:[%s2209 + $0x2] sm:$0xff]
      %v9151 = vld [vmem:[%s2209 + $0xa] sm:$0xff]
      %v9152 = vld [vmem:[%s2209 + $0x1a] sm:$0xff]
      %v9153 = vld [vmem:[%s2209 + $0x22] sm:$0xff]
      %v9154 = vld [vmem:[%s2209 + $0x32] sm:$0xff]
      %v9155 = vld [vmem:[%s2209 + $0x3a] sm:$0xff]
      %v9156 = vld [vmem:[%s2209 + $0x4a] sm:$0xff]
      %v9157 = vld [vmem:[%s2209 + $0x52] sm:$0xff]
      %v9158 = vld [vmem:[%s2209 + $0x62] sm:$0xff]
      %v9159 = vld [vmem:[%s2209 + $0x6a] sm:$0xff]
      %v9160 = vld [vmem:[%s2209 + $0x7a] sm:$0xff]
      %v9161 = vld [vmem:[%s2209 + $0x82] sm:$0xff]
      %v9162 = vld [vmem:[%s2209 + $0x92] sm:$0xff]
      %v9163 = vld [vmem:[%s2209 + $0x9a] sm:$0xff]
      %v9164 = vld [vmem:[%s2209 + $0xaa] sm:$0xff]
      %v9165 = vld [vmem:[%s2209 + $0xb2] sm:$0xff]
      %v9166 = vld [vmem:[%s2209 + $0xc2] sm:$0xff]
      %v9167 = vld [vmem:[%s2209 + $0xca] sm:$0xff]
      %v9168 = vld [vmem:[%s2209 + $0xda] sm:$0xff]
      %v9169 = vld [vmem:[%s2209 + $0xe2] sm:$0xff]
      %v9170 = vld [vmem:[%s2209 + $0xf2] sm:$0xff]
      %v9171 = vld [vmem:[%s2209 + $0xfa] sm:$0xff]
      %v9172 = vld [vmem:[%s2209 + $0x10a] sm:$0xff]
      %v9173 = vld [vmem:[%s2209 + $0x112] sm:$0xff]
      %v9174 = vld [vmem:[%s2209 + $0x122] sm:$0xff]
      %v9175 = vld [vmem:[%s2209 + $0x12a] sm:$0xff]
      %v9176 = vld [vmem:[%s2209 + $0x13a] sm:$0xff]
      %v9177 = vld [vmem:[%s2209 + $0x142] sm:$0xff]
      %v9178 = vld [vmem:[%s2209 + $0x152] sm:$0xff]
      %v9179 = vld [vmem:[%s2209 + $0x15a] sm:$0xff]
      %v9180 = vld [vmem:[%s2209 + $0x16a] sm:$0xff]
      %v9181 = vld [vmem:[%s2209 + $0x172] sm:$0xff]
      %v9182 = vpack.c.bf16 %v9151, %v9150
      %v9183 = vpack.c.bf16 %v9153, %v9152
      %v9184 = vpack.c.bf16 %v9155, %v9154
      %v9185 = vpack.c.bf16 %v9157, %v9156
      %v9186 = vpack.c.bf16 %v9159, %v9158
      %v9187 = vpack.c.bf16 %v9161, %v9160
      %v9188 = vpack.c.bf16 %v9163, %v9162
      %v9189 = vpack.c.bf16 %v9165, %v9164
      %v9190 = vpack.c.bf16 %v9167, %v9166
      %v9191 = vpack.c.bf16 %v9169, %v9168
      %v9192 = vpack.c.bf16 %v9171, %v9170
      %v9193 = vpack.c.bf16 %v9173, %v9172
      %v9194 = vpack.c.bf16 %v9175, %v9174
      %v9195 = vpack.c.bf16 %v9177, %v9176
      %v9196 = vpack.c.bf16 %v9179, %v9178
      %v9197 = vpack.c.bf16 %v9181, %v9180
      %9214 = vrot.lane.b32.xlu0 %v9182, 112
      %v9215 = vpop.permute.xlu0 %9214
      %9216 = vrot.lane.b32.xlu0 %v9183, 112
      %v9217 = vpop.permute.xlu0 %9216
      %9218 = vrot.lane.b32.xlu0 %v9184, 112
      %v9219 = vpop.permute.xlu0 %9218
      %9220 = vrot.lane.b32.xlu0 %v9185, 112
      %v9221 = vpop.permute.xlu0 %9220
      %9222 = vrot.lane.b32.xlu0 %v9186, 112
      %v9223 = vpop.permute.xlu0 %9222
      %9224 = vrot.lane.b32.xlu0 %v9187, 112
      %v9225 = vpop.permute.xlu0 %9224
      %9226 = vrot.lane.b32.xlu0 %v9188, 112
      %v9227 = vpop.permute.xlu0 %9226
      %9228 = vrot.lane.b32.xlu0 %v9189, 112
      %v9229 = vpop.permute.xlu0 %9228
      %9230 = vrot.lane.b32.xlu0 %v9190, 112
      %v9231 = vpop.permute.xlu0 %9230
      %9232 = vrot.lane.b32.xlu0 %v9191, 112
      %v9233 = vpop.permute.xlu0 %9232
      %9234 = vrot.lane.b32.xlu0 %v9192, 112
      %v9235 = vpop.permute.xlu0 %9234
      %9236 = vrot.lane.b32.xlu0 %v9193, 112
      %v9237 = vpop.permute.xlu0 %9236
      %9238 = vrot.lane.b32.xlu0 %v9194, 112
      %v9239 = vpop.permute.xlu0 %9238
      %9240 = vrot.lane.b32.xlu0 %v9195, 112
      %v9241 = vpop.permute.xlu0 %9240
      %9242 = vrot.lane.b32.xlu0 %v9196, 112
      %v9243 = vpop.permute.xlu0 %9242
      %9244 = vrot.lane.b32.xlu0 %v9197, 112
      %v9245 = vpop.permute.xlu0 %9244
      %vm9262 = vcmask 982912
      %9263 = vst.msk [vmem:[#allocation2] sm:$0xff] %vm9262, %v9215
      %9264 = vst.msk [vmem:[#allocation2 + $0x18] sm:$0xff] %vm9262, %v9217
      %9265 = vst.msk [vmem:[#allocation2 + $0x30] sm:$0xff] %vm9262, %v9219
      %9266 = vst.msk [vmem:[#allocation2 + $0x48] sm:$0xff] %vm9262, %v9221
      %9267 = vst.msk [vmem:[#allocation2 + $0x60] sm:$0xff] %vm9262, %v9223
      %9268 = vst.msk [vmem:[#allocation2 + $0x78] sm:$0xff] %vm9262, %v9225
      %9269 = vst.msk [vmem:[#allocation2 + $0x90] sm:$0xff] %vm9262, %v9227
      %9270 = vst.msk [vmem:[#allocation2 + $0xa8] sm:$0xff] %vm9262, %v9229
      %9271 = vst.msk [vmem:[#allocation2 + $0xc0] sm:$0xff] %vm9262, %v9231
      %9272 = vst.msk [vmem:[#allocation2 + $0xd8] sm:$0xff] %vm9262, %v9233
      %9273 = vst.msk [vmem:[#allocation2 + $0xf0] sm:$0xff] %vm9262, %v9235
      %9274 = vst.msk [vmem:[#allocation2 + $0x108] sm:$0xff] %vm9262, %v9237
      %9275 = vst.msk [vmem:[#allocation2 + $0x120] sm:$0xff] %vm9262, %v9239
      %9276 = vst.msk [vmem:[#allocation2 + $0x138] sm:$0xff] %vm9262, %v9241
      %9277 = vst.msk [vmem:[#allocation2 + $0x150] sm:$0xff] %vm9262, %v9243
      %9278 = vst.msk [vmem:[#allocation2 + $0x168] sm:$0xff] %vm9262, %v9245
      %v9279 = vld [vmem:[%s2282] sm:$0xff]
      %v9280 = vld [vmem:[%s2282 + $0x8] sm:$0xff]
      %v9281 = vld [vmem:[%s2282 + $0x18] sm:$0xff]
      %v9282 = vld [vmem:[%s2282 + $0x20] sm:$0xff]
      %v9283 = vld [vmem:[%s2282 + $0x30] sm:$0xff]
      %v9284 = vld [vmem:[%s2282 + $0x38] sm:$0xff]
      %v9285 = vld [vmem:[%s2282 + $0x48] sm:$0xff]
      %v9286 = vld [vmem:[%s2282 + $0x50] sm:$0xff]
      %v9287 = vld [vmem:[%s2282 + $0x60] sm:$0xff]
      %v9288 = vld [vmem:[%s2282 + $0x68] sm:$0xff]
      %v9289 = vld [vmem:[%s2282 + $0x78] sm:$0xff]
      %v9290 = vld [vmem:[%s2282 + $0x80] sm:$0xff]
      %v9291 = vld [vmem:[%s2282 + $0x90] sm:$0xff]
      %v9292 = vld [vmem:[%s2282 + $0x98] sm:$0xff]
      %v9293 = vld [vmem:[%s2282 + $0xa8] sm:$0xff]
      %v9294 = vld [vmem:[%s2282 + $0xb0] sm:$0xff]
      %v9295 = vld [vmem:[%s2282 + $0xc0] sm:$0xff]
      %v9296 = vld [vmem:[%s2282 + $0xc8] sm:$0xff]
      %v9297 = vld [vmem:[%s2282 + $0xd8] sm:$0xff]
      %v9298 = vld [vmem:[%s2282 + $0xe0] sm:$0xff]
      %v9299 = vld [vmem:[%s2282 + $0xf0] sm:$0xff]
      %v9300 = vld [vmem:[%s2282 + $0xf8] sm:$0xff]
      %v9301 = vld [vmem:[%s2282 + $0x108] sm:$0xff]
      %v9302 = vld [vmem:[%s2282 + $0x110] sm:$0xff]
      %v9303 = vld [vmem:[%s2282 + $0x120] sm:$0xff]
      %v9304 = vld [vmem:[%s2282 + $0x128] sm:$0xff]
      %v9305 = vld [vmem:[%s2282 + $0x138] sm:$0xff]
      %v9306 = vld [vmem:[%s2282 + $0x140] sm:$0xff]
      %v9307 = vld [vmem:[%s2282 + $0x150] sm:$0xff]
      %v9308 = vld [vmem:[%s2282 + $0x158] sm:$0xff]
      %v9309 = vld [vmem:[%s2282 + $0x168] sm:$0xff]
      %v9310 = vld [vmem:[%s2282 + $0x170] sm:$0xff]
      %v9311 = vpack.c.bf16 %v9280, %v9279
      %v9312 = vpack.c.bf16 %v9282, %v9281
      %v9313 = vpack.c.bf16 %v9284, %v9283
      %v9314 = vpack.c.bf16 %v9286, %v9285
      %v9315 = vpack.c.bf16 %v9288, %v9287
      %v9316 = vpack.c.bf16 %v9290, %v9289
      %v9317 = vpack.c.bf16 %v9292, %v9291
      %v9318 = vpack.c.bf16 %v9294, %v9293
      %v9319 = vpack.c.bf16 %v9296, %v9295
      %v9320 = vpack.c.bf16 %v9298, %v9297
      %v9321 = vpack.c.bf16 %v9300, %v9299
      %v9322 = vpack.c.bf16 %v9302, %v9301
      %v9323 = vpack.c.bf16 %v9304, %v9303
      %v9324 = vpack.c.bf16 %v9306, %v9305
      %v9325 = vpack.c.bf16 %v9308, %v9307
      %v9326 = vpack.c.bf16 %v9310, %v9309
      %9343 = vrot.lane.b32.xlu0 %v9311, 120
      %v9344 = vpop.permute.xlu0 %9343
      %9345 = vrot.lane.b32.xlu0 %v9312, 120
      %v9346 = vpop.permute.xlu0 %9345
      %9347 = vrot.lane.b32.xlu0 %v9313, 120
      %v9348 = vpop.permute.xlu0 %9347
      %9349 = vrot.lane.b32.xlu0 %v9314, 120
      %v9350 = vpop.permute.xlu0 %9349
      %9351 = vrot.lane.b32.xlu0 %v9315, 120
      %v9352 = vpop.permute.xlu0 %9351
      %9353 = vrot.lane.b32.xlu0 %v9316, 120
      %v9354 = vpop.permute.xlu0 %9353
      %9355 = vrot.lane.b32.xlu0 %v9317, 120
      %v9356 = vpop.permute.xlu0 %9355
      %9357 = vrot.lane.b32.xlu0 %v9318, 120
      %v9358 = vpop.permute.xlu0 %9357
      %9359 = vrot.lane.b32.xlu0 %v9319, 120
      %v9360 = vpop.permute.xlu0 %9359
      %9361 = vrot.lane.b32.xlu0 %v9320, 120
      %v9362 = vpop.permute.xlu0 %9361
      %9363 = vrot.lane.b32.xlu0 %v9321, 120
      %v9364 = vpop.permute.xlu0 %9363
      %9365 = vrot.lane.b32.xlu0 %v9322, 120
      %v9366 = vpop.permute.xlu0 %9365
      %9367 = vrot.lane.b32.xlu0 %v9323, 120
      %v9368 = vpop.permute.xlu0 %9367
      %9369 = vrot.lane.b32.xlu0 %v9324, 120
      %v9370 = vpop.permute.xlu0 %9369
      %9371 = vrot.lane.b32.xlu0 %v9325, 120
      %v9372 = vpop.permute.xlu0 %9371
      %9373 = vrot.lane.b32.xlu0 %v9326, 120
      %v9374 = vpop.permute.xlu0 %9373
      %vm9391 = vcmask 1048512
      %9392 = vst.msk [vmem:[#allocation2] sm:$0xff] %vm9391, %v9344
      %9393 = vst.msk [vmem:[#allocation2 + $0x18] sm:$0xff] %vm9391, %v9346
      %9394 = vst.msk [vmem:[#allocation2 + $0x30] sm:$0xff] %vm9391, %v9348
      %9395 = vst.msk [vmem:[#allocation2 + $0x48] sm:$0xff] %vm9391, %v9350
      %9396 = vst.msk [vmem:[#allocation2 + $0x60] sm:$0xff] %vm9391, %v9352
      %9397 = vst.msk [vmem:[#allocation2 + $0x78] sm:$0xff] %vm9391, %v9354
      %9398 = vst.msk [vmem:[#allocation2 + $0x90] sm:$0xff] %vm9391, %v9356
      %9399 = vst.msk [vmem:[#allocation2 + $0xa8] sm:$0xff] %vm9391, %v9358
      %9400 = vst.msk [vmem:[#allocation2 + $0xc0] sm:$0xff] %vm9391, %v9360
      %9401 = vst.msk [vmem:[#allocation2 + $0xd8] sm:$0xff] %vm9391, %v9362
      %9402 = vst.msk [vmem:[#allocation2 + $0xf0] sm:$0xff] %vm9391, %v9364
      %9403 = vst.msk [vmem:[#allocation2 + $0x108] sm:$0xff] %vm9391, %v9366
      %9404 = vst.msk [vmem:[#allocation2 + $0x120] sm:$0xff] %vm9391, %v9368
      %9405 = vst.msk [vmem:[#allocation2 + $0x138] sm:$0xff] %vm9391, %v9370
      %9406 = vst.msk [vmem:[#allocation2 + $0x150] sm:$0xff] %vm9391, %v9372
      %9407 = vst.msk [vmem:[#allocation2 + $0x168] sm:$0xff] %vm9391, %v9374
      %v9408 = vld [vmem:[%s2282 + $0x1] sm:$0xff]
      %v9409 = vld [vmem:[%s2282 + $0x9] sm:$0xff]
      %v9410 = vld [vmem:[%s2282 + $0x19] sm:$0xff]
      %v9411 = vld [vmem:[%s2282 + $0x21] sm:$0xff]
      %v9412 = vld [vmem:[%s2282 + $0x31] sm:$0xff]
      %v9413 = vld [vmem:[%s2282 + $0x39] sm:$0xff]
      %v9414 = vld [vmem:[%s2282 + $0x49] sm:$0xff]
      %v9415 = vld [vmem:[%s2282 + $0x51] sm:$0xff]
      %v9416 = vld [vmem:[%s2282 + $0x61] sm:$0xff]
      %v9417 = vld [vmem:[%s2282 + $0x69] sm:$0xff]
      %v9418 = vld [vmem:[%s2282 + $0x79] sm:$0xff]
      %v9419 = vld [vmem:[%s2282 + $0x81] sm:$0xff]
      %v9420 = vld [vmem:[%s2282 + $0x91] sm:$0xff]
      %v9421 = vld [vmem:[%s2282 + $0x99] sm:$0xff]
      %v9422 = vld [vmem:[%s2282 + $0xa9] sm:$0xff]
      %v9423 = vld [vmem:[%s2282 + $0xb1] sm:$0xff]
      %v9424 = vld [vmem:[%s2282 + $0xc1] sm:$0xff]
      %v9425 = vld [vmem:[%s2282 + $0xc9] sm:$0xff]
      %v9426 = vld [vmem:[%s2282 + $0xd9] sm:$0xff]
      %v9427 = vld [vmem:[%s2282 + $0xe1] sm:$0xff]
      %v9428 = vld [vmem:[%s2282 + $0xf1] sm:$0xff]
      %v9429 = vld [vmem:[%s2282 + $0xf9] sm:$0xff]
      %v9430 = vld [vmem:[%s2282 + $0x109] sm:$0xff]
      %v9431 = vld [vmem:[%s2282 + $0x111] sm:$0xff]
      %v9432 = vld [vmem:[%s2282 + $0x121] sm:$0xff]
      %v9433 = vld [vmem:[%s2282 + $0x129] sm:$0xff]
      %v9434 = vld [vmem:[%s2282 + $0x139] sm:$0xff]
      %v9435 = vld [vmem:[%s2282 + $0x141] sm:$0xff]
      %v9436 = vld [vmem:[%s2282 + $0x151] sm:$0xff]
      %v9437 = vld [vmem:[%s2282 + $0x159] sm:$0xff]
      %v9438 = vld [vmem:[%s2282 + $0x169] sm:$0xff]
      %v9439 = vld [vmem:[%s2282 + $0x171] sm:$0xff]
      %v9440 = vpack.c.bf16 %v9409, %v9408
      %v9441 = vpack.c.bf16 %v9411, %v9410
      %v9442 = vpack.c.bf16 %v9413, %v9412
      %v9443 = vpack.c.bf16 %v9415, %v9414
      %v9444 = vpack.c.bf16 %v9417, %v9416
      %v9445 = vpack.c.bf16 %v9419, %v9418
      %v9446 = vpack.c.bf16 %v9421, %v9420
      %v9447 = vpack.c.bf16 %v9423, %v9422
      %v9448 = vpack.c.bf16 %v9425, %v9424
      %v9449 = vpack.c.bf16 %v9427, %v9426
      %v9450 = vpack.c.bf16 %v9429, %v9428
      %v9451 = vpack.c.bf16 %v9431, %v9430
      %v9452 = vpack.c.bf16 %v9433, %v9432
      %v9453 = vpack.c.bf16 %v9435, %v9434
      %v9454 = vpack.c.bf16 %v9437, %v9436
      %v9455 = vpack.c.bf16 %v9439, %v9438
      %9456 = vst.msk [vmem:[#allocation2 + $0x8] sm:$0xff] %vm552, %v9440
      %9457 = vst.msk [vmem:[#allocation2 + $0x20] sm:$0xff] %vm552, %v9441
      %9458 = vst.msk [vmem:[#allocation2 + $0x38] sm:$0xff] %vm552, %v9442
      %9459 = vst.msk [vmem:[#allocation2 + $0x50] sm:$0xff] %vm552, %v9443
      %9460 = vst.msk [vmem:[#allocation2 + $0x68] sm:$0xff] %vm552, %v9444
      %9461 = vst.msk [vmem:[#allocation2 + $0x80] sm:$0xff] %vm552, %v9445
      %9462 = vst.msk [vmem:[#allocation2 + $0x98] sm:$0xff] %vm552, %v9446
      %9463 = vst.msk [vmem:[#allocation2 + $0xb0] sm:$0xff] %vm552, %v9447
      %9464 = vst.msk [vmem:[#allocation2 + $0xc8] sm:$0xff] %vm552, %v9448
      %9465 = vst.msk [vmem:[#allocation2 + $0xe0] sm:$0xff] %vm552, %v9449
      %9466 = vst.msk [vmem:[#allocation2 + $0xf8] sm:$0xff] %vm552, %v9450
      %9467 = vst.msk [vmem:[#allocation2 + $0x110] sm:$0xff] %vm552, %v9451
      %9468 = vst.msk [vmem:[#allocation2 + $0x128] sm:$0xff] %vm552, %v9452
      %9469 = vst.msk [vmem:[#allocation2 + $0x140] sm:$0xff] %vm552, %v9453
      %9470 = vst.msk [vmem:[#allocation2 + $0x158] sm:$0xff] %vm552, %v9454
      %9471 = vst.msk [vmem:[#allocation2 + $0x170] sm:$0xff] %vm552, %v9455
      %v9472 = vld [vmem:[%s2282 + $0x2] sm:$0xff]
      %v9473 = vld [vmem:[%s2282 + $0xa] sm:$0xff]
      %v9474 = vld [vmem:[%s2282 + $0x1a] sm:$0xff]
      %v9475 = vld [vmem:[%s2282 + $0x22] sm:$0xff]
      %v9476 = vld [vmem:[%s2282 + $0x32] sm:$0xff]
      %v9477 = vld [vmem:[%s2282 + $0x3a] sm:$0xff]
      %v9478 = vld [vmem:[%s2282 + $0x4a] sm:$0xff]
      %v9479 = vld [vmem:[%s2282 + $0x52] sm:$0xff]
      %v9480 = vld [vmem:[%s2282 + $0x62] sm:$0xff]
      %v9481 = vld [vmem:[%s2282 + $0x6a] sm:$0xff]
      %v9482 = vld [vmem:[%s2282 + $0x7a] sm:$0xff]
      %v9483 = vld [vmem:[%s2282 + $0x82] sm:$0xff]
      %v9484 = vld [vmem:[%s2282 + $0x92] sm:$0xff]
      %v9485 = vld [vmem:[%s2282 + $0x9a] sm:$0xff]
      %v9486 = vld [vmem:[%s2282 + $0xaa] sm:$0xff]
      %v9487 = vld [vmem:[%s2282 + $0xb2] sm:$0xff]
      %v9488 = vld [vmem:[%s2282 + $0xc2] sm:$0xff]
      %v9489 = vld [vmem:[%s2282 + $0xca] sm:$0xff]
      %v9490 = vld [vmem:[%s2282 + $0xda] sm:$0xff]
      %v9491 = vld [vmem:[%s2282 + $0xe2] sm:$0xff]
      %v9492 = vld [vmem:[%s2282 + $0xf2] sm:$0xff]
      %v9493 = vld [vmem:[%s2282 + $0xfa] sm:$0xff]
      %v9494 = vld [vmem:[%s2282 + $0x10a] sm:$0xff]
      %v9495 = vld [vmem:[%s2282 + $0x112] sm:$0xff]
      %v9496 = vld [vmem:[%s2282 + $0x122] sm:$0xff]
      %v9497 = vld [vmem:[%s2282 + $0x12a] sm:$0xff]
      %v9498 = vld [vmem:[%s2282 + $0x13a] sm:$0xff]
      %v9499 = vld [vmem:[%s2282 + $0x142] sm:$0xff]
      %v9500 = vld [vmem:[%s2282 + $0x152] sm:$0xff]
      %v9501 = vld [vmem:[%s2282 + $0x15a] sm:$0xff]
      %v9502 = vld [vmem:[%s2282 + $0x16a] sm:$0xff]
      %v9503 = vld [vmem:[%s2282 + $0x172] sm:$0xff]
      %v9504 = vpack.c.bf16 %v9473, %v9472
      %v9505 = vpack.c.bf16 %v9475, %v9474
      %v9506 = vpack.c.bf16 %v9477, %v9476
      %v9507 = vpack.c.bf16 %v9479, %v9478
      %v9508 = vpack.c.bf16 %v9481, %v9480
      %v9509 = vpack.c.bf16 %v9483, %v9482
      %v9510 = vpack.c.bf16 %v9485, %v9484
      %v9511 = vpack.c.bf16 %v9487, %v9486
      %v9512 = vpack.c.bf16 %v9489, %v9488
      %v9513 = vpack.c.bf16 %v9491, %v9490
      %v9514 = vpack.c.bf16 %v9493, %v9492
      %v9515 = vpack.c.bf16 %v9495, %v9494
      %v9516 = vpack.c.bf16 %v9497, %v9496
      %v9517 = vpack.c.bf16 %v9499, %v9498
      %v9518 = vpack.c.bf16 %v9501, %v9500
      %v9519 = vpack.c.bf16 %v9503, %v9502
      %9536 = vrot.lane.b32.xlu0 %v9504, 8
      %v9537 = vpop.permute.xlu0 %9536
      %9538 = vrot.lane.b32.xlu0 %v9505, 8
      %v9539 = vpop.permute.xlu0 %9538
      %9540 = vrot.lane.b32.xlu0 %v9506, 8
      %v9541 = vpop.permute.xlu0 %9540
      %9542 = vrot.lane.b32.xlu0 %v9507, 8
      %v9543 = vpop.permute.xlu0 %9542
      %9544 = vrot.lane.b32.xlu0 %v9508, 8
      %v9545 = vpop.permute.xlu0 %9544
      %9546 = vrot.lane.b32.xlu0 %v9509, 8
      %v9547 = vpop.permute.xlu0 %9546
      %9548 = vrot.lane.b32.xlu0 %v9510, 8
      %v9549 = vpop.permute.xlu0 %9548
      %9550 = vrot.lane.b32.xlu0 %v9511, 8
      %v9551 = vpop.permute.xlu0 %9550
      %9552 = vrot.lane.b32.xlu0 %v9512, 8
      %v9553 = vpop.permute.xlu0 %9552
      %9554 = vrot.lane.b32.xlu0 %v9513, 8
      %v9555 = vpop.permute.xlu0 %9554
      %9556 = vrot.lane.b32.xlu0 %v9514, 8
      %v9557 = vpop.permute.xlu0 %9556
      %9558 = vrot.lane.b32.xlu0 %v9515, 8
      %v9559 = vpop.permute.xlu0 %9558
      %9560 = vrot.lane.b32.xlu0 %v9516, 8
      %v9561 = vpop.permute.xlu0 %9560
      %9562 = vrot.lane.b32.xlu0 %v9517, 8
      %v9563 = vpop.permute.xlu0 %9562
      %9564 = vrot.lane.b32.xlu0 %v9518, 8
      %v9565 = vpop.permute.xlu0 %9564
      %9566 = vrot.lane.b32.xlu0 %v9519, 8
      %v9567 = vpop.permute.xlu0 %9566
      %9584 = vst.msk [vmem:[#allocation2 + $0x8] sm:$0xff] %vm2384, %v9537
      %9585 = vst.msk [vmem:[#allocation2 + $0x20] sm:$0xff] %vm2384, %v9539
      %9586 = vst.msk [vmem:[#allocation2 + $0x38] sm:$0xff] %vm2384, %v9541
      %9587 = vst.msk [vmem:[#allocation2 + $0x50] sm:$0xff] %vm2384, %v9543
      %9588 = vst.msk [vmem:[#allocation2 + $0x68] sm:$0xff] %vm2384, %v9545
      %9589 = vst.msk [vmem:[#allocation2 + $0x80] sm:$0xff] %vm2384, %v9547
      %9590 = vst.msk [vmem:[#allocation2 + $0x98] sm:$0xff] %vm2384, %v9549
      %9591 = vst.msk [vmem:[#allocation2 + $0xb0] sm:$0xff] %vm2384, %v9551
      %9592 = vst.msk [vmem:[#allocation2 + $0xc8] sm:$0xff] %vm2384, %v9553
      %9593 = vst.msk [vmem:[#allocation2 + $0xe0] sm:$0xff] %vm2384, %v9555
      %9594 = vst.msk [vmem:[#allocation2 + $0xf8] sm:$0xff] %vm2384, %v9557
      %9595 = vst.msk [vmem:[#allocation2 + $0x110] sm:$0xff] %vm2384, %v9559
      %9596 = vst.msk [vmem:[#allocation2 + $0x128] sm:$0xff] %vm2384, %v9561
      %9597 = vst.msk [vmem:[#allocation2 + $0x140] sm:$0xff] %vm2384, %v9563
      %9598 = vst.msk [vmem:[#allocation2 + $0x158] sm:$0xff] %vm2384, %v9565
      %9599 = vst.msk [vmem:[#allocation2 + $0x170] sm:$0xff] %vm2384, %v9567
      %v9600 = vld [vmem:[#allocation2] sm:$0xff]
      %v9601 = vld [vmem:[#allocation2 + $0x8] sm:$0xff]
      %v9602 = vld [vmem:[#allocation2 + $0x18] sm:$0xff]
      %v9603 = vld [vmem:[#allocation2 + $0x20] sm:$0xff]
      %v9604 = vld [vmem:[#allocation2 + $0x30] sm:$0xff]
      %v9605 = vld [vmem:[#allocation2 + $0x38] sm:$0xff]
      %v9606 = vld [vmem:[#allocation2 + $0x48] sm:$0xff]
      %v9607 = vld [vmem:[#allocation2 + $0x50] sm:$0xff]
      %v9608 = vld [vmem:[#allocation2 + $0x60] sm:$0xff]
      %v9609 = vld [vmem:[#allocation2 + $0x68] sm:$0xff]
      %v9610 = vld [vmem:[#allocation2 + $0x78] sm:$0xff]
      %v9611 = vld [vmem:[#allocation2 + $0x80] sm:$0xff]
      %v9612 = vld [vmem:[#allocation2 + $0x90] sm:$0xff]
      %v9613 = vld [vmem:[#allocation2 + $0x98] sm:$0xff]
      %v9614 = vld [vmem:[#allocation2 + $0xa8] sm:$0xff]
      %v9615 = vld [vmem:[#allocation2 + $0xb0] sm:$0xff]
      %v9616 = vld [vmem:[#allocation2 + $0xc0] sm:$0xff]
      %v9617 = vld [vmem:[#allocation2 + $0xc8] sm:$0xff]
      %v9618 = vld [vmem:[#allocation2 + $0xd8] sm:$0xff]
      %v9619 = vld [vmem:[#allocation2 + $0xe0] sm:$0xff]
      %v9620 = vld [vmem:[#allocation2 + $0xf0] sm:$0xff]
      %v9621 = vld [vmem:[#allocation2 + $0xf8] sm:$0xff]
      %v9622 = vld [vmem:[#allocation2 + $0x108] sm:$0xff]
      %v9623 = vld [vmem:[#allocation2 + $0x110] sm:$0xff]
      %v9624 = vld [vmem:[#allocation2 + $0x120] sm:$0xff]
      %v9625 = vld [vmem:[#allocation2 + $0x128] sm:$0xff]
      %v9626 = vld [vmem:[#allocation2 + $0x138] sm:$0xff]
      %v9627 = vld [vmem:[#allocation2 + $0x140] sm:$0xff]
      %v9628 = vld [vmem:[#allocation2 + $0x150] sm:$0xff]
      %v9629 = vld [vmem:[#allocation2 + $0x158] sm:$0xff]
      %v9630 = vld [vmem:[#allocation2 + $0x168] sm:$0xff]
      %v9631 = vld [vmem:[#allocation2 + $0x170] sm:$0xff]
      %v9632 = vld [vmem:[%s13] sm:$0xf]
      %v9633 = vld [vmem:[%s13 + $0x4] sm:$0xf]
      %v9634 = vld [vmem:[%s13 + $0x8] sm:$0xf]
      %v9635 = vld [vmem:[%s13 + $0xc] sm:$0xf]
      %v9636 = vld [vmem:[%s13 + $0x10] sm:$0xf]
      %v9637 = vld [vmem:[%s13 + $0x14] sm:$0xf]
      %v9638 = vld [vmem:[%s13 + $0x18] sm:$0xf]
      %v9639 = vld [vmem:[%s13 + $0x1c] sm:$0xf]
      %v9640 = vld [vmem:[%s13 + $0x20] sm:$0xf]
      %v9641 = vld [vmem:[%s13 + $0x24] sm:$0xf]
      %v9642 = vld [vmem:[%s13 + $0x28] sm:$0xf]
      %v9643 = vld [vmem:[%s13 + $0x2c] sm:$0xf]
      %v9644 = vld [vmem:[%s13 + $0x30] sm:$0xf]
      %v9645 = vld [vmem:[%s13 + $0x34] sm:$0xf]
      %v9646 = vld [vmem:[%s13 + $0x38] sm:$0xf]
      %v9647 = vld [vmem:[%s13 + $0x3c] sm:$0xf]
      %v9648 = vld [vmem:[%s13 + $0x40] sm:$0xf]
      %v9649 = vld [vmem:[%s13 + $0x44] sm:$0xf]
      %v9650 = vld [vmem:[%s14] sm:$0x1]
      %v9652 = vlaneseq
      %v9653 = vshrl.u32 %v9652, 7
      %v9654 = vsub.s32 0, %v9653
      %v9655 = vrot.slane %v9650, %v9654
      %v9675 = vunpack.c.l.b16 %v9632
      %v9676 = vunpack.c.l.b16 %v9633
      %v9677 = vunpack.c.l.b16 %v9634
      %v9678 = vunpack.c.l.b16 %v9635
      %v9679 = vunpack.c.l.b16 %v9636
      %v9680 = vunpack.c.l.b16 %v9637
      %v9681 = vunpack.c.l.b16 %v9638
      %v9682 = vunpack.c.l.b16 %v9639
      %v9683 = vunpack.c.l.b16 %v9640
      %v9684 = vunpack.c.l.b16 %v9641
      %v9685 = vunpack.c.l.b16 %v9642
      %v9686 = vunpack.c.l.b16 %v9643
      %v9687 = vunpack.c.l.b16 %v9644
      %v9688 = vunpack.c.l.b16 %v9645
      %v9689 = vunpack.c.l.b16 %v9646
      %v9690 = vunpack.c.l.b16 %v9647
      %v9691 = vunpack.c.l.b16 %v9648
      %v9692 = vunpack.c.l.b16 %v9649
      %v9693 = vpack.c.b16 %v9676, %v9675
      %v9694 = vpack.c.b16 %v9678, %v9677
      %v9695 = vpack.c.b16 %v9680, %v9679
      %v9696 = vpack.c.b16 %v9682, %v9681
      %v9697 = vpack.c.b16 %v9684, %v9683
      %v9698 = vpack.c.b16 %v9686, %v9685
      %v9699 = vpack.c.b16 %v9688, %v9687
      %v9700 = vpack.c.b16 %v9690, %v9689
      %v9701 = vpack.c.b16 %v9692, %v9691
      %v9712 = vsel %vm628, %v9601, 0
      %v9715 = vsel %vm628, %v9603, 0
      %v9718 = vsel %vm628, %v9605, 0
      %v9721 = vsel %vm628, %v9607, 0
      %v9724 = vsel %vm628, %v9609, 0
      %v9727 = vsel %vm628, %v9611, 0
      %v9730 = vsel %vm628, %v9613, 0
      %v9733 = vsel %vm628, %v9615, 0
      %v9736 = vsel %vm628, %v9617, 0
      %v9739 = vsel %vm628, %v9619, 0
      %v9742 = vsel %vm628, %v9621, 0
      %v9745 = vsel %vm628, %v9623, 0
      %v9748 = vsel %vm628, %v9625, 0
      %v9751 = vsel %vm628, %v9627, 0
      %v9754 = vsel %vm628, %v9629, 0
      %v9757 = vsel %vm628, %v9631, 0
      %9759 = vmatprep.subr.bf16.mxu0 0
      %9760 = vmatpush1.bf16.msra.mxu0 %v9693
      %9761 = vmatprep.subr.bf16.mxu0 0
      %9762 = vmatpush1.bf16.msra.mxu0 %v9694
      %9763 = vmatprep.subr.bf16.mxu0 0
      %9764 = vmatpush1.bf16.msra.mxu0 %v9695
      %9765 = vmatprep.subr.bf16.mxu0 0
      %9766 = vmatpush1.bf16.msra.mxu0 %v9696
      %9767 = vmatprep.subr.bf16.mxu0 0
      %9768 = vmatpush1.bf16.msra.mxu0 %v9697
      %9769 = vmatprep.subr.bf16.mxu0 0
      %9770 = vmatpush1.bf16.msra.mxu0 %v9698
      %9771 = vmatprep.subr.bf16.mxu0 0
      %9772 = vmatpush1.bf16.msra.mxu0 %v9699
      %9773 = vmatprep.subr.bf16.mxu0 0
      %9774 = vmatpush1.bf16.msra.mxu0 %v9700
      %9775 = vmatprep.subr.bf16.mxu0 0
      %9776 = vmatpush1.bf16.msra.mxu0 %v9701
      %9777 = vmatprep.subr.bf16.mxu0 0
      %9778 = vmatpush1.bf16.msra.mxu0 0
      %9779 = vmatprep.subr.bf16.mxu0 0
      %9780 = vmatpush1.bf16.msra.mxu0 0
      %9781 = vmatprep.subr.bf16.mxu0 0
      %9782 = vmatpush1.bf16.msra.mxu0 0
      %9783 = vmatprep.subr.bf16.mxu0 0
      %9784 = vmatpush1.bf16.msra.mxu0 0
      %9785 = vmatprep.subr.bf16.mxu0 0
      %9786 = vmatpush1.bf16.msra.mxu0 0
      %9787 = vmatprep.subr.bf16.mxu0 0
      %9788 = vmatpush1.bf16.msra.mxu0 0
      %9789 = vmatprep.subr.bf16.mxu0 0
      %9790 = vmatpush1.bf16.msra.mxu0 0
      %9791 = vmatprep.mubr.bf16.mxu0 %v9712
      %9792 = vmatmul.mubr.bf16.gmra.mrb[0].mxu0 %v9600
      %v9793 = vpop.f32.mrb[0].mxu0
      %v9794 = vadd.f32 %v9655, %v9793
      %v9795 = vpop.f32.mrb[0].mxu0
      %v9796 = vpop.f32.mrb[0].mxu0
      %v9797 = vadd.f32 %v9655, %v9796
      %v9798 = vpop.f32.mrb[0].mxu0
      %9799 = vmatprep.mubr.bf16.mxu0 %v9715
      %9800 = vmatmul.mubr.bf16.gmra.mrb[0].mxu0 %v9602
      %v9801 = vpop.f32.mrb[0].mxu0
      %v9802 = vadd.f32 %v9655, %v9801
      %v9803 = vpop.f32.mrb[0].mxu0
      %v9804 = vpop.f32.mrb[0].mxu0
      %v9805 = vadd.f32 %v9655, %v9804
      %v9806 = vpop.f32.mrb[0].mxu0
      %9807 = vmatprep.mubr.bf16.mxu0 %v9718
      %9808 = vmatmul.mubr.bf16.gmra.mrb[0].mxu0 %v9604
      %v9809 = vpop.f32.mrb[0].mxu0
      %v9810 = vadd.f32 %v9655, %v9809
      %v9811 = vpop.f32.mrb[0].mxu0
      %v9812 = vpop.f32.mrb[0].mxu0
      %v9813 = vadd.f32 %v9655, %v9812
      %v9814 = vpop.f32.mrb[0].mxu0
      %9815 = vmatprep.mubr.bf16.mxu0 %v9721
      %9816 = vmatmul.mubr.bf16.gmra.mrb[0].mxu0 %v9606
      %v9817 = vpop.f32.mrb[0].mxu0
      %v9818 = vadd.f32 %v9655, %v9817
      %v9819 = vpop.f32.mrb[0].mxu0
      %v9820 = vpop.f32.mrb[0].mxu0
      %v9821 = vadd.f32 %v9655, %v9820
      %v9822 = vpop.f32.mrb[0].mxu0
      %9823 = vmatprep.mubr.bf16.mxu0 %v9724
      %9824 = vmatmul.mubr.bf16.gmra.mrb[0].mxu0 %v9608
      %v9825 = vpop.f32.mrb[0].mxu0
      %v9826 = vadd.f32 %v9655, %v9825
      %v9827 = vpop.f32.mrb[0].mxu0
      %v9828 = vpop.f32.mrb[0].mxu0
      %v9829 = vadd.f32 %v9655, %v9828
      %v9830 = vpop.f32.mrb[0].mxu0
      %9831 = vmatprep.mubr.bf16.mxu0 %v9727
      %9832 = vmatmul.mubr.bf16.gmra.mrb[0].mxu0 %v9610
      %v9833 = vpop.f32.mrb[0].mxu0
      %v9834 = vadd.f32 %v9655, %v9833
      %v9835 = vpop.f32.mrb[0].mxu0
      %v9836 = vpop.f32.mrb[0].mxu0
      %v9837 = vadd.f32 %v9655, %v9836
      %v9838 = vpop.f32.mrb[0].mxu0
      %9839 = vmatprep.mubr.bf16.mxu0 %v9730
      %9840 = vmatmul.mubr.bf16.gmra.mrb[0].mxu0 %v9612
      %v9841 = vpop.f32.mrb[0].mxu0
      %v9842 = vadd.f32 %v9655, %v9841
      %v9843 = vpop.f32.mrb[0].mxu0
      %v9844 = vpop.f32.mrb[0].mxu0
      %v9845 = vadd.f32 %v9655, %v9844
      %v9846 = vpop.f32.mrb[0].mxu0
      %9847 = vmatprep.mubr.bf16.mxu0 %v9733
      %9848 = vmatmul.mubr.bf16.gmra.mrb[0].mxu0 %v9614
      %v9849 = vpop.f32.mrb[0].mxu0
      %v9850 = vadd.f32 %v9655, %v9849
      %v9851 = vpop.f32.mrb[0].mxu0
      %v9852 = vpop.f32.mrb[0].mxu0
      %v9853 = vadd.f32 %v9655, %v9852
      %v9854 = vpop.f32.mrb[0].mxu0
      %9855 = vmatprep.mubr.bf16.mxu0 %v9736
      %9856 = vmatmul.mubr.bf16.gmra.mrb[0].mxu0 %v9616
      %v9857 = vpop.f32.mrb[0].mxu0
      %v9858 = vadd.f32 %v9655, %v9857
      %v9859 = vpop.f32.mrb[0].mxu0
      %v9860 = vpop.f32.mrb[0].mxu0
      %v9861 = vadd.f32 %v9655, %v9860
      %v9862 = vpop.f32.mrb[0].mxu0
      %9863 = vmatprep.mubr.bf16.mxu0 %v9739
      %9864 = vmatmul.mubr.bf16.gmra.mrb[0].mxu0 %v9618
      %v9865 = vpop.f32.mrb[0].mxu0
      %v9866 = vadd.f32 %v9655, %v9865
      %v9867 = vpop.f32.mrb[0].mxu0
      %v9868 = vpop.f32.mrb[0].mxu0
      %v9869 = vadd.f32 %v9655, %v9868
      %v9870 = vpop.f32.mrb[0].mxu0
      %9871 = vmatprep.mubr.bf16.mxu0 %v9742
      %9872 = vmatmul.mubr.bf16.gmra.mrb[0].mxu0 %v9620
      %v9873 = vpop.f32.mrb[0].mxu0
      %v9874 = vadd.f32 %v9655, %v9873
      %v9875 = vpop.f32.mrb[0].mxu0
      %v9876 = vpop.f32.mrb[0].mxu0
      %v9877 = vadd.f32 %v9655, %v9876
      %v9878 = vpop.f32.mrb[0].mxu0
      %9879 = vmatprep.mubr.bf16.mxu0 %v9745
      %9880 = vmatmul.mubr.bf16.gmra.mrb[0].mxu0 %v9622
      %v9881 = vpop.f32.mrb[0].mxu0
      %v9882 = vadd.f32 %v9655, %v9881
      %v9883 = vpop.f32.mrb[0].mxu0
      %v9884 = vpop.f32.mrb[0].mxu0
      %v9885 = vadd.f32 %v9655, %v9884
      %v9886 = vpop.f32.mrb[0].mxu0
      %9887 = vmatprep.mubr.bf16.mxu0 %v9748
      %9888 = vmatmul.mubr.bf16.gmra.mrb[0].mxu0 %v9624
      %v9889 = vpop.f32.mrb[0].mxu0
      %v9890 = vadd.f32 %v9655, %v9889
      %v9891 = vpop.f32.mrb[0].mxu0
      %v9892 = vpop.f32.mrb[0].mxu0
      %v9893 = vadd.f32 %v9655, %v9892
      %v9894 = vpop.f32.mrb[0].mxu0
      %9895 = vmatprep.mubr.bf16.mxu0 %v9751
      %9896 = vmatmul.mubr.bf16.gmra.mrb[0].mxu0 %v9626
      %v9897 = vpop.f32.mrb[0].mxu0
      %v9898 = vadd.f32 %v9655, %v9897
      %v9899 = vpop.f32.mrb[0].mxu0
      %v9900 = vpop.f32.mrb[0].mxu0
      %v9901 = vadd.f32 %v9655, %v9900
      %v9902 = vpop.f32.mrb[0].mxu0
      %9903 = vmatprep.mubr.bf16.mxu0 %v9754
      %9904 = vmatmul.mubr.bf16.gmra.mrb[0].mxu0 %v9628
      %v9905 = vpop.f32.mrb[0].mxu0
      %v9906 = vadd.f32 %v9655, %v9905
      %v9907 = vpop.f32.mrb[0].mxu0
      %v9908 = vpop.f32.mrb[0].mxu0
      %v9909 = vadd.f32 %v9655, %v9908
      %v9910 = vpop.f32.mrb[0].mxu0
      %9911 = vmatprep.mubr.bf16.mxu0 %v9757
      %9912 = vmatmul.mubr.bf16.gmra.mrb[0].mxu0 %v9630
      %v9913 = vpop.f32.mrb[0].mxu0
      %v9914 = vadd.f32 %v9655, %v9913
      %v9915 = vpop.f32.mrb[0].mxu0
      %v9916 = vpop.f32.mrb[0].mxu0
      %v9917 = vadd.f32 %v9655, %v9916
      %v9918 = vpop.f32.mrb[0].mxu0
      %9919 = vdwg.mxu0
      %v9920 = vtanh.pop %v9794
      %v9921 = vtanh.pop %v9797
      %v9922 = vtanh.pop %v9802
      %v9923 = vtanh.pop %v9805
      %v9924 = vtanh.pop %v9810
      %v9925 = vtanh.pop %v9813
      %v9926 = vtanh.pop %v9818
      %v9927 = vtanh.pop %v9821
      %v9928 = vtanh.pop %v9826
      %v9929 = vtanh.pop %v9829
      %v9930 = vtanh.pop %v9834
      %v9931 = vtanh.pop %v9837
      %v9932 = vtanh.pop %v9842
      %v9933 = vtanh.pop %v9845
      %v9934 = vtanh.pop %v9850
      %v9935 = vtanh.pop %v9853
      %v9936 = vtanh.pop %v9858
      %v9937 = vtanh.pop %v9861
      %v9938 = vtanh.pop %v9866
      %v9939 = vtanh.pop %v9869
      %v9940 = vtanh.pop %v9874
      %v9941 = vtanh.pop %v9877
      %v9942 = vtanh.pop %v9882
      %v9943 = vtanh.pop %v9885
      %v9944 = vtanh.pop %v9890
      %v9945 = vtanh.pop %v9893
      %v9946 = vtanh.pop %v9898
      %v9947 = vtanh.pop %v9901
      %v9948 = vtanh.pop %v9906
      %v9949 = vtanh.pop %v9909
      %v9950 = vtanh.pop %v9914
      %v9951 = vtanh.pop %v9917
      %vm9952 = vcmask 23552
      %9953 = vst.msk [vmem:[%s494] sm:$0xff] %vm9952, %v9920
      %9954 = vst.msk [vmem:[%s494 + $0x8] sm:$0xff] %vm9952, %v9921
      %9955 = vst.msk [vmem:[%s494 + $0x10] sm:$0xff] %vm9952, %v9922
      %9956 = vst.msk [vmem:[%s494 + $0x18] sm:$0xff] %vm9952, %v9923
      %9957 = vst.msk [vmem:[%s494 + $0x20] sm:$0xff] %vm9952, %v9924
      %9958 = vst.msk [vmem:[%s494 + $0x28] sm:$0xff] %vm9952, %v9925
      %9959 = vst.msk [vmem:[%s494 + $0x30] sm:$0xff] %vm9952, %v9926
      %9960 = vst.msk [vmem:[%s494 + $0x38] sm:$0xff] %vm9952, %v9927
      %9961 = vst.msk [vmem:[%s494 + $0x40] sm:$0xff] %vm9952, %v9928
      %9962 = vst.msk [vmem:[%s494 + $0x48] sm:$0xff] %vm9952, %v9929
      %9963 = vst.msk [vmem:[%s494 + $0x50] sm:$0xff] %vm9952, %v9930
      %9964 = vst.msk [vmem:[%s494 + $0x58] sm:$0xff] %vm9952, %v9931
      %9965 = vst.msk [vmem:[%s494 + $0x60] sm:$0xff] %vm9952, %v9932
      %9966 = vst.msk [vmem:[%s494 + $0x68] sm:$0xff] %vm9952, %v9933
      %9967 = vst.msk [vmem:[%s494 + $0x70] sm:$0xff] %vm9952, %v9934
      %9968 = vst.msk [vmem:[%s494 + $0x78] sm:$0xff] %vm9952, %v9935
      %9969 = vst.msk [vmem:[%s494 + $0x80] sm:$0xff] %vm9952, %v9936
      %9970 = vst.msk [vmem:[%s494 + $0x88] sm:$0xff] %vm9952, %v9937
      %9971 = vst.msk [vmem:[%s494 + $0x90] sm:$0xff] %vm9952, %v9938
      %9972 = vst.msk [vmem:[%s494 + $0x98] sm:$0xff] %vm9952, %v9939
      %9973 = vst.msk [vmem:[%s494 + $0xa0] sm:$0xff] %vm9952, %v9940
      %9974 = vst.msk [vmem:[%s494 + $0xa8] sm:$0xff] %vm9952, %v9941
      %9975 = vst.msk [vmem:[%s494 + $0xb0] sm:$0xff] %vm9952, %v9942
      %9976 = vst.msk [vmem:[%s494 + $0xb8] sm:$0xff] %vm9952, %v9943
      %9977 = vst.msk [vmem:[%s494 + $0xc0] sm:$0xff] %vm9952, %v9944
      %9978 = vst.msk [vmem:[%s494 + $0xc8] sm:$0xff] %vm9952, %v9945
      %9979 = vst.msk [vmem:[%s494 + $0xd0] sm:$0xff] %vm9952, %v9946
      %9980 = vst.msk [vmem:[%s494 + $0xd8] sm:$0xff] %vm9952, %v9947
      %9981 = vst.msk [vmem:[%s494 + $0xe0] sm:$0xff] %vm9952, %v9948
      %9982 = vst.msk [vmem:[%s494 + $0xe8] sm:$0xff] %vm9952, %v9949
      %9983 = vst.msk [vmem:[%s494 + $0xf0] sm:$0xff] %vm9952, %v9950
      %9984 = vst.msk [vmem:[%s494 + $0xf8] sm:$0xff] %vm9952, %v9951
      %p9985 = scmp.lt.s32.totalorder %s26, 1
      %s9986 = scalar_select %p9985, %s26, 1
      %s9987 = smul.addr %s9986, 32
      %s9988 = smul.addr %s9987, 8
      %s9989 = scalar_lea.vmem %s15, %s9988
      // Predicated region
      $region81: #{unet_forward.1} parent=79 // pred_check
        %p9990 = pneg %p364
      $region82: #{unet_forward.1} parent=79 // pred_check_branch
        %9992 = sbr.rel (%p9990) target = $region84
      $region83: #{unet_forward.1} parent=79 // pred_region
        _
      $region84: #{unet_forward.1} parent=79 // pred_fallthru
        _
    $region80: #{unet_forward.1} parent=5 // pred_fallthru
      _
    %p9993 = scmp.le.s32.totalorder 2, %s21
    // Predicated region
    $region85: #{unet_forward.1} parent=5 // pred_check
      %p9994 = pneg %p9993
    $region86: #{unet_forward.1} parent=5 // pred_check_branch
      %9996 = sbr.rel (%p9994) target = $region88
    $region87: #{unet_forward.1} parent=5 // pred_region
      %s9997 = ssub.s32 %s21, 2
      // Predicated region
      $region89: #{unet_forward.1} parent=87 // pred_check
        %p9998 = pneg %p370
      $region90: #{unet_forward.1} parent=87 // pred_check_branch
        %10000 = sbr.rel (%p9998) target = $region92
      $region91: #{unet_forward.1} parent=87 // pred_region
        %p10001 = scmp.lt.s32.totalorder %s27, 1
        %s10002 = scalar_select %p10001, %s27, 1
        %s10003 = smul.addr %s10002, 32
        %s10004 = smul.addr %s10003, 8
        %s10005 = scalar_lea.vmem %s15, %s10004
      $region92: #{unet_forward.1} parent=87 // pred_fallthru
        _
    $region88: #{unet_forward.1} parent=5 // pred_fallthru
      _
  $region6: #{unet_forward.1} parent=0 // loop_footer
    %s25 = sadd.s32 1, %s21
  $region7: #{unet_forward.1} parent=0 // loop_footer_branch
    %20 = sbr.rel target = $region3
  $region8: #{unet_forward.1} parent=0 // loop_exit
    _

</llo_original>
